<compile_context>
chip_gen: v5e
topology: v5e:2x2
jax: 0.10.0
libtpu: 0.0.40
codegen_flags: <defaults>
</compile_context>

<pallas_src>
import functools

import jax
import jax.numpy as jnp
from jax.experimental import pallas as pl
from jax.experimental.pallas import tpu as pltpu


# ---------------------------------------------------------------------------
# Stage 1: 1x1 conv + folded BN + ReLU
# ---------------------------------------------------------------------------
def _convbn_relu_kernel(x_ref, w_ref, t_ref, y_ref):
    # x_ref: (TM, C)   w_ref: (C, 2F) (BN scale pre-folded)   t_ref: (1, 2F)
    acc = jnp.dot(x_ref[...], w_ref[...], preferred_element_type=jnp.float32)
    y_ref[...] = jnp.maximum(acc + t_ref[...], 0.0).astype(y_ref.dtype)


# ---------------------------------------------------------------------------
# Stage 2: per-segment 3x3 convs + temporal differences
# ---------------------------------------------------------------------------
def _conv3x3_fused(z, w3_ref, b_ref, H, W):
    """'SAME' 3x3 conv of z:(N,H,W,F) -> (N,H,W,F) in f32.

    The three W-shifts are built once and concatenated along lanes (im2col over
    the kernel's x axis), so the conv is 3 MXU matmuls with K=3F (one per
    kernel row) rather than nine K=F matmuls per frame.  Only leading/H-axis
    slices are taken per row tap.
    """
    N = z.shape[0]
    F = z.shape[3]
    zc = jnp.zeros((N, H, 1, F), z.dtype)
    t_m = jnp.concatenate([zc, z[:, :, :W - 1, :]], axis=2)   # value at col j-1
    t_p = jnp.concatenate([z[:, :, 1:, :], zc], axis=2)       # value at col j+1
    zx = jnp.concatenate([t_m, z, t_p], axis=3)               # (N, H, W, 3F)
    zr = jnp.zeros((N, 1, W, 3 * F), z.dtype)
    zh = jnp.concatenate([zr, zx, zr], axis=1)                # (N, H+2, W, 3F)
    acc = None
    for ky in range(3):                                       # cheap H-axis slices
        s = zh[:, ky:ky + H].reshape(N * H * W, 3 * F)
        p = jnp.dot(s, w3_ref[ky], preferred_element_type=jnp.float32)
        acc = p if acc is None else acc + p
    return (acc + b_ref[...]).reshape(N, H, W, F)


def _assemble_kernel(n_segment, fold, H, W,
                     y_ref, wn_ref, bn_ref, wl_ref, bl_ref, o_ref):
    T, F = n_segment, fold
    # Whole segment resident in VMEM; each y frame is DMA'd exactly once.
    y = y_ref[0].reshape(T, H, W, 2 * F)

    # out[t, :F]   = conv_next(y1[t+1]) - y1[t]    for t < T-1, else 0
    nxt = _conv3x3_fused(y[1:, :, :, :F], wn_ref, bn_ref, H, W)       # (T-1,H,W,F)
    out1 = nxt - y[:T - 1, :, :, :F].astype(jnp.float32)
    # out[t, F:2F] = y2[t] - conv_last(y2[t-1])    for t > 0,   else 0
    prv = _conv3x3_fused(y[:T - 1, :, :, F:], wl_ref, bl_ref, H, W)   # (T-1,H,W,F)
    out2 = y[1:, :, :, F:].astype(jnp.float32) - prv

    R = (T - 1) * H
    dt = o_ref.dtype
    o_ref[0, :R, :, :F] = out1.reshape(R, W, F).astype(dt)
    o_ref[0, R:, :, :F] = jnp.zeros((H, W, F), dt)
    o_ref[0, :H, :, F:] = jnp.zeros((H, W, F), dt)
    o_ref[0, H:, :, F:] = out2.reshape(R, W, F).astype(dt)


# ---------------------------------------------------------------------------
# Wrapper
# ---------------------------------------------------------------------------
def _pick_row_tile(rows, cap):
    """Largest multiple-of-8 divisor of `rows` that is <= cap (else rows)."""
    cap = min(cap, rows)
    cap -= cap % 8
    for tm in range(cap, 7, -8):
        if rows % tm == 0:
            return tm
    return rows


def light_motion_replace_block(x_nchw, params, *, n_segment, n_div,
                               y_dtype=jnp.bfloat16):
    nt, C, H, W = x_nchw.shape
    assert nt % n_segment == 0 and C % n_div == 0
    fold = C // n_div
    n_batch = nt // n_segment
    eps = 1e-5

    # NCHW -> NHWC (lane axis = channels).
    # TODO(synk): for tiny channel counts an NCHW formulation (lane = H*W)
    # would be lane-dense; NHWC is kept for the general / large-C case.
    x = jnp.transpose(x_nchw, (0, 2, 3, 1))

    # ---- stage 1: 1x1 conv + folded BN + ReLU ------------------------------
    scale = params["bn_gamma"] / jnp.sqrt(params["bn_var"] + eps)          # (2F,)
    shift = params["bn_beta"] + (params["b_down"] - params["bn_mean"]) * scale
    w1 = (jnp.transpose(params["w_down"][:, :, 0, 0], (1, 0))
          * scale[None, :]).astype(x.dtype)                                # (C, 2F)
    shift2 = shift.reshape(1, 2 * fold).astype(jnp.float32)

    rows = nt * H * W
    bytes_per_row = C * x.dtype.itemsize
    cap = max(8, min(4096, (4 * 1024 * 1024) // bytes_per_row))
    TM = _pick_row_tile(rows, cap)
    x2d = x.reshape(rows, C)
    y2d = pl.pallas_call(
        _convbn_relu_kernel,
        out_shape=jax.ShapeDtypeStruct((rows, 2 * fold), y_dtype),
        grid=(rows // TM,),
        in_specs=[
            pl.BlockSpec((TM, C), lambda i: (i, 0)),
            pl.BlockSpec((C, 2 * fold), lambda i: (0, 0)),
            pl.BlockSpec((1, 2 * fold), lambda i: (0, 0)),
        ],
        out_specs=pl.BlockSpec((TM, 2 * fold), lambda i: (i, 0)),
        compiler_params=pltpu.CompilerParams(
            dimension_semantics=("parallel",)),
    )(x2d, w1, shift2)

    # ---- stage 2: per-segment 3x3 convs + temporal assembly ----------------
    if n_segment == 1:
        out2f = jnp.zeros((nt, H, W, 2 * fold), x.dtype)
    else:
        # PyTorch OIHW (O, I, 3, 3) -> (ky, kx*F + c_in, O): one fused weight
        # slab per kernel row, matching the lane-concat order of the operand.
        def fuse_w(w):
            return (jnp.transpose(w, (2, 3, 1, 0))
                    .reshape(3, 3 * fold, fold).astype(y_dtype))
        wn3 = fuse_w(params["w_next"])
        wl3 = fuse_w(params["w_last"])
        bn2 = params["b_next"].reshape(1, fold).astype(jnp.float32)
        bl2 = params["b_last"].reshape(1, fold).astype(jnp.float32)

        y4 = y2d.reshape(n_batch, n_segment * H, W, 2 * fold)
        kernel = functools.partial(_assemble_kernel, n_segment, fold, H, W)
        out2f = pl.pallas_call(
            kernel,
            out_shape=jax.ShapeDtypeStruct(
                (n_batch, n_segment * H, W, 2 * fold), x.dtype),
            grid=(n_batch,),
            in_specs=[
                pl.BlockSpec((1, n_segment * H, W, 2 * fold),
                             lambda b: (b, 0, 0, 0)),
                pl.BlockSpec((3, 3 * fold, fold), lambda b: (0, 0, 0)),
                pl.BlockSpec((1, fold), lambda b: (0, 0)),
                pl.BlockSpec((3, 3 * fold, fold), lambda b: (0, 0, 0)),
                pl.BlockSpec((1, fold), lambda b: (0, 0)),
            ],
            out_specs=pl.BlockSpec((1, n_segment * H, W, 2 * fold),
                                   lambda b: (b, 0, 0, 0)),
            compiler_params=pltpu.CompilerParams(
                dimension_semantics=("parallel",),
                vmem_limit_bytes=64 * 1024 * 1024),
        )(y4, wn3, bn2, wl3, bl2)
        out2f = out2f.reshape(nt, H, W, 2 * fold)

    # Identity channels bypass stage 2 entirely; stitch them back here.
    out = jnp.concatenate([out2f, x[..., 2 * fold:]], axis=-1)
    return jnp.transpose(out, (0, 3, 1, 2))                   # NHWC -> NCHW


# ---------------------------------------------------------------------------
# Pure-JAX reference (NCHW, mirrors the PyTorch code)
# ---------------------------------------------------------------------------
def reference(x_nchw, params, *, n_segment, n_div):
    nt, C, H, W = x_nchw.shape
    fold = C // n_div
    eps = 1e-5
    dn = ("NCHW", "OIHW", "NCHW")

    y = jax.lax.conv_general_dilated(x_nchw, params["w_down"], (1, 1), "VALID",
                                     dimension_numbers=dn)
    y = y + params["b_down"][None, :, None, None]
    scale = params["bn_gamma"] / jnp.sqrt(params["bn_var"] + eps)
    y = (y - params["bn_mean"][None, :, None, None]) * scale[None, :, None, None]
    y = y + params["bn_beta"][None, :, None, None]
    y = jnp.maximum(y, 0.0)

    n_batch = nt // n_segment
    ident = x_nchw.reshape(n_batch, n_segment, C, H, W)
    out = jnp.zeros_like(ident)
    yv = y.reshape(n_batch, n_segment, 2 * fold, H, W)

    nxt = jax.lax.conv_general_dilated(y[:, :fold], params["w_next"], (1, 1),
                                       ((1, 1), (1, 1)), dimension_numbers=dn)
    nxt = (nxt + params["b_next"][None, :, None, None]
           ).reshape(n_batch, n_segment, fold, H, W)
    out = out.at[:, :-1, :fold].set(nxt[:, 1:] - yv[:, :-1, :fold])

    lst = jax.lax.conv_general_dilated(y[:, fold:2 * fold], params["w_last"],
                                       (1, 1), ((1, 1), (1, 1)),
                                       dimension_numbers=dn)
    lst = (lst + params["b_last"][None, :, None, None]
           ).reshape(n_batch, n_segment, fold, H, W)
    out = out.at[:, 1:, fold:2 * fold].set(yv[:, 1:, fold:2 * fold] - lst[:, :-1])

    out = out.at[:, :, 2 * fold:].set(ident[:, :, 2 * fold:])
    return out.reshape(nt, C, H, W)


# ---------------------------------------------------------------------------
if __name__ == "__main__":
    n_batch, n_segment, n_div = 2, 4, 4
    C, H, W = 16, 16, 16
    nt = n_batch * n_segment
    fold = C // n_div

    key = jax.random.PRNGKey(0)
    ks = jax.random.split(key, 11)
    x = jax.random.normal(ks[0], (nt, C, H, W), jnp.float32)

    base = dict(
        # channel_down 1x1 conv (OIHW) + bias
        w_down=0.1 * jax.random.normal(ks[1], (2 * fold, C, 1, 1), jnp.float32),
        b_down=0.1 * jax.random.normal(ks[2], (2 * fold,), jnp.float32),
        # BatchNorm2d(2*fold), inference-mode running stats
        bn_gamma=1.0 + 0.1 * jax.random.normal(ks[3], (2 * fold,), jnp.float32),
        bn_beta=0.1 * jax.random.normal(ks[4], (2 * fold,), jnp.float32),
        bn_mean=0.1 * jax.random.normal(ks[5], (2 * fold,), jnp.float32),
        bn_var=jnp.abs(1.0 + 0.1 * jax.random.normal(ks[6], (2 * fold,),
                                                     jnp.float32)),
    )
    # (a) module-__init__ parameters: 3x3 convs zero-initialized.
    params_zero = dict(base,
                       w_next=jnp.zeros((fold, fold, 3, 3), jnp.float32),
                       b_next=jnp.zeros((fold,), jnp.float32),
                       w_last=jnp.zeros((fold, fold, 3, 3), jnp.float32),
                       b_last=jnp.zeros((fold,), jnp.float32))
    # (b) random nonzero 3x3 convs: exercises tap order / padding / bias.
    params_rand = dict(base,
                       w_next=0.1 * jax.random.normal(ks[7], (fold, fold, 3, 3),
                                                      jnp.float32),
                       b_next=0.1 * jax.random.normal(ks[8], (fold,), jnp.float32),
                       w_last=0.1 * jax.random.normal(ks[9], (fold, fold, 3, 3),
                                                      jnp.float32),
                       b_last=0.1 * jax.random.normal(ks[10], (fold,), jnp.float32))

    fn_f32 = jax.jit(functools.partial(light_motion_replace_block,
                                       n_segment=n_segment, n_div=n_div,
                                       y_dtype=jnp.float32))
    fn_bf16 = jax.jit(functools.partial(light_motion_replace_block,
                                        n_segment=n_segment, n_div=n_div,
                                        y_dtype=jnp.bfloat16))

    checks = (
        ("zero-init/f32", params_zero, fn_f32, 1e-4),
        ("random/f32", params_rand, fn_f32, 1e-4),
        ("random/bf16", params_rand, fn_bf16, 3e-2),   # bf16 intermediate y
    )
    for name, params, fn, tol in checks:
        out = jax.block_until_ready(fn(x, params))
        ref = reference(x, params, n_segment=n_segment, n_div=n_div)
        assert out.shape == x.shape and out.dtype == x.dtype, name
        err = float(jnp.max(jnp.abs(out - ref)))
        assert jnp.allclose(out, ref, atol=tol, rtol=tol), (name, err)

    print("KERNEL_OK")
</pallas_src>

<mosaic_0001>
module attributes {stable_mosaic.version = 11 : i64} {
  func.func @_assemble_kernel(%arg0: i32, %arg1: memref<1x64x16x8xf32, #tpu.memory_space<vmem>>, %arg2: memref<3x12x4xf32, #tpu.memory_space<vmem>>, %arg3: memref<1x4xf32, #tpu.memory_space<vmem>>, %arg4: memref<3x12x4xf32, #tpu.memory_space<vmem>>, %arg5: memref<1x4xf32, #tpu.memory_space<vmem>>, %arg6: memref<1x64x16x8xf32, #tpu.memory_space<vmem>>) attributes {dimension_semantics = [#tpu.dimension_semantics<parallel>], iteration_bounds = array<i64: 2>, scalar_prefetch = 0 : i64, scratch_operands = 0 : i64, tpu.core_type = #tpu.core_type<tc>, window_params = [{transform_indices = @transform_0, window_bounds = array<i64: 1, 64, 16, 8>}, {pipeline_mode = #tpu.pipeline_mode<synchronous>, transform_indices = @transform_1, window_bounds = array<i64: 3, 12, 4>}, {pipeline_mode = #tpu.pipeline_mode<synchronous>, transform_indices = @transform_2, window_bounds = array<i64: 1, 4>}, {pipeline_mode = #tpu.pipeline_mode<synchronous>, transform_indices = @transform_3, window_bounds = array<i64: 3, 12, 4>}, {pipeline_mode = #tpu.pipeline_mode<synchronous>, transform_indices = @transform_4, window_bounds = array<i64: 1, 4>}, {transform_indices = @transform_5, window_bounds = array<i64: 1, 64, 16, 8>}]} {
    %c0 = arith.constant 0 : index
    %c0_0 = arith.constant 0 : index
    %c0_1 = arith.constant 0 : index
    %c0_2 = arith.constant 0 : index
    %0 = vector.load %arg1[%c0, %c0_0, %c0_1, %c0_2] : memref<1x64x16x8xf32, #tpu.memory_space<vmem>>, vector<1x64x16x8xf32>
    %1 = vector.shape_cast %0 : vector<1x64x16x8xf32> to vector<64x16x8xf32>
    %2 = vector.shape_cast %1 : vector<64x16x8xf32> to vector<4x16x16x8xf32>
    %3 = vector.extract_strided_slice %2 {offsets = [1, 0, 0, 0], sizes = [3, 16, 16, 4], strides = [1, 1, 1, 1]} : vector<4x16x16x8xf32> to vector<3x16x16x4xf32>
    %cst = arith.constant 0.000000e+00 : f32
    %4 = vector.broadcast %cst : f32 to vector<3x16x1x4xf32>
    %5 = vector.extract_strided_slice %3 {offsets = [0, 0, 0, 0], sizes = [3, 16, 15, 4], strides = [1, 1, 1, 1]} : vector<3x16x16x4xf32> to vector<3x16x15x4xf32>
    %6 = tpu.concatenate %4, %5 in 2 : vector<3x16x1x4xf32>, vector<3x16x15x4xf32> -> vector<3x16x16x4xf32>
    %7 = vector.extract_strided_slice %3 {offsets = [0, 0, 1, 0], sizes = [3, 16, 15, 4], strides = [1, 1, 1, 1]} : vector<3x16x16x4xf32> to vector<3x16x15x4xf32>
    %8 = tpu.concatenate %7, %4 in 2 : vector<3x16x15x4xf32>, vector<3x16x1x4xf32> -> vector<3x16x16x4xf32>
    %9 = tpu.concatenate %6, %3, %8 in 3 : vector<3x16x16x4xf32>, vector<3x16x16x4xf32>, vector<3x16x16x4xf32> -> vector<3x16x16x12xf32>
    %cst_3 = arith.constant 0.000000e+00 : f32
    %10 = vector.broadcast %cst_3 : f32 to vector<3x1x16x12xf32>
    %11 = tpu.concatenate %10, %9, %10 in 1 : vector<3x1x16x12xf32>, vector<3x16x16x12xf32>, vector<3x1x16x12xf32> -> vector<3x18x16x12xf32>
    %12 = vector.extract_strided_slice %11 {offsets = [0, 0, 0, 0], sizes = [3, 16, 16, 12], strides = [1, 1, 1, 1]} : vector<3x18x16x12xf32> to vector<3x16x16x12xf32>
    %13 = vector.shape_cast %12 : vector<3x16x16x12xf32> to vector<768x12xf32>
    %c0_4 = arith.constant 0 : index
    %c0_5 = arith.constant 0 : index
    %c0_6 = arith.constant 0 : index
    %14 = vector.load %arg2[%c0_4, %c0_5, %c0_6] : memref<3x12x4xf32, #tpu.memory_space<vmem>>, vector<1x12x4xf32>
    %15 = vector.shape_cast %14 : vector<1x12x4xf32> to vector<12x4xf32>
    %cst_7 = arith.constant dense<0.000000e+00> : vector<768x4xf32>
    %16 = tpu.matmul %13, %15, %cst_7 {dimension_numbers = #tpu.dot_dimension_numbers<[1], [0], [0], [1], [0, 0, 1, 1], [], []>} : vector<768x12xf32>, vector<12x4xf32>, vector<768x4xf32> -> vector<768x4xf32>
    %17 = vector.extract_strided_slice %11 {offsets = [0, 1, 0, 0], sizes = [3, 16, 16, 12], strides = [1, 1, 1, 1]} : vector<3x18x16x12xf32> to vector<3x16x16x12xf32>
    %18 = vector.shape_cast %17 : vector<3x16x16x12xf32> to vector<768x12xf32>
    %c1 = arith.constant 1 : index
    %c0_8 = arith.constant 0 : index
    %c0_9 = arith.constant 0 : index
    %19 = vector.load %arg2[%c1, %c0_8, %c0_9] : memref<3x12x4xf32, #tpu.memory_space<vmem>>, vector<1x12x4xf32>
    %20 = vector.shape_cast %19 : vector<1x12x4xf32> to vector<12x4xf32>
    %cst_10 = arith.constant dense<0.000000e+00> : vector<768x4xf32>
    %21 = tpu.matmul %18, %20, %cst_10 {dimension_numbers = #tpu.dot_dimension_numbers<[1], [0], [0], [1], [0, 0, 1, 1], [], []>} : vector<768x12xf32>, vector<12x4xf32>, vector<768x4xf32> -> vector<768x4xf32>
    %22 = arith.addf %16, %21 : vector<768x4xf32>
    %23 = vector.extract_strided_slice %11 {offsets = [0, 2, 0, 0], sizes = [3, 16, 16, 12], strides = [1, 1, 1, 1]} : vector<3x18x16x12xf32> to vector<3x16x16x12xf32>
    %24 = vector.shape_cast %23 : vector<3x16x16x12xf32> to vector<768x12xf32>
    %c2 = arith.constant 2 : index
    %c0_11 = arith.constant 0 : index
    %c0_12 = arith.constant 0 : index
    %25 = vector.load %arg2[%c2, %c0_11, %c0_12] : memref<3x12x4xf32, #tpu.memory_space<vmem>>, vector<1x12x4xf32>
    %26 = vector.shape_cast %25 : vector<1x12x4xf32> to vector<12x4xf32>
    %cst_13 = arith.constant dense<0.000000e+00> : vector<768x4xf32>
    %27 = tpu.matmul %24, %26, %cst_13 {dimension_numbers = #tpu.dot_dimension_numbers<[1], [0], [0], [1], [0, 0, 1, 1], [], []>} : vector<768x12xf32>, vector<12x4xf32>, vector<768x4xf32> -> vector<768x4xf32>
    %28 = arith.addf %22, %27 : vector<768x4xf32>
    %c0_14 = arith.constant 0 : index
    %c0_15 = arith.constant 0 : index
    %29 = vector.load %arg3[%c0_14, %c0_15] : memref<1x4xf32, #tpu.memory_space<vmem>>, vector<1x4xf32>
    %30 = vector.broadcast %29 : vector<1x4xf32> to vector<768x4xf32>
    %31 = arith.addf %28, %30 : vector<768x4xf32>
    %32 = vector.shape_cast %31 : vector<768x4xf32> to vector<3x16x16x4xf32>
    %33 = vector.extract_strided_slice %2 {offsets = [0, 0, 0, 0], sizes = [3, 16, 16, 4], strides = [1, 1, 1, 1]} : vector<4x16x16x8xf32> to vector<3x16x16x4xf32>
    %34 = arith.subf %32, %33 : vector<3x16x16x4xf32>
    %35 = vector.extract_strided_slice %2 {offsets = [0, 0, 0, 4], sizes = [3, 16, 16, 4], strides = [1, 1, 1, 1]} : vector<4x16x16x8xf32> to vector<3x16x16x4xf32>
    %cst_16 = arith.constant 0.000000e+00 : f32
    %36 = vector.broadcast %cst_16 : f32 to vector<3x16x1x4xf32>
    %37 = vector.extract_strided_slice %35 {offsets = [0, 0, 0, 0], sizes = [3, 16, 15, 4], strides = [1, 1, 1, 1]} : vector<3x16x16x4xf32> to vector<3x16x15x4xf32>
    %38 = tpu.concatenate %36, %37 in 2 : vector<3x16x1x4xf32>, vector<3x16x15x4xf32> -> vector<3x16x16x4xf32>
    %39 = vector.extract_strided_slice %35 {offsets = [0, 0, 1, 0], sizes = [3, 16, 15, 4], strides = [1, 1, 1, 1]} : vector<3x16x16x4xf32> to vector<3x16x15x4xf32>
    %40 = tpu.concatenate %39, %36 in 2 : vector<3x16x15x4xf32>, vector<3x16x1x4xf32> -> vector<3x16x16x4xf32>
    %41 = tpu.concatenate %38, %35, %40 in 3 : vector<3x16x16x4xf32>, vector<3x16x16x4xf32>, vector<3x16x16x4xf32> -> vector<3x16x16x12xf32>
    %cst_17 = arith.constant 0.000000e+00 : f32
    %42 = vector.broadcast %cst_17 : f32 to vector<3x1x16x12xf32>
    %43 = tpu.concatenate %42, %41, %42 in 1 : vector<3x1x16x12xf32>, vector<3x16x16x12xf32>, vector<3x1x16x12xf32> -> vector<3x18x16x12xf32>
    %44 = vector.extract_strided_slice %43 {offsets = [0, 0, 0, 0], sizes = [3, 16, 16, 12], strides = [1, 1, 1, 1]} : vector<3x18x16x12xf32> to vector<3x16x16x12xf32>
    %45 = vector.shape_cast %44 : vector<3x16x16x12xf32> to vector<768x12xf32>
    %c0_18 = arith.constant 0 : index
    %c0_19 = arith.constant 0 : index
    %c0_20 = arith.constant 0 : index
    %46 = vector.load %arg4[%c0_18, %c0_19, %c0_20] : memref<3x12x4xf32, #tpu.memory_space<vmem>>, vector<1x12x4xf32>
    %47 = vector.shape_cast %46 : vector<1x12x4xf32> to vector<12x4xf32>
    %cst_21 = arith.constant dense<0.000000e+00> : vector<768x4xf32>
    %48 = tpu.matmul %45, %47, %cst_21 {dimension_numbers = #tpu.dot_dimension_numbers<[1], [0], [0], [1], [0, 0, 1, 1], [], []>} : vector<768x12xf32>, vector<12x4xf32>, vector<768x4xf32> -> vector<768x4xf32>
    %49 = vector.extract_strided_slice %43 {offsets = [0, 1, 0, 0], sizes = [3, 16, 16, 12], strides = [1, 1, 1, 1]} : vector<3x18x16x12xf32> to vector<3x16x16x12xf32>
    %50 = vector.shape_cast %49 : vector<3x16x16x12xf32> to vector<768x12xf32>
    %c1_22 = arith.constant 1 : index
    %c0_23 = arith.constant 0 : index
    %c0_24 = arith.constant 0 : index
    %51 = vector.load %arg4[%c1_22, %c0_23, %c0_24] : memref<3x12x4xf32, #tpu.memory_space<vmem>>, vector<1x12x4xf32>
    %52 = vector.shape_cast %51 : vector<1x12x4xf32> to vector<12x4xf32>
    %cst_25 = arith.constant dense<0.000000e+00> : vector<768x4xf32>
    %53 = tpu.matmul %50, %52, %cst_25 {dimension_numbers = #tpu.dot_dimension_numbers<[1], [0], [0], [1], [0, 0, 1, 1], [], []>} : vector<768x12xf32>, vector<12x4xf32>, vector<768x4xf32> -> vector<768x4xf32>
    %54 = arith.addf %48, %53 : vector<768x4xf32>
    %55 = vector.extract_strided_slice %43 {offsets = [0, 2, 0, 0], sizes = [3, 16, 16, 12], strides = [1, 1, 1, 1]} : vector<3x18x16x12xf32> to vector<3x16x16x12xf32>
    %56 = vector.shape_cast %55 : vector<3x16x16x12xf32> to vector<768x12xf32>
    %c2_26 = arith.constant 2 : index
    %c0_27 = arith.constant 0 : index
    %c0_28 = arith.constant 0 : index
    %57 = vector.load %arg4[%c2_26, %c0_27, %c0_28] : memref<3x12x4xf32, #tpu.memory_space<vmem>>, vector<1x12x4xf32>
    %58 = vector.shape_cast %57 : vector<1x12x4xf32> to vector<12x4xf32>
    %cst_29 = arith.constant dense<0.000000e+00> : vector<768x4xf32>
    %59 = tpu.matmul %56, %58, %cst_29 {dimension_numbers = #tpu.dot_dimension_numbers<[1], [0], [0], [1], [0, 0, 1, 1], [], []>} : vector<768x12xf32>, vector<12x4xf32>, vector<768x4xf32> -> vector<768x4xf32>
    %60 = arith.addf %54, %59 : vector<768x4xf32>
    %c0_30 = arith.constant 0 : index
    %c0_31 = arith.constant 0 : index
    %61 = vector.load %arg5[%c0_30, %c0_31] : memref<1x4xf32, #tpu.memory_space<vmem>>, vector<1x4xf32>
    %62 = vector.broadcast %61 : vector<1x4xf32> to vector<768x4xf32>
    %63 = arith.addf %60, %62 : vector<768x4xf32>
    %64 = vector.shape_cast %63 : vector<768x4xf32> to vector<3x16x16x4xf32>
    %65 = vector.extract_strided_slice %2 {offsets = [1, 0, 0, 4], sizes = [3, 16, 16, 4], strides = [1, 1, 1, 1]} : vector<4x16x16x8xf32> to vector<3x16x16x4xf32>
    %66 = arith.subf %65, %64 : vector<3x16x16x4xf32>
    %67 = vector.shape_cast %34 : vector<3x16x16x4xf32> to vector<48x16x4xf32>
    %c0_32 = arith.constant 0 : index
    %c0_33 = arith.constant 0 : index
    %c0_34 = arith.constant 0 : index
    %c0_35 = arith.constant 0 : index
    %68 = vector.load %arg6[%c0_32, %c0_33, %c0_34, %c0_35] : memref<1x64x16x8xf32, #tpu.memory_space<vmem>>, vector<1x48x16x4xf32>
    %69 = vector.shape_cast %68 : vector<1x48x16x4xf32> to vector<48x16x4xf32>
    %70 = vector.shape_cast %67 : vector<48x16x4xf32> to vector<1x48x16x4xf32>
    tpu.vector_store %arg6[%c0_32, %c0_33, %c0_34, %c0_35], %70 {strides = array<i32>} : memref<1x64x16x8xf32, #tpu.memory_space<vmem>>, vector<1x48x16x4xf32>,
    %cst_36 = arith.constant 0.000000e+00 : f32
    %71 = vector.broadcast %cst_36 : f32 to vector<16x16x4xf32>
    %c0_37 = arith.constant 0 : index
    %c48 = arith.constant 48 : index
    %c0_38 = arith.constant 0 : index
    %c0_39 = arith.constant 0 : index
    %72 = vector.load %arg6[%c0_37, %c48, %c0_38, %c0_39] : memref<1x64x16x8xf32, #tpu.memory_space<vmem>>, vector<1x16x16x4xf32>
    %73 = vector.shape_cast %72 : vector<1x16x16x4xf32> to vector<16x16x4xf32>
    %74 = vector.shape_cast %71 : vector<16x16x4xf32> to vector<1x16x16x4xf32>
    tpu.vector_store %arg6[%c0_37, %c48, %c0_38, %c0_39], %74 {strides = array<i32>} : memref<1x64x16x8xf32, #tpu.memory_space<vmem>>, vector<1x16x16x4xf32>,
    %cst_40 = arith.constant 0.000000e+00 : f32
    %75 = vector.broadcast %cst_40 : f32 to vector<16x16x4xf32>
    %c0_41 = arith.constant 0 : index
    %c0_42 = arith.constant 0 : index
    %c0_43 = arith.constant 0 : index
    %c4 = arith.constant 4 : index
    %76 = vector.load %arg6[%c0_41, %c0_42, %c0_43, %c4] : memref<1x64x16x8xf32, #tpu.memory_space<vmem>>, vector<1x16x16x4xf32>
    %77 = vector.shape_cast %76 : vector<1x16x16x4xf32> to vector<16x16x4xf32>
    %78 = vector.shape_cast %75 : vector<16x16x4xf32> to vector<1x16x16x4xf32>
    tpu.vector_store %arg6[%c0_41, %c0_42, %c0_43, %c4], %78 {strides = array<i32>} : memref<1x64x16x8xf32, #tpu.memory_space<vmem>>, vector<1x16x16x4xf32>,
    %79 = vector.shape_cast %66 : vector<3x16x16x4xf32> to vector<48x16x4xf32>
    %c0_44 = arith.constant 0 : index
    %c16 = arith.constant 16 : index
    %c0_45 = arith.constant 0 : index
    %c4_46 = arith.constant 4 : index
    %80 = vector.load %arg6[%c0_44, %c16, %c0_45, %c4_46] : memref<1x64x16x8xf32, #tpu.memory_space<vmem>>, vector<1x48x16x4xf32>
    %81 = vector.shape_cast %80 : vector<1x48x16x4xf32> to vector<48x16x4xf32>
    %82 = vector.shape_cast %79 : vector<48x16x4xf32> to vector<1x48x16x4xf32>
    tpu.vector_store %arg6[%c0_44, %c16, %c0_45, %c4_46], %82 {strides = array<i32>} : memref<1x64x16x8xf32, #tpu.memory_space<vmem>>, vector<1x48x16x4xf32>,
    return
  }
  func.func @transform_0(%arg0: i32) -> (i32, i32, i32, i32) {
    %c0_i32 = arith.constant 0 : i32
    %c0_i32_0 = arith.constant 0 : i32
    %c0_i32_1 = arith.constant 0 : i32
    %c0_i32_2 = arith.constant 0 : i32
    return %arg0, %c0_i32, %c0_i32_0, %c0_i32_1 : i32, i32, i32, i32
  }
  func.func @transform_1(%arg0: i32) -> (i32, i32, i32) {
    %c0_i32 = arith.constant 0 : i32
    %c0_i32_0 = arith.constant 0 : i32
    %c0_i32_1 = arith.constant 0 : i32
    %c0_i32_2 = arith.constant 0 : i32
    return %c0_i32, %c0_i32_0, %c0_i32_1 : i32, i32, i32
  }
  func.func @transform_2(%arg0: i32) -> (i32, i32) {
    %c0_i32 = arith.constant 0 : i32
    %c0_i32_0 = arith.constant 0 : i32
    %c0_i32_1 = arith.constant 0 : i32
    return %c0_i32, %c0_i32_0 : i32, i32
  }
  func.func @transform_3(%arg0: i32) -> (i32, i32, i32) {
    %c0_i32 = arith.constant 0 : i32
    %c0_i32_0 = arith.constant 0 : i32
    %c0_i32_1 = arith.constant 0 : i32
    %c0_i32_2 = arith.constant 0 : i32
    return %c0_i32, %c0_i32_0, %c0_i32_1 : i32, i32, i32
  }
  func.func @transform_4(%arg0: i32) -> (i32, i32) {
    %c0_i32 = arith.constant 0 : i32
    %c0_i32_0 = arith.constant 0 : i32
    %c0_i32_1 = arith.constant 0 : i32
    return %c0_i32, %c0_i32_0 : i32, i32
  }
  func.func @transform_5(%arg0: i32) -> (i32, i32, i32, i32) {
    %c0_i32 = arith.constant 0 : i32
    %c0_i32_0 = arith.constant 0 : i32
    %c0_i32_1 = arith.constant 0 : i32
    %c0_i32_2 = arith.constant 0 : i32
    return %arg0, %c0_i32, %c0_i32_0, %c0_i32_1 : i32, i32, i32, i32
  }
}

module attributes {stable_mosaic.version = 11 : i64} {
  func.func @_convbn_relu_kernel(%arg0: i32, %arg1: memref<2048x16xf32, #tpu.memory_space<vmem>>, %arg2: memref<16x8xf32, #tpu.memory_space<vmem>>, %arg3: memref<1x8xf32, #tpu.memory_space<vmem>>, %arg4: memref<2048x8xf32, #tpu.memory_space<vmem>>) attributes {dimension_semantics = [#tpu.dimension_semantics<parallel>], iteration_bounds = array<i64: 1>, scalar_prefetch = 0 : i64, scratch_operands = 0 : i64, tpu.core_type = #tpu.core_type<tc>, window_params = [{transform_indices = @transform_0, window_bounds = array<i64: 2048, 16>}, {pipeline_mode = #tpu.pipeline_mode<synchronous>, transform_indices = @transform_1, window_bounds = array<i64: 16, 8>}, {pipeline_mode = #tpu.pipeline_mode<synchronous>, transform_indices = @transform_2, window_bounds = array<i64: 1, 8>}, {transform_indices = @transform_3, window_bounds = array<i64: 2048, 8>}]} {
    %c0 = arith.constant 0 : index
    %c0_0 = arith.constant 0 : index
    %0 = vector.load %arg1[%c0, %c0_0] : memref<2048x16xf32, #tpu.memory_space<vmem>>, vector<2048x16xf32>
    %c0_1 = arith.constant 0 : index
    %c0_2 = arith.constant 0 : index
    %1 = vector.load %arg2[%c0_1, %c0_2] : memref<16x8xf32, #tpu.memory_space<vmem>>, vector<16x8xf32>
    %cst = arith.constant dense<0.000000e+00> : vector<2048x8xf32>
    %2 = tpu.matmul %0, %1, %cst {dimension_numbers = #tpu.dot_dimension_numbers<[1], [0], [0], [1], [0, 0, 1, 1], [], []>} : vector<2048x16xf32>, vector<16x8xf32>, vector<2048x8xf32> -> vector<2048x8xf32>
    %c0_3 = arith.constant 0 : index
    %c0_4 = arith.constant 0 : index
    %3 = vector.load %arg3[%c0_3, %c0_4] : memref<1x8xf32, #tpu.memory_space<vmem>>, vector<1x8xf32>
    %4 = vector.broadcast %3 : vector<1x8xf32> to vector<2048x8xf32>
    %5 = arith.addf %2, %4 : vector<2048x8xf32>
    %cst_5 = arith.constant 0.000000e+00 : f32
    %6 = vector.broadcast %cst_5 : f32 to vector<2048x8xf32>
    %7 = arith.maximumf %5, %6 : vector<2048x8xf32>
    %c0_6 = arith.constant 0 : index
    %c0_7 = arith.constant 0 : index
    %8 = vector.load %arg4[%c0_6, %c0_7] : memref<2048x8xf32, #tpu.memory_space<vmem>>, vector<2048x8xf32>
    tpu.vector_store %arg4[%c0_6, %c0_7], %7 {strides = array<i32>} : memref<2048x8xf32, #tpu.memory_space<vmem>>, vector<2048x8xf32>,
    return
  }
  func.func @transform_0(%arg0: i32) -> (i32, i32) {
    %c0_i32 = arith.constant 0 : i32
    %c0_i32_0 = arith.constant 0 : i32
    return %arg0, %c0_i32 : i32, i32
  }
  func.func @transform_1(%arg0: i32) -> (i32, i32) {
    %c0_i32 = arith.constant 0 : i32
    %c0_i32_0 = arith.constant 0 : i32
    %c0_i32_1 = arith.constant 0 : i32
    return %c0_i32, %c0_i32_0 : i32, i32
  }
  func.func @transform_2(%arg0: i32) -> (i32, i32) {
    %c0_i32 = arith.constant 0 : i32
    %c0_i32_0 = arith.constant 0 : i32
    %c0_i32_1 = arith.constant 0 : i32
    return %c0_i32, %c0_i32_0 : i32, i32
  }
  func.func @transform_3(%arg0: i32) -> (i32, i32) {
    %c0_i32 = arith.constant 0 : i32
    %c0_i32_0 = arith.constant 0 : i32
    return %arg0, %c0_i32 : i32, i32
  }
}

</mosaic_0001>

<llo_original>
// kernel: light_motion_replace_block.2
$region0: #{light_motion_replace_block.2}
  #allocation0 [shape = 'u32[]', space=smem, size = 0x4, offset = 0x4, fixed_abs, tag = 'smem constant byte address 0x4 - core index']
  #allocation1 [shape = 'u32[72,128]{1,0:T(1,128)}', space=vmem, size = 0x9000, scoped, tag = 'internal scratch']
  %s0 = inlined_call_operand.vmem [shape: f32[2048,16], index: 0, kind: input, shape index: {}]
  %s1 = inlined_call_operand.vmem [shape: f32[16,8], index: 1, kind: input, shape index: {}]
  %s2 = inlined_call_operand.vmem [shape: f32[1,8], index: 2, kind: input, shape index: {}]
  %s3 = inlined_call_operand.vmem [shape: f32[2048,8], index: 3, kind: output, shape index: {}]
  %s4 = sld [smem:[#allocation0]]
  $region22: #{light_motion_replace_block.2} parent=0
    _
  %s6 = ssub.s32 1, %s4
  %s7 = scalar_select 0, %s6, %s4
  // Predicated region
  $region2: #{light_motion_replace_block.2} parent=0 // pred_check
    _
  $region3: #{light_motion_replace_block.2} parent=0 // pred_check_branch
    %9 = sbr.rel (0) target = $region5
  $region4: #{light_motion_replace_block.2} parent=0 // pred_region
    _
  $region5: #{light_motion_replace_block.2} parent=0 // pred_fallthru
    _
  // Predicated region
  $region6: #{light_motion_replace_block.2} parent=0 // pred_check
    _
  $region7: #{light_motion_replace_block.2} parent=0 // pred_check_branch
    %11 = sbr.rel (0) target = $region9
  $region8: #{light_motion_replace_block.2} parent=0 // pred_region
    _
  $region9: #{light_motion_replace_block.2} parent=0 // pred_fallthru
    _
  // Predicated region
  $region10: #{light_motion_replace_block.2} parent=0 // pred_check
    _
  $region11: #{light_motion_replace_block.2} parent=0 // pred_check_branch
    %13 = sbr.rel (0) target = $region13
  $region12: #{light_motion_replace_block.2} parent=0 // pred_region
    _
  $region13: #{light_motion_replace_block.2} parent=0 // pred_fallthru
    _
  %v14 = vld [vmem:[%s0] sm:$0xff]
  %v15 = vld [vmem:[%s0 + $0x8] sm:$0xff]
  %v16 = vld [vmem:[%s0 + $0x10] sm:$0xff]
  %v17 = vld [vmem:[%s0 + $0x18] sm:$0xff]
  %v18 = vld [vmem:[%s0 + $0x20] sm:$0xff]
  %v19 = vld [vmem:[%s0 + $0x28] sm:$0xff]
  %v20 = vld [vmem:[%s0 + $0x30] sm:$0xff]
  %v21 = vld [vmem:[%s0 + $0x38] sm:$0xff]
  %v22 = vld [vmem:[%s0 + $0x40] sm:$0xff]
  %v23 = vld [vmem:[%s0 + $0x48] sm:$0xff]
  %v24 = vld [vmem:[%s0 + $0x50] sm:$0xff]
  %v25 = vld [vmem:[%s0 + $0x58] sm:$0xff]
  %v26 = vld [vmem:[%s0 + $0x60] sm:$0xff]
  %v27 = vld [vmem:[%s0 + $0x68] sm:$0xff]
  %v28 = vld [vmem:[%s0 + $0x70] sm:$0xff]
  %v29 = vld [vmem:[%s0 + $0x78] sm:$0xff]
  %v30 = vld [vmem:[%s0 + $0x80] sm:$0xff]
  %v31 = vld [vmem:[%s0 + $0x88] sm:$0xff]
  %v32 = vld [vmem:[%s0 + $0x90] sm:$0xff]
  %v33 = vld [vmem:[%s0 + $0x98] sm:$0xff]
  %v34 = vld [vmem:[%s0 + $0xa0] sm:$0xff]
  %v35 = vld [vmem:[%s0 + $0xa8] sm:$0xff]
  %v36 = vld [vmem:[%s0 + $0xb0] sm:$0xff]
  %v37 = vld [vmem:[%s0 + $0xb8] sm:$0xff]
  %v38 = vld [vmem:[%s0 + $0xc0] sm:$0xff]
  %v39 = vld [vmem:[%s0 + $0xc8] sm:$0xff]
  %v40 = vld [vmem:[%s0 + $0xd0] sm:$0xff]
  %v41 = vld [vmem:[%s0 + $0xd8] sm:$0xff]
  %v42 = vld [vmem:[%s0 + $0xe0] sm:$0xff]
  %v43 = vld [vmem:[%s0 + $0xe8] sm:$0xff]
  %v44 = vld [vmem:[%s0 + $0xf0] sm:$0xff]
  %v45 = vld [vmem:[%s0 + $0xf8] sm:$0xff]
  %v46 = vld [vmem:[%s0 + $0x100] sm:$0xff]
  %v47 = vld [vmem:[%s0 + $0x108] sm:$0xff]
  %v48 = vld [vmem:[%s0 + $0x110] sm:$0xff]
  %v49 = vld [vmem:[%s0 + $0x118] sm:$0xff]
  %v50 = vld [vmem:[%s0 + $0x120] sm:$0xff]
  %v51 = vld [vmem:[%s0 + $0x128] sm:$0xff]
  %v52 = vld [vmem:[%s0 + $0x130] sm:$0xff]
  %v53 = vld [vmem:[%s0 + $0x138] sm:$0xff]
  %v54 = vld [vmem:[%s0 + $0x140] sm:$0xff]
  %v55 = vld [vmem:[%s0 + $0x148] sm:$0xff]
  %v56 = vld [vmem:[%s0 + $0x150] sm:$0xff]
  %v57 = vld [vmem:[%s0 + $0x158] sm:$0xff]
  %v58 = vld [vmem:[%s0 + $0x160] sm:$0xff]
  %v59 = vld [vmem:[%s0 + $0x168] sm:$0xff]
  %v60 = vld [vmem:[%s0 + $0x170] sm:$0xff]
  %v61 = vld [vmem:[%s0 + $0x178] sm:$0xff]
  %v62 = vld [vmem:[%s0 + $0x180] sm:$0xff]
  %v63 = vld [vmem:[%s0 + $0x188] sm:$0xff]
  %v64 = vld [vmem:[%s0 + $0x190] sm:$0xff]
  %v65 = vld [vmem:[%s0 + $0x198] sm:$0xff]
  %v66 = vld [vmem:[%s0 + $0x1a0] sm:$0xff]
  %v67 = vld [vmem:[%s0 + $0x1a8] sm:$0xff]
  %v68 = vld [vmem:[%s0 + $0x1b0] sm:$0xff]
  %v69 = vld [vmem:[%s0 + $0x1b8] sm:$0xff]
  %v70 = vld [vmem:[%s0 + $0x1c0] sm:$0xff]
  %v71 = vld [vmem:[%s0 + $0x1c8] sm:$0xff]
  %v72 = vld [vmem:[%s0 + $0x1d0] sm:$0xff]
  %v73 = vld [vmem:[%s0 + $0x1d8] sm:$0xff]
  %v74 = vld [vmem:[%s0 + $0x1e0] sm:$0xff]
  %v75 = vld [vmem:[%s0 + $0x1e8] sm:$0xff]
  %v76 = vld [vmem:[%s0 + $0x1f0] sm:$0xff]
  %v77 = vld [vmem:[%s0 + $0x1f8] sm:$0xff]
  %v78 = vld [vmem:[%s0 + $0x200] sm:$0xff]
  %v79 = vld [vmem:[%s0 + $0x208] sm:$0xff]
  %v80 = vld [vmem:[%s0 + $0x210] sm:$0xff]
  %v81 = vld [vmem:[%s0 + $0x218] sm:$0xff]
  %v82 = vld [vmem:[%s0 + $0x220] sm:$0xff]
  %v83 = vld [vmem:[%s0 + $0x228] sm:$0xff]
  %v84 = vld [vmem:[%s0 + $0x230] sm:$0xff]
  %v85 = vld [vmem:[%s0 + $0x238] sm:$0xff]
  %v86 = vld [vmem:[%s0 + $0x240] sm:$0xff]
  %v87 = vld [vmem:[%s0 + $0x248] sm:$0xff]
  %v88 = vld [vmem:[%s0 + $0x250] sm:$0xff]
  %v89 = vld [vmem:[%s0 + $0x258] sm:$0xff]
  %v90 = vld [vmem:[%s0 + $0x260] sm:$0xff]
  %v91 = vld [vmem:[%s0 + $0x268] sm:$0xff]
  %v92 = vld [vmem:[%s0 + $0x270] sm:$0xff]
  %v93 = vld [vmem:[%s0 + $0x278] sm:$0xff]
  %v94 = vld [vmem:[%s0 + $0x280] sm:$0xff]
  %v95 = vld [vmem:[%s0 + $0x288] sm:$0xff]
  %v96 = vld [vmem:[%s0 + $0x290] sm:$0xff]
  %v97 = vld [vmem:[%s0 + $0x298] sm:$0xff]
  %v98 = vld [vmem:[%s0 + $0x2a0] sm:$0xff]
  %v99 = vld [vmem:[%s0 + $0x2a8] sm:$0xff]
  %v100 = vld [vmem:[%s0 + $0x2b0] sm:$0xff]
  %v101 = vld [vmem:[%s0 + $0x2b8] sm:$0xff]
  %v102 = vld [vmem:[%s0 + $0x2c0] sm:$0xff]
  %v103 = vld [vmem:[%s0 + $0x2c8] sm:$0xff]
  %v104 = vld [vmem:[%s0 + $0x2d0] sm:$0xff]
  %v105 = vld [vmem:[%s0 + $0x2d8] sm:$0xff]
  %v106 = vld [vmem:[%s0 + $0x2e0] sm:$0xff]
  %v107 = vld [vmem:[%s0 + $0x2e8] sm:$0xff]
  %v108 = vld [vmem:[%s0 + $0x2f0] sm:$0xff]
  %v109 = vld [vmem:[%s0 + $0x2f8] sm:$0xff]
  %v110 = vld [vmem:[%s0 + $0x300] sm:$0xff]
  %v111 = vld [vmem:[%s0 + $0x308] sm:$0xff]
  %v112 = vld [vmem:[%s0 + $0x310] sm:$0xff]
  %v113 = vld [vmem:[%s0 + $0x318] sm:$0xff]
  %v114 = vld [vmem:[%s0 + $0x320] sm:$0xff]
  %v115 = vld [vmem:[%s0 + $0x328] sm:$0xff]
  %v116 = vld [vmem:[%s0 + $0x330] sm:$0xff]
  %v117 = vld [vmem:[%s0 + $0x338] sm:$0xff]
  %v118 = vld [vmem:[%s0 + $0x340] sm:$0xff]
  %v119 = vld [vmem:[%s0 + $0x348] sm:$0xff]
  %v120 = vld [vmem:[%s0 + $0x350] sm:$0xff]
  %v121 = vld [vmem:[%s0 + $0x358] sm:$0xff]
  %v122 = vld [vmem:[%s0 + $0x360] sm:$0xff]
  %v123 = vld [vmem:[%s0 + $0x368] sm:$0xff]
  %v124 = vld [vmem:[%s0 + $0x370] sm:$0xff]
  %v125 = vld [vmem:[%s0 + $0x378] sm:$0xff]
  %v126 = vld [vmem:[%s0 + $0x380] sm:$0xff]
  %v127 = vld [vmem:[%s0 + $0x388] sm:$0xff]
  %v128 = vld [vmem:[%s0 + $0x390] sm:$0xff]
  %v129 = vld [vmem:[%s0 + $0x398] sm:$0xff]
  %v130 = vld [vmem:[%s0 + $0x3a0] sm:$0xff]
  %v131 = vld [vmem:[%s0 + $0x3a8] sm:$0xff]
  %v132 = vld [vmem:[%s0 + $0x3b0] sm:$0xff]
  %v133 = vld [vmem:[%s0 + $0x3b8] sm:$0xff]
  %v134 = vld [vmem:[%s0 + $0x3c0] sm:$0xff]
  %v135 = vld [vmem:[%s0 + $0x3c8] sm:$0xff]
  %v136 = vld [vmem:[%s0 + $0x3d0] sm:$0xff]
  %v137 = vld [vmem:[%s0 + $0x3d8] sm:$0xff]
  %v138 = vld [vmem:[%s0 + $0x3e0] sm:$0xff]
  %v139 = vld [vmem:[%s0 + $0x3e8] sm:$0xff]
  %v140 = vld [vmem:[%s0 + $0x3f0] sm:$0xff]
  %v141 = vld [vmem:[%s0 + $0x3f8] sm:$0xff]
  %v142 = vld [vmem:[%s0 + $0x400] sm:$0xff]
  %v143 = vld [vmem:[%s0 + $0x408] sm:$0xff]
  %v144 = vld [vmem:[%s0 + $0x410] sm:$0xff]
  %v145 = vld [vmem:[%s0 + $0x418] sm:$0xff]
  %v146 = vld [vmem:[%s0 + $0x420] sm:$0xff]
  %v147 = vld [vmem:[%s0 + $0x428] sm:$0xff]
  %v148 = vld [vmem:[%s0 + $0x430] sm:$0xff]
  %v149 = vld [vmem:[%s0 + $0x438] sm:$0xff]
  %v150 = vld [vmem:[%s0 + $0x440] sm:$0xff]
  %v151 = vld [vmem:[%s0 + $0x448] sm:$0xff]
  %v152 = vld [vmem:[%s0 + $0x450] sm:$0xff]
  %v153 = vld [vmem:[%s0 + $0x458] sm:$0xff]
  %v154 = vld [vmem:[%s0 + $0x460] sm:$0xff]
  %v155 = vld [vmem:[%s0 + $0x468] sm:$0xff]
  %v156 = vld [vmem:[%s0 + $0x470] sm:$0xff]
  %v157 = vld [vmem:[%s0 + $0x478] sm:$0xff]
  %v158 = vld [vmem:[%s0 + $0x480] sm:$0xff]
  %v159 = vld [vmem:[%s0 + $0x488] sm:$0xff]
  %v160 = vld [vmem:[%s0 + $0x490] sm:$0xff]
  %v161 = vld [vmem:[%s0 + $0x498] sm:$0xff]
  %v162 = vld [vmem:[%s0 + $0x4a0] sm:$0xff]
  %v163 = vld [vmem:[%s0 + $0x4a8] sm:$0xff]
  %v164 = vld [vmem:[%s0 + $0x4b0] sm:$0xff]
  %v165 = vld [vmem:[%s0 + $0x4b8] sm:$0xff]
  %v166 = vld [vmem:[%s0 + $0x4c0] sm:$0xff]
  %v167 = vld [vmem:[%s0 + $0x4c8] sm:$0xff]
  %v168 = vld [vmem:[%s0 + $0x4d0] sm:$0xff]
  %v169 = vld [vmem:[%s0 + $0x4d8] sm:$0xff]
  %v170 = vld [vmem:[%s0 + $0x4e0] sm:$0xff]
  %v171 = vld [vmem:[%s0 + $0x4e8] sm:$0xff]
  %v172 = vld [vmem:[%s0 + $0x4f0] sm:$0xff]
  %v173 = vld [vmem:[%s0 + $0x4f8] sm:$0xff]
  %v174 = vld [vmem:[%s0 + $0x500] sm:$0xff]
  %v175 = vld [vmem:[%s0 + $0x508] sm:$0xff]
  %v176 = vld [vmem:[%s0 + $0x510] sm:$0xff]
  %v177 = vld [vmem:[%s0 + $0x518] sm:$0xff]
  %v178 = vld [vmem:[%s0 + $0x520] sm:$0xff]
  %v179 = vld [vmem:[%s0 + $0x528] sm:$0xff]
  %v180 = vld [vmem:[%s0 + $0x530] sm:$0xff]
  %v181 = vld [vmem:[%s0 + $0x538] sm:$0xff]
  %v182 = vld [vmem:[%s0 + $0x540] sm:$0xff]
  %v183 = vld [vmem:[%s0 + $0x548] sm:$0xff]
  %v184 = vld [vmem:[%s0 + $0x550] sm:$0xff]
  %v185 = vld [vmem:[%s0 + $0x558] sm:$0xff]
  %v186 = vld [vmem:[%s0 + $0x560] sm:$0xff]
  %v187 = vld [vmem:[%s0 + $0x568] sm:$0xff]
  %v188 = vld [vmem:[%s0 + $0x570] sm:$0xff]
  %v189 = vld [vmem:[%s0 + $0x578] sm:$0xff]
  %v190 = vld [vmem:[%s0 + $0x580] sm:$0xff]
  %v191 = vld [vmem:[%s0 + $0x588] sm:$0xff]
  %v192 = vld [vmem:[%s0 + $0x590] sm:$0xff]
  %v193 = vld [vmem:[%s0 + $0x598] sm:$0xff]
  %v194 = vld [vmem:[%s0 + $0x5a0] sm:$0xff]
  %v195 = vld [vmem:[%s0 + $0x5a8] sm:$0xff]
  %v196 = vld [vmem:[%s0 + $0x5b0] sm:$0xff]
  %v197 = vld [vmem:[%s0 + $0x5b8] sm:$0xff]
  %v198 = vld [vmem:[%s0 + $0x5c0] sm:$0xff]
  %v199 = vld [vmem:[%s0 + $0x5c8] sm:$0xff]
  %v200 = vld [vmem:[%s0 + $0x5d0] sm:$0xff]
  %v201 = vld [vmem:[%s0 + $0x5d8] sm:$0xff]
  %v202 = vld [vmem:[%s0 + $0x5e0] sm:$0xff]
  %v203 = vld [vmem:[%s0 + $0x5e8] sm:$0xff]
  %v204 = vld [vmem:[%s0 + $0x5f0] sm:$0xff]
  %v205 = vld [vmem:[%s0 + $0x5f8] sm:$0xff]
  %v206 = vld [vmem:[%s0 + $0x600] sm:$0xff]
  %v207 = vld [vmem:[%s0 + $0x608] sm:$0xff]
  %v208 = vld [vmem:[%s0 + $0x610] sm:$0xff]
  %v209 = vld [vmem:[%s0 + $0x618] sm:$0xff]
  %v210 = vld [vmem:[%s0 + $0x620] sm:$0xff]
  %v211 = vld [vmem:[%s0 + $0x628] sm:$0xff]
  %v212 = vld [vmem:[%s0 + $0x630] sm:$0xff]
  %v213 = vld [vmem:[%s0 + $0x638] sm:$0xff]
  %v214 = vld [vmem:[%s0 + $0x640] sm:$0xff]
  %v215 = vld [vmem:[%s0 + $0x648] sm:$0xff]
  %v216 = vld [vmem:[%s0 + $0x650] sm:$0xff]
  %v217 = vld [vmem:[%s0 + $0x658] sm:$0xff]
  %v218 = vld [vmem:[%s0 + $0x660] sm:$0xff]
  %v219 = vld [vmem:[%s0 + $0x668] sm:$0xff]
  %v220 = vld [vmem:[%s0 + $0x670] sm:$0xff]
  %v221 = vld [vmem:[%s0 + $0x678] sm:$0xff]
  %v222 = vld [vmem:[%s0 + $0x680] sm:$0xff]
  %v223 = vld [vmem:[%s0 + $0x688] sm:$0xff]
  %v224 = vld [vmem:[%s0 + $0x690] sm:$0xff]
  %v225 = vld [vmem:[%s0 + $0x698] sm:$0xff]
  %v226 = vld [vmem:[%s0 + $0x6a0] sm:$0xff]
  %v227 = vld [vmem:[%s0 + $0x6a8] sm:$0xff]
  %v228 = vld [vmem:[%s0 + $0x6b0] sm:$0xff]
  %v229 = vld [vmem:[%s0 + $0x6b8] sm:$0xff]
  %v230 = vld [vmem:[%s0 + $0x6c0] sm:$0xff]
  %v231 = vld [vmem:[%s0 + $0x6c8] sm:$0xff]
  %v232 = vld [vmem:[%s0 + $0x6d0] sm:$0xff]
  %v233 = vld [vmem:[%s0 + $0x6d8] sm:$0xff]
  %v234 = vld [vmem:[%s0 + $0x6e0] sm:$0xff]
  %v235 = vld [vmem:[%s0 + $0x6e8] sm:$0xff]
  %v236 = vld [vmem:[%s0 + $0x6f0] sm:$0xff]
  %v237 = vld [vmem:[%s0 + $0x6f8] sm:$0xff]
  %v238 = vld [vmem:[%s0 + $0x700] sm:$0xff]
  %v239 = vld [vmem:[%s0 + $0x708] sm:$0xff]
  %v240 = vld [vmem:[%s0 + $0x710] sm:$0xff]
  %v241 = vld [vmem:[%s0 + $0x718] sm:$0xff]
  %v242 = vld [vmem:[%s0 + $0x720] sm:$0xff]
  %v243 = vld [vmem:[%s0 + $0x728] sm:$0xff]
  %v244 = vld [vmem:[%s0 + $0x730] sm:$0xff]
  %v245 = vld [vmem:[%s0 + $0x738] sm:$0xff]
  %v246 = vld [vmem:[%s0 + $0x740] sm:$0xff]
  %v247 = vld [vmem:[%s0 + $0x748] sm:$0xff]
  %v248 = vld [vmem:[%s0 + $0x750] sm:$0xff]
  %v249 = vld [vmem:[%s0 + $0x758] sm:$0xff]
  %v250 = vld [vmem:[%s0 + $0x760] sm:$0xff]
  %v251 = vld [vmem:[%s0 + $0x768] sm:$0xff]
  %v252 = vld [vmem:[%s0 + $0x770] sm:$0xff]
  %v253 = vld [vmem:[%s0 + $0x778] sm:$0xff]
  %v254 = vld [vmem:[%s0 + $0x780] sm:$0xff]
  %v255 = vld [vmem:[%s0 + $0x788] sm:$0xff]
  %v256 = vld [vmem:[%s0 + $0x790] sm:$0xff]
  %v257 = vld [vmem:[%s0 + $0x798] sm:$0xff]
  %v258 = vld [vmem:[%s0 + $0x7a0] sm:$0xff]
  %v259 = vld [vmem:[%s0 + $0x7a8] sm:$0xff]
  %v260 = vld [vmem:[%s0 + $0x7b0] sm:$0xff]
  %v261 = vld [vmem:[%s0 + $0x7b8] sm:$0xff]
  %v262 = vld [vmem:[%s0 + $0x7c0] sm:$0xff]
  %v263 = vld [vmem:[%s0 + $0x7c8] sm:$0xff]
  %v264 = vld [vmem:[%s0 + $0x7d0] sm:$0xff]
  %v265 = vld [vmem:[%s0 + $0x7d8] sm:$0xff]
  %v266 = vld [vmem:[%s0 + $0x7e0] sm:$0xff]
  %v267 = vld [vmem:[%s0 + $0x7e8] sm:$0xff]
  %v268 = vld [vmem:[%s0 + $0x7f0] sm:$0xff]
  %v269 = vld [vmem:[%s0 + $0x7f8] sm:$0xff]
  %v270 = vld [vmem:[%s1] sm:$0xff]
  %v271 = vld [vmem:[%s1 + $0x8] sm:$0xff]
  %v272 = vld [vmem:[%s2] sm:$0x1]
  %v274 = vperm.slane %v272, 0
  %vm276 = vcmask 130048
  %v278 = vsel %vm276, %v14, 0
  %v281 = vsel %vm276, %v15, 0
  %v284 = vsel %vm276, %v16, 0
  %v287 = vsel %vm276, %v17, 0
  %v290 = vsel %vm276, %v18, 0
  %v293 = vsel %vm276, %v19, 0
  %v296 = vsel %vm276, %v20, 0
  %v299 = vsel %vm276, %v21, 0
  %v302 = vsel %vm276, %v22, 0
  %v305 = vsel %vm276, %v23, 0
  %v308 = vsel %vm276, %v24, 0
  %v311 = vsel %vm276, %v25, 0
  %v314 = vsel %vm276, %v26, 0
  %v317 = vsel %vm276, %v27, 0
  %v320 = vsel %vm276, %v28, 0
  %v323 = vsel %vm276, %v29, 0
  %v326 = vsel %vm276, %v30, 0
  %v329 = vsel %vm276, %v31, 0
  %v332 = vsel %vm276, %v32, 0
  %v335 = vsel %vm276, %v33, 0
  %v338 = vsel %vm276, %v34, 0
  %v341 = vsel %vm276, %v35, 0
  %v344 = vsel %vm276, %v36, 0
  %v347 = vsel %vm276, %v37, 0
  %v350 = vsel %vm276, %v38, 0
  %v353 = vsel %vm276, %v39, 0
  %v356 = vsel %vm276, %v40, 0
  %v359 = vsel %vm276, %v41, 0
  %v362 = vsel %vm276, %v42, 0
  %v365 = vsel %vm276, %v43, 0
  %v368 = vsel %vm276, %v44, 0
  %v371 = vsel %vm276, %v45, 0
  %v374 = vsel %vm276, %v46, 0
  %v377 = vsel %vm276, %v47, 0
  %v380 = vsel %vm276, %v48, 0
  %v383 = vsel %vm276, %v49, 0
  %v386 = vsel %vm276, %v50, 0
  %v389 = vsel %vm276, %v51, 0
  %v392 = vsel %vm276, %v52, 0
  %v395 = vsel %vm276, %v53, 0
  %v398 = vsel %vm276, %v54, 0
  %v401 = vsel %vm276, %v55, 0
  %v404 = vsel %vm276, %v56, 0
  %v407 = vsel %vm276, %v57, 0
  %v410 = vsel %vm276, %v58, 0
  %v413 = vsel %vm276, %v59, 0
  %v416 = vsel %vm276, %v60, 0
  %v419 = vsel %vm276, %v61, 0
  %v422 = vsel %vm276, %v62, 0
  %v425 = vsel %vm276, %v63, 0
  %v428 = vsel %vm276, %v64, 0
  %v431 = vsel %vm276, %v65, 0
  %v434 = vsel %vm276, %v66, 0
  %v437 = vsel %vm276, %v67, 0
  %v440 = vsel %vm276, %v68, 0
  %v443 = vsel %vm276, %v69, 0
  %v446 = vsel %vm276, %v70, 0
  %v449 = vsel %vm276, %v71, 0
  %v452 = vsel %vm276, %v72, 0
  %v455 = vsel %vm276, %v73, 0
  %v458 = vsel %vm276, %v74, 0
  %v461 = vsel %vm276, %v75, 0
  %v464 = vsel %vm276, %v76, 0
  %v467 = vsel %vm276, %v77, 0
  %v470 = vsel %vm276, %v78, 0
  %v473 = vsel %vm276, %v79, 0
  %v476 = vsel %vm276, %v80, 0
  %v479 = vsel %vm276, %v81, 0
  %v482 = vsel %vm276, %v82, 0
  %v485 = vsel %vm276, %v83, 0
  %v488 = vsel %vm276, %v84, 0
  %v491 = vsel %vm276, %v85, 0
  %v494 = vsel %vm276, %v86, 0
  %v497 = vsel %vm276, %v87, 0
  %v500 = vsel %vm276, %v88, 0
  %v503 = vsel %vm276, %v89, 0
  %v506 = vsel %vm276, %v90, 0
  %v509 = vsel %vm276, %v91, 0
  %v512 = vsel %vm276, %v92, 0
  %v515 = vsel %vm276, %v93, 0
  %v518 = vsel %vm276, %v94, 0
  %v521 = vsel %vm276, %v95, 0
  %v524 = vsel %vm276, %v96, 0
  %v527 = vsel %vm276, %v97, 0
  %v530 = vsel %vm276, %v98, 0
  %v533 = vsel %vm276, %v99, 0
  %v536 = vsel %vm276, %v100, 0
  %v539 = vsel %vm276, %v101, 0
  %v542 = vsel %vm276, %v102, 0
  %v545 = vsel %vm276, %v103, 0
  %v548 = vsel %vm276, %v104, 0
  %v551 = vsel %vm276, %v105, 0
  %v554 = vsel %vm276, %v106, 0
  %v557 = vsel %vm276, %v107, 0
  %v560 = vsel %vm276, %v108, 0
  %v563 = vsel %vm276, %v109, 0
  %v566 = vsel %vm276, %v110, 0
  %v569 = vsel %vm276, %v111, 0
  %v572 = vsel %vm276, %v112, 0
  %v575 = vsel %vm276, %v113, 0
  %v578 = vsel %vm276, %v114, 0
  %v581 = vsel %vm276, %v115, 0
  %v584 = vsel %vm276, %v116, 0
  %v587 = vsel %vm276, %v117, 0
  %v590 = vsel %vm276, %v118, 0
  %v593 = vsel %vm276, %v119, 0
  %v596 = vsel %vm276, %v120, 0
  %v599 = vsel %vm276, %v121, 0
  %v602 = vsel %vm276, %v122, 0
  %v605 = vsel %vm276, %v123, 0
  %v608 = vsel %vm276, %v124, 0
  %v611 = vsel %vm276, %v125, 0
  %v614 = vsel %vm276, %v126, 0
  %v617 = vsel %vm276, %v127, 0
  %v620 = vsel %vm276, %v128, 0
  %v623 = vsel %vm276, %v129, 0
  %v626 = vsel %vm276, %v130, 0
  %v629 = vsel %vm276, %v131, 0
  %v632 = vsel %vm276, %v132, 0
  %v635 = vsel %vm276, %v133, 0
  %v638 = vsel %vm276, %v134, 0
  %v641 = vsel %vm276, %v135, 0
  %v644 = vsel %vm276, %v136, 0
  %v647 = vsel %vm276, %v137, 0
  %v650 = vsel %vm276, %v138, 0
  %v653 = vsel %vm276, %v139, 0
  %v656 = vsel %vm276, %v140, 0
  %v659 = vsel %vm276, %v141, 0
  %v662 = vsel %vm276, %v142, 0
  %v665 = vsel %vm276, %v143, 0
  %v668 = vsel %vm276, %v144, 0
  %v671 = vsel %vm276, %v145, 0
  %v674 = vsel %vm276, %v146, 0
  %v677 = vsel %vm276, %v147, 0
  %v680 = vsel %vm276, %v148, 0
  %v683 = vsel %vm276, %v149, 0
  %v686 = vsel %vm276, %v150, 0
  %v689 = vsel %vm276, %v151, 0
  %v692 = vsel %vm276, %v152, 0
  %v695 = vsel %vm276, %v153, 0
  %v698 = vsel %vm276, %v154, 0
  %v701 = vsel %vm276, %v155, 0
  %v704 = vsel %vm276, %v156, 0
  %v707 = vsel %vm276, %v157, 0
  %v710 = vsel %vm276, %v158, 0
  %v713 = vsel %vm276, %v159, 0
  %v716 = vsel %vm276, %v160, 0
  %v719 = vsel %vm276, %v161, 0
  %v722 = vsel %vm276, %v162, 0
  %v725 = vsel %vm276, %v163, 0
  %v728 = vsel %vm276, %v164, 0
  %v731 = vsel %vm276, %v165, 0
  %v734 = vsel %vm276, %v166, 0
  %v737 = vsel %vm276, %v167, 0
  %v740 = vsel %vm276, %v168, 0
  %v743 = vsel %vm276, %v169, 0
  %v746 = vsel %vm276, %v170, 0
  %v749 = vsel %vm276, %v171, 0
  %v752 = vsel %vm276, %v172, 0
  %v755 = vsel %vm276, %v173, 0
  %v758 = vsel %vm276, %v174, 0
  %v761 = vsel %vm276, %v175, 0
  %v764 = vsel %vm276, %v176, 0
  %v767 = vsel %vm276, %v177, 0
  %v770 = vsel %vm276, %v178, 0
  %v773 = vsel %vm276, %v179, 0
  %v776 = vsel %vm276, %v180, 0
  %v779 = vsel %vm276, %v181, 0
  %v782 = vsel %vm276, %v182, 0
  %v785 = vsel %vm276, %v183, 0
  %v788 = vsel %vm276, %v184, 0
  %v791 = vsel %vm276, %v185, 0
  %v794 = vsel %vm276, %v186, 0
  %v797 = vsel %vm276, %v187, 0
  %v800 = vsel %vm276, %v188, 0
  %v803 = vsel %vm276, %v189, 0
  %v806 = vsel %vm276, %v190, 0
  %v809 = vsel %vm276, %v191, 0
  %v812 = vsel %vm276, %v192, 0
  %v815 = vsel %vm276, %v193, 0
  %v818 = vsel %vm276, %v194, 0
  %v821 = vsel %vm276, %v195, 0
  %v824 = vsel %vm276, %v196, 0
  %v827 = vsel %vm276, %v197, 0
  %v830 = vsel %vm276, %v198, 0
  %v833 = vsel %vm276, %v199, 0
  %v836 = vsel %vm276, %v200, 0
  %v839 = vsel %vm276, %v201, 0
  %v842 = vsel %vm276, %v202, 0
  %v845 = vsel %vm276, %v203, 0
  %v848 = vsel %vm276, %v204, 0
  %v851 = vsel %vm276, %v205, 0
  %v854 = vsel %vm276, %v206, 0
  %v857 = vsel %vm276, %v207, 0
  %v860 = vsel %vm276, %v208, 0
  %v863 = vsel %vm276, %v209, 0
  %v866 = vsel %vm276, %v210, 0
  %v869 = vsel %vm276, %v211, 0
  %v872 = vsel %vm276, %v212, 0
  %v875 = vsel %vm276, %v213, 0
  %v878 = vsel %vm276, %v214, 0
  %v881 = vsel %vm276, %v215, 0
  %v884 = vsel %vm276, %v216, 0
  %v887 = vsel %vm276, %v217, 0
  %v890 = vsel %vm276, %v218, 0
  %v893 = vsel %vm276, %v219, 0
  %v896 = vsel %vm276, %v220, 0
  %v899 = vsel %vm276, %v221, 0
  %v902 = vsel %vm276, %v222, 0
  %v905 = vsel %vm276, %v223, 0
  %v908 = vsel %vm276, %v224, 0
  %v911 = vsel %vm276, %v225, 0
  %v914 = vsel %vm276, %v226, 0
  %v917 = vsel %vm276, %v227, 0
  %v920 = vsel %vm276, %v228, 0
  %v923 = vsel %vm276, %v229, 0
  %v926 = vsel %vm276, %v230, 0
  %v929 = vsel %vm276, %v231, 0
  %v932 = vsel %vm276, %v232, 0
  %v935 = vsel %vm276, %v233, 0
  %v938 = vsel %vm276, %v234, 0
  %v941 = vsel %vm276, %v235, 0
  %v944 = vsel %vm276, %v236, 0
  %v947 = vsel %vm276, %v237, 0
  %v950 = vsel %vm276, %v238, 0
  %v953 = vsel %vm276, %v239, 0
  %v956 = vsel %vm276, %v240, 0
  %v959 = vsel %vm276, %v241, 0
  %v962 = vsel %vm276, %v242, 0
  %v965 = vsel %vm276, %v243, 0
  %v968 = vsel %vm276, %v244, 0
  %v971 = vsel %vm276, %v245, 0
  %v974 = vsel %vm276, %v246, 0
  %v977 = vsel %vm276, %v247, 0
  %v980 = vsel %vm276, %v248, 0
  %v983 = vsel %vm276, %v249, 0
  %v986 = vsel %vm276, %v250, 0
  %v989 = vsel %vm276, %v251, 0
  %v992 = vsel %vm276, %v252, 0
  %v995 = vsel %vm276, %v253, 0
  %v998 = vsel %vm276, %v254, 0
  %v1001 = vsel %vm276, %v255, 0
  %v1004 = vsel %vm276, %v256, 0
  %v1007 = vsel %vm276, %v257, 0
  %v1010 = vsel %vm276, %v258, 0
  %v1013 = vsel %vm276, %v259, 0
  %v1016 = vsel %vm276, %v260, 0
  %v1019 = vsel %vm276, %v261, 0
  %v1022 = vsel %vm276, %v262, 0
  %v1025 = vsel %vm276, %v263, 0
  %v1028 = vsel %vm276, %v264, 0
  %v1031 = vsel %vm276, %v265, 0
  %v1034 = vsel %vm276, %v266, 0
  %v1037 = vsel %vm276, %v267, 0
  %v1040 = vsel %vm276, %v268, 0
  %v1043 = vsel %vm276, %v269, 0
  %1045 = vmatpush.msra.mxu0 0.0
  %1046 = vmatpush.msra.mxu0 0.0
  %1047 = vmatpush.msra.mxu0 0.0
  %1048 = vmatpush.msra.mxu0 0.0
  %1049 = vmatpush.msra.mxu0 0.0
  %1050 = vmatpush.msra.mxu0 0.0
  %1051 = vmatpush.msra.mxu0 0.0
  %1052 = vmatpush.msra.mxu0 0.0
  %1053 = vmatpush.msra.mxu0 0.0
  %1054 = vmatpush.msra.mxu0 0.0
  %1055 = vmatpush.msra.mxu0 0.0
  %1056 = vmatpush.msra.mxu0 0.0
  %1057 = vmatpush.msra.mxu0 0.0
  %1058 = vmatpush.msra.mxu0 0.0
  %1059 = vmatpush.msra.mxu0 %v271
  %1060 = vmatpush.msra.mxu0 %v270
  %1061 = vmatmul.f32.gmra.mxu0 %v278
  %v1062 = vpop.f32.mrf.mxu0
  %v1063 = vadd.f32 %v274, %v1062
  %1064 = vmatmul.f32.gmra.mxu0 %v281
  %v1065 = vpop.f32.mrf.mxu0
  %v1066 = vadd.f32 %v274, %v1065
  %1067 = vmatmul.f32.gmra.mxu0 %v284
  %v1068 = vpop.f32.mrf.mxu0
  %v1069 = vadd.f32 %v274, %v1068
  %1070 = vmatmul.f32.gmra.mxu0 %v287
  %v1071 = vpop.f32.mrf.mxu0
  %v1072 = vadd.f32 %v274, %v1071
  %1073 = vmatmul.f32.gmra.mxu0 %v290
  %v1074 = vpop.f32.mrf.mxu0
  %v1075 = vadd.f32 %v274, %v1074
  %1076 = vmatmul.f32.gmra.mxu0 %v293
  %v1077 = vpop.f32.mrf.mxu0
  %v1078 = vadd.f32 %v274, %v1077
  %1079 = vmatmul.f32.gmra.mxu0 %v296
  %v1080 = vpop.f32.mrf.mxu0
  %v1081 = vadd.f32 %v274, %v1080
  %1082 = vmatmul.f32.gmra.mxu0 %v299
  %v1083 = vpop.f32.mrf.mxu0
  %v1084 = vadd.f32 %v274, %v1083
  %1085 = vmatmul.f32.gmra.mxu0 %v302
  %v1086 = vpop.f32.mrf.mxu0
  %v1087 = vadd.f32 %v274, %v1086
  %1088 = vmatmul.f32.gmra.mxu0 %v305
  %v1089 = vpop.f32.mrf.mxu0
  %v1090 = vadd.f32 %v274, %v1089
  %1091 = vmatmul.f32.gmra.mxu0 %v308
  %v1092 = vpop.f32.mrf.mxu0
  %v1093 = vadd.f32 %v274, %v1092
  %1094 = vmatmul.f32.gmra.mxu0 %v311
  %v1095 = vpop.f32.mrf.mxu0
  %v1096 = vadd.f32 %v274, %v1095
  %1097 = vmatmul.f32.gmra.mxu0 %v314
  %v1098 = vpop.f32.mrf.mxu0
  %v1099 = vadd.f32 %v274, %v1098
  %1100 = vmatmul.f32.gmra.mxu0 %v317
  %v1101 = vpop.f32.mrf.mxu0
  %v1102 = vadd.f32 %v274, %v1101
  %1103 = vmatmul.f32.gmra.mxu0 %v320
  %v1104 = vpop.f32.mrf.mxu0
  %v1105 = vadd.f32 %v274, %v1104
  %1106 = vmatmul.f32.gmra.mxu0 %v323
  %v1107 = vpop.f32.mrf.mxu0
  %v1108 = vadd.f32 %v274, %v1107
  %1109 = vmatmul.f32.gmra.mxu0 %v326
  %v1110 = vpop.f32.mrf.mxu0
  %v1111 = vadd.f32 %v274, %v1110
  %1112 = vmatmul.f32.gmra.mxu0 %v329
  %v1113 = vpop.f32.mrf.mxu0
  %v1114 = vadd.f32 %v274, %v1113
  %1115 = vmatmul.f32.gmra.mxu0 %v332
  %v1116 = vpop.f32.mrf.mxu0
  %v1117 = vadd.f32 %v274, %v1116
  %1118 = vmatmul.f32.gmra.mxu0 %v335
  %v1119 = vpop.f32.mrf.mxu0
  %v1120 = vadd.f32 %v274, %v1119
  %1121 = vmatmul.f32.gmra.mxu0 %v338
  %v1122 = vpop.f32.mrf.mxu0
  %v1123 = vadd.f32 %v274, %v1122
  %1124 = vmatmul.f32.gmra.mxu0 %v341
  %v1125 = vpop.f32.mrf.mxu0
  %v1126 = vadd.f32 %v274, %v1125
  %1127 = vmatmul.f32.gmra.mxu0 %v344
  %v1128 = vpop.f32.mrf.mxu0
  %v1129 = vadd.f32 %v274, %v1128
  %1130 = vmatmul.f32.gmra.mxu0 %v347
  %v1131 = vpop.f32.mrf.mxu0
  %v1132 = vadd.f32 %v274, %v1131
  %1133 = vmatmul.f32.gmra.mxu0 %v350
  %v1134 = vpop.f32.mrf.mxu0
  %v1135 = vadd.f32 %v274, %v1134
  %1136 = vmatmul.f32.gmra.mxu0 %v353
  %v1137 = vpop.f32.mrf.mxu0
  %v1138 = vadd.f32 %v274, %v1137
  %1139 = vmatmul.f32.gmra.mxu0 %v356
  %v1140 = vpop.f32.mrf.mxu0
  %v1141 = vadd.f32 %v274, %v1140
  %1142 = vmatmul.f32.gmra.mxu0 %v359
  %v1143 = vpop.f32.mrf.mxu0
  %v1144 = vadd.f32 %v274, %v1143
  %1145 = vmatmul.f32.gmra.mxu0 %v362
  %v1146 = vpop.f32.mrf.mxu0
  %v1147 = vadd.f32 %v274, %v1146
  %1148 = vmatmul.f32.gmra.mxu0 %v365
  %v1149 = vpop.f32.mrf.mxu0
  %v1150 = vadd.f32 %v274, %v1149
  %1151 = vmatmul.f32.gmra.mxu0 %v368
  %v1152 = vpop.f32.mrf.mxu0
  %v1153 = vadd.f32 %v274, %v1152
  %1154 = vmatmul.f32.gmra.mxu0 %v371
  %v1155 = vpop.f32.mrf.mxu0
  %v1156 = vadd.f32 %v274, %v1155
  %1157 = vmatmul.f32.gmra.mxu0 %v374
  %v1158 = vpop.f32.mrf.mxu0
  %v1159 = vadd.f32 %v274, %v1158
  %1160 = vmatmul.f32.gmra.mxu0 %v377
  %v1161 = vpop.f32.mrf.mxu0
  %v1162 = vadd.f32 %v274, %v1161
  %1163 = vmatmul.f32.gmra.mxu0 %v380
  %v1164 = vpop.f32.mrf.mxu0
  %v1165 = vadd.f32 %v274, %v1164
  %1166 = vmatmul.f32.gmra.mxu0 %v383
  %v1167 = vpop.f32.mrf.mxu0
  %v1168 = vadd.f32 %v274, %v1167
  %1169 = vmatmul.f32.gmra.mxu0 %v386
  %v1170 = vpop.f32.mrf.mxu0
  %v1171 = vadd.f32 %v274, %v1170
  %1172 = vmatmul.f32.gmra.mxu0 %v389
  %v1173 = vpop.f32.mrf.mxu0
  %v1174 = vadd.f32 %v274, %v1173
  %1175 = vmatmul.f32.gmra.mxu0 %v392
  %v1176 = vpop.f32.mrf.mxu0
  %v1177 = vadd.f32 %v274, %v1176
  %1178 = vmatmul.f32.gmra.mxu0 %v395
  %v1179 = vpop.f32.mrf.mxu0
  %v1180 = vadd.f32 %v274, %v1179
  %1181 = vmatmul.f32.gmra.mxu0 %v398
  %v1182 = vpop.f32.mrf.mxu0
  %v1183 = vadd.f32 %v274, %v1182
  %1184 = vmatmul.f32.gmra.mxu0 %v401
  %v1185 = vpop.f32.mrf.mxu0
  %v1186 = vadd.f32 %v274, %v1185
  %1187 = vmatmul.f32.gmra.mxu0 %v404
  %v1188 = vpop.f32.mrf.mxu0
  %v1189 = vadd.f32 %v274, %v1188
  %1190 = vmatmul.f32.gmra.mxu0 %v407
  %v1191 = vpop.f32.mrf.mxu0
  %v1192 = vadd.f32 %v274, %v1191
  %1193 = vmatmul.f32.gmra.mxu0 %v410
  %v1194 = vpop.f32.mrf.mxu0
  %v1195 = vadd.f32 %v274, %v1194
  %1196 = vmatmul.f32.gmra.mxu0 %v413
  %v1197 = vpop.f32.mrf.mxu0
  %v1198 = vadd.f32 %v274, %v1197
  %1199 = vmatmul.f32.gmra.mxu0 %v416
  %v1200 = vpop.f32.mrf.mxu0
  %v1201 = vadd.f32 %v274, %v1200
  %1202 = vmatmul.f32.gmra.mxu0 %v419
  %v1203 = vpop.f32.mrf.mxu0
  %v1204 = vadd.f32 %v274, %v1203
  %1205 = vmatmul.f32.gmra.mxu0 %v422
  %v1206 = vpop.f32.mrf.mxu0
  %v1207 = vadd.f32 %v274, %v1206
  %1208 = vmatmul.f32.gmra.mxu0 %v425
  %v1209 = vpop.f32.mrf.mxu0
  %v1210 = vadd.f32 %v274, %v1209
  %1211 = vmatmul.f32.gmra.mxu0 %v428
  %v1212 = vpop.f32.mrf.mxu0
  %v1213 = vadd.f32 %v274, %v1212
  %1214 = vmatmul.f32.gmra.mxu0 %v431
  %v1215 = vpop.f32.mrf.mxu0
  %v1216 = vadd.f32 %v274, %v1215
  %1217 = vmatmul.f32.gmra.mxu0 %v434
  %v1218 = vpop.f32.mrf.mxu0
  %v1219 = vadd.f32 %v274, %v1218
  %1220 = vmatmul.f32.gmra.mxu0 %v437
  %v1221 = vpop.f32.mrf.mxu0
  %v1222 = vadd.f32 %v274, %v1221
  %1223 = vmatmul.f32.gmra.mxu0 %v440
  %v1224 = vpop.f32.mrf.mxu0
  %v1225 = vadd.f32 %v274, %v1224
  %1226 = vmatmul.f32.gmra.mxu0 %v443
  %v1227 = vpop.f32.mrf.mxu0
  %v1228 = vadd.f32 %v274, %v1227
  %1229 = vmatmul.f32.gmra.mxu0 %v446
  %v1230 = vpop.f32.mrf.mxu0
  %v1231 = vadd.f32 %v274, %v1230
  %1232 = vmatmul.f32.gmra.mxu0 %v449
  %v1233 = vpop.f32.mrf.mxu0
  %v1234 = vadd.f32 %v274, %v1233
  %1235 = vmatmul.f32.gmra.mxu0 %v452
  %v1236 = vpop.f32.mrf.mxu0
  %v1237 = vadd.f32 %v274, %v1236
  %1238 = vmatmul.f32.gmra.mxu0 %v455
  %v1239 = vpop.f32.mrf.mxu0
  %v1240 = vadd.f32 %v274, %v1239
  %1241 = vmatmul.f32.gmra.mxu0 %v458
  %v1242 = vpop.f32.mrf.mxu0
  %v1243 = vadd.f32 %v274, %v1242
  %1244 = vmatmul.f32.gmra.mxu0 %v461
  %v1245 = vpop.f32.mrf.mxu0
  %v1246 = vadd.f32 %v274, %v1245
  %1247 = vmatmul.f32.gmra.mxu0 %v464
  %v1248 = vpop.f32.mrf.mxu0
  %v1249 = vadd.f32 %v274, %v1248
  %1250 = vmatmul.f32.gmra.mxu0 %v467
  %v1251 = vpop.f32.mrf.mxu0
  %v1252 = vadd.f32 %v274, %v1251
  %1253 = vmatmul.f32.gmra.mxu0 %v470
  %v1254 = vpop.f32.mrf.mxu0
  %v1255 = vadd.f32 %v274, %v1254
  %1256 = vmatmul.f32.gmra.mxu0 %v473
  %v1257 = vpop.f32.mrf.mxu0
  %v1258 = vadd.f32 %v274, %v1257
  %1259 = vmatmul.f32.gmra.mxu0 %v476
  %v1260 = vpop.f32.mrf.mxu0
  %v1261 = vadd.f32 %v274, %v1260
  %1262 = vmatmul.f32.gmra.mxu0 %v479
  %v1263 = vpop.f32.mrf.mxu0
  %v1264 = vadd.f32 %v274, %v1263
  %1265 = vmatmul.f32.gmra.mxu0 %v482
  %v1266 = vpop.f32.mrf.mxu0
  %v1267 = vadd.f32 %v274, %v1266
  %1268 = vmatmul.f32.gmra.mxu0 %v485
  %v1269 = vpop.f32.mrf.mxu0
  %v1270 = vadd.f32 %v274, %v1269
  %1271 = vmatmul.f32.gmra.mxu0 %v488
  %v1272 = vpop.f32.mrf.mxu0
  %v1273 = vadd.f32 %v274, %v1272
  %1274 = vmatmul.f32.gmra.mxu0 %v491
  %v1275 = vpop.f32.mrf.mxu0
  %v1276 = vadd.f32 %v274, %v1275
  %1277 = vmatmul.f32.gmra.mxu0 %v494
  %v1278 = vpop.f32.mrf.mxu0
  %v1279 = vadd.f32 %v274, %v1278
  %1280 = vmatmul.f32.gmra.mxu0 %v497
  %v1281 = vpop.f32.mrf.mxu0
  %v1282 = vadd.f32 %v274, %v1281
  %1283 = vmatmul.f32.gmra.mxu0 %v500
  %v1284 = vpop.f32.mrf.mxu0
  %v1285 = vadd.f32 %v274, %v1284
  %1286 = vmatmul.f32.gmra.mxu0 %v503
  %v1287 = vpop.f32.mrf.mxu0
  %v1288 = vadd.f32 %v274, %v1287
  %1289 = vmatmul.f32.gmra.mxu0 %v506
  %v1290 = vpop.f32.mrf.mxu0
  %v1291 = vadd.f32 %v274, %v1290
  %1292 = vmatmul.f32.gmra.mxu0 %v509
  %v1293 = vpop.f32.mrf.mxu0
  %v1294 = vadd.f32 %v274, %v1293
  %1295 = vmatmul.f32.gmra.mxu0 %v512
  %v1296 = vpop.f32.mrf.mxu0
  %v1297 = vadd.f32 %v274, %v1296
  %1298 = vmatmul.f32.gmra.mxu0 %v515
  %v1299 = vpop.f32.mrf.mxu0
  %v1300 = vadd.f32 %v274, %v1299
  %1301 = vmatmul.f32.gmra.mxu0 %v518
  %v1302 = vpop.f32.mrf.mxu0
  %v1303 = vadd.f32 %v274, %v1302
  %1304 = vmatmul.f32.gmra.mxu0 %v521
  %v1305 = vpop.f32.mrf.mxu0
  %v1306 = vadd.f32 %v274, %v1305
  %1307 = vmatmul.f32.gmra.mxu0 %v524
  %v1308 = vpop.f32.mrf.mxu0
  %v1309 = vadd.f32 %v274, %v1308
  %1310 = vmatmul.f32.gmra.mxu0 %v527
  %v1311 = vpop.f32.mrf.mxu0
  %v1312 = vadd.f32 %v274, %v1311
  %1313 = vmatmul.f32.gmra.mxu0 %v530
  %v1314 = vpop.f32.mrf.mxu0
  %v1315 = vadd.f32 %v274, %v1314
  %1316 = vmatmul.f32.gmra.mxu0 %v533
  %v1317 = vpop.f32.mrf.mxu0
  %v1318 = vadd.f32 %v274, %v1317
  %1319 = vmatmul.f32.gmra.mxu0 %v536
  %v1320 = vpop.f32.mrf.mxu0
  %v1321 = vadd.f32 %v274, %v1320
  %1322 = vmatmul.f32.gmra.mxu0 %v539
  %v1323 = vpop.f32.mrf.mxu0
  %v1324 = vadd.f32 %v274, %v1323
  %1325 = vmatmul.f32.gmra.mxu0 %v542
  %v1326 = vpop.f32.mrf.mxu0
  %v1327 = vadd.f32 %v274, %v1326
  %1328 = vmatmul.f32.gmra.mxu0 %v545
  %v1329 = vpop.f32.mrf.mxu0
  %v1330 = vadd.f32 %v274, %v1329
  %1331 = vmatmul.f32.gmra.mxu0 %v548
  %v1332 = vpop.f32.mrf.mxu0
  %v1333 = vadd.f32 %v274, %v1332
  %1334 = vmatmul.f32.gmra.mxu0 %v551
  %v1335 = vpop.f32.mrf.mxu0
  %v1336 = vadd.f32 %v274, %v1335
  %1337 = vmatmul.f32.gmra.mxu0 %v554
  %v1338 = vpop.f32.mrf.mxu0
  %v1339 = vadd.f32 %v274, %v1338
  %1340 = vmatmul.f32.gmra.mxu0 %v557
  %v1341 = vpop.f32.mrf.mxu0
  %v1342 = vadd.f32 %v274, %v1341
  %1343 = vmatmul.f32.gmra.mxu0 %v560
  %v1344 = vpop.f32.mrf.mxu0
  %v1345 = vadd.f32 %v274, %v1344
  %1346 = vmatmul.f32.gmra.mxu0 %v563
  %v1347 = vpop.f32.mrf.mxu0
  %v1348 = vadd.f32 %v274, %v1347
  %1349 = vmatmul.f32.gmra.mxu0 %v566
  %v1350 = vpop.f32.mrf.mxu0
  %v1351 = vadd.f32 %v274, %v1350
  %1352 = vmatmul.f32.gmra.mxu0 %v569
  %v1353 = vpop.f32.mrf.mxu0
  %v1354 = vadd.f32 %v274, %v1353
  %1355 = vmatmul.f32.gmra.mxu0 %v572
  %v1356 = vpop.f32.mrf.mxu0
  %v1357 = vadd.f32 %v274, %v1356
  %1358 = vmatmul.f32.gmra.mxu0 %v575
  %v1359 = vpop.f32.mrf.mxu0
  %v1360 = vadd.f32 %v274, %v1359
  %1361 = vmatmul.f32.gmra.mxu0 %v578
  %v1362 = vpop.f32.mrf.mxu0
  %v1363 = vadd.f32 %v274, %v1362
  %1364 = vmatmul.f32.gmra.mxu0 %v581
  %v1365 = vpop.f32.mrf.mxu0
  %v1366 = vadd.f32 %v274, %v1365
  %1367 = vmatmul.f32.gmra.mxu0 %v584
  %v1368 = vpop.f32.mrf.mxu0
  %v1369 = vadd.f32 %v274, %v1368
  %1370 = vmatmul.f32.gmra.mxu0 %v587
  %v1371 = vpop.f32.mrf.mxu0
  %v1372 = vadd.f32 %v274, %v1371
  %1373 = vmatmul.f32.gmra.mxu0 %v590
  %v1374 = vpop.f32.mrf.mxu0
  %v1375 = vadd.f32 %v274, %v1374
  %1376 = vmatmul.f32.gmra.mxu0 %v593
  %v1377 = vpop.f32.mrf.mxu0
  %v1378 = vadd.f32 %v274, %v1377
  %1379 = vmatmul.f32.gmra.mxu0 %v596
  %v1380 = vpop.f32.mrf.mxu0
  %v1381 = vadd.f32 %v274, %v1380
  %1382 = vmatmul.f32.gmra.mxu0 %v599
  %v1383 = vpop.f32.mrf.mxu0
  %v1384 = vadd.f32 %v274, %v1383
  %1385 = vmatmul.f32.gmra.mxu0 %v602
  %v1386 = vpop.f32.mrf.mxu0
  %v1387 = vadd.f32 %v274, %v1386
  %1388 = vmatmul.f32.gmra.mxu0 %v605
  %v1389 = vpop.f32.mrf.mxu0
  %v1390 = vadd.f32 %v274, %v1389
  %1391 = vmatmul.f32.gmra.mxu0 %v608
  %v1392 = vpop.f32.mrf.mxu0
  %v1393 = vadd.f32 %v274, %v1392
  %1394 = vmatmul.f32.gmra.mxu0 %v611
  %v1395 = vpop.f32.mrf.mxu0
  %v1396 = vadd.f32 %v274, %v1395
  %1397 = vmatmul.f32.gmra.mxu0 %v614
  %v1398 = vpop.f32.mrf.mxu0
  %v1399 = vadd.f32 %v274, %v1398
  %1400 = vmatmul.f32.gmra.mxu0 %v617
  %v1401 = vpop.f32.mrf.mxu0
  %v1402 = vadd.f32 %v274, %v1401
  %1403 = vmatmul.f32.gmra.mxu0 %v620
  %v1404 = vpop.f32.mrf.mxu0
  %v1405 = vadd.f32 %v274, %v1404
  %1406 = vmatmul.f32.gmra.mxu0 %v623
  %v1407 = vpop.f32.mrf.mxu0
  %v1408 = vadd.f32 %v274, %v1407
  %1409 = vmatmul.f32.gmra.mxu0 %v626
  %v1410 = vpop.f32.mrf.mxu0
  %v1411 = vadd.f32 %v274, %v1410
  %1412 = vmatmul.f32.gmra.mxu0 %v629
  %v1413 = vpop.f32.mrf.mxu0
  %v1414 = vadd.f32 %v274, %v1413
  %1415 = vmatmul.f32.gmra.mxu0 %v632
  %v1416 = vpop.f32.mrf.mxu0
  %v1417 = vadd.f32 %v274, %v1416
  %1418 = vmatmul.f32.gmra.mxu0 %v635
  %v1419 = vpop.f32.mrf.mxu0
  %v1420 = vadd.f32 %v274, %v1419
  %1421 = vmatmul.f32.gmra.mxu0 %v638
  %v1422 = vpop.f32.mrf.mxu0
  %v1423 = vadd.f32 %v274, %v1422
  %1424 = vmatmul.f32.gmra.mxu0 %v641
  %v1425 = vpop.f32.mrf.mxu0
  %v1426 = vadd.f32 %v274, %v1425
  %1427 = vmatmul.f32.gmra.mxu0 %v644
  %v1428 = vpop.f32.mrf.mxu0
  %v1429 = vadd.f32 %v274, %v1428
  %1430 = vmatmul.f32.gmra.mxu0 %v647
  %v1431 = vpop.f32.mrf.mxu0
  %v1432 = vadd.f32 %v274, %v1431
  %1433 = vmatmul.f32.gmra.mxu0 %v650
  %v1434 = vpop.f32.mrf.mxu0
  %v1435 = vadd.f32 %v274, %v1434
  %1436 = vmatmul.f32.gmra.mxu0 %v653
  %v1437 = vpop.f32.mrf.mxu0
  %v1438 = vadd.f32 %v274, %v1437
  %1439 = vmatmul.f32.gmra.mxu0 %v656
  %v1440 = vpop.f32.mrf.mxu0
  %v1441 = vadd.f32 %v274, %v1440
  %1442 = vmatmul.f32.gmra.mxu0 %v659
  %v1443 = vpop.f32.mrf.mxu0
  %v1444 = vadd.f32 %v274, %v1443
  %1445 = vmatmul.f32.gmra.mxu0 %v662
  %v1446 = vpop.f32.mrf.mxu0
  %v1447 = vadd.f32 %v274, %v1446
  %1448 = vmatmul.f32.gmra.mxu0 %v665
  %v1449 = vpop.f32.mrf.mxu0
  %v1450 = vadd.f32 %v274, %v1449
  %1451 = vmatmul.f32.gmra.mxu0 %v668
  %v1452 = vpop.f32.mrf.mxu0
  %v1453 = vadd.f32 %v274, %v1452
  %1454 = vmatmul.f32.gmra.mxu0 %v671
  %v1455 = vpop.f32.mrf.mxu0
  %v1456 = vadd.f32 %v274, %v1455
  %1457 = vmatmul.f32.gmra.mxu0 %v674
  %v1458 = vpop.f32.mrf.mxu0
  %v1459 = vadd.f32 %v274, %v1458
  %1460 = vmatmul.f32.gmra.mxu0 %v677
  %v1461 = vpop.f32.mrf.mxu0
  %v1462 = vadd.f32 %v274, %v1461
  %1463 = vmatmul.f32.gmra.mxu0 %v680
  %v1464 = vpop.f32.mrf.mxu0
  %v1465 = vadd.f32 %v274, %v1464
  %1466 = vmatmul.f32.gmra.mxu0 %v683
  %v1467 = vpop.f32.mrf.mxu0
  %v1468 = vadd.f32 %v274, %v1467
  %1469 = vmatmul.f32.gmra.mxu0 %v686
  %v1470 = vpop.f32.mrf.mxu0
  %v1471 = vadd.f32 %v274, %v1470
  %1472 = vmatmul.f32.gmra.mxu0 %v689
  %v1473 = vpop.f32.mrf.mxu0
  %v1474 = vadd.f32 %v274, %v1473
  %1475 = vmatmul.f32.gmra.mxu0 %v692
  %v1476 = vpop.f32.mrf.mxu0
  %v1477 = vadd.f32 %v274, %v1476
  %1478 = vmatmul.f32.gmra.mxu0 %v695
  %v1479 = vpop.f32.mrf.mxu0
  %v1480 = vadd.f32 %v274, %v1479
  %1481 = vmatmul.f32.gmra.mxu0 %v698
  %v1482 = vpop.f32.mrf.mxu0
  %v1483 = vadd.f32 %v274, %v1482
  %1484 = vmatmul.f32.gmra.mxu0 %v701
  %v1485 = vpop.f32.mrf.mxu0
  %v1486 = vadd.f32 %v274, %v1485
  %1487 = vmatmul.f32.gmra.mxu0 %v704
  %v1488 = vpop.f32.mrf.mxu0
  %v1489 = vadd.f32 %v274, %v1488
  %1490 = vmatmul.f32.gmra.mxu0 %v707
  %v1491 = vpop.f32.mrf.mxu0
  %v1492 = vadd.f32 %v274, %v1491
  %1493 = vmatmul.f32.gmra.mxu0 %v710
  %v1494 = vpop.f32.mrf.mxu0
  %v1495 = vadd.f32 %v274, %v1494
  %1496 = vmatmul.f32.gmra.mxu0 %v713
  %v1497 = vpop.f32.mrf.mxu0
  %v1498 = vadd.f32 %v274, %v1497
  %1499 = vmatmul.f32.gmra.mxu0 %v716
  %v1500 = vpop.f32.mrf.mxu0
  %v1501 = vadd.f32 %v274, %v1500
  %1502 = vmatmul.f32.gmra.mxu0 %v719
  %v1503 = vpop.f32.mrf.mxu0
  %v1504 = vadd.f32 %v274, %v1503
  %1505 = vmatmul.f32.gmra.mxu0 %v722
  %v1506 = vpop.f32.mrf.mxu0
  %v1507 = vadd.f32 %v274, %v1506
  %1508 = vmatmul.f32.gmra.mxu0 %v725
  %v1509 = vpop.f32.mrf.mxu0
  %v1510 = vadd.f32 %v274, %v1509
  %1511 = vmatmul.f32.gmra.mxu0 %v728
  %v1512 = vpop.f32.mrf.mxu0
  %v1513 = vadd.f32 %v274, %v1512
  %1514 = vmatmul.f32.gmra.mxu0 %v731
  %v1515 = vpop.f32.mrf.mxu0
  %v1516 = vadd.f32 %v274, %v1515
  %1517 = vmatmul.f32.gmra.mxu0 %v734
  %v1518 = vpop.f32.mrf.mxu0
  %v1519 = vadd.f32 %v274, %v1518
  %1520 = vmatmul.f32.gmra.mxu0 %v737
  %v1521 = vpop.f32.mrf.mxu0
  %v1522 = vadd.f32 %v274, %v1521
  %1523 = vmatmul.f32.gmra.mxu0 %v740
  %v1524 = vpop.f32.mrf.mxu0
  %v1525 = vadd.f32 %v274, %v1524
  %1526 = vmatmul.f32.gmra.mxu0 %v743
  %v1527 = vpop.f32.mrf.mxu0
  %v1528 = vadd.f32 %v274, %v1527
  %1529 = vmatmul.f32.gmra.mxu0 %v746
  %v1530 = vpop.f32.mrf.mxu0
  %v1531 = vadd.f32 %v274, %v1530
  %1532 = vmatmul.f32.gmra.mxu0 %v749
  %v1533 = vpop.f32.mrf.mxu0
  %v1534 = vadd.f32 %v274, %v1533
  %1535 = vmatmul.f32.gmra.mxu0 %v752
  %v1536 = vpop.f32.mrf.mxu0
  %v1537 = vadd.f32 %v274, %v1536
  %1538 = vmatmul.f32.gmra.mxu0 %v755
  %v1539 = vpop.f32.mrf.mxu0
  %v1540 = vadd.f32 %v274, %v1539
  %1541 = vmatmul.f32.gmra.mxu0 %v758
  %v1542 = vpop.f32.mrf.mxu0
  %v1543 = vadd.f32 %v274, %v1542
  %1544 = vmatmul.f32.gmra.mxu0 %v761
  %v1545 = vpop.f32.mrf.mxu0
  %v1546 = vadd.f32 %v274, %v1545
  %1547 = vmatmul.f32.gmra.mxu0 %v764
  %v1548 = vpop.f32.mrf.mxu0
  %v1549 = vadd.f32 %v274, %v1548
  %1550 = vmatmul.f32.gmra.mxu0 %v767
  %v1551 = vpop.f32.mrf.mxu0
  %v1552 = vadd.f32 %v274, %v1551
  %1553 = vmatmul.f32.gmra.mxu0 %v770
  %v1554 = vpop.f32.mrf.mxu0
  %v1555 = vadd.f32 %v274, %v1554
  %1556 = vmatmul.f32.gmra.mxu0 %v773
  %v1557 = vpop.f32.mrf.mxu0
  %v1558 = vadd.f32 %v274, %v1557
  %1559 = vmatmul.f32.gmra.mxu0 %v776
  %v1560 = vpop.f32.mrf.mxu0
  %v1561 = vadd.f32 %v274, %v1560
  %1562 = vmatmul.f32.gmra.mxu0 %v779
  %v1563 = vpop.f32.mrf.mxu0
  %v1564 = vadd.f32 %v274, %v1563
  %1565 = vmatmul.f32.gmra.mxu0 %v782
  %v1566 = vpop.f32.mrf.mxu0
  %v1567 = vadd.f32 %v274, %v1566
  %1568 = vmatmul.f32.gmra.mxu0 %v785
  %v1569 = vpop.f32.mrf.mxu0
  %v1570 = vadd.f32 %v274, %v1569
  %1571 = vmatmul.f32.gmra.mxu0 %v788
  %v1572 = vpop.f32.mrf.mxu0
  %v1573 = vadd.f32 %v274, %v1572
  %1574 = vmatmul.f32.gmra.mxu0 %v791
  %v1575 = vpop.f32.mrf.mxu0
  %v1576 = vadd.f32 %v274, %v1575
  %1577 = vmatmul.f32.gmra.mxu0 %v794
  %v1578 = vpop.f32.mrf.mxu0
  %v1579 = vadd.f32 %v274, %v1578
  %1580 = vmatmul.f32.gmra.mxu0 %v797
  %v1581 = vpop.f32.mrf.mxu0
  %v1582 = vadd.f32 %v274, %v1581
  %1583 = vmatmul.f32.gmra.mxu0 %v800
  %v1584 = vpop.f32.mrf.mxu0
  %v1585 = vadd.f32 %v274, %v1584
  %1586 = vmatmul.f32.gmra.mxu0 %v803
  %v1587 = vpop.f32.mrf.mxu0
  %v1588 = vadd.f32 %v274, %v1587
  %1589 = vmatmul.f32.gmra.mxu0 %v806
  %v1590 = vpop.f32.mrf.mxu0
  %v1591 = vadd.f32 %v274, %v1590
  %1592 = vmatmul.f32.gmra.mxu0 %v809
  %v1593 = vpop.f32.mrf.mxu0
  %v1594 = vadd.f32 %v274, %v1593
  %1595 = vmatmul.f32.gmra.mxu0 %v812
  %v1596 = vpop.f32.mrf.mxu0
  %v1597 = vadd.f32 %v274, %v1596
  %1598 = vmatmul.f32.gmra.mxu0 %v815
  %v1599 = vpop.f32.mrf.mxu0
  %v1600 = vadd.f32 %v274, %v1599
  %1601 = vmatmul.f32.gmra.mxu0 %v818
  %v1602 = vpop.f32.mrf.mxu0
  %v1603 = vadd.f32 %v274, %v1602
  %1604 = vmatmul.f32.gmra.mxu0 %v821
  %v1605 = vpop.f32.mrf.mxu0
  %v1606 = vadd.f32 %v274, %v1605
  %1607 = vmatmul.f32.gmra.mxu0 %v824
  %v1608 = vpop.f32.mrf.mxu0
  %v1609 = vadd.f32 %v274, %v1608
  %1610 = vmatmul.f32.gmra.mxu0 %v827
  %v1611 = vpop.f32.mrf.mxu0
  %v1612 = vadd.f32 %v274, %v1611
  %1613 = vmatmul.f32.gmra.mxu0 %v830
  %v1614 = vpop.f32.mrf.mxu0
  %v1615 = vadd.f32 %v274, %v1614
  %1616 = vmatmul.f32.gmra.mxu0 %v833
  %v1617 = vpop.f32.mrf.mxu0
  %v1618 = vadd.f32 %v274, %v1617
  %1619 = vmatmul.f32.gmra.mxu0 %v836
  %v1620 = vpop.f32.mrf.mxu0
  %v1621 = vadd.f32 %v274, %v1620
  %1622 = vmatmul.f32.gmra.mxu0 %v839
  %v1623 = vpop.f32.mrf.mxu0
  %v1624 = vadd.f32 %v274, %v1623
  %1625 = vmatmul.f32.gmra.mxu0 %v842
  %v1626 = vpop.f32.mrf.mxu0
  %v1627 = vadd.f32 %v274, %v1626
  %1628 = vmatmul.f32.gmra.mxu0 %v845
  %v1629 = vpop.f32.mrf.mxu0
  %v1630 = vadd.f32 %v274, %v1629
  %1631 = vmatmul.f32.gmra.mxu0 %v848
  %v1632 = vpop.f32.mrf.mxu0
  %v1633 = vadd.f32 %v274, %v1632
  %1634 = vmatmul.f32.gmra.mxu0 %v851
  %v1635 = vpop.f32.mrf.mxu0
  %v1636 = vadd.f32 %v274, %v1635
  %1637 = vmatmul.f32.gmra.mxu0 %v854
  %v1638 = vpop.f32.mrf.mxu0
  %v1639 = vadd.f32 %v274, %v1638
  %1640 = vmatmul.f32.gmra.mxu0 %v857
  %v1641 = vpop.f32.mrf.mxu0
  %v1642 = vadd.f32 %v274, %v1641
  %1643 = vmatmul.f32.gmra.mxu0 %v860
  %v1644 = vpop.f32.mrf.mxu0
  %v1645 = vadd.f32 %v274, %v1644
  %1646 = vmatmul.f32.gmra.mxu0 %v863
  %v1647 = vpop.f32.mrf.mxu0
  %v1648 = vadd.f32 %v274, %v1647
  %1649 = vmatmul.f32.gmra.mxu0 %v866
  %v1650 = vpop.f32.mrf.mxu0
  %v1651 = vadd.f32 %v274, %v1650
  %1652 = vmatmul.f32.gmra.mxu0 %v869
  %v1653 = vpop.f32.mrf.mxu0
  %v1654 = vadd.f32 %v274, %v1653
  %1655 = vmatmul.f32.gmra.mxu0 %v872
  %v1656 = vpop.f32.mrf.mxu0
  %v1657 = vadd.f32 %v274, %v1656
  %1658 = vmatmul.f32.gmra.mxu0 %v875
  %v1659 = vpop.f32.mrf.mxu0
  %v1660 = vadd.f32 %v274, %v1659
  %1661 = vmatmul.f32.gmra.mxu0 %v878
  %v1662 = vpop.f32.mrf.mxu0
  %v1663 = vadd.f32 %v274, %v1662
  %1664 = vmatmul.f32.gmra.mxu0 %v881
  %v1665 = vpop.f32.mrf.mxu0
  %v1666 = vadd.f32 %v274, %v1665
  %1667 = vmatmul.f32.gmra.mxu0 %v884
  %v1668 = vpop.f32.mrf.mxu0
  %v1669 = vadd.f32 %v274, %v1668
  %1670 = vmatmul.f32.gmra.mxu0 %v887
  %v1671 = vpop.f32.mrf.mxu0
  %v1672 = vadd.f32 %v274, %v1671
  %1673 = vmatmul.f32.gmra.mxu0 %v890
  %v1674 = vpop.f32.mrf.mxu0
  %v1675 = vadd.f32 %v274, %v1674
  %1676 = vmatmul.f32.gmra.mxu0 %v893
  %v1677 = vpop.f32.mrf.mxu0
  %v1678 = vadd.f32 %v274, %v1677
  %1679 = vmatmul.f32.gmra.mxu0 %v896
  %v1680 = vpop.f32.mrf.mxu0
  %v1681 = vadd.f32 %v274, %v1680
  %1682 = vmatmul.f32.gmra.mxu0 %v899
  %v1683 = vpop.f32.mrf.mxu0
  %v1684 = vadd.f32 %v274, %v1683
  %1685 = vmatmul.f32.gmra.mxu0 %v902
  %v1686 = vpop.f32.mrf.mxu0
  %v1687 = vadd.f32 %v274, %v1686
  %1688 = vmatmul.f32.gmra.mxu0 %v905
  %v1689 = vpop.f32.mrf.mxu0
  %v1690 = vadd.f32 %v274, %v1689
  %1691 = vmatmul.f32.gmra.mxu0 %v908
  %v1692 = vpop.f32.mrf.mxu0
  %v1693 = vadd.f32 %v274, %v1692
  %1694 = vmatmul.f32.gmra.mxu0 %v911
  %v1695 = vpop.f32.mrf.mxu0
  %v1696 = vadd.f32 %v274, %v1695
  %1697 = vmatmul.f32.gmra.mxu0 %v914
  %v1698 = vpop.f32.mrf.mxu0
  %v1699 = vadd.f32 %v274, %v1698
  %1700 = vmatmul.f32.gmra.mxu0 %v917
  %v1701 = vpop.f32.mrf.mxu0
  %v1702 = vadd.f32 %v274, %v1701
  %1703 = vmatmul.f32.gmra.mxu0 %v920
  %v1704 = vpop.f32.mrf.mxu0
  %v1705 = vadd.f32 %v274, %v1704
  %1706 = vmatmul.f32.gmra.mxu0 %v923
  %v1707 = vpop.f32.mrf.mxu0
  %v1708 = vadd.f32 %v274, %v1707
  %1709 = vmatmul.f32.gmra.mxu0 %v926
  %v1710 = vpop.f32.mrf.mxu0
  %v1711 = vadd.f32 %v274, %v1710
  %1712 = vmatmul.f32.gmra.mxu0 %v929
  %v1713 = vpop.f32.mrf.mxu0
  %v1714 = vadd.f32 %v274, %v1713
  %1715 = vmatmul.f32.gmra.mxu0 %v932
  %v1716 = vpop.f32.mrf.mxu0
  %v1717 = vadd.f32 %v274, %v1716
  %1718 = vmatmul.f32.gmra.mxu0 %v935
  %v1719 = vpop.f32.mrf.mxu0
  %v1720 = vadd.f32 %v274, %v1719
  %1721 = vmatmul.f32.gmra.mxu0 %v938
  %v1722 = vpop.f32.mrf.mxu0
  %v1723 = vadd.f32 %v274, %v1722
  %1724 = vmatmul.f32.gmra.mxu0 %v941
  %v1725 = vpop.f32.mrf.mxu0
  %v1726 = vadd.f32 %v274, %v1725
  %1727 = vmatmul.f32.gmra.mxu0 %v944
  %v1728 = vpop.f32.mrf.mxu0
  %v1729 = vadd.f32 %v274, %v1728
  %1730 = vmatmul.f32.gmra.mxu0 %v947
  %v1731 = vpop.f32.mrf.mxu0
  %v1732 = vadd.f32 %v274, %v1731
  %1733 = vmatmul.f32.gmra.mxu0 %v950
  %v1734 = vpop.f32.mrf.mxu0
  %v1735 = vadd.f32 %v274, %v1734
  %1736 = vmatmul.f32.gmra.mxu0 %v953
  %v1737 = vpop.f32.mrf.mxu0
  %v1738 = vadd.f32 %v274, %v1737
  %1739 = vmatmul.f32.gmra.mxu0 %v956
  %v1740 = vpop.f32.mrf.mxu0
  %v1741 = vadd.f32 %v274, %v1740
  %1742 = vmatmul.f32.gmra.mxu0 %v959
  %v1743 = vpop.f32.mrf.mxu0
  %v1744 = vadd.f32 %v274, %v1743
  %1745 = vmatmul.f32.gmra.mxu0 %v962
  %v1746 = vpop.f32.mrf.mxu0
  %v1747 = vadd.f32 %v274, %v1746
  %1748 = vmatmul.f32.gmra.mxu0 %v965
  %v1749 = vpop.f32.mrf.mxu0
  %v1750 = vadd.f32 %v274, %v1749
  %1751 = vmatmul.f32.gmra.mxu0 %v968
  %v1752 = vpop.f32.mrf.mxu0
  %v1753 = vadd.f32 %v274, %v1752
  %1754 = vmatmul.f32.gmra.mxu0 %v971
  %v1755 = vpop.f32.mrf.mxu0
  %v1756 = vadd.f32 %v274, %v1755
  %1757 = vmatmul.f32.gmra.mxu0 %v974
  %v1758 = vpop.f32.mrf.mxu0
  %v1759 = vadd.f32 %v274, %v1758
  %1760 = vmatmul.f32.gmra.mxu0 %v977
  %v1761 = vpop.f32.mrf.mxu0
  %v1762 = vadd.f32 %v274, %v1761
  %1763 = vmatmul.f32.gmra.mxu0 %v980
  %v1764 = vpop.f32.mrf.mxu0
  %v1765 = vadd.f32 %v274, %v1764
  %1766 = vmatmul.f32.gmra.mxu0 %v983
  %v1767 = vpop.f32.mrf.mxu0
  %v1768 = vadd.f32 %v274, %v1767
  %1769 = vmatmul.f32.gmra.mxu0 %v986
  %v1770 = vpop.f32.mrf.mxu0
  %v1771 = vadd.f32 %v274, %v1770
  %1772 = vmatmul.f32.gmra.mxu0 %v989
  %v1773 = vpop.f32.mrf.mxu0
  %v1774 = vadd.f32 %v274, %v1773
  %1775 = vmatmul.f32.gmra.mxu0 %v992
  %v1776 = vpop.f32.mrf.mxu0
  %v1777 = vadd.f32 %v274, %v1776
  %1778 = vmatmul.f32.gmra.mxu0 %v995
  %v1779 = vpop.f32.mrf.mxu0
  %v1780 = vadd.f32 %v274, %v1779
  %1781 = vmatmul.f32.gmra.mxu0 %v998
  %v1782 = vpop.f32.mrf.mxu0
  %v1783 = vadd.f32 %v274, %v1782
  %1784 = vmatmul.f32.gmra.mxu0 %v1001
  %v1785 = vpop.f32.mrf.mxu0
  %v1786 = vadd.f32 %v274, %v1785
  %1787 = vmatmul.f32.gmra.mxu0 %v1004
  %v1788 = vpop.f32.mrf.mxu0
  %v1789 = vadd.f32 %v274, %v1788
  %1790 = vmatmul.f32.gmra.mxu0 %v1007
  %v1791 = vpop.f32.mrf.mxu0
  %v1792 = vadd.f32 %v274, %v1791
  %1793 = vmatmul.f32.gmra.mxu0 %v1010
  %v1794 = vpop.f32.mrf.mxu0
  %v1795 = vadd.f32 %v274, %v1794
  %1796 = vmatmul.f32.gmra.mxu0 %v1013
  %v1797 = vpop.f32.mrf.mxu0
  %v1798 = vadd.f32 %v274, %v1797
  %1799 = vmatmul.f32.gmra.mxu0 %v1016
  %v1800 = vpop.f32.mrf.mxu0
  %v1801 = vadd.f32 %v274, %v1800
  %1802 = vmatmul.f32.gmra.mxu0 %v1019
  %v1803 = vpop.f32.mrf.mxu0
  %v1804 = vadd.f32 %v274, %v1803
  %1805 = vmatmul.f32.gmra.mxu0 %v1022
  %v1806 = vpop.f32.mrf.mxu0
  %v1807 = vadd.f32 %v274, %v1806
  %1808 = vmatmul.f32.gmra.mxu0 %v1025
  %v1809 = vpop.f32.mrf.mxu0
  %v1810 = vadd.f32 %v274, %v1809
  %1811 = vmatmul.f32.gmra.mxu0 %v1028
  %v1812 = vpop.f32.mrf.mxu0
  %v1813 = vadd.f32 %v274, %v1812
  %1814 = vmatmul.f32.gmra.mxu0 %v1031
  %v1815 = vpop.f32.mrf.mxu0
  %v1816 = vadd.f32 %v274, %v1815
  %1817 = vmatmul.f32.gmra.mxu0 %v1034
  %v1818 = vpop.f32.mrf.mxu0
  %v1819 = vadd.f32 %v274, %v1818
  %1820 = vmatmul.f32.gmra.mxu0 %v1037
  %v1821 = vpop.f32.mrf.mxu0
  %v1822 = vadd.f32 %v274, %v1821
  %1823 = vmatmul.f32.gmra.mxu0 %v1040
  %v1824 = vpop.f32.mrf.mxu0
  %v1825 = vadd.f32 %v274, %v1824
  %1826 = vmatmul.f32.gmra.mxu0 %v1043
  %v1827 = vpop.f32.mrf.mxu0
  %v1828 = vadd.f32 %v274, %v1827
  %1829 = vdwg.mxu0
  %v1830 = vmax.f32 %v1063, 0.0
  %v1831 = vmax.f32 %v1066, 0.0
  %v1832 = vmax.f32 %v1069, 0.0
  %v1833 = vmax.f32 %v1072, 0.0
  %v1834 = vmax.f32 %v1075, 0.0
  %v1835 = vmax.f32 %v1078, 0.0
  %v1836 = vmax.f32 %v1081, 0.0
  %v1837 = vmax.f32 %v1084, 0.0
  %v1838 = vmax.f32 %v1087, 0.0
  %v1839 = vmax.f32 %v1090, 0.0
  %v1840 = vmax.f32 %v1093, 0.0
  %v1841 = vmax.f32 %v1096, 0.0
  %v1842 = vmax.f32 %v1099, 0.0
  %v1843 = vmax.f32 %v1102, 0.0
  %v1844 = vmax.f32 %v1105, 0.0
  %v1845 = vmax.f32 %v1108, 0.0
  %v1846 = vmax.f32 %v1111, 0.0
  %v1847 = vmax.f32 %v1114, 0.0
  %v1848 = vmax.f32 %v1117, 0.0
  %v1849 = vmax.f32 %v1120, 0.0
  %v1850 = vmax.f32 %v1123, 0.0
  %v1851 = vmax.f32 %v1126, 0.0
  %v1852 = vmax.f32 %v1129, 0.0
  %v1853 = vmax.f32 %v1132, 0.0
  %v1854 = vmax.f32 %v1135, 0.0
  %v1855 = vmax.f32 %v1138, 0.0
  %v1856 = vmax.f32 %v1141, 0.0
  %v1857 = vmax.f32 %v1144, 0.0
  %v1858 = vmax.f32 %v1147, 0.0
  %v1859 = vmax.f32 %v1150, 0.0
  %v1860 = vmax.f32 %v1153, 0.0
  %v1861 = vmax.f32 %v1156, 0.0
  %v1862 = vmax.f32 %v1159, 0.0
  %v1863 = vmax.f32 %v1162, 0.0
  %v1864 = vmax.f32 %v1165, 0.0
  %v1865 = vmax.f32 %v1168, 0.0
  %v1866 = vmax.f32 %v1171, 0.0
  %v1867 = vmax.f32 %v1174, 0.0
  %v1868 = vmax.f32 %v1177, 0.0
  %v1869 = vmax.f32 %v1180, 0.0
  %v1870 = vmax.f32 %v1183, 0.0
  %v1871 = vmax.f32 %v1186, 0.0
  %v1872 = vmax.f32 %v1189, 0.0
  %v1873 = vmax.f32 %v1192, 0.0
  %v1874 = vmax.f32 %v1195, 0.0
  %v1875 = vmax.f32 %v1198, 0.0
  %v1876 = vmax.f32 %v1201, 0.0
  %v1877 = vmax.f32 %v1204, 0.0
  %v1878 = vmax.f32 %v1207, 0.0
  %v1879 = vmax.f32 %v1210, 0.0
  %v1880 = vmax.f32 %v1213, 0.0
  %v1881 = vmax.f32 %v1216, 0.0
  %v1882 = vmax.f32 %v1219, 0.0
  %v1883 = vmax.f32 %v1222, 0.0
  %v1884 = vmax.f32 %v1225, 0.0
  %v1885 = vmax.f32 %v1228, 0.0
  %v1886 = vmax.f32 %v1231, 0.0
  %v1887 = vmax.f32 %v1234, 0.0
  %v1888 = vmax.f32 %v1237, 0.0
  %v1889 = vmax.f32 %v1240, 0.0
  %v1890 = vmax.f32 %v1243, 0.0
  %v1891 = vmax.f32 %v1246, 0.0
  %v1892 = vmax.f32 %v1249, 0.0
  %v1893 = vmax.f32 %v1252, 0.0
  %v1894 = vmax.f32 %v1255, 0.0
  %v1895 = vmax.f32 %v1258, 0.0
  %v1896 = vmax.f32 %v1261, 0.0
  %v1897 = vmax.f32 %v1264, 0.0
  %v1898 = vmax.f32 %v1267, 0.0
  %v1899 = vmax.f32 %v1270, 0.0
  %v1900 = vmax.f32 %v1273, 0.0
  %v1901 = vmax.f32 %v1276, 0.0
  %v1902 = vmax.f32 %v1279, 0.0
  %v1903 = vmax.f32 %v1282, 0.0
  %v1904 = vmax.f32 %v1285, 0.0
  %v1905 = vmax.f32 %v1288, 0.0
  %v1906 = vmax.f32 %v1291, 0.0
  %v1907 = vmax.f32 %v1294, 0.0
  %v1908 = vmax.f32 %v1297, 0.0
  %v1909 = vmax.f32 %v1300, 0.0
  %v1910 = vmax.f32 %v1303, 0.0
  %v1911 = vmax.f32 %v1306, 0.0
  %v1912 = vmax.f32 %v1309, 0.0
  %v1913 = vmax.f32 %v1312, 0.0
  %v1914 = vmax.f32 %v1315, 0.0
  %v1915 = vmax.f32 %v1318, 0.0
  %v1916 = vmax.f32 %v1321, 0.0
  %v1917 = vmax.f32 %v1324, 0.0
  %v1918 = vmax.f32 %v1327, 0.0
  %v1919 = vmax.f32 %v1330, 0.0
  %v1920 = vmax.f32 %v1333, 0.0
  %v1921 = vmax.f32 %v1336, 0.0
  %v1922 = vmax.f32 %v1339, 0.0
  %v1923 = vmax.f32 %v1342, 0.0
  %v1924 = vmax.f32 %v1345, 0.0
  %v1925 = vmax.f32 %v1348, 0.0
  %v1926 = vmax.f32 %v1351, 0.0
  %v1927 = vmax.f32 %v1354, 0.0
  %v1928 = vmax.f32 %v1357, 0.0
  %v1929 = vmax.f32 %v1360, 0.0
  %v1930 = vmax.f32 %v1363, 0.0
  %v1931 = vmax.f32 %v1366, 0.0
  %v1932 = vmax.f32 %v1369, 0.0
  %v1933 = vmax.f32 %v1372, 0.0
  %v1934 = vmax.f32 %v1375, 0.0
  %v1935 = vmax.f32 %v1378, 0.0
  %v1936 = vmax.f32 %v1381, 0.0
  %v1937 = vmax.f32 %v1384, 0.0
  %v1938 = vmax.f32 %v1387, 0.0
  %v1939 = vmax.f32 %v1390, 0.0
  %v1940 = vmax.f32 %v1393, 0.0
  %v1941 = vmax.f32 %v1396, 0.0
  %v1942 = vmax.f32 %v1399, 0.0
  %v1943 = vmax.f32 %v1402, 0.0
  %v1944 = vmax.f32 %v1405, 0.0
  %v1945 = vmax.f32 %v1408, 0.0
  %v1946 = vmax.f32 %v1411, 0.0
  %v1947 = vmax.f32 %v1414, 0.0
  %v1948 = vmax.f32 %v1417, 0.0
  %v1949 = vmax.f32 %v1420, 0.0
  %v1950 = vmax.f32 %v1423, 0.0
  %v1951 = vmax.f32 %v1426, 0.0
  %v1952 = vmax.f32 %v1429, 0.0
  %v1953 = vmax.f32 %v1432, 0.0
  %v1954 = vmax.f32 %v1435, 0.0
  %v1955 = vmax.f32 %v1438, 0.0
  %v1956 = vmax.f32 %v1441, 0.0
  %v1957 = vmax.f32 %v1444, 0.0
  %v1958 = vmax.f32 %v1447, 0.0
  %v1959 = vmax.f32 %v1450, 0.0
  %v1960 = vmax.f32 %v1453, 0.0
  %v1961 = vmax.f32 %v1456, 0.0
  %v1962 = vmax.f32 %v1459, 0.0
  %v1963 = vmax.f32 %v1462, 0.0
  %v1964 = vmax.f32 %v1465, 0.0
  %v1965 = vmax.f32 %v1468, 0.0
  %v1966 = vmax.f32 %v1471, 0.0
  %v1967 = vmax.f32 %v1474, 0.0
  %v1968 = vmax.f32 %v1477, 0.0
  %v1969 = vmax.f32 %v1480, 0.0
  %v1970 = vmax.f32 %v1483, 0.0
  %v1971 = vmax.f32 %v1486, 0.0
  %v1972 = vmax.f32 %v1489, 0.0
  %v1973 = vmax.f32 %v1492, 0.0
  %v1974 = vmax.f32 %v1495, 0.0
  %v1975 = vmax.f32 %v1498, 0.0
  %v1976 = vmax.f32 %v1501, 0.0
  %v1977 = vmax.f32 %v1504, 0.0
  %v1978 = vmax.f32 %v1507, 0.0
  %v1979 = vmax.f32 %v1510, 0.0
  %v1980 = vmax.f32 %v1513, 0.0
  %v1981 = vmax.f32 %v1516, 0.0
  %v1982 = vmax.f32 %v1519, 0.0
  %v1983 = vmax.f32 %v1522, 0.0
  %v1984 = vmax.f32 %v1525, 0.0
  %v1985 = vmax.f32 %v1528, 0.0
  %v1986 = vmax.f32 %v1531, 0.0
  %v1987 = vmax.f32 %v1534, 0.0
  %v1988 = vmax.f32 %v1537, 0.0
  %v1989 = vmax.f32 %v1540, 0.0
  %v1990 = vmax.f32 %v1543, 0.0
  %v1991 = vmax.f32 %v1546, 0.0
  %v1992 = vmax.f32 %v1549, 0.0
  %v1993 = vmax.f32 %v1552, 0.0
  %v1994 = vmax.f32 %v1555, 0.0
  %v1995 = vmax.f32 %v1558, 0.0
  %v1996 = vmax.f32 %v1561, 0.0
  %v1997 = vmax.f32 %v1564, 0.0
  %v1998 = vmax.f32 %v1567, 0.0
  %v1999 = vmax.f32 %v1570, 0.0
  %v2000 = vmax.f32 %v1573, 0.0
  %v2001 = vmax.f32 %v1576, 0.0
  %v2002 = vmax.f32 %v1579, 0.0
  %v2003 = vmax.f32 %v1582, 0.0
  %v2004 = vmax.f32 %v1585, 0.0
  %v2005 = vmax.f32 %v1588, 0.0
  %v2006 = vmax.f32 %v1591, 0.0
  %v2007 = vmax.f32 %v1594, 0.0
  %v2008 = vmax.f32 %v1597, 0.0
  %v2009 = vmax.f32 %v1600, 0.0
  %v2010 = vmax.f32 %v1603, 0.0
  %v2011 = vmax.f32 %v1606, 0.0
  %v2012 = vmax.f32 %v1609, 0.0
  %v2013 = vmax.f32 %v1612, 0.0
  %v2014 = vmax.f32 %v1615, 0.0
  %v2015 = vmax.f32 %v1618, 0.0
  %v2016 = vmax.f32 %v1621, 0.0
  %v2017 = vmax.f32 %v1624, 0.0
  %v2018 = vmax.f32 %v1627, 0.0
  %v2019 = vmax.f32 %v1630, 0.0
  %v2020 = vmax.f32 %v1633, 0.0
  %v2021 = vmax.f32 %v1636, 0.0
  %v2022 = vmax.f32 %v1639, 0.0
  %v2023 = vmax.f32 %v1642, 0.0
  %v2024 = vmax.f32 %v1645, 0.0
  %v2025 = vmax.f32 %v1648, 0.0
  %v2026 = vmax.f32 %v1651, 0.0
  %v2027 = vmax.f32 %v1654, 0.0
  %v2028 = vmax.f32 %v1657, 0.0
  %v2029 = vmax.f32 %v1660, 0.0
  %v2030 = vmax.f32 %v1663, 0.0
  %v2031 = vmax.f32 %v1666, 0.0
  %v2032 = vmax.f32 %v1669, 0.0
  %v2033 = vmax.f32 %v1672, 0.0
  %v2034 = vmax.f32 %v1675, 0.0
  %v2035 = vmax.f32 %v1678, 0.0
  %v2036 = vmax.f32 %v1681, 0.0
  %v2037 = vmax.f32 %v1684, 0.0
  %v2038 = vmax.f32 %v1687, 0.0
  %v2039 = vmax.f32 %v1690, 0.0
  %v2040 = vmax.f32 %v1693, 0.0
  %v2041 = vmax.f32 %v1696, 0.0
  %v2042 = vmax.f32 %v1699, 0.0
  %v2043 = vmax.f32 %v1702, 0.0
  %v2044 = vmax.f32 %v1705, 0.0
  %v2045 = vmax.f32 %v1708, 0.0
  %v2046 = vmax.f32 %v1711, 0.0
  %v2047 = vmax.f32 %v1714, 0.0
  %v2048 = vmax.f32 %v1717, 0.0
  %v2049 = vmax.f32 %v1720, 0.0
  %v2050 = vmax.f32 %v1723, 0.0
  %v2051 = vmax.f32 %v1726, 0.0
  %v2052 = vmax.f32 %v1729, 0.0
  %v2053 = vmax.f32 %v1732, 0.0
  %v2054 = vmax.f32 %v1735, 0.0
  %v2055 = vmax.f32 %v1738, 0.0
  %v2056 = vmax.f32 %v1741, 0.0
  %v2057 = vmax.f32 %v1744, 0.0
  %v2058 = vmax.f32 %v1747, 0.0
  %v2059 = vmax.f32 %v1750, 0.0
  %v2060 = vmax.f32 %v1753, 0.0
  %v2061 = vmax.f32 %v1756, 0.0
  %v2062 = vmax.f32 %v1759, 0.0
  %v2063 = vmax.f32 %v1762, 0.0
  %v2064 = vmax.f32 %v1765, 0.0
  %v2065 = vmax.f32 %v1768, 0.0
  %v2066 = vmax.f32 %v1771, 0.0
  %v2067 = vmax.f32 %v1774, 0.0
  %v2068 = vmax.f32 %v1777, 0.0
  %v2069 = vmax.f32 %v1780, 0.0
  %v2070 = vmax.f32 %v1783, 0.0
  %v2071 = vmax.f32 %v1786, 0.0
  %v2072 = vmax.f32 %v1789, 0.0
  %v2073 = vmax.f32 %v1792, 0.0
  %v2074 = vmax.f32 %v1795, 0.0
  %v2075 = vmax.f32 %v1798, 0.0
  %v2076 = vmax.f32 %v1801, 0.0
  %v2077 = vmax.f32 %v1804, 0.0
  %v2078 = vmax.f32 %v1807, 0.0
  %v2079 = vmax.f32 %v1810, 0.0
  %v2080 = vmax.f32 %v1813, 0.0
  %v2081 = vmax.f32 %v1816, 0.0
  %v2082 = vmax.f32 %v1819, 0.0
  %v2083 = vmax.f32 %v1822, 0.0
  %v2084 = vmax.f32 %v1825, 0.0
  %v2085 = vmax.f32 %v1828, 0.0
  %vm2086 = vcmask 64512
  %2087 = vst.msk [vmem:[%s3] sm:$0xff] %vm2086, %v1830
  %2088 = vst.msk [vmem:[%s3 + $0x8] sm:$0xff] %vm2086, %v1831
  %2089 = vst.msk [vmem:[%s3 + $0x10] sm:$0xff] %vm2086, %v1832
  %2090 = vst.msk [vmem:[%s3 + $0x18] sm:$0xff] %vm2086, %v1833
  %2091 = vst.msk [vmem:[%s3 + $0x20] sm:$0xff] %vm2086, %v1834
  %2092 = vst.msk [vmem:[%s3 + $0x28] sm:$0xff] %vm2086, %v1835
  %2093 = vst.msk [vmem:[%s3 + $0x30] sm:$0xff] %vm2086, %v1836
  %2094 = vst.msk [vmem:[%s3 + $0x38] sm:$0xff] %vm2086, %v1837
  %2095 = vst.msk [vmem:[%s3 + $0x40] sm:$0xff] %vm2086, %v1838
  %2096 = vst.msk [vmem:[%s3 + $0x48] sm:$0xff] %vm2086, %v1839
  %2097 = vst.msk [vmem:[%s3 + $0x50] sm:$0xff] %vm2086, %v1840
  %2098 = vst.msk [vmem:[%s3 + $0x58] sm:$0xff] %vm2086, %v1841
  %2099 = vst.msk [vmem:[%s3 + $0x60] sm:$0xff] %vm2086, %v1842
  %2100 = vst.msk [vmem:[%s3 + $0x68] sm:$0xff] %vm2086, %v1843
  %2101 = vst.msk [vmem:[%s3 + $0x70] sm:$0xff] %vm2086, %v1844
  %2102 = vst.msk [vmem:[%s3 + $0x78] sm:$0xff] %vm2086, %v1845
  %2103 = vst.msk [vmem:[%s3 + $0x80] sm:$0xff] %vm2086, %v1846
  %2104 = vst.msk [vmem:[%s3 + $0x88] sm:$0xff] %vm2086, %v1847
  %2105 = vst.msk [vmem:[%s3 + $0x90] sm:$0xff] %vm2086, %v1848
  %2106 = vst.msk [vmem:[%s3 + $0x98] sm:$0xff] %vm2086, %v1849
  %2107 = vst.msk [vmem:[%s3 + $0xa0] sm:$0xff] %vm2086, %v1850
  %2108 = vst.msk [vmem:[%s3 + $0xa8] sm:$0xff] %vm2086, %v1851
  %2109 = vst.msk [vmem:[%s3 + $0xb0] sm:$0xff] %vm2086, %v1852
  %2110 = vst.msk [vmem:[%s3 + $0xb8] sm:$0xff] %vm2086, %v1853
  %2111 = vst.msk [vmem:[%s3 + $0xc0] sm:$0xff] %vm2086, %v1854
  %2112 = vst.msk [vmem:[%s3 + $0xc8] sm:$0xff] %vm2086, %v1855
  %2113 = vst.msk [vmem:[%s3 + $0xd0] sm:$0xff] %vm2086, %v1856
  %2114 = vst.msk [vmem:[%s3 + $0xd8] sm:$0xff] %vm2086, %v1857
  %2115 = vst.msk [vmem:[%s3 + $0xe0] sm:$0xff] %vm2086, %v1858
  %2116 = vst.msk [vmem:[%s3 + $0xe8] sm:$0xff] %vm2086, %v1859
  %2117 = vst.msk [vmem:[%s3 + $0xf0] sm:$0xff] %vm2086, %v1860
  %2118 = vst.msk [vmem:[%s3 + $0xf8] sm:$0xff] %vm2086, %v1861
  %2119 = vst.msk [vmem:[%s3 + $0x100] sm:$0xff] %vm2086, %v1862
  %2120 = vst.msk [vmem:[%s3 + $0x108] sm:$0xff] %vm2086, %v1863
  %2121 = vst.msk [vmem:[%s3 + $0x110] sm:$0xff] %vm2086, %v1864
  %2122 = vst.msk [vmem:[%s3 + $0x118] sm:$0xff] %vm2086, %v1865
  %2123 = vst.msk [vmem:[%s3 + $0x120] sm:$0xff] %vm2086, %v1866
  %2124 = vst.msk [vmem:[%s3 + $0x128] sm:$0xff] %vm2086, %v1867
  %2125 = vst.msk [vmem:[%s3 + $0x130] sm:$0xff] %vm2086, %v1868
  %2126 = vst.msk [vmem:[%s3 + $0x138] sm:$0xff] %vm2086, %v1869
  %2127 = vst.msk [vmem:[%s3 + $0x140] sm:$0xff] %vm2086, %v1870
  %2128 = vst.msk [vmem:[%s3 + $0x148] sm:$0xff] %vm2086, %v1871
  %2129 = vst.msk [vmem:[%s3 + $0x150] sm:$0xff] %vm2086, %v1872
  %2130 = vst.msk [vmem:[%s3 + $0x158] sm:$0xff] %vm2086, %v1873
  %2131 = vst.msk [vmem:[%s3 + $0x160] sm:$0xff] %vm2086, %v1874
  %2132 = vst.msk [vmem:[%s3 + $0x168] sm:$0xff] %vm2086, %v1875
  %2133 = vst.msk [vmem:[%s3 + $0x170] sm:$0xff] %vm2086, %v1876
  %2134 = vst.msk [vmem:[%s3 + $0x178] sm:$0xff] %vm2086, %v1877
  %2135 = vst.msk [vmem:[%s3 + $0x180] sm:$0xff] %vm2086, %v1878
  %2136 = vst.msk [vmem:[%s3 + $0x188] sm:$0xff] %vm2086, %v1879
  %2137 = vst.msk [vmem:[%s3 + $0x190] sm:$0xff] %vm2086, %v1880
  %2138 = vst.msk [vmem:[%s3 + $0x198] sm:$0xff] %vm2086, %v1881
  %2139 = vst.msk [vmem:[%s3 + $0x1a0] sm:$0xff] %vm2086, %v1882
  %2140 = vst.msk [vmem:[%s3 + $0x1a8] sm:$0xff] %vm2086, %v1883
  %2141 = vst.msk [vmem:[%s3 + $0x1b0] sm:$0xff] %vm2086, %v1884
  %2142 = vst.msk [vmem:[%s3 + $0x1b8] sm:$0xff] %vm2086, %v1885
  %2143 = vst.msk [vmem:[%s3 + $0x1c0] sm:$0xff] %vm2086, %v1886
  %2144 = vst.msk [vmem:[%s3 + $0x1c8] sm:$0xff] %vm2086, %v1887
  %2145 = vst.msk [vmem:[%s3 + $0x1d0] sm:$0xff] %vm2086, %v1888
  %2146 = vst.msk [vmem:[%s3 + $0x1d8] sm:$0xff] %vm2086, %v1889
  %2147 = vst.msk [vmem:[%s3 + $0x1e0] sm:$0xff] %vm2086, %v1890
  %2148 = vst.msk [vmem:[%s3 + $0x1e8] sm:$0xff] %vm2086, %v1891
  %2149 = vst.msk [vmem:[%s3 + $0x1f0] sm:$0xff] %vm2086, %v1892
  %2150 = vst.msk [vmem:[%s3 + $0x1f8] sm:$0xff] %vm2086, %v1893
  %2151 = vst.msk [vmem:[%s3 + $0x200] sm:$0xff] %vm2086, %v1894
  %2152 = vst.msk [vmem:[%s3 + $0x208] sm:$0xff] %vm2086, %v1895
  %2153 = vst.msk [vmem:[%s3 + $0x210] sm:$0xff] %vm2086, %v1896
  %2154 = vst.msk [vmem:[%s3 + $0x218] sm:$0xff] %vm2086, %v1897
  %2155 = vst.msk [vmem:[%s3 + $0x220] sm:$0xff] %vm2086, %v1898
  %2156 = vst.msk [vmem:[%s3 + $0x228] sm:$0xff] %vm2086, %v1899
  %2157 = vst.msk [vmem:[%s3 + $0x230] sm:$0xff] %vm2086, %v1900
  %2158 = vst.msk [vmem:[%s3 + $0x238] sm:$0xff] %vm2086, %v1901
  %2159 = vst.msk [vmem:[%s3 + $0x240] sm:$0xff] %vm2086, %v1902
  %2160 = vst.msk [vmem:[%s3 + $0x248] sm:$0xff] %vm2086, %v1903
  %2161 = vst.msk [vmem:[%s3 + $0x250] sm:$0xff] %vm2086, %v1904
  %2162 = vst.msk [vmem:[%s3 + $0x258] sm:$0xff] %vm2086, %v1905
  %2163 = vst.msk [vmem:[%s3 + $0x260] sm:$0xff] %vm2086, %v1906
  %2164 = vst.msk [vmem:[%s3 + $0x268] sm:$0xff] %vm2086, %v1907
  %2165 = vst.msk [vmem:[%s3 + $0x270] sm:$0xff] %vm2086, %v1908
  %2166 = vst.msk [vmem:[%s3 + $0x278] sm:$0xff] %vm2086, %v1909
  %2167 = vst.msk [vmem:[%s3 + $0x280] sm:$0xff] %vm2086, %v1910
  %2168 = vst.msk [vmem:[%s3 + $0x288] sm:$0xff] %vm2086, %v1911
  %2169 = vst.msk [vmem:[%s3 + $0x290] sm:$0xff] %vm2086, %v1912
  %2170 = vst.msk [vmem:[%s3 + $0x298] sm:$0xff] %vm2086, %v1913
  %2171 = vst.msk [vmem:[%s3 + $0x2a0] sm:$0xff] %vm2086, %v1914
  %2172 = vst.msk [vmem:[%s3 + $0x2a8] sm:$0xff] %vm2086, %v1915
  %2173 = vst.msk [vmem:[%s3 + $0x2b0] sm:$0xff] %vm2086, %v1916
  %2174 = vst.msk [vmem:[%s3 + $0x2b8] sm:$0xff] %vm2086, %v1917
  %2175 = vst.msk [vmem:[%s3 + $0x2c0] sm:$0xff] %vm2086, %v1918
  %2176 = vst.msk [vmem:[%s3 + $0x2c8] sm:$0xff] %vm2086, %v1919
  %2177 = vst.msk [vmem:[%s3 + $0x2d0] sm:$0xff] %vm2086, %v1920
  %2178 = vst.msk [vmem:[%s3 + $0x2d8] sm:$0xff] %vm2086, %v1921
  %2179 = vst.msk [vmem:[%s3 + $0x2e0] sm:$0xff] %vm2086, %v1922
  %2180 = vst.msk [vmem:[%s3 + $0x2e8] sm:$0xff] %vm2086, %v1923
  %2181 = vst.msk [vmem:[%s3 + $0x2f0] sm:$0xff] %vm2086, %v1924
  %2182 = vst.msk [vmem:[%s3 + $0x2f8] sm:$0xff] %vm2086, %v1925
  %2183 = vst.msk [vmem:[%s3 + $0x300] sm:$0xff] %vm2086, %v1926
  %2184 = vst.msk [vmem:[%s3 + $0x308] sm:$0xff] %vm2086, %v1927
  %2185 = vst.msk [vmem:[%s3 + $0x310] sm:$0xff] %vm2086, %v1928
  %2186 = vst.msk [vmem:[%s3 + $0x318] sm:$0xff] %vm2086, %v1929
  %2187 = vst.msk [vmem:[%s3 + $0x320] sm:$0xff] %vm2086, %v1930
  %2188 = vst.msk [vmem:[%s3 + $0x328] sm:$0xff] %vm2086, %v1931
  %2189 = vst.msk [vmem:[%s3 + $0x330] sm:$0xff] %vm2086, %v1932
  %2190 = vst.msk [vmem:[%s3 + $0x338] sm:$0xff] %vm2086, %v1933
  %2191 = vst.msk [vmem:[%s3 + $0x340] sm:$0xff] %vm2086, %v1934
  %2192 = vst.msk [vmem:[%s3 + $0x348] sm:$0xff] %vm2086, %v1935
  %2193 = vst.msk [vmem:[%s3 + $0x350] sm:$0xff] %vm2086, %v1936
  %2194 = vst.msk [vmem:[%s3 + $0x358] sm:$0xff] %vm2086, %v1937
  %2195 = vst.msk [vmem:[%s3 + $0x360] sm:$0xff] %vm2086, %v1938
  %2196 = vst.msk [vmem:[%s3 + $0x368] sm:$0xff] %vm2086, %v1939
  %2197 = vst.msk [vmem:[%s3 + $0x370] sm:$0xff] %vm2086, %v1940
  %2198 = vst.msk [vmem:[%s3 + $0x378] sm:$0xff] %vm2086, %v1941
  %2199 = vst.msk [vmem:[%s3 + $0x380] sm:$0xff] %vm2086, %v1942
  %2200 = vst.msk [vmem:[%s3 + $0x388] sm:$0xff] %vm2086, %v1943
  %2201 = vst.msk [vmem:[%s3 + $0x390] sm:$0xff] %vm2086, %v1944
  %2202 = vst.msk [vmem:[%s3 + $0x398] sm:$0xff] %vm2086, %v1945
  %2203 = vst.msk [vmem:[%s3 + $0x3a0] sm:$0xff] %vm2086, %v1946
  %2204 = vst.msk [vmem:[%s3 + $0x3a8] sm:$0xff] %vm2086, %v1947
  %2205 = vst.msk [vmem:[%s3 + $0x3b0] sm:$0xff] %vm2086, %v1948
  %2206 = vst.msk [vmem:[%s3 + $0x3b8] sm:$0xff] %vm2086, %v1949
  %2207 = vst.msk [vmem:[%s3 + $0x3c0] sm:$0xff] %vm2086, %v1950
  %2208 = vst.msk [vmem:[%s3 + $0x3c8] sm:$0xff] %vm2086, %v1951
  %2209 = vst.msk [vmem:[%s3 + $0x3d0] sm:$0xff] %vm2086, %v1952
  %2210 = vst.msk [vmem:[%s3 + $0x3d8] sm:$0xff] %vm2086, %v1953
  %2211 = vst.msk [vmem:[%s3 + $0x3e0] sm:$0xff] %vm2086, %v1954
  %2212 = vst.msk [vmem:[%s3 + $0x3e8] sm:$0xff] %vm2086, %v1955
  %2213 = vst.msk [vmem:[%s3 + $0x3f0] sm:$0xff] %vm2086, %v1956
  %2214 = vst.msk [vmem:[%s3 + $0x3f8] sm:$0xff] %vm2086, %v1957
  %2215 = vst.msk [vmem:[%s3 + $0x400] sm:$0xff] %vm2086, %v1958
  %2216 = vst.msk [vmem:[%s3 + $0x408] sm:$0xff] %vm2086, %v1959
  %2217 = vst.msk [vmem:[%s3 + $0x410] sm:$0xff] %vm2086, %v1960
  %2218 = vst.msk [vmem:[%s3 + $0x418] sm:$0xff] %vm2086, %v1961
  %2219 = vst.msk [vmem:[%s3 + $0x420] sm:$0xff] %vm2086, %v1962
  %2220 = vst.msk [vmem:[%s3 + $0x428] sm:$0xff] %vm2086, %v1963
  %2221 = vst.msk [vmem:[%s3 + $0x430] sm:$0xff] %vm2086, %v1964
  %2222 = vst.msk [vmem:[%s3 + $0x438] sm:$0xff] %vm2086, %v1965
  %2223 = vst.msk [vmem:[%s3 + $0x440] sm:$0xff] %vm2086, %v1966
  %2224 = vst.msk [vmem:[%s3 + $0x448] sm:$0xff] %vm2086, %v1967
  %2225 = vst.msk [vmem:[%s3 + $0x450] sm:$0xff] %vm2086, %v1968
  %2226 = vst.msk [vmem:[%s3 + $0x458] sm:$0xff] %vm2086, %v1969
  %2227 = vst.msk [vmem:[%s3 + $0x460] sm:$0xff] %vm2086, %v1970
  %2228 = vst.msk [vmem:[%s3 + $0x468] sm:$0xff] %vm2086, %v1971
  %2229 = vst.msk [vmem:[%s3 + $0x470] sm:$0xff] %vm2086, %v1972
  %2230 = vst.msk [vmem:[%s3 + $0x478] sm:$0xff] %vm2086, %v1973
  %2231 = vst.msk [vmem:[%s3 + $0x480] sm:$0xff] %vm2086, %v1974
  %2232 = vst.msk [vmem:[%s3 + $0x488] sm:$0xff] %vm2086, %v1975
  %2233 = vst.msk [vmem:[%s3 + $0x490] sm:$0xff] %vm2086, %v1976
  %2234 = vst.msk [vmem:[%s3 + $0x498] sm:$0xff] %vm2086, %v1977
  %2235 = vst.msk [vmem:[%s3 + $0x4a0] sm:$0xff] %vm2086, %v1978
  %2236 = vst.msk [vmem:[%s3 + $0x4a8] sm:$0xff] %vm2086, %v1979
  %2237 = vst.msk [vmem:[%s3 + $0x4b0] sm:$0xff] %vm2086, %v1980
  %2238 = vst.msk [vmem:[%s3 + $0x4b8] sm:$0xff] %vm2086, %v1981
  %2239 = vst.msk [vmem:[%s3 + $0x4c0] sm:$0xff] %vm2086, %v1982
  %2240 = vst.msk [vmem:[%s3 + $0x4c8] sm:$0xff] %vm2086, %v1983
  %2241 = vst.msk [vmem:[%s3 + $0x4d0] sm:$0xff] %vm2086, %v1984
  %2242 = vst.msk [vmem:[%s3 + $0x4d8] sm:$0xff] %vm2086, %v1985
  %2243 = vst.msk [vmem:[%s3 + $0x4e0] sm:$0xff] %vm2086, %v1986
  %2244 = vst.msk [vmem:[%s3 + $0x4e8] sm:$0xff] %vm2086, %v1987
  %2245 = vst.msk [vmem:[%s3 + $0x4f0] sm:$0xff] %vm2086, %v1988
  %2246 = vst.msk [vmem:[%s3 + $0x4f8] sm:$0xff] %vm2086, %v1989
  %2247 = vst.msk [vmem:[%s3 + $0x500] sm:$0xff] %vm2086, %v1990
  %2248 = vst.msk [vmem:[%s3 + $0x508] sm:$0xff] %vm2086, %v1991
  %2249 = vst.msk [vmem:[%s3 + $0x510] sm:$0xff] %vm2086, %v1992
  %2250 = vst.msk [vmem:[%s3 + $0x518] sm:$0xff] %vm2086, %v1993
  %2251 = vst.msk [vmem:[%s3 + $0x520] sm:$0xff] %vm2086, %v1994
  %2252 = vst.msk [vmem:[%s3 + $0x528] sm:$0xff] %vm2086, %v1995
  %2253 = vst.msk [vmem:[%s3 + $0x530] sm:$0xff] %vm2086, %v1996
  %2254 = vst.msk [vmem:[%s3 + $0x538] sm:$0xff] %vm2086, %v1997
  %2255 = vst.msk [vmem:[%s3 + $0x540] sm:$0xff] %vm2086, %v1998
  %2256 = vst.msk [vmem:[%s3 + $0x548] sm:$0xff] %vm2086, %v1999
  %2257 = vst.msk [vmem:[%s3 + $0x550] sm:$0xff] %vm2086, %v2000
  %2258 = vst.msk [vmem:[%s3 + $0x558] sm:$0xff] %vm2086, %v2001
  %2259 = vst.msk [vmem:[%s3 + $0x560] sm:$0xff] %vm2086, %v2002
  %2260 = vst.msk [vmem:[%s3 + $0x568] sm:$0xff] %vm2086, %v2003
  %2261 = vst.msk [vmem:[%s3 + $0x570] sm:$0xff] %vm2086, %v2004
  %2262 = vst.msk [vmem:[%s3 + $0x578] sm:$0xff] %vm2086, %v2005
  %2263 = vst.msk [vmem:[%s3 + $0x580] sm:$0xff] %vm2086, %v2006
  %2264 = vst.msk [vmem:[%s3 + $0x588] sm:$0xff] %vm2086, %v2007
  %2265 = vst.msk [vmem:[%s3 + $0x590] sm:$0xff] %vm2086, %v2008
  %2266 = vst.msk [vmem:[%s3 + $0x598] sm:$0xff] %vm2086, %v2009
  %2267 = vst.msk [vmem:[%s3 + $0x5a0] sm:$0xff] %vm2086, %v2010
  %2268 = vst.msk [vmem:[%s3 + $0x5a8] sm:$0xff] %vm2086, %v2011
  %2269 = vst.msk [vmem:[%s3 + $0x5b0] sm:$0xff] %vm2086, %v2012
  %2270 = vst.msk [vmem:[%s3 + $0x5b8] sm:$0xff] %vm2086, %v2013
  %2271 = vst.msk [vmem:[%s3 + $0x5c0] sm:$0xff] %vm2086, %v2014
  %2272 = vst.msk [vmem:[%s3 + $0x5c8] sm:$0xff] %vm2086, %v2015
  %2273 = vst.msk [vmem:[%s3 + $0x5d0] sm:$0xff] %vm2086, %v2016
  %2274 = vst.msk [vmem:[%s3 + $0x5d8] sm:$0xff] %vm2086, %v2017
  %2275 = vst.msk [vmem:[%s3 + $0x5e0] sm:$0xff] %vm2086, %v2018
  %2276 = vst.msk [vmem:[%s3 + $0x5e8] sm:$0xff] %vm2086, %v2019
  %2277 = vst.msk [vmem:[%s3 + $0x5f0] sm:$0xff] %vm2086, %v2020
  %2278 = vst.msk [vmem:[%s3 + $0x5f8] sm:$0xff] %vm2086, %v2021
  %2279 = vst.msk [vmem:[%s3 + $0x600] sm:$0xff] %vm2086, %v2022
  %2280 = vst.msk [vmem:[%s3 + $0x608] sm:$0xff] %vm2086, %v2023
  %2281 = vst.msk [vmem:[%s3 + $0x610] sm:$0xff] %vm2086, %v2024
  %2282 = vst.msk [vmem:[%s3 + $0x618] sm:$0xff] %vm2086, %v2025
  %2283 = vst.msk [vmem:[%s3 + $0x620] sm:$0xff] %vm2086, %v2026
  %2284 = vst.msk [vmem:[%s3 + $0x628] sm:$0xff] %vm2086, %v2027
  %2285 = vst.msk [vmem:[%s3 + $0x630] sm:$0xff] %vm2086, %v2028
  %2286 = vst.msk [vmem:[%s3 + $0x638] sm:$0xff] %vm2086, %v2029
  %2287 = vst.msk [vmem:[%s3 + $0x640] sm:$0xff] %vm2086, %v2030
  %2288 = vst.msk [vmem:[%s3 + $0x648] sm:$0xff] %vm2086, %v2031
  %2289 = vst.msk [vmem:[%s3 + $0x650] sm:$0xff] %vm2086, %v2032
  %2290 = vst.msk [vmem:[%s3 + $0x658] sm:$0xff] %vm2086, %v2033
  %2291 = vst.msk [vmem:[%s3 + $0x660] sm:$0xff] %vm2086, %v2034
  %2292 = vst.msk [vmem:[%s3 + $0x668] sm:$0xff] %vm2086, %v2035
  %2293 = vst.msk [vmem:[%s3 + $0x670] sm:$0xff] %vm2086, %v2036
  %2294 = vst.msk [vmem:[%s3 + $0x678] sm:$0xff] %vm2086, %v2037
  %2295 = vst.msk [vmem:[%s3 + $0x680] sm:$0xff] %vm2086, %v2038
  %2296 = vst.msk [vmem:[%s3 + $0x688] sm:$0xff] %vm2086, %v2039
  %2297 = vst.msk [vmem:[%s3 + $0x690] sm:$0xff] %vm2086, %v2040
  %2298 = vst.msk [vmem:[%s3 + $0x698] sm:$0xff] %vm2086, %v2041
  %2299 = vst.msk [vmem:[%s3 + $0x6a0] sm:$0xff] %vm2086, %v2042
  %2300 = vst.msk [vmem:[%s3 + $0x6a8] sm:$0xff] %vm2086, %v2043
  %2301 = vst.msk [vmem:[%s3 + $0x6b0] sm:$0xff] %vm2086, %v2044
  %2302 = vst.msk [vmem:[%s3 + $0x6b8] sm:$0xff] %vm2086, %v2045
  %2303 = vst.msk [vmem:[%s3 + $0x6c0] sm:$0xff] %vm2086, %v2046
  %2304 = vst.msk [vmem:[%s3 + $0x6c8] sm:$0xff] %vm2086, %v2047
  %2305 = vst.msk [vmem:[%s3 + $0x6d0] sm:$0xff] %vm2086, %v2048
  %2306 = vst.msk [vmem:[%s3 + $0x6d8] sm:$0xff] %vm2086, %v2049
  %2307 = vst.msk [vmem:[%s3 + $0x6e0] sm:$0xff] %vm2086, %v2050
  %2308 = vst.msk [vmem:[%s3 + $0x6e8] sm:$0xff] %vm2086, %v2051
  %2309 = vst.msk [vmem:[%s3 + $0x6f0] sm:$0xff] %vm2086, %v2052
  %2310 = vst.msk [vmem:[%s3 + $0x6f8] sm:$0xff] %vm2086, %v2053
  %2311 = vst.msk [vmem:[%s3 + $0x700] sm:$0xff] %vm2086, %v2054
  %2312 = vst.msk [vmem:[%s3 + $0x708] sm:$0xff] %vm2086, %v2055
  %2313 = vst.msk [vmem:[%s3 + $0x710] sm:$0xff] %vm2086, %v2056
  %2314 = vst.msk [vmem:[%s3 + $0x718] sm:$0xff] %vm2086, %v2057
  %2315 = vst.msk [vmem:[%s3 + $0x720] sm:$0xff] %vm2086, %v2058
  %2316 = vst.msk [vmem:[%s3 + $0x728] sm:$0xff] %vm2086, %v2059
  %2317 = vst.msk [vmem:[%s3 + $0x730] sm:$0xff] %vm2086, %v2060
  %2318 = vst.msk [vmem:[%s3 + $0x738] sm:$0xff] %vm2086, %v2061
  %2319 = vst.msk [vmem:[%s3 + $0x740] sm:$0xff] %vm2086, %v2062
  %2320 = vst.msk [vmem:[%s3 + $0x748] sm:$0xff] %vm2086, %v2063
  %2321 = vst.msk [vmem:[%s3 + $0x750] sm:$0xff] %vm2086, %v2064
  %2322 = vst.msk [vmem:[%s3 + $0x758] sm:$0xff] %vm2086, %v2065
  %2323 = vst.msk [vmem:[%s3 + $0x760] sm:$0xff] %vm2086, %v2066
  %2324 = vst.msk [vmem:[%s3 + $0x768] sm:$0xff] %vm2086, %v2067
  %2325 = vst.msk [vmem:[%s3 + $0x770] sm:$0xff] %vm2086, %v2068
  %2326 = vst.msk [vmem:[%s3 + $0x778] sm:$0xff] %vm2086, %v2069
  %2327 = vst.msk [vmem:[%s3 + $0x780] sm:$0xff] %vm2086, %v2070
  %2328 = vst.msk [vmem:[%s3 + $0x788] sm:$0xff] %vm2086, %v2071
  %2329 = vst.msk [vmem:[%s3 + $0x790] sm:$0xff] %vm2086, %v2072
  %2330 = vst.msk [vmem:[%s3 + $0x798] sm:$0xff] %vm2086, %v2073
  %2331 = vst.msk [vmem:[%s3 + $0x7a0] sm:$0xff] %vm2086, %v2074
  %2332 = vst.msk [vmem:[%s3 + $0x7a8] sm:$0xff] %vm2086, %v2075
  %2333 = vst.msk [vmem:[%s3 + $0x7b0] sm:$0xff] %vm2086, %v2076
  %2334 = vst.msk [vmem:[%s3 + $0x7b8] sm:$0xff] %vm2086, %v2077
  %2335 = vst.msk [vmem:[%s3 + $0x7c0] sm:$0xff] %vm2086, %v2078
  %2336 = vst.msk [vmem:[%s3 + $0x7c8] sm:$0xff] %vm2086, %v2079
  %2337 = vst.msk [vmem:[%s3 + $0x7d0] sm:$0xff] %vm2086, %v2080
  %2338 = vst.msk [vmem:[%s3 + $0x7d8] sm:$0xff] %vm2086, %v2081
  %2339 = vst.msk [vmem:[%s3 + $0x7e0] sm:$0xff] %vm2086, %v2082
  %2340 = vst.msk [vmem:[%s3 + $0x7e8] sm:$0xff] %vm2086, %v2083
  %2341 = vst.msk [vmem:[%s3 + $0x7f0] sm:$0xff] %vm2086, %v2084
  %2342 = vst.msk [vmem:[%s3 + $0x7f8] sm:$0xff] %vm2086, %v2085
  // Predicated region
  $region14: #{light_motion_replace_block.2} parent=0 // pred_check
    _
  $region15: #{light_motion_replace_block.2} parent=0 // pred_check_branch
    %2344 = sbr.rel (0) target = $region17
  $region16: #{light_motion_replace_block.2} parent=0 // pred_region
    _
  $region17: #{light_motion_replace_block.2} parent=0 // pred_fallthru
    _
  // Predicated region
  $region18: #{light_motion_replace_block.2} parent=0 // pred_check
    _
  $region19: #{light_motion_replace_block.2} parent=0 // pred_check_branch
    %2346 = sbr.rel (0) target = $region21
  $region20: #{light_motion_replace_block.2} parent=0 // pred_region
    _
  $region21: #{light_motion_replace_block.2} parent=0 // pred_fallthru
    _

// kernel: light_motion_replace_block.3
$region0: #{light_motion_replace_block.3}
  #allocation0 [shape = 'u32[]', space=smem, size = 0x4, offset = 0x4, fixed_abs, tag = 'smem constant byte address 0x4 - core index']
  #allocation1 [shape = 'u32[72,128]{1,0:T(1,128)}', space=vmem, size = 0x9000, scoped, tag = 'internal scratch']
  %s0 = inlined_call_operand.vmem [shape: f32[2,64,16,8], index: 0, kind: input, shape index: {}]
  %s1 = inlined_call_operand.vmem [shape: f32[3,12,4], index: 1, kind: input, shape index: {}]
  %s2 = inlined_call_operand.vmem [shape: f32[1,4], index: 2, kind: input, shape index: {}]
  %s3 = inlined_call_operand.vmem [shape: f32[3,12,4], index: 3, kind: input, shape index: {}]
  %s4 = inlined_call_operand.vmem [shape: f32[1,4], index: 4, kind: input, shape index: {}]
  %s5 = inlined_call_operand.vmem [shape: f32[2,64,16,8], index: 5, kind: output, shape index: {}]
  %s6 = sld [smem:[#allocation0]]
  $region53: #{light_motion_replace_block.3} parent=0
    _
  %s8 = ssub.s32 1, %s6
  %s9 = scalar_select 0, %s8, %s6
  loop: start=0, step=1, limit=4
  $region2: #{light_motion_replace_block.3} parent=0 // loop_pre_header
    _
  $region3: #{light_motion_replace_block.3} parent=0 // loop_header
    %s11 = sphi 0, %s15
    %p12 = scmp.ge.s32.totalorder %s11, 4
    %s21 = sphi 0, %s23
    %s24 = sphi 0, %s21
    %s25 = sphi 0, %s24
    %s41 = sphi 0, %s25
    %s45 = sphi 0, %s45
    %s47 = sphi 0, %s45
    %s48 = sphi 0, %s47
    %s62 = sphi 0, %s48
    %s66 = sphi 0, %s66
    %s68 = sphi 0, %s66
    %s69 = sphi 0, %s68
    %s83 = sphi 0, %s69
    %s87 = sphi 0, %s87
    %s89 = sphi 0, %s87
    %s90 = sphi 0, %s89
    %s104 = sphi 0, %s90
    %s108 = sphi 0, %s108
    %s110 = sphi 0, %s108
    %s111 = sphi 0, %s110
    %s125 = sphi 0, %s111
    %s131 = sphi 0, %s133
    %s134 = sphi 0, %s131
    %s135 = sphi 0, %s134
    %s151 = sphi 0, %s135
  $region4: #{light_motion_replace_block.3} parent=0 // loop_header_branch
    %14 = sbr.rel (%p12) target = $region8
  $region5: #{light_motion_replace_block.3} parent=0 // loop_body
    %s16 = ssub.s32 %s11, 1
    %s17 = ssub.s32 %s11, 2
    %s18 = sadd.s32 %s11, 1
    %s19 = ssub.s32 %s11, %s18
    %p20 = scmp.eq.s32.totalorder %s19, 0
    %s22 = sadd.s32 %s21, 1
    %s23 = scalar_select %p20, %s21, %s22
    %p26 = pneg %p20
    %p27 = scmp.eq.s32.totalorder %s11, 1
    %p28 = por %p26, %p27
    %p29 = scmp.ne.s32.totalorder %s21, %s24
    %p30 = scmp.eq.s32.totalorder %s11, 0
    %p31 = por %p29, %p30
    %p32 = scmp.ne.s32.totalorder %s21, %s24
    %p33 = scmp.eq.s32.totalorder %s16, 1
    %p34 = por %p32, %p33
    %p35 = scmp.ne.s32.totalorder %s24, %s25
    %p36 = scmp.eq.s32.totalorder %s16, 0
    %p37 = por %p35, %p36
    %p38 = scmp.ne.s32.totalorder %s24, %s25
    %p39 = scmp.eq.s32.totalorder %s17, 1
    %p40 = por %p38, %p39
    %p42 = scmp.ne.s32.totalorder %s25, %s41
    %p43 = scmp.eq.s32.totalorder %s17, 0
    %p44 = por %p42, %p43
    %s46 = sadd.s32 %s45, 1
    %p49 = scmp.eq.s32.totalorder %s11, 1
    %p50 = scmp.ne.s32.totalorder %s45, %s47
    %p51 = scmp.eq.s32.totalorder %s11, 0
    %p52 = por %p50, %p51
    %p53 = scmp.ne.s32.totalorder %s45, %s47
    %p54 = scmp.eq.s32.totalorder %s16, 1
    %p55 = por %p53, %p54
    %p56 = scmp.ne.s32.totalorder %s47, %s48
    %p57 = scmp.eq.s32.totalorder %s16, 0
    %p58 = por %p56, %p57
    %p59 = scmp.ne.s32.totalorder %s47, %s48
    %p60 = scmp.eq.s32.totalorder %s17, 1
    %p61 = por %p59, %p60
    %p63 = scmp.ne.s32.totalorder %s48, %s62
    %p64 = scmp.eq.s32.totalorder %s17, 0
    %p65 = por %p63, %p64
    %s67 = sadd.s32 %s66, 1
    %p70 = scmp.eq.s32.totalorder %s11, 1
    %p71 = scmp.ne.s32.totalorder %s66, %s68
    %p72 = scmp.eq.s32.totalorder %s11, 0
    %p73 = por %p71, %p72
    %p74 = scmp.ne.s32.totalorder %s66, %s68
    %p75 = scmp.eq.s32.totalorder %s16, 1
    %p76 = por %p74, %p75
    %p77 = scmp.ne.s32.totalorder %s68, %s69
    %p78 = scmp.eq.s32.totalorder %s16, 0
    %p79 = por %p77, %p78
    %p80 = scmp.ne.s32.totalorder %s68, %s69
    %p81 = scmp.eq.s32.totalorder %s17, 1
    %p82 = por %p80, %p81
    %p84 = scmp.ne.s32.totalorder %s69, %s83
    %p85 = scmp.eq.s32.totalorder %s17, 0
    %p86 = por %p84, %p85
    %s88 = sadd.s32 %s87, 1
    %p91 = scmp.eq.s32.totalorder %s11, 1
    %p92 = scmp.ne.s32.totalorder %s87, %s89
    %p93 = scmp.eq.s32.totalorder %s11, 0
    %p94 = por %p92, %p93
    %p95 = scmp.ne.s32.totalorder %s87, %s89
    %p96 = scmp.eq.s32.totalorder %s16, 1
    %p97 = por %p95, %p96
    %p98 = scmp.ne.s32.totalorder %s89, %s90
    %p99 = scmp.eq.s32.totalorder %s16, 0
    %p100 = por %p98, %p99
    %p101 = scmp.ne.s32.totalorder %s89, %s90
    %p102 = scmp.eq.s32.totalorder %s17, 1
    %p103 = por %p101, %p102
    %p105 = scmp.ne.s32.totalorder %s90, %s104
    %p106 = scmp.eq.s32.totalorder %s17, 0
    %p107 = por %p105, %p106
    %s109 = sadd.s32 %s108, 1
    %p112 = scmp.eq.s32.totalorder %s11, 1
    %p113 = scmp.ne.s32.totalorder %s108, %s110
    %p114 = scmp.eq.s32.totalorder %s11, 0
    %p115 = por %p113, %p114
    %p116 = scmp.ne.s32.totalorder %s108, %s110
    %p117 = scmp.eq.s32.totalorder %s16, 1
    %p118 = por %p116, %p117
    %p119 = scmp.ne.s32.totalorder %s110, %s111
    %p120 = scmp.eq.s32.totalorder %s16, 0
    %p121 = por %p119, %p120
    %p122 = scmp.ne.s32.totalorder %s110, %s111
    %p123 = scmp.eq.s32.totalorder %s17, 1
    %p124 = por %p122, %p123
    %p126 = scmp.ne.s32.totalorder %s111, %s125
    %p127 = scmp.eq.s32.totalorder %s17, 0
    %p128 = por %p126, %p127
    %s129 = ssub.s32 %s11, %s18
    %p130 = scmp.eq.s32.totalorder %s129, 0
    %s132 = sadd.s32 %s131, 1
    %s133 = scalar_select %p130, %s131, %s132
    %p136 = pneg %p130
    %p137 = scmp.eq.s32.totalorder %s11, 1
    %p138 = por %p136, %p137
    %p139 = scmp.ne.s32.totalorder %s131, %s134
    %p140 = scmp.eq.s32.totalorder %s11, 0
    %p141 = por %p139, %p140
    %p142 = scmp.ne.s32.totalorder %s131, %s134
    %p143 = scmp.eq.s32.totalorder %s16, 1
    %p144 = por %p142, %p143
    %p145 = scmp.ne.s32.totalorder %s134, %s135
    %p146 = scmp.eq.s32.totalorder %s16, 0
    %p147 = por %p145, %p146
    %p148 = scmp.ne.s32.totalorder %s134, %s135
    %p149 = scmp.eq.s32.totalorder %s17, 1
    %p150 = por %p148, %p149
    %p152 = scmp.ne.s32.totalorder %s135, %s151
    %p153 = scmp.eq.s32.totalorder %s17, 0
    %p154 = por %p152, %p153
    %p155 = scmp.le.s32.totalorder 1, %s11
    %p156 = scmp.lt.s32.totalorder %s11, 3
    %p157 = pnand %p155, %p156
    %p158 = pneg %p157
    // Predicated region
    $region9: #{light_motion_replace_block.3} parent=5 // pred_check
      _
    $region10: #{light_motion_replace_block.3} parent=5 // pred_check_branch
      %160 = sbr.rel (%p157) target = $region12
    $region11: #{light_motion_replace_block.3} parent=5 // pred_region
      %s161 = ssub.s32 %s11, 1
      // Predicated region
      $region13: #{light_motion_replace_block.3} parent=11 // pred_check
        %p162 = pneg %p58
      $region14: #{light_motion_replace_block.3} parent=11 // pred_check_branch
        %164 = sbr.rel (%p162) target = $region16
      $region15: #{light_motion_replace_block.3} parent=11 // pred_region
        _
      $region16: #{light_motion_replace_block.3} parent=11 // pred_fallthru
        _
      // Predicated region
      $region17: #{light_motion_replace_block.3} parent=11 // pred_check
        %p165 = pneg %p79
      $region18: #{light_motion_replace_block.3} parent=11 // pred_check_branch
        %167 = sbr.rel (%p165) target = $region20
      $region19: #{light_motion_replace_block.3} parent=11 // pred_region
        _
      $region20: #{light_motion_replace_block.3} parent=11 // pred_fallthru
        _
      // Predicated region
      $region21: #{light_motion_replace_block.3} parent=11 // pred_check
        %p168 = pneg %p100
      $region22: #{light_motion_replace_block.3} parent=11 // pred_check_branch
        %170 = sbr.rel (%p168) target = $region24
      $region23: #{light_motion_replace_block.3} parent=11 // pred_region
        _
      $region24: #{light_motion_replace_block.3} parent=11 // pred_fallthru
        _
      // Predicated region
      $region25: #{light_motion_replace_block.3} parent=11 // pred_check
        %p171 = pneg %p121
      $region26: #{light_motion_replace_block.3} parent=11 // pred_check_branch
        %173 = sbr.rel (%p171) target = $region28
      $region27: #{light_motion_replace_block.3} parent=11 // pred_region
        _
      $region28: #{light_motion_replace_block.3} parent=11 // pred_fallthru
        _
    $region12: #{light_motion_replace_block.3} parent=5 // pred_fallthru
      _
    %p174 = scmp.lt.s32.totalorder %s11, 2
    // Predicated region
    $region29: #{light_motion_replace_block.3} parent=5 // pred_check
      %p175 = pneg %p174
    $region30: #{light_motion_replace_block.3} parent=5 // pred_check_branch
      %177 = sbr.rel (%p175) target = $region32
    $region31: #{light_motion_replace_block.3} parent=5 // pred_region
      // Predicated region
      $region33: #{light_motion_replace_block.3} parent=31 // pred_check
        %p178 = pneg %p31
      $region34: #{light_motion_replace_block.3} parent=31 // pred_check_branch
        %180 = sbr.rel (%p178) target = $region36
      $region35: #{light_motion_replace_block.3} parent=31 // pred_region
        %p181 = scmp.lt.s32.totalorder %s11, 1
        %s182 = scalar_select %p181, %s11, 1
        %s183 = smul.addr %s182, 128
        %s184 = smul.addr %s183, 8
        %s185 = scalar_lea.vmem %s0, %s184
      $region36: #{light_motion_replace_block.3} parent=31 // pred_fallthru
        _
    $region32: #{light_motion_replace_block.3} parent=5 // pred_fallthru
      _
    %p186 = scmp.le.s32.totalorder 1, %s11
    %p187 = scmp.lt.s32.totalorder %s11, 3
    %p188 = pnand %p186, %p187
    %p189 = pneg %p188
    // Predicated region
    $region37: #{light_motion_replace_block.3} parent=5 // pred_check
      _
    $region38: #{light_motion_replace_block.3} parent=5 // pred_check_branch
      %191 = sbr.rel (%p188) target = $region40
    $region39: #{light_motion_replace_block.3} parent=5 // pred_region
      %s192 = ssub.s32 %s11, 1
      %p193 = scmp.lt.s32.totalorder %s16, 1
      %s194 = scalar_select %p193, %s16, 1
      %s195 = smul.addr %s194, 128
      %s196 = smul.addr %s195, 8
      %s197 = scalar_lea.vmem %s0, %s196
      %p198 = pneg %p37
      %p199 = pneg %p34
      %p200 = pneg %p58
      %p201 = pneg %p55
      %p202 = pneg %p79
      %p203 = pneg %p76
      %p204 = pneg %p100
      %p205 = pneg %p97
      %p206 = pneg %p121
      %p207 = pneg %p118
      %p208 = pneg %p147
      %p209 = pneg %p144
      %p210 = scmp.lt.s32.totalorder %s16, 1
      %s211 = scalar_select %p210, %s16, 1
      %s212 = smul.addr %s211, 128
      %s213 = smul.addr %s212, 8
      %s214 = scalar_lea.vmem %s5, %s213
      %p215 = scmp.lt.s32.totalorder %s16, 1
      %s216 = scalar_select %p215, %s16, 1
      %s217 = smul.addr %s216, 128
      %s218 = smul.addr %s217, 8
      %s219 = scalar_lea.vmem %s0, %s218
      %p220 = scmp.lt.s32.totalorder %s16, 1
      %s221 = scalar_select %p220, %s16, 1
      %s222 = smul.addr %s221, 128
      %s223 = smul.addr %s222, 8
      %s224 = scalar_lea.vmem %s5, %s223
      %v225 = vld [vmem:[%s219] sm:$0xff]
      %v226 = vld [vmem:[%s219 + $0x8] sm:$0xff]
      %v227 = vld [vmem:[%s219 + $0x10] sm:$0xff]
      %v228 = vld [vmem:[%s219 + $0x18] sm:$0xff]
      %v229 = vld [vmem:[%s219 + $0x20] sm:$0xff]
      %v230 = vld [vmem:[%s219 + $0x28] sm:$0xff]
      %v231 = vld [vmem:[%s219 + $0x30] sm:$0xff]
      %v232 = vld [vmem:[%s219 + $0x38] sm:$0xff]
      %v233 = vld [vmem:[%s219 + $0x40] sm:$0xff]
      %v234 = vld [vmem:[%s219 + $0x48] sm:$0xff]
      %v235 = vld [vmem:[%s219 + $0x50] sm:$0xff]
      %v236 = vld [vmem:[%s219 + $0x58] sm:$0xff]
      %v237 = vld [vmem:[%s219 + $0x60] sm:$0xff]
      %v238 = vld [vmem:[%s219 + $0x68] sm:$0xff]
      %v239 = vld [vmem:[%s219 + $0x70] sm:$0xff]
      %v240 = vld [vmem:[%s219 + $0x78] sm:$0xff]
      %v241 = vld [vmem:[%s219 + $0x80] sm:$0xff]
      %v242 = vld [vmem:[%s219 + $0x88] sm:$0xff]
      %v243 = vld [vmem:[%s219 + $0x90] sm:$0xff]
      %v244 = vld [vmem:[%s219 + $0x98] sm:$0xff]
      %v245 = vld [vmem:[%s219 + $0xa0] sm:$0xff]
      %v246 = vld [vmem:[%s219 + $0xa8] sm:$0xff]
      %v247 = vld [vmem:[%s219 + $0xb0] sm:$0xff]
      %v248 = vld [vmem:[%s219 + $0xb8] sm:$0xff]
      %v249 = vld [vmem:[%s219 + $0xc0] sm:$0xff]
      %v250 = vld [vmem:[%s219 + $0xc8] sm:$0xff]
      %v251 = vld [vmem:[%s219 + $0xd0] sm:$0xff]
      %v252 = vld [vmem:[%s219 + $0xd8] sm:$0xff]
      %v253 = vld [vmem:[%s219 + $0xe0] sm:$0xff]
      %v254 = vld [vmem:[%s219 + $0xe8] sm:$0xff]
      %v255 = vld [vmem:[%s219 + $0xf0] sm:$0xff]
      %v256 = vld [vmem:[%s219 + $0xf8] sm:$0xff]
      %v257 = vld [vmem:[%s219 + $0x100] sm:$0xff]
      %v258 = vld [vmem:[%s219 + $0x108] sm:$0xff]
      %v259 = vld [vmem:[%s219 + $0x110] sm:$0xff]
      %v260 = vld [vmem:[%s219 + $0x118] sm:$0xff]
      %v261 = vld [vmem:[%s219 + $0x120] sm:$0xff]
      %v262 = vld [vmem:[%s219 + $0x128] sm:$0xff]
      %v263 = vld [vmem:[%s219 + $0x130] sm:$0xff]
      %v264 = vld [vmem:[%s219 + $0x138] sm:$0xff]
      %v265 = vld [vmem:[%s219 + $0x140] sm:$0xff]
      %v266 = vld [vmem:[%s219 + $0x148] sm:$0xff]
      %v267 = vld [vmem:[%s219 + $0x150] sm:$0xff]
      %v268 = vld [vmem:[%s219 + $0x158] sm:$0xff]
      %v269 = vld [vmem:[%s219 + $0x160] sm:$0xff]
      %v270 = vld [vmem:[%s219 + $0x168] sm:$0xff]
      %v271 = vld [vmem:[%s219 + $0x170] sm:$0xff]
      %v272 = vld [vmem:[%s219 + $0x178] sm:$0xff]
      %v273 = vld [vmem:[%s219 + $0x180] sm:$0xff]
      %v274 = vld [vmem:[%s219 + $0x188] sm:$0xff]
      %v275 = vld [vmem:[%s219 + $0x190] sm:$0xff]
      %v276 = vld [vmem:[%s219 + $0x198] sm:$0xff]
      %v277 = vld [vmem:[%s219 + $0x1a0] sm:$0xff]
      %v278 = vld [vmem:[%s219 + $0x1a8] sm:$0xff]
      %v279 = vld [vmem:[%s219 + $0x1b0] sm:$0xff]
      %v280 = vld [vmem:[%s219 + $0x1b8] sm:$0xff]
      %v281 = vld [vmem:[%s219 + $0x1c0] sm:$0xff]
      %v282 = vld [vmem:[%s219 + $0x1c8] sm:$0xff]
      %v283 = vld [vmem:[%s219 + $0x1d0] sm:$0xff]
      %v284 = vld [vmem:[%s219 + $0x1d8] sm:$0xff]
      %v285 = vld [vmem:[%s219 + $0x1e0] sm:$0xff]
      %v286 = vld [vmem:[%s219 + $0x1e8] sm:$0xff]
      %v287 = vld [vmem:[%s219 + $0x1f0] sm:$0xff]
      %v288 = vld [vmem:[%s219 + $0x1f8] sm:$0xff]
      %v289 = vld [vmem:[%s219 + $0x200] sm:$0xff]
      %v290 = vld [vmem:[%s219 + $0x208] sm:$0xff]
      %v291 = vld [vmem:[%s219 + $0x210] sm:$0xff]
      %v292 = vld [vmem:[%s219 + $0x218] sm:$0xff]
      %v293 = vld [vmem:[%s219 + $0x220] sm:$0xff]
      %v294 = vld [vmem:[%s219 + $0x228] sm:$0xff]
      %v295 = vld [vmem:[%s219 + $0x230] sm:$0xff]
      %v296 = vld [vmem:[%s219 + $0x238] sm:$0xff]
      %v297 = vld [vmem:[%s219 + $0x240] sm:$0xff]
      %v298 = vld [vmem:[%s219 + $0x248] sm:$0xff]
      %v299 = vld [vmem:[%s219 + $0x250] sm:$0xff]
      %v300 = vld [vmem:[%s219 + $0x258] sm:$0xff]
      %v301 = vld [vmem:[%s219 + $0x260] sm:$0xff]
      %v302 = vld [vmem:[%s219 + $0x268] sm:$0xff]
      %v303 = vld [vmem:[%s219 + $0x270] sm:$0xff]
      %v304 = vld [vmem:[%s219 + $0x278] sm:$0xff]
      %v305 = vld [vmem:[%s219 + $0x280] sm:$0xff]
      %v306 = vld [vmem:[%s219 + $0x288] sm:$0xff]
      %v307 = vld [vmem:[%s219 + $0x290] sm:$0xff]
      %v308 = vld [vmem:[%s219 + $0x298] sm:$0xff]
      %v309 = vld [vmem:[%s219 + $0x2a0] sm:$0xff]
      %v310 = vld [vmem:[%s219 + $0x2a8] sm:$0xff]
      %v311 = vld [vmem:[%s219 + $0x2b0] sm:$0xff]
      %v312 = vld [vmem:[%s219 + $0x2b8] sm:$0xff]
      %v313 = vld [vmem:[%s219 + $0x2c0] sm:$0xff]
      %v314 = vld [vmem:[%s219 + $0x2c8] sm:$0xff]
      %v315 = vld [vmem:[%s219 + $0x2d0] sm:$0xff]
      %v316 = vld [vmem:[%s219 + $0x2d8] sm:$0xff]
      %v317 = vld [vmem:[%s219 + $0x2e0] sm:$0xff]
      %v318 = vld [vmem:[%s219 + $0x2e8] sm:$0xff]
      %v319 = vld [vmem:[%s219 + $0x2f0] sm:$0xff]
      %v320 = vld [vmem:[%s219 + $0x2f8] sm:$0xff]
      %v321 = vld [vmem:[%s219 + $0x300] sm:$0xff]
      %v322 = vld [vmem:[%s219 + $0x308] sm:$0xff]
      %v323 = vld [vmem:[%s219 + $0x310] sm:$0xff]
      %v324 = vld [vmem:[%s219 + $0x318] sm:$0xff]
      %v325 = vld [vmem:[%s219 + $0x320] sm:$0xff]
      %v326 = vld [vmem:[%s219 + $0x328] sm:$0xff]
      %v327 = vld [vmem:[%s219 + $0x330] sm:$0xff]
      %v328 = vld [vmem:[%s219 + $0x338] sm:$0xff]
      %v329 = vld [vmem:[%s219 + $0x340] sm:$0xff]
      %v330 = vld [vmem:[%s219 + $0x348] sm:$0xff]
      %v331 = vld [vmem:[%s219 + $0x350] sm:$0xff]
      %v332 = vld [vmem:[%s219 + $0x358] sm:$0xff]
      %v333 = vld [vmem:[%s219 + $0x360] sm:$0xff]
      %v334 = vld [vmem:[%s219 + $0x368] sm:$0xff]
      %v335 = vld [vmem:[%s219 + $0x370] sm:$0xff]
      %v336 = vld [vmem:[%s219 + $0x378] sm:$0xff]
      %v337 = vld [vmem:[%s219 + $0x380] sm:$0xff]
      %v338 = vld [vmem:[%s219 + $0x388] sm:$0xff]
      %v339 = vld [vmem:[%s219 + $0x390] sm:$0xff]
      %v340 = vld [vmem:[%s219 + $0x398] sm:$0xff]
      %v341 = vld [vmem:[%s219 + $0x3a0] sm:$0xff]
      %v342 = vld [vmem:[%s219 + $0x3a8] sm:$0xff]
      %v343 = vld [vmem:[%s219 + $0x3b0] sm:$0xff]
      %v344 = vld [vmem:[%s219 + $0x3b8] sm:$0xff]
      %v345 = vld [vmem:[%s219 + $0x3c0] sm:$0xff]
      %v346 = vld [vmem:[%s219 + $0x3c8] sm:$0xff]
      %v347 = vld [vmem:[%s219 + $0x3d0] sm:$0xff]
      %v348 = vld [vmem:[%s219 + $0x3d8] sm:$0xff]
      %v349 = vld [vmem:[%s219 + $0x3e0] sm:$0xff]
      %v350 = vld [vmem:[%s219 + $0x3e8] sm:$0xff]
      %v351 = vld [vmem:[%s219 + $0x3f0] sm:$0xff]
      %v352 = vld [vmem:[%s219 + $0x3f8] sm:$0xff]
      %vm449 = vcmask 1040384
      %v450 = vrot.slane %v257, 7
      %v451 = vrot.slane %v258, 7
      %v452 = vsel %vm449, %v450, %v451
      %v453 = vrot.slane %v259, 7
      %v454 = vrot.slane %v260, 7
      %v455 = vsel %vm449, %v453, %v454
      %v456 = vrot.slane %v261, 7
      %v457 = vrot.slane %v262, 7
      %v458 = vsel %vm449, %v456, %v457
      %v459 = vrot.slane %v263, 7
      %v460 = vrot.slane %v264, 7
      %v461 = vsel %vm449, %v459, %v460
      %v462 = vrot.slane %v265, 7
      %v463 = vrot.slane %v266, 7
      %v464 = vsel %vm449, %v462, %v463
      %v465 = vrot.slane %v267, 7
      %v466 = vrot.slane %v268, 7
      %v467 = vsel %vm449, %v465, %v466
      %v468 = vrot.slane %v269, 7
      %v469 = vrot.slane %v270, 7
      %v470 = vsel %vm449, %v468, %v469
      %v471 = vrot.slane %v271, 7
      %v472 = vrot.slane %v272, 7
      %v473 = vsel %vm449, %v471, %v472
      %v474 = vrot.slane %v273, 7
      %v475 = vrot.slane %v274, 7
      %v476 = vsel %vm449, %v474, %v475
      %v477 = vrot.slane %v275, 7
      %v478 = vrot.slane %v276, 7
      %v479 = vsel %vm449, %v477, %v478
      %v480 = vrot.slane %v277, 7
      %v481 = vrot.slane %v278, 7
      %v482 = vsel %vm449, %v480, %v481
      %v483 = vrot.slane %v279, 7
      %v484 = vrot.slane %v280, 7
      %v485 = vsel %vm449, %v483, %v484
      %v486 = vrot.slane %v281, 7
      %v487 = vrot.slane %v282, 7
      %v488 = vsel %vm449, %v486, %v487
      %v489 = vrot.slane %v283, 7
      %v490 = vrot.slane %v284, 7
      %v491 = vsel %vm449, %v489, %v490
      %v492 = vrot.slane %v285, 7
      %v493 = vrot.slane %v286, 7
      %v494 = vsel %vm449, %v492, %v493
      %v495 = vrot.slane %v287, 7
      %v496 = vrot.slane %v288, 7
      %v497 = vsel %vm449, %v495, %v496
      %v498 = vrot.slane %v289, 7
      %v499 = vrot.slane %v290, 7
      %v500 = vsel %vm449, %v498, %v499
      %v501 = vrot.slane %v291, 7
      %v502 = vrot.slane %v292, 7
      %v503 = vsel %vm449, %v501, %v502
      %v504 = vrot.slane %v293, 7
      %v505 = vrot.slane %v294, 7
      %v506 = vsel %vm449, %v504, %v505
      %v507 = vrot.slane %v295, 7
      %v508 = vrot.slane %v296, 7
      %v509 = vsel %vm449, %v507, %v508
      %v510 = vrot.slane %v297, 7
      %v511 = vrot.slane %v298, 7
      %v512 = vsel %vm449, %v510, %v511
      %v513 = vrot.slane %v299, 7
      %v514 = vrot.slane %v300, 7
      %v515 = vsel %vm449, %v513, %v514
      %v516 = vrot.slane %v301, 7
      %v517 = vrot.slane %v302, 7
      %v518 = vsel %vm449, %v516, %v517
      %v519 = vrot.slane %v303, 7
      %v520 = vrot.slane %v304, 7
      %v521 = vsel %vm449, %v519, %v520
      %v522 = vrot.slane %v305, 7
      %v523 = vrot.slane %v306, 7
      %v524 = vsel %vm449, %v522, %v523
      %v525 = vrot.slane %v307, 7
      %v526 = vrot.slane %v308, 7
      %v527 = vsel %vm449, %v525, %v526
      %v528 = vrot.slane %v309, 7
      %v529 = vrot.slane %v310, 7
      %v530 = vsel %vm449, %v528, %v529
      %v531 = vrot.slane %v311, 7
      %v532 = vrot.slane %v312, 7
      %v533 = vsel %vm449, %v531, %v532
      %v534 = vrot.slane %v313, 7
      %v535 = vrot.slane %v314, 7
      %v536 = vsel %vm449, %v534, %v535
      %v537 = vrot.slane %v315, 7
      %v538 = vrot.slane %v316, 7
      %v539 = vsel %vm449, %v537, %v538
      %v540 = vrot.slane %v317, 7
      %v541 = vrot.slane %v318, 7
      %v542 = vsel %vm449, %v540, %v541
      %v543 = vrot.slane %v319, 7
      %v544 = vrot.slane %v320, 7
      %v545 = vsel %vm449, %v543, %v544
      %v546 = vrot.slane %v321, 7
      %v547 = vrot.slane %v322, 7
      %v548 = vsel %vm449, %v546, %v547
      %v549 = vrot.slane %v323, 7
      %v550 = vrot.slane %v324, 7
      %v551 = vsel %vm449, %v549, %v550
      %v552 = vrot.slane %v325, 7
      %v553 = vrot.slane %v326, 7
      %v554 = vsel %vm449, %v552, %v553
      %v555 = vrot.slane %v327, 7
      %v556 = vrot.slane %v328, 7
      %v557 = vsel %vm449, %v555, %v556
      %v558 = vrot.slane %v329, 7
      %v559 = vrot.slane %v330, 7
      %v560 = vsel %vm449, %v558, %v559
      %v561 = vrot.slane %v331, 7
      %v562 = vrot.slane %v332, 7
      %v563 = vsel %vm449, %v561, %v562
      %v564 = vrot.slane %v333, 7
      %v565 = vrot.slane %v334, 7
      %v566 = vsel %vm449, %v564, %v565
      %v567 = vrot.slane %v335, 7
      %v568 = vrot.slane %v336, 7
      %v569 = vsel %vm449, %v567, %v568
      %v570 = vrot.slane %v337, 7
      %v571 = vrot.slane %v338, 7
      %v572 = vsel %vm449, %v570, %v571
      %v573 = vrot.slane %v339, 7
      %v574 = vrot.slane %v340, 7
      %v575 = vsel %vm449, %v573, %v574
      %v576 = vrot.slane %v341, 7
      %v577 = vrot.slane %v342, 7
      %v578 = vsel %vm449, %v576, %v577
      %v579 = vrot.slane %v343, 7
      %v580 = vrot.slane %v344, 7
      %v581 = vsel %vm449, %v579, %v580
      %v582 = vrot.slane %v345, 7
      %v583 = vrot.slane %v346, 7
      %v584 = vsel %vm449, %v582, %v583
      %v585 = vrot.slane %v347, 7
      %v586 = vrot.slane %v348, 7
      %v587 = vsel %vm449, %v585, %v586
      %v588 = vrot.slane %v349, 7
      %v589 = vrot.slane %v350, 7
      %v590 = vsel %vm449, %v588, %v589
      %v591 = vrot.slane %v351, 7
      %v592 = vrot.slane %v352, 7
      %v593 = vsel %vm449, %v591, %v592
      %v690 = vsel %vm449, 0.0, %v450
      %v691 = vsel %vm449, 0.0, %v453
      %v692 = vsel %vm449, 0.0, %v456
      %v693 = vsel %vm449, 0.0, %v459
      %v694 = vsel %vm449, 0.0, %v462
      %v695 = vsel %vm449, 0.0, %v465
      %v696 = vsel %vm449, 0.0, %v468
      %v697 = vsel %vm449, 0.0, %v471
      %v698 = vsel %vm449, 0.0, %v474
      %v699 = vsel %vm449, 0.0, %v477
      %v700 = vsel %vm449, 0.0, %v480
      %v701 = vsel %vm449, 0.0, %v483
      %v702 = vsel %vm449, 0.0, %v486
      %v703 = vsel %vm449, 0.0, %v489
      %v704 = vsel %vm449, 0.0, %v492
      %v705 = vsel %vm449, 0.0, %v495
      %v706 = vsel %vm449, 0.0, %v498
      %v707 = vsel %vm449, 0.0, %v501
      %v708 = vsel %vm449, 0.0, %v504
      %v709 = vsel %vm449, 0.0, %v507
      %v710 = vsel %vm449, 0.0, %v510
      %v711 = vsel %vm449, 0.0, %v513
      %v712 = vsel %vm449, 0.0, %v516
      %v713 = vsel %vm449, 0.0, %v519
      %v714 = vsel %vm449, 0.0, %v522
      %v715 = vsel %vm449, 0.0, %v525
      %v716 = vsel %vm449, 0.0, %v528
      %v717 = vsel %vm449, 0.0, %v531
      %v718 = vsel %vm449, 0.0, %v534
      %v719 = vsel %vm449, 0.0, %v537
      %v720 = vsel %vm449, 0.0, %v540
      %v721 = vsel %vm449, 0.0, %v543
      %v722 = vsel %vm449, 0.0, %v546
      %v723 = vsel %vm449, 0.0, %v549
      %v724 = vsel %vm449, 0.0, %v552
      %v725 = vsel %vm449, 0.0, %v555
      %v726 = vsel %vm449, 0.0, %v558
      %v727 = vsel %vm449, 0.0, %v561
      %v728 = vsel %vm449, 0.0, %v564
      %v729 = vsel %vm449, 0.0, %v567
      %v730 = vsel %vm449, 0.0, %v570
      %v731 = vsel %vm449, 0.0, %v573
      %v732 = vsel %vm449, 0.0, %v576
      %v733 = vsel %vm449, 0.0, %v579
      %v734 = vsel %vm449, 0.0, %v582
      %v735 = vsel %vm449, 0.0, %v585
      %v736 = vsel %vm449, 0.0, %v588
      %v737 = vsel %vm449, 0.0, %v591
      %vm738 = vcmask 1046528
      %v739 = vrot.slane %v257, 1
      %v740 = vrot.slane %v258, 1
      %v741 = vsel %vm738, %v739, %v740
      %v742 = vrot.slane %v259, 1
      %v743 = vrot.slane %v260, 1
      %v744 = vsel %vm738, %v742, %v743
      %v745 = vrot.slane %v261, 1
      %v746 = vrot.slane %v262, 1
      %v747 = vsel %vm738, %v745, %v746
      %v748 = vrot.slane %v263, 1
      %v749 = vrot.slane %v264, 1
      %v750 = vsel %vm738, %v748, %v749
      %v751 = vrot.slane %v265, 1
      %v752 = vrot.slane %v266, 1
      %v753 = vsel %vm738, %v751, %v752
      %v754 = vrot.slane %v267, 1
      %v755 = vrot.slane %v268, 1
      %v756 = vsel %vm738, %v754, %v755
      %v757 = vrot.slane %v269, 1
      %v758 = vrot.slane %v270, 1
      %v759 = vsel %vm738, %v757, %v758
      %v760 = vrot.slane %v271, 1
      %v761 = vrot.slane %v272, 1
      %v762 = vsel %vm738, %v760, %v761
      %v763 = vrot.slane %v273, 1
      %v764 = vrot.slane %v274, 1
      %v765 = vsel %vm738, %v763, %v764
      %v766 = vrot.slane %v275, 1
      %v767 = vrot.slane %v276, 1
      %v768 = vsel %vm738, %v766, %v767
      %v769 = vrot.slane %v277, 1
      %v770 = vrot.slane %v278, 1
      %v771 = vsel %vm738, %v769, %v770
      %v772 = vrot.slane %v279, 1
      %v773 = vrot.slane %v280, 1
      %v774 = vsel %vm738, %v772, %v773
      %v775 = vrot.slane %v281, 1
      %v776 = vrot.slane %v282, 1
      %v777 = vsel %vm738, %v775, %v776
      %v778 = vrot.slane %v283, 1
      %v779 = vrot.slane %v284, 1
      %v780 = vsel %vm738, %v778, %v779
      %v781 = vrot.slane %v285, 1
      %v782 = vrot.slane %v286, 1
      %v783 = vsel %vm738, %v781, %v782
      %v784 = vrot.slane %v287, 1
      %v785 = vrot.slane %v288, 1
      %v786 = vsel %vm738, %v784, %v785
      %v787 = vrot.slane %v289, 1
      %v788 = vrot.slane %v290, 1
      %v789 = vsel %vm738, %v787, %v788
      %v790 = vrot.slane %v291, 1
      %v791 = vrot.slane %v292, 1
      %v792 = vsel %vm738, %v790, %v791
      %v793 = vrot.slane %v293, 1
      %v794 = vrot.slane %v294, 1
      %v795 = vsel %vm738, %v793, %v794
      %v796 = vrot.slane %v295, 1
      %v797 = vrot.slane %v296, 1
      %v798 = vsel %vm738, %v796, %v797
      %v799 = vrot.slane %v297, 1
      %v800 = vrot.slane %v298, 1
      %v801 = vsel %vm738, %v799, %v800
      %v802 = vrot.slane %v299, 1
      %v803 = vrot.slane %v300, 1
      %v804 = vsel %vm738, %v802, %v803
      %v805 = vrot.slane %v301, 1
      %v806 = vrot.slane %v302, 1
      %v807 = vsel %vm738, %v805, %v806
      %v808 = vrot.slane %v303, 1
      %v809 = vrot.slane %v304, 1
      %v810 = vsel %vm738, %v808, %v809
      %v811 = vrot.slane %v305, 1
      %v812 = vrot.slane %v306, 1
      %v813 = vsel %vm738, %v811, %v812
      %v814 = vrot.slane %v307, 1
      %v815 = vrot.slane %v308, 1
      %v816 = vsel %vm738, %v814, %v815
      %v817 = vrot.slane %v309, 1
      %v818 = vrot.slane %v310, 1
      %v819 = vsel %vm738, %v817, %v818
      %v820 = vrot.slane %v311, 1
      %v821 = vrot.slane %v312, 1
      %v822 = vsel %vm738, %v820, %v821
      %v823 = vrot.slane %v313, 1
      %v824 = vrot.slane %v314, 1
      %v825 = vsel %vm738, %v823, %v824
      %v826 = vrot.slane %v315, 1
      %v827 = vrot.slane %v316, 1
      %v828 = vsel %vm738, %v826, %v827
      %v829 = vrot.slane %v317, 1
      %v830 = vrot.slane %v318, 1
      %v831 = vsel %vm738, %v829, %v830
      %v832 = vrot.slane %v319, 1
      %v833 = vrot.slane %v320, 1
      %v834 = vsel %vm738, %v832, %v833
      %v835 = vrot.slane %v321, 1
      %v836 = vrot.slane %v322, 1
      %v837 = vsel %vm738, %v835, %v836
      %v838 = vrot.slane %v323, 1
      %v839 = vrot.slane %v324, 1
      %v840 = vsel %vm738, %v838, %v839
      %v841 = vrot.slane %v325, 1
      %v842 = vrot.slane %v326, 1
      %v843 = vsel %vm738, %v841, %v842
      %v844 = vrot.slane %v327, 1
      %v845 = vrot.slane %v328, 1
      %v846 = vsel %vm738, %v844, %v845
      %v847 = vrot.slane %v329, 1
      %v848 = vrot.slane %v330, 1
      %v849 = vsel %vm738, %v847, %v848
      %v850 = vrot.slane %v331, 1
      %v851 = vrot.slane %v332, 1
      %v852 = vsel %vm738, %v850, %v851
      %v853 = vrot.slane %v333, 1
      %v854 = vrot.slane %v334, 1
      %v855 = vsel %vm738, %v853, %v854
      %v856 = vrot.slane %v335, 1
      %v857 = vrot.slane %v336, 1
      %v858 = vsel %vm738, %v856, %v857
      %v859 = vrot.slane %v337, 1
      %v860 = vrot.slane %v338, 1
      %v861 = vsel %vm738, %v859, %v860
      %v862 = vrot.slane %v339, 1
      %v863 = vrot.slane %v340, 1
      %v864 = vsel %vm738, %v862, %v863
      %v865 = vrot.slane %v341, 1
      %v866 = vrot.slane %v342, 1
      %v867 = vsel %vm738, %v865, %v866
      %v868 = vrot.slane %v343, 1
      %v869 = vrot.slane %v344, 1
      %v870 = vsel %vm738, %v868, %v869
      %v871 = vrot.slane %v345, 1
      %v872 = vrot.slane %v346, 1
      %v873 = vsel %vm738, %v871, %v872
      %v874 = vrot.slane %v347, 1
      %v875 = vrot.slane %v348, 1
      %v876 = vsel %vm738, %v874, %v875
      %v877 = vrot.slane %v349, 1
      %v878 = vrot.slane %v350, 1
      %v879 = vsel %vm738, %v877, %v878
      %v880 = vrot.slane %v351, 1
      %v881 = vrot.slane %v352, 1
      %v882 = vsel %vm738, %v880, %v881
      %v931 = vsel %vm738, %v740, 0.0
      %v932 = vsel %vm738, %v743, 0.0
      %v933 = vsel %vm738, %v746, 0.0
      %v934 = vsel %vm738, %v749, 0.0
      %v935 = vsel %vm738, %v752, 0.0
      %v936 = vsel %vm738, %v755, 0.0
      %v937 = vsel %vm738, %v758, 0.0
      %v938 = vsel %vm738, %v761, 0.0
      %v939 = vsel %vm738, %v764, 0.0
      %v940 = vsel %vm738, %v767, 0.0
      %v941 = vsel %vm738, %v770, 0.0
      %v942 = vsel %vm738, %v773, 0.0
      %v943 = vsel %vm738, %v776, 0.0
      %v944 = vsel %vm738, %v779, 0.0
      %v945 = vsel %vm738, %v782, 0.0
      %v946 = vsel %vm738, %v785, 0.0
      %v947 = vsel %vm738, %v788, 0.0
      %v948 = vsel %vm738, %v791, 0.0
      %v949 = vsel %vm738, %v794, 0.0
      %v950 = vsel %vm738, %v797, 0.0
      %v951 = vsel %vm738, %v800, 0.0
      %v952 = vsel %vm738, %v803, 0.0
      %v953 = vsel %vm738, %v806, 0.0
      %v954 = vsel %vm738, %v809, 0.0
      %v955 = vsel %vm738, %v812, 0.0
      %v956 = vsel %vm738, %v815, 0.0
      %v957 = vsel %vm738, %v818, 0.0
      %v958 = vsel %vm738, %v821, 0.0
      %v959 = vsel %vm738, %v824, 0.0
      %v960 = vsel %vm738, %v827, 0.0
      %v961 = vsel %vm738, %v830, 0.0
      %v962 = vsel %vm738, %v833, 0.0
      %v963 = vsel %vm738, %v836, 0.0
      %v964 = vsel %vm738, %v839, 0.0
      %v965 = vsel %vm738, %v842, 0.0
      %v966 = vsel %vm738, %v845, 0.0
      %v967 = vsel %vm738, %v848, 0.0
      %v968 = vsel %vm738, %v851, 0.0
      %v969 = vsel %vm738, %v854, 0.0
      %v970 = vsel %vm738, %v857, 0.0
      %v971 = vsel %vm738, %v860, 0.0
      %v972 = vsel %vm738, %v863, 0.0
      %v973 = vsel %vm738, %v866, 0.0
      %v974 = vsel %vm738, %v869, 0.0
      %v975 = vsel %vm738, %v872, 0.0
      %v976 = vsel %vm738, %v875, 0.0
      %v977 = vsel %vm738, %v878, 0.0
      %v978 = vsel %vm738, %v881, 0.0
      %979 = vrot.lane.b32.xlu0 %v257, 4
      %v980 = vpop.permute.xlu0 %979
      %981 = vrot.lane.b32.xlu0 %v258, 4
      %v982 = vpop.permute.xlu0 %981
      %983 = vrot.lane.b32.xlu0 %v259, 4
      %v984 = vpop.permute.xlu0 %983
      %985 = vrot.lane.b32.xlu0 %v260, 4
      %v986 = vpop.permute.xlu0 %985
      %987 = vrot.lane.b32.xlu0 %v261, 4
      %v988 = vpop.permute.xlu0 %987
      %989 = vrot.lane.b32.xlu0 %v262, 4
      %v990 = vpop.permute.xlu0 %989
      %991 = vrot.lane.b32.xlu0 %v263, 4
      %v992 = vpop.permute.xlu0 %991
      %993 = vrot.lane.b32.xlu0 %v264, 4
      %v994 = vpop.permute.xlu0 %993
      %995 = vrot.lane.b32.xlu0 %v265, 4
      %v996 = vpop.permute.xlu0 %995
      %997 = vrot.lane.b32.xlu0 %v266, 4
      %v998 = vpop.permute.xlu0 %997
      %999 = vrot.lane.b32.xlu0 %v267, 4
      %v1000 = vpop.permute.xlu0 %999
      %1001 = vrot.lane.b32.xlu0 %v268, 4
      %v1002 = vpop.permute.xlu0 %1001
      %1003 = vrot.lane.b32.xlu0 %v269, 4
      %v1004 = vpop.permute.xlu0 %1003
      %1005 = vrot.lane.b32.xlu0 %v270, 4
      %v1006 = vpop.permute.xlu0 %1005
      %1007 = vrot.lane.b32.xlu0 %v271, 4
      %v1008 = vpop.permute.xlu0 %1007
      %1009 = vrot.lane.b32.xlu0 %v272, 4
      %v1010 = vpop.permute.xlu0 %1009
      %1011 = vrot.lane.b32.xlu0 %v273, 4
      %v1012 = vpop.permute.xlu0 %1011
      %1013 = vrot.lane.b32.xlu0 %v274, 4
      %v1014 = vpop.permute.xlu0 %1013
      %1015 = vrot.lane.b32.xlu0 %v275, 4
      %v1016 = vpop.permute.xlu0 %1015
      %1017 = vrot.lane.b32.xlu0 %v276, 4
      %v1018 = vpop.permute.xlu0 %1017
      %1019 = vrot.lane.b32.xlu0 %v277, 4
      %v1020 = vpop.permute.xlu0 %1019
      %1021 = vrot.lane.b32.xlu0 %v278, 4
      %v1022 = vpop.permute.xlu0 %1021
      %1023 = vrot.lane.b32.xlu0 %v279, 4
      %v1024 = vpop.permute.xlu0 %1023
      %1025 = vrot.lane.b32.xlu0 %v280, 4
      %v1026 = vpop.permute.xlu0 %1025
      %1027 = vrot.lane.b32.xlu0 %v281, 4
      %v1028 = vpop.permute.xlu0 %1027
      %1029 = vrot.lane.b32.xlu0 %v282, 4
      %v1030 = vpop.permute.xlu0 %1029
      %1031 = vrot.lane.b32.xlu0 %v283, 4
      %v1032 = vpop.permute.xlu0 %1031
      %1033 = vrot.lane.b32.xlu0 %v284, 4
      %v1034 = vpop.permute.xlu0 %1033
      %1035 = vrot.lane.b32.xlu0 %v285, 4
      %v1036 = vpop.permute.xlu0 %1035
      %1037 = vrot.lane.b32.xlu0 %v286, 4
      %v1038 = vpop.permute.xlu0 %1037
      %1039 = vrot.lane.b32.xlu0 %v287, 4
      %v1040 = vpop.permute.xlu0 %1039
      %1041 = vrot.lane.b32.xlu0 %v288, 4
      %v1042 = vpop.permute.xlu0 %1041
      %1043 = vrot.lane.b32.xlu0 %v289, 4
      %v1044 = vpop.permute.xlu0 %1043
      %1045 = vrot.lane.b32.xlu0 %v290, 4
      %v1046 = vpop.permute.xlu0 %1045
      %1047 = vrot.lane.b32.xlu0 %v291, 4
      %v1048 = vpop.permute.xlu0 %1047
      %1049 = vrot.lane.b32.xlu0 %v292, 4
      %v1050 = vpop.permute.xlu0 %1049
      %1051 = vrot.lane.b32.xlu0 %v293, 4
      %v1052 = vpop.permute.xlu0 %1051
      %1053 = vrot.lane.b32.xlu0 %v294, 4
      %v1054 = vpop.permute.xlu0 %1053
      %1055 = vrot.lane.b32.xlu0 %v295, 4
      %v1056 = vpop.permute.xlu0 %1055
      %1057 = vrot.lane.b32.xlu0 %v296, 4
      %v1058 = vpop.permute.xlu0 %1057
      %1059 = vrot.lane.b32.xlu0 %v297, 4
      %v1060 = vpop.permute.xlu0 %1059
      %1061 = vrot.lane.b32.xlu0 %v298, 4
      %v1062 = vpop.permute.xlu0 %1061
      %1063 = vrot.lane.b32.xlu0 %v299, 4
      %v1064 = vpop.permute.xlu0 %1063
      %1065 = vrot.lane.b32.xlu0 %v300, 4
      %v1066 = vpop.permute.xlu0 %1065
      %1067 = vrot.lane.b32.xlu0 %v301, 4
      %v1068 = vpop.permute.xlu0 %1067
      %1069 = vrot.lane.b32.xlu0 %v302, 4
      %v1070 = vpop.permute.xlu0 %1069
      %1071 = vrot.lane.b32.xlu0 %v303, 4
      %v1072 = vpop.permute.xlu0 %1071
      %1073 = vrot.lane.b32.xlu0 %v304, 4
      %v1074 = vpop.permute.xlu0 %1073
      %1075 = vrot.lane.b32.xlu0 %v305, 4
      %v1076 = vpop.permute.xlu0 %1075
      %1077 = vrot.lane.b32.xlu0 %v306, 4
      %v1078 = vpop.permute.xlu0 %1077
      %1079 = vrot.lane.b32.xlu0 %v307, 4
      %v1080 = vpop.permute.xlu0 %1079
      %1081 = vrot.lane.b32.xlu0 %v308, 4
      %v1082 = vpop.permute.xlu0 %1081
      %1083 = vrot.lane.b32.xlu0 %v309, 4
      %v1084 = vpop.permute.xlu0 %1083
      %1085 = vrot.lane.b32.xlu0 %v310, 4
      %v1086 = vpop.permute.xlu0 %1085
      %1087 = vrot.lane.b32.xlu0 %v311, 4
      %v1088 = vpop.permute.xlu0 %1087
      %1089 = vrot.lane.b32.xlu0 %v312, 4
      %v1090 = vpop.permute.xlu0 %1089
      %1091 = vrot.lane.b32.xlu0 %v313, 4
      %v1092 = vpop.permute.xlu0 %1091
      %1093 = vrot.lane.b32.xlu0 %v314, 4
      %v1094 = vpop.permute.xlu0 %1093
      %1095 = vrot.lane.b32.xlu0 %v315, 4
      %v1096 = vpop.permute.xlu0 %1095
      %1097 = vrot.lane.b32.xlu0 %v316, 4
      %v1098 = vpop.permute.xlu0 %1097
      %1099 = vrot.lane.b32.xlu0 %v317, 4
      %v1100 = vpop.permute.xlu0 %1099
      %1101 = vrot.lane.b32.xlu0 %v318, 4
      %v1102 = vpop.permute.xlu0 %1101
      %1103 = vrot.lane.b32.xlu0 %v319, 4
      %v1104 = vpop.permute.xlu0 %1103
      %1105 = vrot.lane.b32.xlu0 %v320, 4
      %v1106 = vpop.permute.xlu0 %1105
      %1107 = vrot.lane.b32.xlu0 %v321, 4
      %v1108 = vpop.permute.xlu0 %1107
      %1109 = vrot.lane.b32.xlu0 %v322, 4
      %v1110 = vpop.permute.xlu0 %1109
      %1111 = vrot.lane.b32.xlu0 %v323, 4
      %v1112 = vpop.permute.xlu0 %1111
      %1113 = vrot.lane.b32.xlu0 %v324, 4
      %v1114 = vpop.permute.xlu0 %1113
      %1115 = vrot.lane.b32.xlu0 %v325, 4
      %v1116 = vpop.permute.xlu0 %1115
      %1117 = vrot.lane.b32.xlu0 %v326, 4
      %v1118 = vpop.permute.xlu0 %1117
      %1119 = vrot.lane.b32.xlu0 %v327, 4
      %v1120 = vpop.permute.xlu0 %1119
      %1121 = vrot.lane.b32.xlu0 %v328, 4
      %v1122 = vpop.permute.xlu0 %1121
      %1123 = vrot.lane.b32.xlu0 %v329, 4
      %v1124 = vpop.permute.xlu0 %1123
      %1125 = vrot.lane.b32.xlu0 %v330, 4
      %v1126 = vpop.permute.xlu0 %1125
      %1127 = vrot.lane.b32.xlu0 %v331, 4
      %v1128 = vpop.permute.xlu0 %1127
      %1129 = vrot.lane.b32.xlu0 %v332, 4
      %v1130 = vpop.permute.xlu0 %1129
      %1131 = vrot.lane.b32.xlu0 %v333, 4
      %v1132 = vpop.permute.xlu0 %1131
      %1133 = vrot.lane.b32.xlu0 %v334, 4
      %v1134 = vpop.permute.xlu0 %1133
      %1135 = vrot.lane.b32.xlu0 %v335, 4
      %v1136 = vpop.permute.xlu0 %1135
      %1137 = vrot.lane.b32.xlu0 %v336, 4
      %v1138 = vpop.permute.xlu0 %1137
      %1139 = vrot.lane.b32.xlu0 %v337, 4
      %v1140 = vpop.permute.xlu0 %1139
      %1141 = vrot.lane.b32.xlu0 %v338, 4
      %v1142 = vpop.permute.xlu0 %1141
      %1143 = vrot.lane.b32.xlu0 %v339, 4
      %v1144 = vpop.permute.xlu0 %1143
      %1145 = vrot.lane.b32.xlu0 %v340, 4
      %v1146 = vpop.permute.xlu0 %1145
      %1147 = vrot.lane.b32.xlu0 %v341, 4
      %v1148 = vpop.permute.xlu0 %1147
      %1149 = vrot.lane.b32.xlu0 %v342, 4
      %v1150 = vpop.permute.xlu0 %1149
      %1151 = vrot.lane.b32.xlu0 %v343, 4
      %v1152 = vpop.permute.xlu0 %1151
      %1153 = vrot.lane.b32.xlu0 %v344, 4
      %v1154 = vpop.permute.xlu0 %1153
      %1155 = vrot.lane.b32.xlu0 %v345, 4
      %v1156 = vpop.permute.xlu0 %1155
      %1157 = vrot.lane.b32.xlu0 %v346, 4
      %v1158 = vpop.permute.xlu0 %1157
      %1159 = vrot.lane.b32.xlu0 %v347, 4
      %v1160 = vpop.permute.xlu0 %1159
      %1161 = vrot.lane.b32.xlu0 %v348, 4
      %v1162 = vpop.permute.xlu0 %1161
      %1163 = vrot.lane.b32.xlu0 %v349, 4
      %v1164 = vpop.permute.xlu0 %1163
      %1165 = vrot.lane.b32.xlu0 %v350, 4
      %v1166 = vpop.permute.xlu0 %1165
      %1167 = vrot.lane.b32.xlu0 %v351, 4
      %v1168 = vpop.permute.xlu0 %1167
      %1169 = vrot.lane.b32.xlu0 %v352, 4
      %v1170 = vpop.permute.xlu0 %1169
      %1315 = vrot.lane.b32.xlu0 %v741, 8
      %v1316 = vpop.permute.xlu0 %1315
      %1317 = vrot.lane.b32.xlu0 %v931, 8
      %v1318 = vpop.permute.xlu0 %1317
      %1319 = vrot.lane.b32.xlu0 %v744, 8
      %v1320 = vpop.permute.xlu0 %1319
      %1321 = vrot.lane.b32.xlu0 %v932, 8
      %v1322 = vpop.permute.xlu0 %1321
      %1323 = vrot.lane.b32.xlu0 %v747, 8
      %v1324 = vpop.permute.xlu0 %1323
      %1325 = vrot.lane.b32.xlu0 %v933, 8
      %v1326 = vpop.permute.xlu0 %1325
      %1327 = vrot.lane.b32.xlu0 %v750, 8
      %v1328 = vpop.permute.xlu0 %1327
      %1329 = vrot.lane.b32.xlu0 %v934, 8
      %v1330 = vpop.permute.xlu0 %1329
      %1331 = vrot.lane.b32.xlu0 %v753, 8
      %v1332 = vpop.permute.xlu0 %1331
      %1333 = vrot.lane.b32.xlu0 %v935, 8
      %v1334 = vpop.permute.xlu0 %1333
      %1335 = vrot.lane.b32.xlu0 %v756, 8
      %v1336 = vpop.permute.xlu0 %1335
      %1337 = vrot.lane.b32.xlu0 %v936, 8
      %v1338 = vpop.permute.xlu0 %1337
      %1339 = vrot.lane.b32.xlu0 %v759, 8
      %v1340 = vpop.permute.xlu0 %1339
      %1341 = vrot.lane.b32.xlu0 %v937, 8
      %v1342 = vpop.permute.xlu0 %1341
      %1343 = vrot.lane.b32.xlu0 %v762, 8
      %v1344 = vpop.permute.xlu0 %1343
      %1345 = vrot.lane.b32.xlu0 %v938, 8
      %v1346 = vpop.permute.xlu0 %1345
      %1347 = vrot.lane.b32.xlu0 %v765, 8
      %v1348 = vpop.permute.xlu0 %1347
      %1349 = vrot.lane.b32.xlu0 %v939, 8
      %v1350 = vpop.permute.xlu0 %1349
      %1351 = vrot.lane.b32.xlu0 %v768, 8
      %v1352 = vpop.permute.xlu0 %1351
      %1353 = vrot.lane.b32.xlu0 %v940, 8
      %v1354 = vpop.permute.xlu0 %1353
      %1355 = vrot.lane.b32.xlu0 %v771, 8
      %v1356 = vpop.permute.xlu0 %1355
      %1357 = vrot.lane.b32.xlu0 %v941, 8
      %v1358 = vpop.permute.xlu0 %1357
      %1359 = vrot.lane.b32.xlu0 %v774, 8
      %v1360 = vpop.permute.xlu0 %1359
      %1361 = vrot.lane.b32.xlu0 %v942, 8
      %v1362 = vpop.permute.xlu0 %1361
      %1363 = vrot.lane.b32.xlu0 %v777, 8
      %v1364 = vpop.permute.xlu0 %1363
      %1365 = vrot.lane.b32.xlu0 %v943, 8
      %v1366 = vpop.permute.xlu0 %1365
      %1367 = vrot.lane.b32.xlu0 %v780, 8
      %v1368 = vpop.permute.xlu0 %1367
      %1369 = vrot.lane.b32.xlu0 %v944, 8
      %v1370 = vpop.permute.xlu0 %1369
      %1371 = vrot.lane.b32.xlu0 %v783, 8
      %v1372 = vpop.permute.xlu0 %1371
      %1373 = vrot.lane.b32.xlu0 %v945, 8
      %v1374 = vpop.permute.xlu0 %1373
      %1375 = vrot.lane.b32.xlu0 %v786, 8
      %v1376 = vpop.permute.xlu0 %1375
      %1377 = vrot.lane.b32.xlu0 %v946, 8
      %v1378 = vpop.permute.xlu0 %1377
      %1379 = vrot.lane.b32.xlu0 %v789, 8
      %v1380 = vpop.permute.xlu0 %1379
      %1381 = vrot.lane.b32.xlu0 %v947, 8
      %v1382 = vpop.permute.xlu0 %1381
      %1383 = vrot.lane.b32.xlu0 %v792, 8
      %v1384 = vpop.permute.xlu0 %1383
      %1385 = vrot.lane.b32.xlu0 %v948, 8
      %v1386 = vpop.permute.xlu0 %1385
      %1387 = vrot.lane.b32.xlu0 %v795, 8
      %v1388 = vpop.permute.xlu0 %1387
      %1389 = vrot.lane.b32.xlu0 %v949, 8
      %v1390 = vpop.permute.xlu0 %1389
      %1391 = vrot.lane.b32.xlu0 %v798, 8
      %v1392 = vpop.permute.xlu0 %1391
      %1393 = vrot.lane.b32.xlu0 %v950, 8
      %v1394 = vpop.permute.xlu0 %1393
      %1395 = vrot.lane.b32.xlu0 %v801, 8
      %v1396 = vpop.permute.xlu0 %1395
      %1397 = vrot.lane.b32.xlu0 %v951, 8
      %v1398 = vpop.permute.xlu0 %1397
      %1399 = vrot.lane.b32.xlu0 %v804, 8
      %v1400 = vpop.permute.xlu0 %1399
      %1401 = vrot.lane.b32.xlu0 %v952, 8
      %v1402 = vpop.permute.xlu0 %1401
      %1403 = vrot.lane.b32.xlu0 %v807, 8
      %v1404 = vpop.permute.xlu0 %1403
      %1405 = vrot.lane.b32.xlu0 %v953, 8
      %v1406 = vpop.permute.xlu0 %1405
      %1407 = vrot.lane.b32.xlu0 %v810, 8
      %v1408 = vpop.permute.xlu0 %1407
      %1409 = vrot.lane.b32.xlu0 %v954, 8
      %v1410 = vpop.permute.xlu0 %1409
      %1411 = vrot.lane.b32.xlu0 %v813, 8
      %v1412 = vpop.permute.xlu0 %1411
      %1413 = vrot.lane.b32.xlu0 %v955, 8
      %v1414 = vpop.permute.xlu0 %1413
      %1415 = vrot.lane.b32.xlu0 %v816, 8
      %v1416 = vpop.permute.xlu0 %1415
      %1417 = vrot.lane.b32.xlu0 %v956, 8
      %v1418 = vpop.permute.xlu0 %1417
      %1419 = vrot.lane.b32.xlu0 %v819, 8
      %v1420 = vpop.permute.xlu0 %1419
      %1421 = vrot.lane.b32.xlu0 %v957, 8
      %v1422 = vpop.permute.xlu0 %1421
      %1423 = vrot.lane.b32.xlu0 %v822, 8
      %v1424 = vpop.permute.xlu0 %1423
      %1425 = vrot.lane.b32.xlu0 %v958, 8
      %v1426 = vpop.permute.xlu0 %1425
      %1427 = vrot.lane.b32.xlu0 %v825, 8
      %v1428 = vpop.permute.xlu0 %1427
      %1429 = vrot.lane.b32.xlu0 %v959, 8
      %v1430 = vpop.permute.xlu0 %1429
      %1431 = vrot.lane.b32.xlu0 %v828, 8
      %v1432 = vpop.permute.xlu0 %1431
      %1433 = vrot.lane.b32.xlu0 %v960, 8
      %v1434 = vpop.permute.xlu0 %1433
      %1435 = vrot.lane.b32.xlu0 %v831, 8
      %v1436 = vpop.permute.xlu0 %1435
      %1437 = vrot.lane.b32.xlu0 %v961, 8
      %v1438 = vpop.permute.xlu0 %1437
      %1439 = vrot.lane.b32.xlu0 %v834, 8
      %v1440 = vpop.permute.xlu0 %1439
      %1441 = vrot.lane.b32.xlu0 %v962, 8
      %v1442 = vpop.permute.xlu0 %1441
      %1443 = vrot.lane.b32.xlu0 %v837, 8
      %v1444 = vpop.permute.xlu0 %1443
      %1445 = vrot.lane.b32.xlu0 %v963, 8
      %v1446 = vpop.permute.xlu0 %1445
      %1447 = vrot.lane.b32.xlu0 %v840, 8
      %v1448 = vpop.permute.xlu0 %1447
      %1449 = vrot.lane.b32.xlu0 %v964, 8
      %v1450 = vpop.permute.xlu0 %1449
      %1451 = vrot.lane.b32.xlu0 %v843, 8
      %v1452 = vpop.permute.xlu0 %1451
      %1453 = vrot.lane.b32.xlu0 %v965, 8
      %v1454 = vpop.permute.xlu0 %1453
      %1455 = vrot.lane.b32.xlu0 %v846, 8
      %v1456 = vpop.permute.xlu0 %1455
      %1457 = vrot.lane.b32.xlu0 %v966, 8
      %v1458 = vpop.permute.xlu0 %1457
      %1459 = vrot.lane.b32.xlu0 %v849, 8
      %v1460 = vpop.permute.xlu0 %1459
      %1461 = vrot.lane.b32.xlu0 %v967, 8
      %v1462 = vpop.permute.xlu0 %1461
      %1463 = vrot.lane.b32.xlu0 %v852, 8
      %v1464 = vpop.permute.xlu0 %1463
      %1465 = vrot.lane.b32.xlu0 %v968, 8
      %v1466 = vpop.permute.xlu0 %1465
      %1467 = vrot.lane.b32.xlu0 %v855, 8
      %v1468 = vpop.permute.xlu0 %1467
      %1469 = vrot.lane.b32.xlu0 %v969, 8
      %v1470 = vpop.permute.xlu0 %1469
      %1471 = vrot.lane.b32.xlu0 %v858, 8
      %v1472 = vpop.permute.xlu0 %1471
      %1473 = vrot.lane.b32.xlu0 %v970, 8
      %v1474 = vpop.permute.xlu0 %1473
      %1475 = vrot.lane.b32.xlu0 %v861, 8
      %v1476 = vpop.permute.xlu0 %1475
      %1477 = vrot.lane.b32.xlu0 %v971, 8
      %v1478 = vpop.permute.xlu0 %1477
      %1479 = vrot.lane.b32.xlu0 %v864, 8
      %v1480 = vpop.permute.xlu0 %1479
      %1481 = vrot.lane.b32.xlu0 %v972, 8
      %v1482 = vpop.permute.xlu0 %1481
      %1483 = vrot.lane.b32.xlu0 %v867, 8
      %v1484 = vpop.permute.xlu0 %1483
      %1485 = vrot.lane.b32.xlu0 %v973, 8
      %v1486 = vpop.permute.xlu0 %1485
      %1487 = vrot.lane.b32.xlu0 %v870, 8
      %v1488 = vpop.permute.xlu0 %1487
      %1489 = vrot.lane.b32.xlu0 %v974, 8
      %v1490 = vpop.permute.xlu0 %1489
      %1491 = vrot.lane.b32.xlu0 %v873, 8
      %v1492 = vpop.permute.xlu0 %1491
      %1493 = vrot.lane.b32.xlu0 %v975, 8
      %v1494 = vpop.permute.xlu0 %1493
      %1495 = vrot.lane.b32.xlu0 %v876, 8
      %v1496 = vpop.permute.xlu0 %1495
      %1497 = vrot.lane.b32.xlu0 %v976, 8
      %v1498 = vpop.permute.xlu0 %1497
      %1499 = vrot.lane.b32.xlu0 %v879, 8
      %v1500 = vpop.permute.xlu0 %1499
      %1501 = vrot.lane.b32.xlu0 %v977, 8
      %v1502 = vpop.permute.xlu0 %1501
      %1503 = vrot.lane.b32.xlu0 %v882, 8
      %v1504 = vpop.permute.xlu0 %1503
      %1505 = vrot.lane.b32.xlu0 %v978, 8
      %v1506 = vpop.permute.xlu0 %1505
      %vm1603 = vcmask 31744
      %v1604 = vsel %vm1603, %v690, %v980
      %v1605 = vsel %vm1603, %v452, %v982
      %v1606 = vsel %vm1603, %v691, %v984
      %v1607 = vsel %vm1603, %v455, %v986
      %v1608 = vsel %vm1603, %v692, %v988
      %v1609 = vsel %vm1603, %v458, %v990
      %v1610 = vsel %vm1603, %v693, %v992
      %v1611 = vsel %vm1603, %v461, %v994
      %v1612 = vsel %vm1603, %v694, %v996
      %v1613 = vsel %vm1603, %v464, %v998
      %v1614 = vsel %vm1603, %v695, %v1000
      %v1615 = vsel %vm1603, %v467, %v1002
      %v1616 = vsel %vm1603, %v696, %v1004
      %v1617 = vsel %vm1603, %v470, %v1006
      %v1618 = vsel %vm1603, %v697, %v1008
      %v1619 = vsel %vm1603, %v473, %v1010
      %v1620 = vsel %vm1603, %v698, %v1012
      %v1621 = vsel %vm1603, %v476, %v1014
      %v1622 = vsel %vm1603, %v699, %v1016
      %v1623 = vsel %vm1603, %v479, %v1018
      %v1624 = vsel %vm1603, %v700, %v1020
      %v1625 = vsel %vm1603, %v482, %v1022
      %v1626 = vsel %vm1603, %v701, %v1024
      %v1627 = vsel %vm1603, %v485, %v1026
      %v1628 = vsel %vm1603, %v702, %v1028
      %v1629 = vsel %vm1603, %v488, %v1030
      %v1630 = vsel %vm1603, %v703, %v1032
      %v1631 = vsel %vm1603, %v491, %v1034
      %v1632 = vsel %vm1603, %v704, %v1036
      %v1633 = vsel %vm1603, %v494, %v1038
      %v1634 = vsel %vm1603, %v705, %v1040
      %v1635 = vsel %vm1603, %v497, %v1042
      %v1636 = vsel %vm1603, %v706, %v1044
      %v1637 = vsel %vm1603, %v500, %v1046
      %v1638 = vsel %vm1603, %v707, %v1048
      %v1639 = vsel %vm1603, %v503, %v1050
      %v1640 = vsel %vm1603, %v708, %v1052
      %v1641 = vsel %vm1603, %v506, %v1054
      %v1642 = vsel %vm1603, %v709, %v1056
      %v1643 = vsel %vm1603, %v509, %v1058
      %v1644 = vsel %vm1603, %v710, %v1060
      %v1645 = vsel %vm1603, %v512, %v1062
      %v1646 = vsel %vm1603, %v711, %v1064
      %v1647 = vsel %vm1603, %v515, %v1066
      %v1648 = vsel %vm1603, %v712, %v1068
      %v1649 = vsel %vm1603, %v518, %v1070
      %v1650 = vsel %vm1603, %v713, %v1072
      %v1651 = vsel %vm1603, %v521, %v1074
      %v1652 = vsel %vm1603, %v714, %v1076
      %v1653 = vsel %vm1603, %v524, %v1078
      %v1654 = vsel %vm1603, %v715, %v1080
      %v1655 = vsel %vm1603, %v527, %v1082
      %v1656 = vsel %vm1603, %v716, %v1084
      %v1657 = vsel %vm1603, %v530, %v1086
      %v1658 = vsel %vm1603, %v717, %v1088
      %v1659 = vsel %vm1603, %v533, %v1090
      %v1660 = vsel %vm1603, %v718, %v1092
      %v1661 = vsel %vm1603, %v536, %v1094
      %v1662 = vsel %vm1603, %v719, %v1096
      %v1663 = vsel %vm1603, %v539, %v1098
      %v1664 = vsel %vm1603, %v720, %v1100
      %v1665 = vsel %vm1603, %v542, %v1102
      %v1666 = vsel %vm1603, %v721, %v1104
      %v1667 = vsel %vm1603, %v545, %v1106
      %v1668 = vsel %vm1603, %v722, %v1108
      %v1669 = vsel %vm1603, %v548, %v1110
      %v1670 = vsel %vm1603, %v723, %v1112
      %v1671 = vsel %vm1603, %v551, %v1114
      %v1672 = vsel %vm1603, %v724, %v1116
      %v1673 = vsel %vm1603, %v554, %v1118
      %v1674 = vsel %vm1603, %v725, %v1120
      %v1675 = vsel %vm1603, %v557, %v1122
      %v1676 = vsel %vm1603, %v726, %v1124
      %v1677 = vsel %vm1603, %v560, %v1126
      %v1678 = vsel %vm1603, %v727, %v1128
      %v1679 = vsel %vm1603, %v563, %v1130
      %v1680 = vsel %vm1603, %v728, %v1132
      %v1681 = vsel %vm1603, %v566, %v1134
      %v1682 = vsel %vm1603, %v729, %v1136
      %v1683 = vsel %vm1603, %v569, %v1138
      %v1684 = vsel %vm1603, %v730, %v1140
      %v1685 = vsel %vm1603, %v572, %v1142
      %v1686 = vsel %vm1603, %v731, %v1144
      %v1687 = vsel %vm1603, %v575, %v1146
      %v1688 = vsel %vm1603, %v732, %v1148
      %v1689 = vsel %vm1603, %v578, %v1150
      %v1690 = vsel %vm1603, %v733, %v1152
      %v1691 = vsel %vm1603, %v581, %v1154
      %v1692 = vsel %vm1603, %v734, %v1156
      %v1693 = vsel %vm1603, %v584, %v1158
      %v1694 = vsel %vm1603, %v735, %v1160
      %v1695 = vsel %vm1603, %v587, %v1162
      %v1696 = vsel %vm1603, %v736, %v1164
      %v1697 = vsel %vm1603, %v590, %v1166
      %v1698 = vsel %vm1603, %v737, %v1168
      %v1699 = vsel %vm1603, %v593, %v1170
      %vm1700 = vcmask 64512
      %v1701 = vsel %vm1700, %v1604, %v1316
      %v1702 = vsel %vm1700, %v1605, %v1318
      %v1703 = vsel %vm1700, %v1606, %v1320
      %v1704 = vsel %vm1700, %v1607, %v1322
      %v1705 = vsel %vm1700, %v1608, %v1324
      %v1706 = vsel %vm1700, %v1609, %v1326
      %v1707 = vsel %vm1700, %v1610, %v1328
      %v1708 = vsel %vm1700, %v1611, %v1330
      %v1709 = vsel %vm1700, %v1612, %v1332
      %v1710 = vsel %vm1700, %v1613, %v1334
      %v1711 = vsel %vm1700, %v1614, %v1336
      %v1712 = vsel %vm1700, %v1615, %v1338
      %v1713 = vsel %vm1700, %v1616, %v1340
      %v1714 = vsel %vm1700, %v1617, %v1342
      %v1715 = vsel %vm1700, %v1618, %v1344
      %v1716 = vsel %vm1700, %v1619, %v1346
      %v1717 = vsel %vm1700, %v1620, %v1348
      %v1718 = vsel %vm1700, %v1621, %v1350
      %v1719 = vsel %vm1700, %v1622, %v1352
      %v1720 = vsel %vm1700, %v1623, %v1354
      %v1721 = vsel %vm1700, %v1624, %v1356
      %v1722 = vsel %vm1700, %v1625, %v1358
      %v1723 = vsel %vm1700, %v1626, %v1360
      %v1724 = vsel %vm1700, %v1627, %v1362
      %v1725 = vsel %vm1700, %v1628, %v1364
      %v1726 = vsel %vm1700, %v1629, %v1366
      %v1727 = vsel %vm1700, %v1630, %v1368
      %v1728 = vsel %vm1700, %v1631, %v1370
      %v1729 = vsel %vm1700, %v1632, %v1372
      %v1730 = vsel %vm1700, %v1633, %v1374
      %v1731 = vsel %vm1700, %v1634, %v1376
      %v1732 = vsel %vm1700, %v1635, %v1378
      %v1733 = vsel %vm1700, %v1636, %v1380
      %v1734 = vsel %vm1700, %v1637, %v1382
      %v1735 = vsel %vm1700, %v1638, %v1384
      %v1736 = vsel %vm1700, %v1639, %v1386
      %v1737 = vsel %vm1700, %v1640, %v1388
      %v1738 = vsel %vm1700, %v1641, %v1390
      %v1739 = vsel %vm1700, %v1642, %v1392
      %v1740 = vsel %vm1700, %v1643, %v1394
      %v1741 = vsel %vm1700, %v1644, %v1396
      %v1742 = vsel %vm1700, %v1645, %v1398
      %v1743 = vsel %vm1700, %v1646, %v1400
      %v1744 = vsel %vm1700, %v1647, %v1402
      %v1745 = vsel %vm1700, %v1648, %v1404
      %v1746 = vsel %vm1700, %v1649, %v1406
      %v1747 = vsel %vm1700, %v1650, %v1408
      %v1748 = vsel %vm1700, %v1651, %v1410
      %v1749 = vsel %vm1700, %v1652, %v1412
      %v1750 = vsel %vm1700, %v1653, %v1414
      %v1751 = vsel %vm1700, %v1654, %v1416
      %v1752 = vsel %vm1700, %v1655, %v1418
      %v1753 = vsel %vm1700, %v1656, %v1420
      %v1754 = vsel %vm1700, %v1657, %v1422
      %v1755 = vsel %vm1700, %v1658, %v1424
      %v1756 = vsel %vm1700, %v1659, %v1426
      %v1757 = vsel %vm1700, %v1660, %v1428
      %v1758 = vsel %vm1700, %v1661, %v1430
      %v1759 = vsel %vm1700, %v1662, %v1432
      %v1760 = vsel %vm1700, %v1663, %v1434
      %v1761 = vsel %vm1700, %v1664, %v1436
      %v1762 = vsel %vm1700, %v1665, %v1438
      %v1763 = vsel %vm1700, %v1666, %v1440
      %v1764 = vsel %vm1700, %v1667, %v1442
      %v1765 = vsel %vm1700, %v1668, %v1444
      %v1766 = vsel %vm1700, %v1669, %v1446
      %v1767 = vsel %vm1700, %v1670, %v1448
      %v1768 = vsel %vm1700, %v1671, %v1450
      %v1769 = vsel %vm1700, %v1672, %v1452
      %v1770 = vsel %vm1700, %v1673, %v1454
      %v1771 = vsel %vm1700, %v1674, %v1456
      %v1772 = vsel %vm1700, %v1675, %v1458
      %v1773 = vsel %vm1700, %v1676, %v1460
      %v1774 = vsel %vm1700, %v1677, %v1462
      %v1775 = vsel %vm1700, %v1678, %v1464
      %v1776 = vsel %vm1700, %v1679, %v1466
      %v1777 = vsel %vm1700, %v1680, %v1468
      %v1778 = vsel %vm1700, %v1681, %v1470
      %v1779 = vsel %vm1700, %v1682, %v1472
      %v1780 = vsel %vm1700, %v1683, %v1474
      %v1781 = vsel %vm1700, %v1684, %v1476
      %v1782 = vsel %vm1700, %v1685, %v1478
      %v1783 = vsel %vm1700, %v1686, %v1480
      %v1784 = vsel %vm1700, %v1687, %v1482
      %v1785 = vsel %vm1700, %v1688, %v1484
      %v1786 = vsel %vm1700, %v1689, %v1486
      %v1787 = vsel %vm1700, %v1690, %v1488
      %v1788 = vsel %vm1700, %v1691, %v1490
      %v1789 = vsel %vm1700, %v1692, %v1492
      %v1790 = vsel %vm1700, %v1693, %v1494
      %v1791 = vsel %vm1700, %v1694, %v1496
      %v1792 = vsel %vm1700, %v1695, %v1498
      %v1793 = vsel %vm1700, %v1696, %v1500
      %v1794 = vsel %vm1700, %v1697, %v1502
      %v1795 = vsel %vm1700, %v1698, %v1504
      %v1796 = vsel %vm1700, %v1699, %v1506
      %v1797 = vld [vmem:[%s1] sm:$0xff]
      %v1798 = vld [vmem:[%s1 + $0x8] sm:$0xf]
      %s1799 = scalar_lea.vmem %s1, 16
      %v1800 = vld [vmem:[%s1799] sm:$0xff]
      %v1801 = vld [vmem:[%s1799 + $0x8] sm:$0xf]
      %vm1802 = vcmask 97280
      %v1804 = vsel %vm1802, %v1701, 0
      %v1807 = vsel %vm1802, %v1702, 0
      %v1810 = vsel %vm1802, %v1703, 0
      %v1813 = vsel %vm1802, %v1704, 0
      %v1816 = vsel %vm1802, %v1705, 0
      %v1819 = vsel %vm1802, %v1706, 0
      %v1822 = vsel %vm1802, %v1707, 0
      %v1825 = vsel %vm1802, %v1708, 0
      %v1828 = vsel %vm1802, %v1709, 0
      %v1831 = vsel %vm1802, %v1710, 0
      %v1834 = vsel %vm1802, %v1711, 0
      %v1837 = vsel %vm1802, %v1712, 0
      %v1840 = vsel %vm1802, %v1713, 0
      %v1843 = vsel %vm1802, %v1714, 0
      %v1846 = vsel %vm1802, %v1715, 0
      %v1849 = vsel %vm1802, %v1716, 0
      %v1852 = vsel %vm1802, %v1717, 0
      %v1855 = vsel %vm1802, %v1718, 0
      %v1858 = vsel %vm1802, %v1719, 0
      %v1861 = vsel %vm1802, %v1720, 0
      %v1864 = vsel %vm1802, %v1721, 0
      %v1867 = vsel %vm1802, %v1722, 0
      %v1870 = vsel %vm1802, %v1723, 0
      %v1873 = vsel %vm1802, %v1724, 0
      %v1876 = vsel %vm1802, %v1725, 0
      %v1879 = vsel %vm1802, %v1726, 0
      %v1882 = vsel %vm1802, %v1727, 0
      %v1885 = vsel %vm1802, %v1728, 0
      %v1888 = vsel %vm1802, %v1729, 0
      %v1891 = vsel %vm1802, %v1730, 0
      %v1894 = vsel %vm1802, %v1731, 0
      %v1897 = vsel %vm1802, %v1732, 0
      %v1900 = vsel %vm1802, %v1733, 0
      %v1903 = vsel %vm1802, %v1734, 0
      %v1906 = vsel %vm1802, %v1735, 0
      %v1909 = vsel %vm1802, %v1736, 0
      %v1912 = vsel %vm1802, %v1737, 0
      %v1915 = vsel %vm1802, %v1738, 0
      %v1918 = vsel %vm1802, %v1739, 0
      %v1921 = vsel %vm1802, %v1740, 0
      %v1924 = vsel %vm1802, %v1741, 0
      %v1927 = vsel %vm1802, %v1742, 0
      %v1930 = vsel %vm1802, %v1743, 0
      %v1933 = vsel %vm1802, %v1744, 0
      %v1936 = vsel %vm1802, %v1745, 0
      %v1939 = vsel %vm1802, %v1746, 0
      %v1942 = vsel %vm1802, %v1747, 0
      %v1945 = vsel %vm1802, %v1748, 0
      %v1948 = vsel %vm1802, %v1749, 0
      %v1951 = vsel %vm1802, %v1750, 0
      %v1954 = vsel %vm1802, %v1751, 0
      %v1957 = vsel %vm1802, %v1752, 0
      %v1960 = vsel %vm1802, %v1753, 0
      %v1963 = vsel %vm1802, %v1754, 0
      %v1966 = vsel %vm1802, %v1755, 0
      %v1969 = vsel %vm1802, %v1756, 0
      %v1972 = vsel %vm1802, %v1757, 0
      %v1975 = vsel %vm1802, %v1758, 0
      %v1978 = vsel %vm1802, %v1759, 0
      %v1981 = vsel %vm1802, %v1760, 0
      %v1984 = vsel %vm1802, %v1761, 0
      %v1987 = vsel %vm1802, %v1762, 0
      %v1990 = vsel %vm1802, %v1763, 0
      %v1993 = vsel %vm1802, %v1764, 0
      %v1996 = vsel %vm1802, %v1765, 0
      %v1999 = vsel %vm1802, %v1766, 0
      %v2002 = vsel %vm1802, %v1767, 0
      %v2005 = vsel %vm1802, %v1768, 0
      %v2008 = vsel %vm1802, %v1769, 0
      %v2011 = vsel %vm1802, %v1770, 0
      %v2014 = vsel %vm1802, %v1771, 0
      %v2017 = vsel %vm1802, %v1772, 0
      %v2020 = vsel %vm1802, %v1773, 0
      %v2023 = vsel %vm1802, %v1774, 0
      %v2026 = vsel %vm1802, %v1775, 0
      %v2029 = vsel %vm1802, %v1776, 0
      %v2032 = vsel %vm1802, %v1777, 0
      %v2035 = vsel %vm1802, %v1778, 0
      %v2038 = vsel %vm1802, %v1779, 0
      %v2041 = vsel %vm1802, %v1780, 0
      %v2044 = vsel %vm1802, %v1781, 0
      %v2047 = vsel %vm1802, %v1782, 0
      %v2050 = vsel %vm1802, %v1783, 0
      %v2053 = vsel %vm1802, %v1784, 0
      %v2056 = vsel %vm1802, %v1785, 0
      %v2059 = vsel %vm1802, %v1786, 0
      %v2062 = vsel %vm1802, %v1787, 0
      %v2065 = vsel %vm1802, %v1788, 0
      %v2068 = vsel %vm1802, %v1789, 0
      %v2071 = vsel %vm1802, %v1790, 0
      %v2074 = vsel %vm1802, %v1791, 0
      %v2077 = vsel %vm1802, %v1792, 0
      %v2080 = vsel %vm1802, %v1793, 0
      %v2083 = vsel %vm1802, %v1794, 0
      %v2086 = vsel %vm1802, %v1795, 0
      %v2089 = vsel %vm1802, %v1796, 0
      %vm2091 = vcmask 1043456
      %v2093 = vsel %vm2091, %v1801, 0
      %2095 = vmatpush.msra.mxu0 0.0
      %2096 = vmatpush.msra.mxu0 0.0
      %2097 = vmatpush.msra.mxu0 0.0
      %2098 = vmatpush.msra.mxu0 0.0
      %2099 = vmatpush.msra.mxu0 0.0
      %2100 = vmatpush.msra.mxu0 0.0
      %2101 = vmatpush.msra.mxu0 0.0
      %2102 = vmatpush.msra.mxu0 0.0
      %2103 = vmatpush.msra.mxu0 0.0
      %2104 = vmatpush.msra.mxu0 0.0
      %2105 = vmatpush.msra.mxu0 0.0
      %2106 = vmatpush.msra.mxu0 0.0
      %2107 = vmatpush.msra.mxu0 0.0
      %2108 = vmatpush.msra.mxu0 0.0
      %2109 = vmatpush.msra.mxu0 %v2093
      %2110 = vmatpush.msra.mxu0 %v1800
      %2111 = vmatmul.f32.gmra.mxu0 %v1804
      %v2112 = vpop.f32.mrf.mxu0
      %v2113 = vadd.f32 0.0, %v2112
      %2114 = vmatmul.f32.gmra.mxu0 %v1807
      %v2115 = vpop.f32.mrf.mxu0
      %v2116 = vadd.f32 0.0, %v2115
      %2117 = vmatmul.f32.gmra.mxu0 %v1810
      %v2118 = vpop.f32.mrf.mxu0
      %v2119 = vadd.f32 0.0, %v2118
      %2120 = vmatmul.f32.gmra.mxu0 %v1813
      %v2121 = vpop.f32.mrf.mxu0
      %v2122 = vadd.f32 0.0, %v2121
      %2123 = vmatmul.f32.gmra.mxu0 %v1816
      %v2124 = vpop.f32.mrf.mxu0
      %v2125 = vadd.f32 0.0, %v2124
      %2126 = vmatmul.f32.gmra.mxu0 %v1819
      %v2127 = vpop.f32.mrf.mxu0
      %v2128 = vadd.f32 0.0, %v2127
      %2129 = vmatmul.f32.gmra.mxu0 %v1822
      %v2130 = vpop.f32.mrf.mxu0
      %v2131 = vadd.f32 0.0, %v2130
      %2132 = vmatmul.f32.gmra.mxu0 %v1825
      %v2133 = vpop.f32.mrf.mxu0
      %v2134 = vadd.f32 0.0, %v2133
      %2135 = vmatmul.f32.gmra.mxu0 %v1828
      %v2136 = vpop.f32.mrf.mxu0
      %v2137 = vadd.f32 0.0, %v2136
      %2138 = vmatmul.f32.gmra.mxu0 %v1831
      %v2139 = vpop.f32.mrf.mxu0
      %v2140 = vadd.f32 0.0, %v2139
      %2141 = vmatmul.f32.gmra.mxu0 %v1834
      %v2142 = vpop.f32.mrf.mxu0
      %v2143 = vadd.f32 0.0, %v2142
      %2144 = vmatmul.f32.gmra.mxu0 %v1837
      %v2145 = vpop.f32.mrf.mxu0
      %v2146 = vadd.f32 0.0, %v2145
      %2147 = vmatmul.f32.gmra.mxu0 %v1840
      %v2148 = vpop.f32.mrf.mxu0
      %v2149 = vadd.f32 0.0, %v2148
      %2150 = vmatmul.f32.gmra.mxu0 %v1843
      %v2151 = vpop.f32.mrf.mxu0
      %v2152 = vadd.f32 0.0, %v2151
      %2153 = vmatmul.f32.gmra.mxu0 %v1846
      %v2154 = vpop.f32.mrf.mxu0
      %v2155 = vadd.f32 0.0, %v2154
      %2156 = vmatmul.f32.gmra.mxu0 %v1849
      %v2157 = vpop.f32.mrf.mxu0
      %v2158 = vadd.f32 0.0, %v2157
      %2159 = vmatmul.f32.gmra.mxu0 %v1852
      %v2160 = vpop.f32.mrf.mxu0
      %v2161 = vadd.f32 0.0, %v2160
      %2162 = vmatmul.f32.gmra.mxu0 %v1855
      %v2163 = vpop.f32.mrf.mxu0
      %v2164 = vadd.f32 0.0, %v2163
      %2165 = vmatmul.f32.gmra.mxu0 %v1858
      %v2166 = vpop.f32.mrf.mxu0
      %v2167 = vadd.f32 0.0, %v2166
      %2168 = vmatmul.f32.gmra.mxu0 %v1861
      %v2169 = vpop.f32.mrf.mxu0
      %v2170 = vadd.f32 0.0, %v2169
      %2171 = vmatmul.f32.gmra.mxu0 %v1864
      %v2172 = vpop.f32.mrf.mxu0
      %v2173 = vadd.f32 0.0, %v2172
      %2174 = vmatmul.f32.gmra.mxu0 %v1867
      %v2175 = vpop.f32.mrf.mxu0
      %v2176 = vadd.f32 0.0, %v2175
      %2177 = vmatmul.f32.gmra.mxu0 %v1870
      %v2178 = vpop.f32.mrf.mxu0
      %v2179 = vadd.f32 0.0, %v2178
      %2180 = vmatmul.f32.gmra.mxu0 %v1873
      %v2181 = vpop.f32.mrf.mxu0
      %v2182 = vadd.f32 0.0, %v2181
      %2183 = vmatmul.f32.gmra.mxu0 %v1876
      %v2184 = vpop.f32.mrf.mxu0
      %v2185 = vadd.f32 0.0, %v2184
      %2186 = vmatmul.f32.gmra.mxu0 %v1879
      %v2187 = vpop.f32.mrf.mxu0
      %v2188 = vadd.f32 0.0, %v2187
      %2189 = vmatmul.f32.gmra.mxu0 %v1882
      %v2190 = vpop.f32.mrf.mxu0
      %v2191 = vadd.f32 0.0, %v2190
      %2192 = vmatmul.f32.gmra.mxu0 %v1885
      %v2193 = vpop.f32.mrf.mxu0
      %v2194 = vadd.f32 0.0, %v2193
      %2195 = vmatmul.f32.gmra.mxu0 %v1888
      %v2196 = vpop.f32.mrf.mxu0
      %v2197 = vadd.f32 0.0, %v2196
      %2198 = vmatmul.f32.gmra.mxu0 %v1891
      %v2199 = vpop.f32.mrf.mxu0
      %v2200 = vadd.f32 0.0, %v2199
      %2201 = vmatmul.f32.gmra.mxu0 %v1894
      %v2202 = vpop.f32.mrf.mxu0
      %v2203 = vadd.f32 0.0, %v2202
      %2204 = vmatmul.f32.gmra.mxu0 %v1897
      %v2205 = vpop.f32.mrf.mxu0
      %v2206 = vadd.f32 0.0, %v2205
      %2207 = vmatmul.f32.gmra.mxu0 %v1900
      %v2208 = vpop.f32.mrf.mxu0
      %v2209 = vadd.f32 0.0, %v2208
      %2210 = vmatmul.f32.gmra.mxu0 %v1903
      %v2211 = vpop.f32.mrf.mxu0
      %v2212 = vadd.f32 0.0, %v2211
      %2213 = vmatmul.f32.gmra.mxu0 %v1906
      %v2214 = vpop.f32.mrf.mxu0
      %v2215 = vadd.f32 0.0, %v2214
      %2216 = vmatmul.f32.gmra.mxu0 %v1909
      %v2217 = vpop.f32.mrf.mxu0
      %v2218 = vadd.f32 0.0, %v2217
      %2219 = vmatmul.f32.gmra.mxu0 %v1912
      %v2220 = vpop.f32.mrf.mxu0
      %v2221 = vadd.f32 0.0, %v2220
      %2222 = vmatmul.f32.gmra.mxu0 %v1915
      %v2223 = vpop.f32.mrf.mxu0
      %v2224 = vadd.f32 0.0, %v2223
      %2225 = vmatmul.f32.gmra.mxu0 %v1918
      %v2226 = vpop.f32.mrf.mxu0
      %v2227 = vadd.f32 0.0, %v2226
      %2228 = vmatmul.f32.gmra.mxu0 %v1921
      %v2229 = vpop.f32.mrf.mxu0
      %v2230 = vadd.f32 0.0, %v2229
      %2231 = vmatmul.f32.gmra.mxu0 %v1924
      %v2232 = vpop.f32.mrf.mxu0
      %v2233 = vadd.f32 0.0, %v2232
      %2234 = vmatmul.f32.gmra.mxu0 %v1927
      %v2235 = vpop.f32.mrf.mxu0
      %v2236 = vadd.f32 0.0, %v2235
      %2237 = vmatmul.f32.gmra.mxu0 %v1930
      %v2238 = vpop.f32.mrf.mxu0
      %v2239 = vadd.f32 0.0, %v2238
      %2240 = vmatmul.f32.gmra.mxu0 %v1933
      %v2241 = vpop.f32.mrf.mxu0
      %v2242 = vadd.f32 0.0, %v2241
      %2243 = vmatmul.f32.gmra.mxu0 %v1936
      %v2244 = vpop.f32.mrf.mxu0
      %v2245 = vadd.f32 0.0, %v2244
      %2246 = vmatmul.f32.gmra.mxu0 %v1939
      %v2247 = vpop.f32.mrf.mxu0
      %v2248 = vadd.f32 0.0, %v2247
      %2249 = vmatmul.f32.gmra.mxu0 %v1942
      %v2250 = vpop.f32.mrf.mxu0
      %v2251 = vadd.f32 0.0, %v2250
      %2252 = vmatmul.f32.gmra.mxu0 %v1945
      %v2253 = vpop.f32.mrf.mxu0
      %v2254 = vadd.f32 0.0, %v2253
      %2255 = vmatmul.f32.gmra.mxu0 %v1948
      %v2256 = vpop.f32.mrf.mxu0
      %v2257 = vadd.f32 0.0, %v2256
      %2258 = vmatmul.f32.gmra.mxu0 %v1951
      %v2259 = vpop.f32.mrf.mxu0
      %v2260 = vadd.f32 0.0, %v2259
      %2261 = vmatmul.f32.gmra.mxu0 %v1954
      %v2262 = vpop.f32.mrf.mxu0
      %v2263 = vadd.f32 0.0, %v2262
      %2264 = vmatmul.f32.gmra.mxu0 %v1957
      %v2265 = vpop.f32.mrf.mxu0
      %v2266 = vadd.f32 0.0, %v2265
      %2267 = vmatmul.f32.gmra.mxu0 %v1960
      %v2268 = vpop.f32.mrf.mxu0
      %v2269 = vadd.f32 0.0, %v2268
      %2270 = vmatmul.f32.gmra.mxu0 %v1963
      %v2271 = vpop.f32.mrf.mxu0
      %v2272 = vadd.f32 0.0, %v2271
      %2273 = vmatmul.f32.gmra.mxu0 %v1966
      %v2274 = vpop.f32.mrf.mxu0
      %v2275 = vadd.f32 0.0, %v2274
      %2276 = vmatmul.f32.gmra.mxu0 %v1969
      %v2277 = vpop.f32.mrf.mxu0
      %v2278 = vadd.f32 0.0, %v2277
      %2279 = vmatmul.f32.gmra.mxu0 %v1972
      %v2280 = vpop.f32.mrf.mxu0
      %v2281 = vadd.f32 0.0, %v2280
      %2282 = vmatmul.f32.gmra.mxu0 %v1975
      %v2283 = vpop.f32.mrf.mxu0
      %v2284 = vadd.f32 0.0, %v2283
      %2285 = vmatmul.f32.gmra.mxu0 %v1978
      %v2286 = vpop.f32.mrf.mxu0
      %v2287 = vadd.f32 0.0, %v2286
      %2288 = vmatmul.f32.gmra.mxu0 %v1981
      %v2289 = vpop.f32.mrf.mxu0
      %v2290 = vadd.f32 0.0, %v2289
      %2291 = vmatmul.f32.gmra.mxu0 %v1984
      %v2292 = vpop.f32.mrf.mxu0
      %v2293 = vadd.f32 0.0, %v2292
      %2294 = vmatmul.f32.gmra.mxu0 %v1987
      %v2295 = vpop.f32.mrf.mxu0
      %v2296 = vadd.f32 0.0, %v2295
      %2297 = vmatmul.f32.gmra.mxu0 %v1990
      %v2298 = vpop.f32.mrf.mxu0
      %v2299 = vadd.f32 0.0, %v2298
      %2300 = vmatmul.f32.gmra.mxu0 %v1993
      %v2301 = vpop.f32.mrf.mxu0
      %v2302 = vadd.f32 0.0, %v2301
      %2303 = vmatmul.f32.gmra.mxu0 %v1996
      %v2304 = vpop.f32.mrf.mxu0
      %v2305 = vadd.f32 0.0, %v2304
      %2306 = vmatmul.f32.gmra.mxu0 %v1999
      %v2307 = vpop.f32.mrf.mxu0
      %v2308 = vadd.f32 0.0, %v2307
      %2309 = vmatmul.f32.gmra.mxu0 %v2002
      %v2310 = vpop.f32.mrf.mxu0
      %v2311 = vadd.f32 0.0, %v2310
      %2312 = vmatmul.f32.gmra.mxu0 %v2005
      %v2313 = vpop.f32.mrf.mxu0
      %v2314 = vadd.f32 0.0, %v2313
      %2315 = vmatmul.f32.gmra.mxu0 %v2008
      %v2316 = vpop.f32.mrf.mxu0
      %v2317 = vadd.f32 0.0, %v2316
      %2318 = vmatmul.f32.gmra.mxu0 %v2011
      %v2319 = vpop.f32.mrf.mxu0
      %v2320 = vadd.f32 0.0, %v2319
      %2321 = vmatmul.f32.gmra.mxu0 %v2014
      %v2322 = vpop.f32.mrf.mxu0
      %v2323 = vadd.f32 0.0, %v2322
      %2324 = vmatmul.f32.gmra.mxu0 %v2017
      %v2325 = vpop.f32.mrf.mxu0
      %v2326 = vadd.f32 0.0, %v2325
      %2327 = vmatmul.f32.gmra.mxu0 %v2020
      %v2328 = vpop.f32.mrf.mxu0
      %v2329 = vadd.f32 0.0, %v2328
      %2330 = vmatmul.f32.gmra.mxu0 %v2023
      %v2331 = vpop.f32.mrf.mxu0
      %v2332 = vadd.f32 0.0, %v2331
      %2333 = vmatmul.f32.gmra.mxu0 %v2026
      %v2334 = vpop.f32.mrf.mxu0
      %v2335 = vadd.f32 0.0, %v2334
      %2336 = vmatmul.f32.gmra.mxu0 %v2029
      %v2337 = vpop.f32.mrf.mxu0
      %v2338 = vadd.f32 0.0, %v2337
      %2339 = vmatmul.f32.gmra.mxu0 %v2032
      %v2340 = vpop.f32.mrf.mxu0
      %v2341 = vadd.f32 0.0, %v2340
      %2342 = vmatmul.f32.gmra.mxu0 %v2035
      %v2343 = vpop.f32.mrf.mxu0
      %v2344 = vadd.f32 0.0, %v2343
      %2345 = vmatmul.f32.gmra.mxu0 %v2038
      %v2346 = vpop.f32.mrf.mxu0
      %v2347 = vadd.f32 0.0, %v2346
      %2348 = vmatmul.f32.gmra.mxu0 %v2041
      %v2349 = vpop.f32.mrf.mxu0
      %v2350 = vadd.f32 0.0, %v2349
      %2351 = vmatmul.f32.gmra.mxu0 %v2044
      %v2352 = vpop.f32.mrf.mxu0
      %v2353 = vadd.f32 0.0, %v2352
      %2354 = vmatmul.f32.gmra.mxu0 %v2047
      %v2355 = vpop.f32.mrf.mxu0
      %v2356 = vadd.f32 0.0, %v2355
      %2357 = vmatmul.f32.gmra.mxu0 %v2050
      %v2358 = vpop.f32.mrf.mxu0
      %v2359 = vadd.f32 0.0, %v2358
      %2360 = vmatmul.f32.gmra.mxu0 %v2053
      %v2361 = vpop.f32.mrf.mxu0
      %v2362 = vadd.f32 0.0, %v2361
      %2363 = vmatmul.f32.gmra.mxu0 %v2056
      %v2364 = vpop.f32.mrf.mxu0
      %v2365 = vadd.f32 0.0, %v2364
      %2366 = vmatmul.f32.gmra.mxu0 %v2059
      %v2367 = vpop.f32.mrf.mxu0
      %v2368 = vadd.f32 0.0, %v2367
      %2369 = vmatmul.f32.gmra.mxu0 %v2062
      %v2370 = vpop.f32.mrf.mxu0
      %v2371 = vadd.f32 0.0, %v2370
      %2372 = vmatmul.f32.gmra.mxu0 %v2065
      %v2373 = vpop.f32.mrf.mxu0
      %v2374 = vadd.f32 0.0, %v2373
      %2375 = vmatmul.f32.gmra.mxu0 %v2068
      %v2376 = vpop.f32.mrf.mxu0
      %v2377 = vadd.f32 0.0, %v2376
      %2378 = vmatmul.f32.gmra.mxu0 %v2071
      %v2379 = vpop.f32.mrf.mxu0
      %v2380 = vadd.f32 0.0, %v2379
      %2381 = vmatmul.f32.gmra.mxu0 %v2074
      %v2382 = vpop.f32.mrf.mxu0
      %v2383 = vadd.f32 0.0, %v2382
      %2384 = vmatmul.f32.gmra.mxu0 %v2077
      %v2385 = vpop.f32.mrf.mxu0
      %v2386 = vadd.f32 0.0, %v2385
      %2387 = vmatmul.f32.gmra.mxu0 %v2080
      %v2388 = vpop.f32.mrf.mxu0
      %v2389 = vadd.f32 0.0, %v2388
      %2390 = vmatmul.f32.gmra.mxu0 %v2083
      %v2391 = vpop.f32.mrf.mxu0
      %v2392 = vadd.f32 0.0, %v2391
      %2393 = vmatmul.f32.gmra.mxu0 %v2086
      %v2394 = vpop.f32.mrf.mxu0
      %v2395 = vadd.f32 0.0, %v2394
      %2396 = vmatmul.f32.gmra.mxu0 %v2089
      %v2397 = vpop.f32.mrf.mxu0
      %v2398 = vadd.f32 0.0, %v2397
      %2399 = vdwg.mxu0
      %v2401 = vsel %vm1802, 0.0, 0
      %v2404 = vsel %vm2091, %v1798, 0
      %2406 = vmatpush.msra.mxu0 0.0
      %2407 = vmatpush.msra.mxu0 0.0
      %2408 = vmatpush.msra.mxu0 0.0
      %2409 = vmatpush.msra.mxu0 0.0
      %2410 = vmatpush.msra.mxu0 0.0
      %2411 = vmatpush.msra.mxu0 0.0
      %2412 = vmatpush.msra.mxu0 0.0
      %2413 = vmatpush.msra.mxu0 0.0
      %2414 = vmatpush.msra.mxu0 0.0
      %2415 = vmatpush.msra.mxu0 0.0
      %2416 = vmatpush.msra.mxu0 0.0
      %2417 = vmatpush.msra.mxu0 0.0
      %2418 = vmatpush.msra.mxu0 0.0
      %2419 = vmatpush.msra.mxu0 0.0
      %2420 = vmatpush.msra.mxu0 %v2404
      %2421 = vmatpush.msra.mxu0 %v1797
      %2422 = vmatmul.f32.gmra.mxu0 %v2401
      %v2423 = vpop.f32.mrf.mxu0
      %v2424 = vadd.f32 %v2113, %v2423
      %2425 = vmatmul.f32.gmra.mxu0 %v2401
      %v2426 = vpop.f32.mrf.mxu0
      %v2427 = vadd.f32 %v2116, %v2426
      %2428 = vmatmul.f32.gmra.mxu0 %v1804
      %v2429 = vpop.f32.mrf.mxu0
      %v2430 = vadd.f32 %v2119, %v2429
      %2431 = vmatmul.f32.gmra.mxu0 %v1807
      %v2432 = vpop.f32.mrf.mxu0
      %v2433 = vadd.f32 %v2122, %v2432
      %2434 = vmatmul.f32.gmra.mxu0 %v1810
      %v2435 = vpop.f32.mrf.mxu0
      %v2436 = vadd.f32 %v2125, %v2435
      %2437 = vmatmul.f32.gmra.mxu0 %v1813
      %v2438 = vpop.f32.mrf.mxu0
      %v2439 = vadd.f32 %v2128, %v2438
      %2440 = vmatmul.f32.gmra.mxu0 %v1816
      %v2441 = vpop.f32.mrf.mxu0
      %v2442 = vadd.f32 %v2131, %v2441
      %2443 = vmatmul.f32.gmra.mxu0 %v1819
      %v2444 = vpop.f32.mrf.mxu0
      %v2445 = vadd.f32 %v2134, %v2444
      %2446 = vmatmul.f32.gmra.mxu0 %v1822
      %v2447 = vpop.f32.mrf.mxu0
      %v2448 = vadd.f32 %v2137, %v2447
      %2449 = vmatmul.f32.gmra.mxu0 %v1825
      %v2450 = vpop.f32.mrf.mxu0
      %v2451 = vadd.f32 %v2140, %v2450
      %2452 = vmatmul.f32.gmra.mxu0 %v1828
      %v2453 = vpop.f32.mrf.mxu0
      %v2454 = vadd.f32 %v2143, %v2453
      %2455 = vmatmul.f32.gmra.mxu0 %v1831
      %v2456 = vpop.f32.mrf.mxu0
      %v2457 = vadd.f32 %v2146, %v2456
      %2458 = vmatmul.f32.gmra.mxu0 %v1834
      %v2459 = vpop.f32.mrf.mxu0
      %v2460 = vadd.f32 %v2149, %v2459
      %2461 = vmatmul.f32.gmra.mxu0 %v1837
      %v2462 = vpop.f32.mrf.mxu0
      %v2463 = vadd.f32 %v2152, %v2462
      %2464 = vmatmul.f32.gmra.mxu0 %v1840
      %v2465 = vpop.f32.mrf.mxu0
      %v2466 = vadd.f32 %v2155, %v2465
      %2467 = vmatmul.f32.gmra.mxu0 %v1843
      %v2468 = vpop.f32.mrf.mxu0
      %v2469 = vadd.f32 %v2158, %v2468
      %2470 = vmatmul.f32.gmra.mxu0 %v1846
      %v2471 = vpop.f32.mrf.mxu0
      %v2472 = vadd.f32 %v2161, %v2471
      %2473 = vmatmul.f32.gmra.mxu0 %v1849
      %v2474 = vpop.f32.mrf.mxu0
      %v2475 = vadd.f32 %v2164, %v2474
      %2476 = vmatmul.f32.gmra.mxu0 %v1852
      %v2477 = vpop.f32.mrf.mxu0
      %v2478 = vadd.f32 %v2167, %v2477
      %2479 = vmatmul.f32.gmra.mxu0 %v1855
      %v2480 = vpop.f32.mrf.mxu0
      %v2481 = vadd.f32 %v2170, %v2480
      %2482 = vmatmul.f32.gmra.mxu0 %v1858
      %v2483 = vpop.f32.mrf.mxu0
      %v2484 = vadd.f32 %v2173, %v2483
      %2485 = vmatmul.f32.gmra.mxu0 %v1861
      %v2486 = vpop.f32.mrf.mxu0
      %v2487 = vadd.f32 %v2176, %v2486
      %2488 = vmatmul.f32.gmra.mxu0 %v1864
      %v2489 = vpop.f32.mrf.mxu0
      %v2490 = vadd.f32 %v2179, %v2489
      %2491 = vmatmul.f32.gmra.mxu0 %v1867
      %v2492 = vpop.f32.mrf.mxu0
      %v2493 = vadd.f32 %v2182, %v2492
      %2494 = vmatmul.f32.gmra.mxu0 %v1870
      %v2495 = vpop.f32.mrf.mxu0
      %v2496 = vadd.f32 %v2185, %v2495
      %2497 = vmatmul.f32.gmra.mxu0 %v1873
      %v2498 = vpop.f32.mrf.mxu0
      %v2499 = vadd.f32 %v2188, %v2498
      %2500 = vmatmul.f32.gmra.mxu0 %v1876
      %v2501 = vpop.f32.mrf.mxu0
      %v2502 = vadd.f32 %v2191, %v2501
      %2503 = vmatmul.f32.gmra.mxu0 %v1879
      %v2504 = vpop.f32.mrf.mxu0
      %v2505 = vadd.f32 %v2194, %v2504
      %2506 = vmatmul.f32.gmra.mxu0 %v1882
      %v2507 = vpop.f32.mrf.mxu0
      %v2508 = vadd.f32 %v2197, %v2507
      %2509 = vmatmul.f32.gmra.mxu0 %v1885
      %v2510 = vpop.f32.mrf.mxu0
      %v2511 = vadd.f32 %v2200, %v2510
      %2512 = vmatmul.f32.gmra.mxu0 %v1888
      %v2513 = vpop.f32.mrf.mxu0
      %v2514 = vadd.f32 %v2203, %v2513
      %2515 = vmatmul.f32.gmra.mxu0 %v1891
      %v2516 = vpop.f32.mrf.mxu0
      %v2517 = vadd.f32 %v2206, %v2516
      %2518 = vmatmul.f32.gmra.mxu0 %v2401
      %v2519 = vpop.f32.mrf.mxu0
      %v2520 = vadd.f32 %v2209, %v2519
      %2521 = vmatmul.f32.gmra.mxu0 %v2401
      %v2522 = vpop.f32.mrf.mxu0
      %v2523 = vadd.f32 %v2212, %v2522
      %2524 = vmatmul.f32.gmra.mxu0 %v1900
      %v2525 = vpop.f32.mrf.mxu0
      %v2526 = vadd.f32 %v2215, %v2525
      %2527 = vmatmul.f32.gmra.mxu0 %v1903
      %v2528 = vpop.f32.mrf.mxu0
      %v2529 = vadd.f32 %v2218, %v2528
      %2530 = vmatmul.f32.gmra.mxu0 %v1906
      %v2531 = vpop.f32.mrf.mxu0
      %v2532 = vadd.f32 %v2221, %v2531
      %2533 = vmatmul.f32.gmra.mxu0 %v1909
      %v2534 = vpop.f32.mrf.mxu0
      %v2535 = vadd.f32 %v2224, %v2534
      %2536 = vmatmul.f32.gmra.mxu0 %v1912
      %v2537 = vpop.f32.mrf.mxu0
      %v2538 = vadd.f32 %v2227, %v2537
      %2539 = vmatmul.f32.gmra.mxu0 %v1915
      %v2540 = vpop.f32.mrf.mxu0
      %v2541 = vadd.f32 %v2230, %v2540
      %2542 = vmatmul.f32.gmra.mxu0 %v1918
      %v2543 = vpop.f32.mrf.mxu0
      %v2544 = vadd.f32 %v2233, %v2543
      %2545 = vmatmul.f32.gmra.mxu0 %v1921
      %v2546 = vpop.f32.mrf.mxu0
      %v2547 = vadd.f32 %v2236, %v2546
      %2548 = vmatmul.f32.gmra.mxu0 %v1924
      %v2549 = vpop.f32.mrf.mxu0
      %v2550 = vadd.f32 %v2239, %v2549
      %2551 = vmatmul.f32.gmra.mxu0 %v1927
      %v2552 = vpop.f32.mrf.mxu0
      %v2553 = vadd.f32 %v2242, %v2552
      %2554 = vmatmul.f32.gmra.mxu0 %v1930
      %v2555 = vpop.f32.mrf.mxu0
      %v2556 = vadd.f32 %v2245, %v2555
      %2557 = vmatmul.f32.gmra.mxu0 %v1933
      %v2558 = vpop.f32.mrf.mxu0
      %v2559 = vadd.f32 %v2248, %v2558
      %2560 = vmatmul.f32.gmra.mxu0 %v1936
      %v2561 = vpop.f32.mrf.mxu0
      %v2562 = vadd.f32 %v2251, %v2561
      %2563 = vmatmul.f32.gmra.mxu0 %v1939
      %v2564 = vpop.f32.mrf.mxu0
      %v2565 = vadd.f32 %v2254, %v2564
      %2566 = vmatmul.f32.gmra.mxu0 %v1942
      %v2567 = vpop.f32.mrf.mxu0
      %v2568 = vadd.f32 %v2257, %v2567
      %2569 = vmatmul.f32.gmra.mxu0 %v1945
      %v2570 = vpop.f32.mrf.mxu0
      %v2571 = vadd.f32 %v2260, %v2570
      %2572 = vmatmul.f32.gmra.mxu0 %v1948
      %v2573 = vpop.f32.mrf.mxu0
      %v2574 = vadd.f32 %v2263, %v2573
      %2575 = vmatmul.f32.gmra.mxu0 %v1951
      %v2576 = vpop.f32.mrf.mxu0
      %v2577 = vadd.f32 %v2266, %v2576
      %2578 = vmatmul.f32.gmra.mxu0 %v1954
      %v2579 = vpop.f32.mrf.mxu0
      %v2580 = vadd.f32 %v2269, %v2579
      %2581 = vmatmul.f32.gmra.mxu0 %v1957
      %v2582 = vpop.f32.mrf.mxu0
      %v2583 = vadd.f32 %v2272, %v2582
      %2584 = vmatmul.f32.gmra.mxu0 %v1960
      %v2585 = vpop.f32.mrf.mxu0
      %v2586 = vadd.f32 %v2275, %v2585
      %2587 = vmatmul.f32.gmra.mxu0 %v1963
      %v2588 = vpop.f32.mrf.mxu0
      %v2589 = vadd.f32 %v2278, %v2588
      %2590 = vmatmul.f32.gmra.mxu0 %v1966
      %v2591 = vpop.f32.mrf.mxu0
      %v2592 = vadd.f32 %v2281, %v2591
      %2593 = vmatmul.f32.gmra.mxu0 %v1969
      %v2594 = vpop.f32.mrf.mxu0
      %v2595 = vadd.f32 %v2284, %v2594
      %2596 = vmatmul.f32.gmra.mxu0 %v1972
      %v2597 = vpop.f32.mrf.mxu0
      %v2598 = vadd.f32 %v2287, %v2597
      %2599 = vmatmul.f32.gmra.mxu0 %v1975
      %v2600 = vpop.f32.mrf.mxu0
      %v2601 = vadd.f32 %v2290, %v2600
      %2602 = vmatmul.f32.gmra.mxu0 %v1978
      %v2603 = vpop.f32.mrf.mxu0
      %v2604 = vadd.f32 %v2293, %v2603
      %2605 = vmatmul.f32.gmra.mxu0 %v1981
      %v2606 = vpop.f32.mrf.mxu0
      %v2607 = vadd.f32 %v2296, %v2606
      %2608 = vmatmul.f32.gmra.mxu0 %v1984
      %v2609 = vpop.f32.mrf.mxu0
      %v2610 = vadd.f32 %v2299, %v2609
      %2611 = vmatmul.f32.gmra.mxu0 %v1987
      %v2612 = vpop.f32.mrf.mxu0
      %v2613 = vadd.f32 %v2302, %v2612
      %2614 = vmatmul.f32.gmra.mxu0 %v2401
      %v2615 = vpop.f32.mrf.mxu0
      %v2616 = vadd.f32 %v2305, %v2615
      %2617 = vmatmul.f32.gmra.mxu0 %v2401
      %v2618 = vpop.f32.mrf.mxu0
      %v2619 = vadd.f32 %v2308, %v2618
      %2620 = vmatmul.f32.gmra.mxu0 %v1996
      %v2621 = vpop.f32.mrf.mxu0
      %v2622 = vadd.f32 %v2311, %v2621
      %2623 = vmatmul.f32.gmra.mxu0 %v1999
      %v2624 = vpop.f32.mrf.mxu0
      %v2625 = vadd.f32 %v2314, %v2624
      %2626 = vmatmul.f32.gmra.mxu0 %v2002
      %v2627 = vpop.f32.mrf.mxu0
      %v2628 = vadd.f32 %v2317, %v2627
      %2629 = vmatmul.f32.gmra.mxu0 %v2005
      %v2630 = vpop.f32.mrf.mxu0
      %v2631 = vadd.f32 %v2320, %v2630
      %2632 = vmatmul.f32.gmra.mxu0 %v2008
      %v2633 = vpop.f32.mrf.mxu0
      %v2634 = vadd.f32 %v2323, %v2633
      %2635 = vmatmul.f32.gmra.mxu0 %v2011
      %v2636 = vpop.f32.mrf.mxu0
      %v2637 = vadd.f32 %v2326, %v2636
      %2638 = vmatmul.f32.gmra.mxu0 %v2014
      %v2639 = vpop.f32.mrf.mxu0
      %v2640 = vadd.f32 %v2329, %v2639
      %2641 = vmatmul.f32.gmra.mxu0 %v2017
      %v2642 = vpop.f32.mrf.mxu0
      %v2643 = vadd.f32 %v2332, %v2642
      %2644 = vmatmul.f32.gmra.mxu0 %v2020
      %v2645 = vpop.f32.mrf.mxu0
      %v2646 = vadd.f32 %v2335, %v2645
      %2647 = vmatmul.f32.gmra.mxu0 %v2023
      %v2648 = vpop.f32.mrf.mxu0
      %v2649 = vadd.f32 %v2338, %v2648
      %2650 = vmatmul.f32.gmra.mxu0 %v2026
      %v2651 = vpop.f32.mrf.mxu0
      %v2652 = vadd.f32 %v2341, %v2651
      %2653 = vmatmul.f32.gmra.mxu0 %v2029
      %v2654 = vpop.f32.mrf.mxu0
      %v2655 = vadd.f32 %v2344, %v2654
      %2656 = vmatmul.f32.gmra.mxu0 %v2032
      %v2657 = vpop.f32.mrf.mxu0
      %v2658 = vadd.f32 %v2347, %v2657
      %2659 = vmatmul.f32.gmra.mxu0 %v2035
      %v2660 = vpop.f32.mrf.mxu0
      %v2661 = vadd.f32 %v2350, %v2660
      %2662 = vmatmul.f32.gmra.mxu0 %v2038
      %v2663 = vpop.f32.mrf.mxu0
      %v2664 = vadd.f32 %v2353, %v2663
      %2665 = vmatmul.f32.gmra.mxu0 %v2041
      %v2666 = vpop.f32.mrf.mxu0
      %v2667 = vadd.f32 %v2356, %v2666
      %2668 = vmatmul.f32.gmra.mxu0 %v2044
      %v2669 = vpop.f32.mrf.mxu0
      %v2670 = vadd.f32 %v2359, %v2669
      %2671 = vmatmul.f32.gmra.mxu0 %v2047
      %v2672 = vpop.f32.mrf.mxu0
      %v2673 = vadd.f32 %v2362, %v2672
      %2674 = vmatmul.f32.gmra.mxu0 %v2050
      %v2675 = vpop.f32.mrf.mxu0
      %v2676 = vadd.f32 %v2365, %v2675
      %2677 = vmatmul.f32.gmra.mxu0 %v2053
      %v2678 = vpop.f32.mrf.mxu0
      %v2679 = vadd.f32 %v2368, %v2678
      %2680 = vmatmul.f32.gmra.mxu0 %v2056
      %v2681 = vpop.f32.mrf.mxu0
      %v2682 = vadd.f32 %v2371, %v2681
      %2683 = vmatmul.f32.gmra.mxu0 %v2059
      %v2684 = vpop.f32.mrf.mxu0
      %v2685 = vadd.f32 %v2374, %v2684
      %2686 = vmatmul.f32.gmra.mxu0 %v2062
      %v2687 = vpop.f32.mrf.mxu0
      %v2688 = vadd.f32 %v2377, %v2687
      %2689 = vmatmul.f32.gmra.mxu0 %v2065
      %v2690 = vpop.f32.mrf.mxu0
      %v2691 = vadd.f32 %v2380, %v2690
      %2692 = vmatmul.f32.gmra.mxu0 %v2068
      %v2693 = vpop.f32.mrf.mxu0
      %v2694 = vadd.f32 %v2383, %v2693
      %2695 = vmatmul.f32.gmra.mxu0 %v2071
      %v2696 = vpop.f32.mrf.mxu0
      %v2697 = vadd.f32 %v2386, %v2696
      %2698 = vmatmul.f32.gmra.mxu0 %v2074
      %v2699 = vpop.f32.mrf.mxu0
      %v2700 = vadd.f32 %v2389, %v2699
      %2701 = vmatmul.f32.gmra.mxu0 %v2077
      %v2702 = vpop.f32.mrf.mxu0
      %v2703 = vadd.f32 %v2392, %v2702
      %2704 = vmatmul.f32.gmra.mxu0 %v2080
      %v2705 = vpop.f32.mrf.mxu0
      %v2706 = vadd.f32 %v2395, %v2705
      %2707 = vmatmul.f32.gmra.mxu0 %v2083
      %v2708 = vpop.f32.mrf.mxu0
      %v2709 = vadd.f32 %v2398, %v2708
      %2710 = vdwg.mxu0
      %s2711 = scalar_lea.vmem %s1, 32
      %v2712 = vld [vmem:[%s2711] sm:$0xff]
      %v2713 = vld [vmem:[%s2711 + $0x8] sm:$0xf]
      %v2715 = vsel %vm2091, %v2713, 0
      %2717 = vmatpush.msra.mxu0 0.0
      %2718 = vmatpush.msra.mxu0 0.0
      %2719 = vmatpush.msra.mxu0 0.0
      %2720 = vmatpush.msra.mxu0 0.0
      %2721 = vmatpush.msra.mxu0 0.0
      %2722 = vmatpush.msra.mxu0 0.0
      %2723 = vmatpush.msra.mxu0 0.0
      %2724 = vmatpush.msra.mxu0 0.0
      %2725 = vmatpush.msra.mxu0 0.0
      %2726 = vmatpush.msra.mxu0 0.0
      %2727 = vmatpush.msra.mxu0 0.0
      %2728 = vmatpush.msra.mxu0 0.0
      %2729 = vmatpush.msra.mxu0 0.0
      %2730 = vmatpush.msra.mxu0 0.0
      %2731 = vmatpush.msra.mxu0 %v2715
      %2732 = vmatpush.msra.mxu0 %v2712
      %2733 = vmatmul.f32.gmra.mxu0 %v1810
      %v2734 = vpop.f32.mrf.mxu0
      %v2735 = vadd.f32 0.0, %v2734
      %2736 = vmatmul.f32.gmra.mxu0 %v1813
      %v2737 = vpop.f32.mrf.mxu0
      %v2738 = vadd.f32 0.0, %v2737
      %2739 = vmatmul.f32.gmra.mxu0 %v1816
      %v2740 = vpop.f32.mrf.mxu0
      %v2741 = vadd.f32 0.0, %v2740
      %2742 = vmatmul.f32.gmra.mxu0 %v1819
      %v2743 = vpop.f32.mrf.mxu0
      %v2744 = vadd.f32 0.0, %v2743
      %2745 = vmatmul.f32.gmra.mxu0 %v1822
      %v2746 = vpop.f32.mrf.mxu0
      %v2747 = vadd.f32 0.0, %v2746
      %2748 = vmatmul.f32.gmra.mxu0 %v1825
      %v2749 = vpop.f32.mrf.mxu0
      %v2750 = vadd.f32 0.0, %v2749
      %2751 = vmatmul.f32.gmra.mxu0 %v1828
      %v2752 = vpop.f32.mrf.mxu0
      %v2753 = vadd.f32 0.0, %v2752
      %2754 = vmatmul.f32.gmra.mxu0 %v1831
      %v2755 = vpop.f32.mrf.mxu0
      %v2756 = vadd.f32 0.0, %v2755
      %2757 = vmatmul.f32.gmra.mxu0 %v1834
      %v2758 = vpop.f32.mrf.mxu0
      %v2759 = vadd.f32 0.0, %v2758
      %2760 = vmatmul.f32.gmra.mxu0 %v1837
      %v2761 = vpop.f32.mrf.mxu0
      %v2762 = vadd.f32 0.0, %v2761
      %2763 = vmatmul.f32.gmra.mxu0 %v1840
      %v2764 = vpop.f32.mrf.mxu0
      %v2765 = vadd.f32 0.0, %v2764
      %2766 = vmatmul.f32.gmra.mxu0 %v1843
      %v2767 = vpop.f32.mrf.mxu0
      %v2768 = vadd.f32 0.0, %v2767
      %2769 = vmatmul.f32.gmra.mxu0 %v1846
      %v2770 = vpop.f32.mrf.mxu0
      %v2771 = vadd.f32 0.0, %v2770
      %2772 = vmatmul.f32.gmra.mxu0 %v1849
      %v2773 = vpop.f32.mrf.mxu0
      %v2774 = vadd.f32 0.0, %v2773
      %2775 = vmatmul.f32.gmra.mxu0 %v1852
      %v2776 = vpop.f32.mrf.mxu0
      %v2777 = vadd.f32 0.0, %v2776
      %2778 = vmatmul.f32.gmra.mxu0 %v1855
      %v2779 = vpop.f32.mrf.mxu0
      %v2780 = vadd.f32 0.0, %v2779
      %2781 = vmatmul.f32.gmra.mxu0 %v1858
      %v2782 = vpop.f32.mrf.mxu0
      %v2783 = vadd.f32 0.0, %v2782
      %2784 = vmatmul.f32.gmra.mxu0 %v1861
      %v2785 = vpop.f32.mrf.mxu0
      %v2786 = vadd.f32 0.0, %v2785
      %2787 = vmatmul.f32.gmra.mxu0 %v1864
      %v2788 = vpop.f32.mrf.mxu0
      %v2789 = vadd.f32 0.0, %v2788
      %2790 = vmatmul.f32.gmra.mxu0 %v1867
      %v2791 = vpop.f32.mrf.mxu0
      %v2792 = vadd.f32 0.0, %v2791
      %2793 = vmatmul.f32.gmra.mxu0 %v1870
      %v2794 = vpop.f32.mrf.mxu0
      %v2795 = vadd.f32 0.0, %v2794
      %2796 = vmatmul.f32.gmra.mxu0 %v1873
      %v2797 = vpop.f32.mrf.mxu0
      %v2798 = vadd.f32 0.0, %v2797
      %2799 = vmatmul.f32.gmra.mxu0 %v1876
      %v2800 = vpop.f32.mrf.mxu0
      %v2801 = vadd.f32 0.0, %v2800
      %2802 = vmatmul.f32.gmra.mxu0 %v1879
      %v2803 = vpop.f32.mrf.mxu0
      %v2804 = vadd.f32 0.0, %v2803
      %2805 = vmatmul.f32.gmra.mxu0 %v1882
      %v2806 = vpop.f32.mrf.mxu0
      %v2807 = vadd.f32 0.0, %v2806
      %2808 = vmatmul.f32.gmra.mxu0 %v1885
      %v2809 = vpop.f32.mrf.mxu0
      %v2810 = vadd.f32 0.0, %v2809
      %2811 = vmatmul.f32.gmra.mxu0 %v1888
      %v2812 = vpop.f32.mrf.mxu0
      %v2813 = vadd.f32 0.0, %v2812
      %2814 = vmatmul.f32.gmra.mxu0 %v1891
      %v2815 = vpop.f32.mrf.mxu0
      %v2816 = vadd.f32 0.0, %v2815
      %2817 = vmatmul.f32.gmra.mxu0 %v1894
      %v2818 = vpop.f32.mrf.mxu0
      %v2819 = vadd.f32 0.0, %v2818
      %2820 = vmatmul.f32.gmra.mxu0 %v1897
      %v2821 = vpop.f32.mrf.mxu0
      %v2822 = vadd.f32 0.0, %v2821
      %2823 = vmatmul.f32.gmra.mxu0 %v2401
      %v2824 = vpop.f32.mrf.mxu0
      %v2825 = vadd.f32 0.0, %v2824
      %2826 = vmatmul.f32.gmra.mxu0 %v2401
      %v2827 = vpop.f32.mrf.mxu0
      %v2828 = vadd.f32 0.0, %v2827
      %2829 = vmatmul.f32.gmra.mxu0 %v1906
      %v2830 = vpop.f32.mrf.mxu0
      %v2831 = vadd.f32 0.0, %v2830
      %2832 = vmatmul.f32.gmra.mxu0 %v1909
      %v2833 = vpop.f32.mrf.mxu0
      %v2834 = vadd.f32 0.0, %v2833
      %2835 = vmatmul.f32.gmra.mxu0 %v1912
      %v2836 = vpop.f32.mrf.mxu0
      %v2837 = vadd.f32 0.0, %v2836
      %2838 = vmatmul.f32.gmra.mxu0 %v1915
      %v2839 = vpop.f32.mrf.mxu0
      %v2840 = vadd.f32 0.0, %v2839
      %2841 = vmatmul.f32.gmra.mxu0 %v1918
      %v2842 = vpop.f32.mrf.mxu0
      %v2843 = vadd.f32 0.0, %v2842
      %2844 = vmatmul.f32.gmra.mxu0 %v1921
      %v2845 = vpop.f32.mrf.mxu0
      %v2846 = vadd.f32 0.0, %v2845
      %2847 = vmatmul.f32.gmra.mxu0 %v1924
      %v2848 = vpop.f32.mrf.mxu0
      %v2849 = vadd.f32 0.0, %v2848
      %2850 = vmatmul.f32.gmra.mxu0 %v1927
      %v2851 = vpop.f32.mrf.mxu0
      %v2852 = vadd.f32 0.0, %v2851
      %2853 = vmatmul.f32.gmra.mxu0 %v1930
      %v2854 = vpop.f32.mrf.mxu0
      %v2855 = vadd.f32 0.0, %v2854
      %2856 = vmatmul.f32.gmra.mxu0 %v1933
      %v2857 = vpop.f32.mrf.mxu0
      %v2858 = vadd.f32 0.0, %v2857
      %2859 = vmatmul.f32.gmra.mxu0 %v1936
      %v2860 = vpop.f32.mrf.mxu0
      %v2861 = vadd.f32 0.0, %v2860
      %2862 = vmatmul.f32.gmra.mxu0 %v1939
      %v2863 = vpop.f32.mrf.mxu0
      %v2864 = vadd.f32 0.0, %v2863
      %2865 = vmatmul.f32.gmra.mxu0 %v1942
      %v2866 = vpop.f32.mrf.mxu0
      %v2867 = vadd.f32 0.0, %v2866
      %2868 = vmatmul.f32.gmra.mxu0 %v1945
      %v2869 = vpop.f32.mrf.mxu0
      %v2870 = vadd.f32 0.0, %v2869
      %2871 = vmatmul.f32.gmra.mxu0 %v1948
      %v2872 = vpop.f32.mrf.mxu0
      %v2873 = vadd.f32 0.0, %v2872
      %2874 = vmatmul.f32.gmra.mxu0 %v1951
      %v2875 = vpop.f32.mrf.mxu0
      %v2876 = vadd.f32 0.0, %v2875
      %2877 = vmatmul.f32.gmra.mxu0 %v1954
      %v2878 = vpop.f32.mrf.mxu0
      %v2879 = vadd.f32 0.0, %v2878
      %2880 = vmatmul.f32.gmra.mxu0 %v1957
      %v2881 = vpop.f32.mrf.mxu0
      %v2882 = vadd.f32 0.0, %v2881
      %2883 = vmatmul.f32.gmra.mxu0 %v1960
      %v2884 = vpop.f32.mrf.mxu0
      %v2885 = vadd.f32 0.0, %v2884
      %2886 = vmatmul.f32.gmra.mxu0 %v1963
      %v2887 = vpop.f32.mrf.mxu0
      %v2888 = vadd.f32 0.0, %v2887
      %2889 = vmatmul.f32.gmra.mxu0 %v1966
      %v2890 = vpop.f32.mrf.mxu0
      %v2891 = vadd.f32 0.0, %v2890
      %2892 = vmatmul.f32.gmra.mxu0 %v1969
      %v2893 = vpop.f32.mrf.mxu0
      %v2894 = vadd.f32 0.0, %v2893
      %2895 = vmatmul.f32.gmra.mxu0 %v1972
      %v2896 = vpop.f32.mrf.mxu0
      %v2897 = vadd.f32 0.0, %v2896
      %2898 = vmatmul.f32.gmra.mxu0 %v1975
      %v2899 = vpop.f32.mrf.mxu0
      %v2900 = vadd.f32 0.0, %v2899
      %2901 = vmatmul.f32.gmra.mxu0 %v1978
      %v2902 = vpop.f32.mrf.mxu0
      %v2903 = vadd.f32 0.0, %v2902
      %2904 = vmatmul.f32.gmra.mxu0 %v1981
      %v2905 = vpop.f32.mrf.mxu0
      %v2906 = vadd.f32 0.0, %v2905
      %2907 = vmatmul.f32.gmra.mxu0 %v1984
      %v2908 = vpop.f32.mrf.mxu0
      %v2909 = vadd.f32 0.0, %v2908
      %2910 = vmatmul.f32.gmra.mxu0 %v1987
      %v2911 = vpop.f32.mrf.mxu0
      %v2912 = vadd.f32 0.0, %v2911
      %2913 = vmatmul.f32.gmra.mxu0 %v1990
      %v2914 = vpop.f32.mrf.mxu0
      %v2915 = vadd.f32 0.0, %v2914
      %2916 = vmatmul.f32.gmra.mxu0 %v1993
      %v2917 = vpop.f32.mrf.mxu0
      %v2918 = vadd.f32 0.0, %v2917
      %2919 = vmatmul.f32.gmra.mxu0 %v2401
      %v2920 = vpop.f32.mrf.mxu0
      %v2921 = vadd.f32 0.0, %v2920
      %2922 = vmatmul.f32.gmra.mxu0 %v2401
      %v2923 = vpop.f32.mrf.mxu0
      %v2924 = vadd.f32 0.0, %v2923
      %2925 = vmatmul.f32.gmra.mxu0 %v2002
      %v2926 = vpop.f32.mrf.mxu0
      %v2927 = vadd.f32 0.0, %v2926
      %2928 = vmatmul.f32.gmra.mxu0 %v2005
      %v2929 = vpop.f32.mrf.mxu0
      %v2930 = vadd.f32 0.0, %v2929
      %2931 = vmatmul.f32.gmra.mxu0 %v2008
      %v2932 = vpop.f32.mrf.mxu0
      %v2933 = vadd.f32 0.0, %v2932
      %2934 = vmatmul.f32.gmra.mxu0 %v2011
      %v2935 = vpop.f32.mrf.mxu0
      %v2936 = vadd.f32 0.0, %v2935
      %2937 = vmatmul.f32.gmra.mxu0 %v2014
      %v2938 = vpop.f32.mrf.mxu0
      %v2939 = vadd.f32 0.0, %v2938
      %2940 = vmatmul.f32.gmra.mxu0 %v2017
      %v2941 = vpop.f32.mrf.mxu0
      %v2942 = vadd.f32 0.0, %v2941
      %2943 = vmatmul.f32.gmra.mxu0 %v2020
      %v2944 = vpop.f32.mrf.mxu0
      %v2945 = vadd.f32 0.0, %v2944
      %2946 = vmatmul.f32.gmra.mxu0 %v2023
      %v2947 = vpop.f32.mrf.mxu0
      %v2948 = vadd.f32 0.0, %v2947
      %2949 = vmatmul.f32.gmra.mxu0 %v2026
      %v2950 = vpop.f32.mrf.mxu0
      %v2951 = vadd.f32 0.0, %v2950
      %2952 = vmatmul.f32.gmra.mxu0 %v2029
      %v2953 = vpop.f32.mrf.mxu0
      %v2954 = vadd.f32 0.0, %v2953
      %2955 = vmatmul.f32.gmra.mxu0 %v2032
      %v2956 = vpop.f32.mrf.mxu0
      %v2957 = vadd.f32 0.0, %v2956
      %2958 = vmatmul.f32.gmra.mxu0 %v2035
      %v2959 = vpop.f32.mrf.mxu0
      %v2960 = vadd.f32 0.0, %v2959
      %2961 = vmatmul.f32.gmra.mxu0 %v2038
      %v2962 = vpop.f32.mrf.mxu0
      %v2963 = vadd.f32 0.0, %v2962
      %2964 = vmatmul.f32.gmra.mxu0 %v2041
      %v2965 = vpop.f32.mrf.mxu0
      %v2966 = vadd.f32 0.0, %v2965
      %2967 = vmatmul.f32.gmra.mxu0 %v2044
      %v2968 = vpop.f32.mrf.mxu0
      %v2969 = vadd.f32 0.0, %v2968
      %2970 = vmatmul.f32.gmra.mxu0 %v2047
      %v2971 = vpop.f32.mrf.mxu0
      %v2972 = vadd.f32 0.0, %v2971
      %2973 = vmatmul.f32.gmra.mxu0 %v2050
      %v2974 = vpop.f32.mrf.mxu0
      %v2975 = vadd.f32 0.0, %v2974
      %2976 = vmatmul.f32.gmra.mxu0 %v2053
      %v2977 = vpop.f32.mrf.mxu0
      %v2978 = vadd.f32 0.0, %v2977
      %2979 = vmatmul.f32.gmra.mxu0 %v2056
      %v2980 = vpop.f32.mrf.mxu0
      %v2981 = vadd.f32 0.0, %v2980
      %2982 = vmatmul.f32.gmra.mxu0 %v2059
      %v2983 = vpop.f32.mrf.mxu0
      %v2984 = vadd.f32 0.0, %v2983
      %2985 = vmatmul.f32.gmra.mxu0 %v2062
      %v2986 = vpop.f32.mrf.mxu0
      %v2987 = vadd.f32 0.0, %v2986
      %2988 = vmatmul.f32.gmra.mxu0 %v2065
      %v2989 = vpop.f32.mrf.mxu0
      %v2990 = vadd.f32 0.0, %v2989
      %2991 = vmatmul.f32.gmra.mxu0 %v2068
      %v2992 = vpop.f32.mrf.mxu0
      %v2993 = vadd.f32 0.0, %v2992
      %2994 = vmatmul.f32.gmra.mxu0 %v2071
      %v2995 = vpop.f32.mrf.mxu0
      %v2996 = vadd.f32 0.0, %v2995
      %2997 = vmatmul.f32.gmra.mxu0 %v2074
      %v2998 = vpop.f32.mrf.mxu0
      %v2999 = vadd.f32 0.0, %v2998
      %3000 = vmatmul.f32.gmra.mxu0 %v2077
      %v3001 = vpop.f32.mrf.mxu0
      %v3002 = vadd.f32 0.0, %v3001
      %3003 = vmatmul.f32.gmra.mxu0 %v2080
      %v3004 = vpop.f32.mrf.mxu0
      %v3005 = vadd.f32 0.0, %v3004
      %3006 = vmatmul.f32.gmra.mxu0 %v2083
      %v3007 = vpop.f32.mrf.mxu0
      %v3008 = vadd.f32 0.0, %v3007
      %3009 = vmatmul.f32.gmra.mxu0 %v2086
      %v3010 = vpop.f32.mrf.mxu0
      %v3011 = vadd.f32 0.0, %v3010
      %3012 = vmatmul.f32.gmra.mxu0 %v2089
      %v3013 = vpop.f32.mrf.mxu0
      %v3014 = vadd.f32 0.0, %v3013
      %3015 = vmatmul.f32.gmra.mxu0 %v2401
      %v3016 = vpop.f32.mrf.mxu0
      %v3017 = vadd.f32 0.0, %v3016
      %3018 = vmatmul.f32.gmra.mxu0 %v2401
      %v3019 = vpop.f32.mrf.mxu0
      %v3020 = vadd.f32 0.0, %v3019
      %3021 = vdwg.mxu0
      %v3022 = vadd.f32 %v2424, %v2735
      %v3023 = vadd.f32 %v2427, %v2738
      %v3024 = vadd.f32 %v2430, %v2741
      %v3025 = vadd.f32 %v2433, %v2744
      %v3026 = vadd.f32 %v2436, %v2747
      %v3027 = vadd.f32 %v2439, %v2750
      %v3028 = vadd.f32 %v2442, %v2753
      %v3029 = vadd.f32 %v2445, %v2756
      %v3030 = vadd.f32 %v2448, %v2759
      %v3031 = vadd.f32 %v2451, %v2762
      %v3032 = vadd.f32 %v2454, %v2765
      %v3033 = vadd.f32 %v2457, %v2768
      %v3034 = vadd.f32 %v2460, %v2771
      %v3035 = vadd.f32 %v2463, %v2774
      %v3036 = vadd.f32 %v2466, %v2777
      %v3037 = vadd.f32 %v2469, %v2780
      %v3038 = vadd.f32 %v2472, %v2783
      %v3039 = vadd.f32 %v2475, %v2786
      %v3040 = vadd.f32 %v2478, %v2789
      %v3041 = vadd.f32 %v2481, %v2792
      %v3042 = vadd.f32 %v2484, %v2795
      %v3043 = vadd.f32 %v2487, %v2798
      %v3044 = vadd.f32 %v2490, %v2801
      %v3045 = vadd.f32 %v2493, %v2804
      %v3046 = vadd.f32 %v2496, %v2807
      %v3047 = vadd.f32 %v2499, %v2810
      %v3048 = vadd.f32 %v2502, %v2813
      %v3049 = vadd.f32 %v2505, %v2816
      %v3050 = vadd.f32 %v2508, %v2819
      %v3051 = vadd.f32 %v2511, %v2822
      %v3052 = vadd.f32 %v2514, %v2825
      %v3053 = vadd.f32 %v2517, %v2828
      %v3054 = vadd.f32 %v2520, %v2831
      %v3055 = vadd.f32 %v2523, %v2834
      %v3056 = vadd.f32 %v2526, %v2837
      %v3057 = vadd.f32 %v2529, %v2840
      %v3058 = vadd.f32 %v2532, %v2843
      %v3059 = vadd.f32 %v2535, %v2846
      %v3060 = vadd.f32 %v2538, %v2849
      %v3061 = vadd.f32 %v2541, %v2852
      %v3062 = vadd.f32 %v2544, %v2855
      %v3063 = vadd.f32 %v2547, %v2858
      %v3064 = vadd.f32 %v2550, %v2861
      %v3065 = vadd.f32 %v2553, %v2864
      %v3066 = vadd.f32 %v2556, %v2867
      %v3067 = vadd.f32 %v2559, %v2870
      %v3068 = vadd.f32 %v2562, %v2873
      %v3069 = vadd.f32 %v2565, %v2876
      %v3070 = vadd.f32 %v2568, %v2879
      %v3071 = vadd.f32 %v2571, %v2882
      %v3072 = vadd.f32 %v2574, %v2885
      %v3073 = vadd.f32 %v2577, %v2888
      %v3074 = vadd.f32 %v2580, %v2891
      %v3075 = vadd.f32 %v2583, %v2894
      %v3076 = vadd.f32 %v2586, %v2897
      %v3077 = vadd.f32 %v2589, %v2900
      %v3078 = vadd.f32 %v2592, %v2903
      %v3079 = vadd.f32 %v2595, %v2906
      %v3080 = vadd.f32 %v2598, %v2909
      %v3081 = vadd.f32 %v2601, %v2912
      %v3082 = vadd.f32 %v2604, %v2915
      %v3083 = vadd.f32 %v2607, %v2918
      %v3084 = vadd.f32 %v2610, %v2921
      %v3085 = vadd.f32 %v2613, %v2924
      %v3086 = vadd.f32 %v2616, %v2927
      %v3087 = vadd.f32 %v2619, %v2930
      %v3088 = vadd.f32 %v2622, %v2933
      %v3089 = vadd.f32 %v2625, %v2936
      %v3090 = vadd.f32 %v2628, %v2939
      %v3091 = vadd.f32 %v2631, %v2942
      %v3092 = vadd.f32 %v2634, %v2945
      %v3093 = vadd.f32 %v2637, %v2948
      %v3094 = vadd.f32 %v2640, %v2951
      %v3095 = vadd.f32 %v2643, %v2954
      %v3096 = vadd.f32 %v2646, %v2957
      %v3097 = vadd.f32 %v2649, %v2960
      %v3098 = vadd.f32 %v2652, %v2963
      %v3099 = vadd.f32 %v2655, %v2966
      %v3100 = vadd.f32 %v2658, %v2969
      %v3101 = vadd.f32 %v2661, %v2972
      %v3102 = vadd.f32 %v2664, %v2975
      %v3103 = vadd.f32 %v2667, %v2978
      %v3104 = vadd.f32 %v2670, %v2981
      %v3105 = vadd.f32 %v2673, %v2984
      %v3106 = vadd.f32 %v2676, %v2987
      %v3107 = vadd.f32 %v2679, %v2990
      %v3108 = vadd.f32 %v2682, %v2993
      %v3109 = vadd.f32 %v2685, %v2996
      %v3110 = vadd.f32 %v2688, %v2999
      %v3111 = vadd.f32 %v2691, %v3002
      %v3112 = vadd.f32 %v2694, %v3005
      %v3113 = vadd.f32 %v2697, %v3008
      %v3114 = vadd.f32 %v2700, %v3011
      %v3115 = vadd.f32 %v2703, %v3014
      %v3116 = vadd.f32 %v2706, %v3017
      %v3117 = vadd.f32 %v2709, %v3020
      %v3118 = vld [vmem:[%s2] sm:$0x1]
      %v3120 = vperm.slane %v3118, 0
      %v3122 = vadd.f32 %v3022, %v3120
      %v3123 = vadd.f32 %v3023, %v3120
      %v3124 = vadd.f32 %v3024, %v3120
      %v3125 = vadd.f32 %v3025, %v3120
      %v3126 = vadd.f32 %v3026, %v3120
      %v3127 = vadd.f32 %v3027, %v3120
      %v3128 = vadd.f32 %v3028, %v3120
      %v3129 = vadd.f32 %v3029, %v3120
      %v3130 = vadd.f32 %v3030, %v3120
      %v3131 = vadd.f32 %v3031, %v3120
      %v3132 = vadd.f32 %v3032, %v3120
      %v3133 = vadd.f32 %v3033, %v3120
      %v3134 = vadd.f32 %v3034, %v3120
      %v3135 = vadd.f32 %v3035, %v3120
      %v3136 = vadd.f32 %v3036, %v3120
      %v3137 = vadd.f32 %v3037, %v3120
      %v3138 = vadd.f32 %v3038, %v3120
      %v3139 = vadd.f32 %v3039, %v3120
      %v3140 = vadd.f32 %v3040, %v3120
      %v3141 = vadd.f32 %v3041, %v3120
      %v3142 = vadd.f32 %v3042, %v3120
      %v3143 = vadd.f32 %v3043, %v3120
      %v3144 = vadd.f32 %v3044, %v3120
      %v3145 = vadd.f32 %v3045, %v3120
      %v3146 = vadd.f32 %v3046, %v3120
      %v3147 = vadd.f32 %v3047, %v3120
      %v3148 = vadd.f32 %v3048, %v3120
      %v3149 = vadd.f32 %v3049, %v3120
      %v3150 = vadd.f32 %v3050, %v3120
      %v3151 = vadd.f32 %v3051, %v3120
      %v3152 = vadd.f32 %v3052, %v3120
      %v3153 = vadd.f32 %v3053, %v3120
      %v3154 = vadd.f32 %v3054, %v3120
      %v3155 = vadd.f32 %v3055, %v3120
      %v3156 = vadd.f32 %v3056, %v3120
      %v3157 = vadd.f32 %v3057, %v3120
      %v3158 = vadd.f32 %v3058, %v3120
      %v3159 = vadd.f32 %v3059, %v3120
      %v3160 = vadd.f32 %v3060, %v3120
      %v3161 = vadd.f32 %v3061, %v3120
      %v3162 = vadd.f32 %v3062, %v3120
      %v3163 = vadd.f32 %v3063, %v3120
      %v3164 = vadd.f32 %v3064, %v3120
      %v3165 = vadd.f32 %v3065, %v3120
      %v3166 = vadd.f32 %v3066, %v3120
      %v3167 = vadd.f32 %v3067, %v3120
      %v3168 = vadd.f32 %v3068, %v3120
      %v3169 = vadd.f32 %v3069, %v3120
      %v3170 = vadd.f32 %v3070, %v3120
      %v3171 = vadd.f32 %v3071, %v3120
      %v3172 = vadd.f32 %v3072, %v3120
      %v3173 = vadd.f32 %v3073, %v3120
      %v3174 = vadd.f32 %v3074, %v3120
      %v3175 = vadd.f32 %v3075, %v3120
      %v3176 = vadd.f32 %v3076, %v3120
      %v3177 = vadd.f32 %v3077, %v3120
      %v3178 = vadd.f32 %v3078, %v3120
      %v3179 = vadd.f32 %v3079, %v3120
      %v3180 = vadd.f32 %v3080, %v3120
      %v3181 = vadd.f32 %v3081, %v3120
      %v3182 = vadd.f32 %v3082, %v3120
      %v3183 = vadd.f32 %v3083, %v3120
      %v3184 = vadd.f32 %v3084, %v3120
      %v3185 = vadd.f32 %v3085, %v3120
      %v3186 = vadd.f32 %v3086, %v3120
      %v3187 = vadd.f32 %v3087, %v3120
      %v3188 = vadd.f32 %v3088, %v3120
      %v3189 = vadd.f32 %v3089, %v3120
      %v3190 = vadd.f32 %v3090, %v3120
      %v3191 = vadd.f32 %v3091, %v3120
      %v3192 = vadd.f32 %v3092, %v3120
      %v3193 = vadd.f32 %v3093, %v3120
      %v3194 = vadd.f32 %v3094, %v3120
      %v3195 = vadd.f32 %v3095, %v3120
      %v3196 = vadd.f32 %v3096, %v3120
      %v3197 = vadd.f32 %v3097, %v3120
      %v3198 = vadd.f32 %v3098, %v3120
      %v3199 = vadd.f32 %v3099, %v3120
      %v3200 = vadd.f32 %v3100, %v3120
      %v3201 = vadd.f32 %v3101, %v3120
      %v3202 = vadd.f32 %v3102, %v3120
      %v3203 = vadd.f32 %v3103, %v3120
      %v3204 = vadd.f32 %v3104, %v3120
      %v3205 = vadd.f32 %v3105, %v3120
      %v3206 = vadd.f32 %v3106, %v3120
      %v3207 = vadd.f32 %v3107, %v3120
      %v3208 = vadd.f32 %v3108, %v3120
      %v3209 = vadd.f32 %v3109, %v3120
      %v3210 = vadd.f32 %v3110, %v3120
      %v3211 = vadd.f32 %v3111, %v3120
      %v3212 = vadd.f32 %v3112, %v3120
      %v3213 = vadd.f32 %v3113, %v3120
      %v3214 = vadd.f32 %v3114, %v3120
      %v3215 = vadd.f32 %v3115, %v3120
      %v3216 = vadd.f32 %v3116, %v3120
      %v3217 = vadd.f32 %v3117, %v3120
      %v3218 = vsub.f32 %v3122, %v225
      %v3219 = vsub.f32 %v3123, %v226
      %v3220 = vsub.f32 %v3124, %v227
      %v3221 = vsub.f32 %v3125, %v228
      %v3222 = vsub.f32 %v3126, %v229
      %v3223 = vsub.f32 %v3127, %v230
      %v3224 = vsub.f32 %v3128, %v231
      %v3225 = vsub.f32 %v3129, %v232
      %v3226 = vsub.f32 %v3130, %v233
      %v3227 = vsub.f32 %v3131, %v234
      %v3228 = vsub.f32 %v3132, %v235
      %v3229 = vsub.f32 %v3133, %v236
      %v3230 = vsub.f32 %v3134, %v237
      %v3231 = vsub.f32 %v3135, %v238
      %v3232 = vsub.f32 %v3136, %v239
      %v3233 = vsub.f32 %v3137, %v240
      %v3234 = vsub.f32 %v3138, %v241
      %v3235 = vsub.f32 %v3139, %v242
      %v3236 = vsub.f32 %v3140, %v243
      %v3237 = vsub.f32 %v3141, %v244
      %v3238 = vsub.f32 %v3142, %v245
      %v3239 = vsub.f32 %v3143, %v246
      %v3240 = vsub.f32 %v3144, %v247
      %v3241 = vsub.f32 %v3145, %v248
      %v3242 = vsub.f32 %v3146, %v249
      %v3243 = vsub.f32 %v3147, %v250
      %v3244 = vsub.f32 %v3148, %v251
      %v3245 = vsub.f32 %v3149, %v252
      %v3246 = vsub.f32 %v3150, %v253
      %v3247 = vsub.f32 %v3151, %v254
      %v3248 = vsub.f32 %v3152, %v255
      %v3249 = vsub.f32 %v3153, %v256
      %v3250 = vsub.f32 %v3154, %v257
      %v3251 = vsub.f32 %v3155, %v258
      %v3252 = vsub.f32 %v3156, %v259
      %v3253 = vsub.f32 %v3157, %v260
      %v3254 = vsub.f32 %v3158, %v261
      %v3255 = vsub.f32 %v3159, %v262
      %v3256 = vsub.f32 %v3160, %v263
      %v3257 = vsub.f32 %v3161, %v264
      %v3258 = vsub.f32 %v3162, %v265
      %v3259 = vsub.f32 %v3163, %v266
      %v3260 = vsub.f32 %v3164, %v267
      %v3261 = vsub.f32 %v3165, %v268
      %v3262 = vsub.f32 %v3166, %v269
      %v3263 = vsub.f32 %v3167, %v270
      %v3264 = vsub.f32 %v3168, %v271
      %v3265 = vsub.f32 %v3169, %v272
      %v3266 = vsub.f32 %v3170, %v273
      %v3267 = vsub.f32 %v3171, %v274
      %v3268 = vsub.f32 %v3172, %v275
      %v3269 = vsub.f32 %v3173, %v276
      %v3270 = vsub.f32 %v3174, %v277
      %v3271 = vsub.f32 %v3175, %v278
      %v3272 = vsub.f32 %v3176, %v279
      %v3273 = vsub.f32 %v3177, %v280
      %v3274 = vsub.f32 %v3178, %v281
      %v3275 = vsub.f32 %v3179, %v282
      %v3276 = vsub.f32 %v3180, %v283
      %v3277 = vsub.f32 %v3181, %v284
      %v3278 = vsub.f32 %v3182, %v285
      %v3279 = vsub.f32 %v3183, %v286
      %v3280 = vsub.f32 %v3184, %v287
      %v3281 = vsub.f32 %v3185, %v288
      %v3282 = vsub.f32 %v3186, %v289
      %v3283 = vsub.f32 %v3187, %v290
      %v3284 = vsub.f32 %v3188, %v291
      %v3285 = vsub.f32 %v3189, %v292
      %v3286 = vsub.f32 %v3190, %v293
      %v3287 = vsub.f32 %v3191, %v294
      %v3288 = vsub.f32 %v3192, %v295
      %v3289 = vsub.f32 %v3193, %v296
      %v3290 = vsub.f32 %v3194, %v297
      %v3291 = vsub.f32 %v3195, %v298
      %v3292 = vsub.f32 %v3196, %v299
      %v3293 = vsub.f32 %v3197, %v300
      %v3294 = vsub.f32 %v3198, %v301
      %v3295 = vsub.f32 %v3199, %v302
      %v3296 = vsub.f32 %v3200, %v303
      %v3297 = vsub.f32 %v3201, %v304
      %v3298 = vsub.f32 %v3202, %v305
      %v3299 = vsub.f32 %v3203, %v306
      %v3300 = vsub.f32 %v3204, %v307
      %v3301 = vsub.f32 %v3205, %v308
      %v3302 = vsub.f32 %v3206, %v309
      %v3303 = vsub.f32 %v3207, %v310
      %v3304 = vsub.f32 %v3208, %v311
      %v3305 = vsub.f32 %v3209, %v312
      %v3306 = vsub.f32 %v3210, %v313
      %v3307 = vsub.f32 %v3211, %v314
      %v3308 = vsub.f32 %v3212, %v315
      %v3309 = vsub.f32 %v3213, %v316
      %v3310 = vsub.f32 %v3214, %v317
      %v3311 = vsub.f32 %v3215, %v318
      %v3312 = vsub.f32 %v3216, %v319
      %v3313 = vsub.f32 %v3217, %v320
      %v3346 = vrot.slane %v225, 7
      %v3347 = vrot.slane %v226, 7
      %v3348 = vsel %vm449, %v3346, %v3347
      %v3349 = vrot.slane %v227, 7
      %v3350 = vrot.slane %v228, 7
      %v3351 = vsel %vm449, %v3349, %v3350
      %v3352 = vrot.slane %v229, 7
      %v3353 = vrot.slane %v230, 7
      %v3354 = vsel %vm449, %v3352, %v3353
      %v3355 = vrot.slane %v231, 7
      %v3356 = vrot.slane %v232, 7
      %v3357 = vsel %vm449, %v3355, %v3356
      %v3358 = vrot.slane %v233, 7
      %v3359 = vrot.slane %v234, 7
      %v3360 = vsel %vm449, %v3358, %v3359
      %v3361 = vrot.slane %v235, 7
      %v3362 = vrot.slane %v236, 7
      %v3363 = vsel %vm449, %v3361, %v3362
      %v3364 = vrot.slane %v237, 7
      %v3365 = vrot.slane %v238, 7
      %v3366 = vsel %vm449, %v3364, %v3365
      %v3367 = vrot.slane %v239, 7
      %v3368 = vrot.slane %v240, 7
      %v3369 = vsel %vm449, %v3367, %v3368
      %v3370 = vrot.slane %v241, 7
      %v3371 = vrot.slane %v242, 7
      %v3372 = vsel %vm449, %v3370, %v3371
      %v3373 = vrot.slane %v243, 7
      %v3374 = vrot.slane %v244, 7
      %v3375 = vsel %vm449, %v3373, %v3374
      %v3376 = vrot.slane %v245, 7
      %v3377 = vrot.slane %v246, 7
      %v3378 = vsel %vm449, %v3376, %v3377
      %v3379 = vrot.slane %v247, 7
      %v3380 = vrot.slane %v248, 7
      %v3381 = vsel %vm449, %v3379, %v3380
      %v3382 = vrot.slane %v249, 7
      %v3383 = vrot.slane %v250, 7
      %v3384 = vsel %vm449, %v3382, %v3383
      %v3385 = vrot.slane %v251, 7
      %v3386 = vrot.slane %v252, 7
      %v3387 = vsel %vm449, %v3385, %v3386
      %v3388 = vrot.slane %v253, 7
      %v3389 = vrot.slane %v254, 7
      %v3390 = vsel %vm449, %v3388, %v3389
      %v3391 = vrot.slane %v255, 7
      %v3392 = vrot.slane %v256, 7
      %v3393 = vsel %vm449, %v3391, %v3392
      %3394 = vrot.lane.b32.xlu0 %v3346, 124
      %v3395 = vpop.permute.xlu0 %3394
      %3396 = vrot.lane.b32.xlu0 %v3348, 124
      %v3397 = vpop.permute.xlu0 %3396
      %3398 = vrot.lane.b32.xlu0 %v3349, 124
      %v3399 = vpop.permute.xlu0 %3398
      %3400 = vrot.lane.b32.xlu0 %v3351, 124
      %v3401 = vpop.permute.xlu0 %3400
      %3402 = vrot.lane.b32.xlu0 %v3352, 124
      %v3403 = vpop.permute.xlu0 %3402
      %3404 = vrot.lane.b32.xlu0 %v3354, 124
      %v3405 = vpop.permute.xlu0 %3404
      %3406 = vrot.lane.b32.xlu0 %v3355, 124
      %v3407 = vpop.permute.xlu0 %3406
      %3408 = vrot.lane.b32.xlu0 %v3357, 124
      %v3409 = vpop.permute.xlu0 %3408
      %3410 = vrot.lane.b32.xlu0 %v3358, 124
      %v3411 = vpop.permute.xlu0 %3410
      %3412 = vrot.lane.b32.xlu0 %v3360, 124
      %v3413 = vpop.permute.xlu0 %3412
      %3414 = vrot.lane.b32.xlu0 %v3361, 124
      %v3415 = vpop.permute.xlu0 %3414
      %3416 = vrot.lane.b32.xlu0 %v3363, 124
      %v3417 = vpop.permute.xlu0 %3416
      %3418 = vrot.lane.b32.xlu0 %v3364, 124
      %v3419 = vpop.permute.xlu0 %3418
      %3420 = vrot.lane.b32.xlu0 %v3366, 124
      %v3421 = vpop.permute.xlu0 %3420
      %3422 = vrot.lane.b32.xlu0 %v3367, 124
      %v3423 = vpop.permute.xlu0 %3422
      %3424 = vrot.lane.b32.xlu0 %v3369, 124
      %v3425 = vpop.permute.xlu0 %3424
      %3426 = vrot.lane.b32.xlu0 %v3370, 124
      %v3427 = vpop.permute.xlu0 %3426
      %3428 = vrot.lane.b32.xlu0 %v3372, 124
      %v3429 = vpop.permute.xlu0 %3428
      %3430 = vrot.lane.b32.xlu0 %v3373, 124
      %v3431 = vpop.permute.xlu0 %3430
      %3432 = vrot.lane.b32.xlu0 %v3375, 124
      %v3433 = vpop.permute.xlu0 %3432
      %3434 = vrot.lane.b32.xlu0 %v3376, 124
      %v3435 = vpop.permute.xlu0 %3434
      %3436 = vrot.lane.b32.xlu0 %v3378, 124
      %v3437 = vpop.permute.xlu0 %3436
      %3438 = vrot.lane.b32.xlu0 %v3379, 124
      %v3439 = vpop.permute.xlu0 %3438
      %3440 = vrot.lane.b32.xlu0 %v3381, 124
      %v3441 = vpop.permute.xlu0 %3440
      %3442 = vrot.lane.b32.xlu0 %v3382, 124
      %v3443 = vpop.permute.xlu0 %3442
      %3444 = vrot.lane.b32.xlu0 %v3384, 124
      %v3445 = vpop.permute.xlu0 %3444
      %3446 = vrot.lane.b32.xlu0 %v3385, 124
      %v3447 = vpop.permute.xlu0 %3446
      %3448 = vrot.lane.b32.xlu0 %v3387, 124
      %v3449 = vpop.permute.xlu0 %3448
      %3450 = vrot.lane.b32.xlu0 %v3388, 124
      %v3451 = vpop.permute.xlu0 %3450
      %3452 = vrot.lane.b32.xlu0 %v3390, 124
      %v3453 = vpop.permute.xlu0 %3452
      %3454 = vrot.lane.b32.xlu0 %v3391, 124
      %v3455 = vpop.permute.xlu0 %3454
      %3456 = vrot.lane.b32.xlu0 %v3393, 124
      %v3457 = vpop.permute.xlu0 %3456
      %3458 = vrot.lane.b32.xlu0 %v450, 124
      %v3459 = vpop.permute.xlu0 %3458
      %3460 = vrot.lane.b32.xlu0 %v452, 124
      %v3461 = vpop.permute.xlu0 %3460
      %3462 = vrot.lane.b32.xlu0 %v453, 124
      %v3463 = vpop.permute.xlu0 %3462
      %3464 = vrot.lane.b32.xlu0 %v455, 124
      %v3465 = vpop.permute.xlu0 %3464
      %3466 = vrot.lane.b32.xlu0 %v456, 124
      %v3467 = vpop.permute.xlu0 %3466
      %3468 = vrot.lane.b32.xlu0 %v458, 124
      %v3469 = vpop.permute.xlu0 %3468
      %3470 = vrot.lane.b32.xlu0 %v459, 124
      %v3471 = vpop.permute.xlu0 %3470
      %3472 = vrot.lane.b32.xlu0 %v461, 124
      %v3473 = vpop.permute.xlu0 %3472
      %3474 = vrot.lane.b32.xlu0 %v462, 124
      %v3475 = vpop.permute.xlu0 %3474
      %3476 = vrot.lane.b32.xlu0 %v464, 124
      %v3477 = vpop.permute.xlu0 %3476
      %3478 = vrot.lane.b32.xlu0 %v465, 124
      %v3479 = vpop.permute.xlu0 %3478
      %3480 = vrot.lane.b32.xlu0 %v467, 124
      %v3481 = vpop.permute.xlu0 %3480
      %3482 = vrot.lane.b32.xlu0 %v468, 124
      %v3483 = vpop.permute.xlu0 %3482
      %3484 = vrot.lane.b32.xlu0 %v470, 124
      %v3485 = vpop.permute.xlu0 %3484
      %3486 = vrot.lane.b32.xlu0 %v471, 124
      %v3487 = vpop.permute.xlu0 %3486
      %3488 = vrot.lane.b32.xlu0 %v473, 124
      %v3489 = vpop.permute.xlu0 %3488
      %3490 = vrot.lane.b32.xlu0 %v474, 124
      %v3491 = vpop.permute.xlu0 %3490
      %3492 = vrot.lane.b32.xlu0 %v476, 124
      %v3493 = vpop.permute.xlu0 %3492
      %3494 = vrot.lane.b32.xlu0 %v477, 124
      %v3495 = vpop.permute.xlu0 %3494
      %3496 = vrot.lane.b32.xlu0 %v479, 124
      %v3497 = vpop.permute.xlu0 %3496
      %3498 = vrot.lane.b32.xlu0 %v480, 124
      %v3499 = vpop.permute.xlu0 %3498
      %3500 = vrot.lane.b32.xlu0 %v482, 124
      %v3501 = vpop.permute.xlu0 %3500
      %3502 = vrot.lane.b32.xlu0 %v483, 124
      %v3503 = vpop.permute.xlu0 %3502
      %3504 = vrot.lane.b32.xlu0 %v485, 124
      %v3505 = vpop.permute.xlu0 %3504
      %3506 = vrot.lane.b32.xlu0 %v486, 124
      %v3507 = vpop.permute.xlu0 %3506
      %3508 = vrot.lane.b32.xlu0 %v488, 124
      %v3509 = vpop.permute.xlu0 %3508
      %3510 = vrot.lane.b32.xlu0 %v489, 124
      %v3511 = vpop.permute.xlu0 %3510
      %3512 = vrot.lane.b32.xlu0 %v491, 124
      %v3513 = vpop.permute.xlu0 %3512
      %3514 = vrot.lane.b32.xlu0 %v492, 124
      %v3515 = vpop.permute.xlu0 %3514
      %3516 = vrot.lane.b32.xlu0 %v494, 124
      %v3517 = vpop.permute.xlu0 %3516
      %3518 = vrot.lane.b32.xlu0 %v495, 124
      %v3519 = vpop.permute.xlu0 %3518
      %3520 = vrot.lane.b32.xlu0 %v497, 124
      %v3521 = vpop.permute.xlu0 %3520
      %3522 = vrot.lane.b32.xlu0 %v498, 124
      %v3523 = vpop.permute.xlu0 %3522
      %3524 = vrot.lane.b32.xlu0 %v500, 124
      %v3525 = vpop.permute.xlu0 %3524
      %3526 = vrot.lane.b32.xlu0 %v501, 124
      %v3527 = vpop.permute.xlu0 %3526
      %3528 = vrot.lane.b32.xlu0 %v503, 124
      %v3529 = vpop.permute.xlu0 %3528
      %3530 = vrot.lane.b32.xlu0 %v504, 124
      %v3531 = vpop.permute.xlu0 %3530
      %3532 = vrot.lane.b32.xlu0 %v506, 124
      %v3533 = vpop.permute.xlu0 %3532
      %3534 = vrot.lane.b32.xlu0 %v507, 124
      %v3535 = vpop.permute.xlu0 %3534
      %3536 = vrot.lane.b32.xlu0 %v509, 124
      %v3537 = vpop.permute.xlu0 %3536
      %3538 = vrot.lane.b32.xlu0 %v510, 124
      %v3539 = vpop.permute.xlu0 %3538
      %3540 = vrot.lane.b32.xlu0 %v512, 124
      %v3541 = vpop.permute.xlu0 %3540
      %3542 = vrot.lane.b32.xlu0 %v513, 124
      %v3543 = vpop.permute.xlu0 %3542
      %3544 = vrot.lane.b32.xlu0 %v515, 124
      %v3545 = vpop.permute.xlu0 %3544
      %3546 = vrot.lane.b32.xlu0 %v516, 124
      %v3547 = vpop.permute.xlu0 %3546
      %3548 = vrot.lane.b32.xlu0 %v518, 124
      %v3549 = vpop.permute.xlu0 %3548
      %3550 = vrot.lane.b32.xlu0 %v519, 124
      %v3551 = vpop.permute.xlu0 %3550
      %3552 = vrot.lane.b32.xlu0 %v521, 124
      %v3553 = vpop.permute.xlu0 %3552
      %3554 = vrot.lane.b32.xlu0 %v522, 124
      %v3555 = vpop.permute.xlu0 %3554
      %3556 = vrot.lane.b32.xlu0 %v524, 124
      %v3557 = vpop.permute.xlu0 %3556
      %3558 = vrot.lane.b32.xlu0 %v525, 124
      %v3559 = vpop.permute.xlu0 %3558
      %3560 = vrot.lane.b32.xlu0 %v527, 124
      %v3561 = vpop.permute.xlu0 %3560
      %3562 = vrot.lane.b32.xlu0 %v528, 124
      %v3563 = vpop.permute.xlu0 %3562
      %3564 = vrot.lane.b32.xlu0 %v530, 124
      %v3565 = vpop.permute.xlu0 %3564
      %3566 = vrot.lane.b32.xlu0 %v531, 124
      %v3567 = vpop.permute.xlu0 %3566
      %3568 = vrot.lane.b32.xlu0 %v533, 124
      %v3569 = vpop.permute.xlu0 %3568
      %3570 = vrot.lane.b32.xlu0 %v534, 124
      %v3571 = vpop.permute.xlu0 %3570
      %3572 = vrot.lane.b32.xlu0 %v536, 124
      %v3573 = vpop.permute.xlu0 %3572
      %3574 = vrot.lane.b32.xlu0 %v537, 124
      %v3575 = vpop.permute.xlu0 %3574
      %3576 = vrot.lane.b32.xlu0 %v539, 124
      %v3577 = vpop.permute.xlu0 %3576
      %3578 = vrot.lane.b32.xlu0 %v540, 124
      %v3579 = vpop.permute.xlu0 %3578
      %3580 = vrot.lane.b32.xlu0 %v542, 124
      %v3581 = vpop.permute.xlu0 %3580
      %3582 = vrot.lane.b32.xlu0 %v543, 124
      %v3583 = vpop.permute.xlu0 %3582
      %3584 = vrot.lane.b32.xlu0 %v545, 124
      %v3585 = vpop.permute.xlu0 %3584
      %v3682 = vsel %vm449, 0.0, %v3395
      %v3683 = vsel %vm449, 0.0, %v3399
      %v3684 = vsel %vm449, 0.0, %v3403
      %v3685 = vsel %vm449, 0.0, %v3407
      %v3686 = vsel %vm449, 0.0, %v3411
      %v3687 = vsel %vm449, 0.0, %v3415
      %v3688 = vsel %vm449, 0.0, %v3419
      %v3689 = vsel %vm449, 0.0, %v3423
      %v3690 = vsel %vm449, 0.0, %v3427
      %v3691 = vsel %vm449, 0.0, %v3431
      %v3692 = vsel %vm449, 0.0, %v3435
      %v3693 = vsel %vm449, 0.0, %v3439
      %v3694 = vsel %vm449, 0.0, %v3443
      %v3695 = vsel %vm449, 0.0, %v3447
      %v3696 = vsel %vm449, 0.0, %v3451
      %v3697 = vsel %vm449, 0.0, %v3455
      %v3698 = vsel %vm449, 0.0, %v3459
      %v3699 = vsel %vm449, 0.0, %v3463
      %v3700 = vsel %vm449, 0.0, %v3467
      %v3701 = vsel %vm449, 0.0, %v3471
      %v3702 = vsel %vm449, 0.0, %v3475
      %v3703 = vsel %vm449, 0.0, %v3479
      %v3704 = vsel %vm449, 0.0, %v3483
      %v3705 = vsel %vm449, 0.0, %v3487
      %v3706 = vsel %vm449, 0.0, %v3491
      %v3707 = vsel %vm449, 0.0, %v3495
      %v3708 = vsel %vm449, 0.0, %v3499
      %v3709 = vsel %vm449, 0.0, %v3503
      %v3710 = vsel %vm449, 0.0, %v3507
      %v3711 = vsel %vm449, 0.0, %v3511
      %v3712 = vsel %vm449, 0.0, %v3515
      %v3713 = vsel %vm449, 0.0, %v3519
      %v3714 = vsel %vm449, 0.0, %v3523
      %v3715 = vsel %vm449, 0.0, %v3527
      %v3716 = vsel %vm449, 0.0, %v3531
      %v3717 = vsel %vm449, 0.0, %v3535
      %v3718 = vsel %vm449, 0.0, %v3539
      %v3719 = vsel %vm449, 0.0, %v3543
      %v3720 = vsel %vm449, 0.0, %v3547
      %v3721 = vsel %vm449, 0.0, %v3551
      %v3722 = vsel %vm449, 0.0, %v3555
      %v3723 = vsel %vm449, 0.0, %v3559
      %v3724 = vsel %vm449, 0.0, %v3563
      %v3725 = vsel %vm449, 0.0, %v3567
      %v3726 = vsel %vm449, 0.0, %v3571
      %v3727 = vsel %vm449, 0.0, %v3575
      %v3728 = vsel %vm449, 0.0, %v3579
      %v3729 = vsel %vm449, 0.0, %v3583
      %v3730 = vrot.slane %v225, 1
      %v3731 = vrot.slane %v226, 1
      %v3732 = vsel %vm738, %v3730, %v3731
      %v3733 = vrot.slane %v227, 1
      %v3734 = vrot.slane %v228, 1
      %v3735 = vsel %vm738, %v3733, %v3734
      %v3736 = vrot.slane %v229, 1
      %v3737 = vrot.slane %v230, 1
      %v3738 = vsel %vm738, %v3736, %v3737
      %v3739 = vrot.slane %v231, 1
      %v3740 = vrot.slane %v232, 1
      %v3741 = vsel %vm738, %v3739, %v3740
      %v3742 = vrot.slane %v233, 1
      %v3743 = vrot.slane %v234, 1
      %v3744 = vsel %vm738, %v3742, %v3743
      %v3745 = vrot.slane %v235, 1
      %v3746 = vrot.slane %v236, 1
      %v3747 = vsel %vm738, %v3745, %v3746
      %v3748 = vrot.slane %v237, 1
      %v3749 = vrot.slane %v238, 1
      %v3750 = vsel %vm738, %v3748, %v3749
      %v3751 = vrot.slane %v239, 1
      %v3752 = vrot.slane %v240, 1
      %v3753 = vsel %vm738, %v3751, %v3752
      %v3754 = vrot.slane %v241, 1
      %v3755 = vrot.slane %v242, 1
      %v3756 = vsel %vm738, %v3754, %v3755
      %v3757 = vrot.slane %v243, 1
      %v3758 = vrot.slane %v244, 1
      %v3759 = vsel %vm738, %v3757, %v3758
      %v3760 = vrot.slane %v245, 1
      %v3761 = vrot.slane %v246, 1
      %v3762 = vsel %vm738, %v3760, %v3761
      %v3763 = vrot.slane %v247, 1
      %v3764 = vrot.slane %v248, 1
      %v3765 = vsel %vm738, %v3763, %v3764
      %v3766 = vrot.slane %v249, 1
      %v3767 = vrot.slane %v250, 1
      %v3768 = vsel %vm738, %v3766, %v3767
      %v3769 = vrot.slane %v251, 1
      %v3770 = vrot.slane %v252, 1
      %v3771 = vsel %vm738, %v3769, %v3770
      %v3772 = vrot.slane %v253, 1
      %v3773 = vrot.slane %v254, 1
      %v3774 = vsel %vm738, %v3772, %v3773
      %v3775 = vrot.slane %v255, 1
      %v3776 = vrot.slane %v256, 1
      %v3777 = vsel %vm738, %v3775, %v3776
      %v3794 = vsel %vm738, %v3731, 0.0
      %v3795 = vsel %vm738, %v3734, 0.0
      %v3796 = vsel %vm738, %v3737, 0.0
      %v3797 = vsel %vm738, %v3740, 0.0
      %v3798 = vsel %vm738, %v3743, 0.0
      %v3799 = vsel %vm738, %v3746, 0.0
      %v3800 = vsel %vm738, %v3749, 0.0
      %v3801 = vsel %vm738, %v3752, 0.0
      %v3802 = vsel %vm738, %v3755, 0.0
      %v3803 = vsel %vm738, %v3758, 0.0
      %v3804 = vsel %vm738, %v3761, 0.0
      %v3805 = vsel %vm738, %v3764, 0.0
      %v3806 = vsel %vm738, %v3767, 0.0
      %v3807 = vsel %vm738, %v3770, 0.0
      %v3808 = vsel %vm738, %v3773, 0.0
      %v3809 = vsel %vm738, %v3776, 0.0
      %3826 = vrot.lane.b32.xlu0 %v3732, 4
      %v3827 = vpop.permute.xlu0 %3826
      %3828 = vrot.lane.b32.xlu0 %v3794, 4
      %v3829 = vpop.permute.xlu0 %3828
      %3830 = vrot.lane.b32.xlu0 %v3735, 4
      %v3831 = vpop.permute.xlu0 %3830
      %3832 = vrot.lane.b32.xlu0 %v3795, 4
      %v3833 = vpop.permute.xlu0 %3832
      %3834 = vrot.lane.b32.xlu0 %v3738, 4
      %v3835 = vpop.permute.xlu0 %3834
      %3836 = vrot.lane.b32.xlu0 %v3796, 4
      %v3837 = vpop.permute.xlu0 %3836
      %3838 = vrot.lane.b32.xlu0 %v3741, 4
      %v3839 = vpop.permute.xlu0 %3838
      %3840 = vrot.lane.b32.xlu0 %v3797, 4
      %v3841 = vpop.permute.xlu0 %3840
      %3842 = vrot.lane.b32.xlu0 %v3744, 4
      %v3843 = vpop.permute.xlu0 %3842
      %3844 = vrot.lane.b32.xlu0 %v3798, 4
      %v3845 = vpop.permute.xlu0 %3844
      %3846 = vrot.lane.b32.xlu0 %v3747, 4
      %v3847 = vpop.permute.xlu0 %3846
      %3848 = vrot.lane.b32.xlu0 %v3799, 4
      %v3849 = vpop.permute.xlu0 %3848
      %3850 = vrot.lane.b32.xlu0 %v3750, 4
      %v3851 = vpop.permute.xlu0 %3850
      %3852 = vrot.lane.b32.xlu0 %v3800, 4
      %v3853 = vpop.permute.xlu0 %3852
      %3854 = vrot.lane.b32.xlu0 %v3753, 4
      %v3855 = vpop.permute.xlu0 %3854
      %3856 = vrot.lane.b32.xlu0 %v3801, 4
      %v3857 = vpop.permute.xlu0 %3856
      %3858 = vrot.lane.b32.xlu0 %v3756, 4
      %v3859 = vpop.permute.xlu0 %3858
      %3860 = vrot.lane.b32.xlu0 %v3802, 4
      %v3861 = vpop.permute.xlu0 %3860
      %3862 = vrot.lane.b32.xlu0 %v3759, 4
      %v3863 = vpop.permute.xlu0 %3862
      %3864 = vrot.lane.b32.xlu0 %v3803, 4
      %v3865 = vpop.permute.xlu0 %3864
      %3866 = vrot.lane.b32.xlu0 %v3762, 4
      %v3867 = vpop.permute.xlu0 %3866
      %3868 = vrot.lane.b32.xlu0 %v3804, 4
      %v3869 = vpop.permute.xlu0 %3868
      %3870 = vrot.lane.b32.xlu0 %v3765, 4
      %v3871 = vpop.permute.xlu0 %3870
      %3872 = vrot.lane.b32.xlu0 %v3805, 4
      %v3873 = vpop.permute.xlu0 %3872
      %3874 = vrot.lane.b32.xlu0 %v3768, 4
      %v3875 = vpop.permute.xlu0 %3874
      %3876 = vrot.lane.b32.xlu0 %v3806, 4
      %v3877 = vpop.permute.xlu0 %3876
      %3878 = vrot.lane.b32.xlu0 %v3771, 4
      %v3879 = vpop.permute.xlu0 %3878
      %3880 = vrot.lane.b32.xlu0 %v3807, 4
      %v3881 = vpop.permute.xlu0 %3880
      %3882 = vrot.lane.b32.xlu0 %v3774, 4
      %v3883 = vpop.permute.xlu0 %3882
      %3884 = vrot.lane.b32.xlu0 %v3808, 4
      %v3885 = vpop.permute.xlu0 %3884
      %3886 = vrot.lane.b32.xlu0 %v3777, 4
      %v3887 = vpop.permute.xlu0 %3886
      %3888 = vrot.lane.b32.xlu0 %v3809, 4
      %v3889 = vpop.permute.xlu0 %3888
      %3890 = vrot.lane.b32.xlu0 %v741, 4
      %v3891 = vpop.permute.xlu0 %3890
      %3892 = vrot.lane.b32.xlu0 %v931, 4
      %v3893 = vpop.permute.xlu0 %3892
      %3894 = vrot.lane.b32.xlu0 %v744, 4
      %v3895 = vpop.permute.xlu0 %3894
      %3896 = vrot.lane.b32.xlu0 %v932, 4
      %v3897 = vpop.permute.xlu0 %3896
      %3898 = vrot.lane.b32.xlu0 %v747, 4
      %v3899 = vpop.permute.xlu0 %3898
      %3900 = vrot.lane.b32.xlu0 %v933, 4
      %v3901 = vpop.permute.xlu0 %3900
      %3902 = vrot.lane.b32.xlu0 %v750, 4
      %v3903 = vpop.permute.xlu0 %3902
      %3904 = vrot.lane.b32.xlu0 %v934, 4
      %v3905 = vpop.permute.xlu0 %3904
      %3906 = vrot.lane.b32.xlu0 %v753, 4
      %v3907 = vpop.permute.xlu0 %3906
      %3908 = vrot.lane.b32.xlu0 %v935, 4
      %v3909 = vpop.permute.xlu0 %3908
      %3910 = vrot.lane.b32.xlu0 %v756, 4
      %v3911 = vpop.permute.xlu0 %3910
      %3912 = vrot.lane.b32.xlu0 %v936, 4
      %v3913 = vpop.permute.xlu0 %3912
      %3914 = vrot.lane.b32.xlu0 %v759, 4
      %v3915 = vpop.permute.xlu0 %3914
      %3916 = vrot.lane.b32.xlu0 %v937, 4
      %v3917 = vpop.permute.xlu0 %3916
      %3918 = vrot.lane.b32.xlu0 %v762, 4
      %v3919 = vpop.permute.xlu0 %3918
      %3920 = vrot.lane.b32.xlu0 %v938, 4
      %v3921 = vpop.permute.xlu0 %3920
      %3922 = vrot.lane.b32.xlu0 %v765, 4
      %v3923 = vpop.permute.xlu0 %3922
      %3924 = vrot.lane.b32.xlu0 %v939, 4
      %v3925 = vpop.permute.xlu0 %3924
      %3926 = vrot.lane.b32.xlu0 %v768, 4
      %v3927 = vpop.permute.xlu0 %3926
      %3928 = vrot.lane.b32.xlu0 %v940, 4
      %v3929 = vpop.permute.xlu0 %3928
      %3930 = vrot.lane.b32.xlu0 %v771, 4
      %v3931 = vpop.permute.xlu0 %3930
      %3932 = vrot.lane.b32.xlu0 %v941, 4
      %v3933 = vpop.permute.xlu0 %3932
      %3934 = vrot.lane.b32.xlu0 %v774, 4
      %v3935 = vpop.permute.xlu0 %3934
      %3936 = vrot.lane.b32.xlu0 %v942, 4
      %v3937 = vpop.permute.xlu0 %3936
      %3938 = vrot.lane.b32.xlu0 %v777, 4
      %v3939 = vpop.permute.xlu0 %3938
      %3940 = vrot.lane.b32.xlu0 %v943, 4
      %v3941 = vpop.permute.xlu0 %3940
      %3942 = vrot.lane.b32.xlu0 %v780, 4
      %v3943 = vpop.permute.xlu0 %3942
      %3944 = vrot.lane.b32.xlu0 %v944, 4
      %v3945 = vpop.permute.xlu0 %3944
      %3946 = vrot.lane.b32.xlu0 %v783, 4
      %v3947 = vpop.permute.xlu0 %3946
      %3948 = vrot.lane.b32.xlu0 %v945, 4
      %v3949 = vpop.permute.xlu0 %3948
      %3950 = vrot.lane.b32.xlu0 %v786, 4
      %v3951 = vpop.permute.xlu0 %3950
      %3952 = vrot.lane.b32.xlu0 %v946, 4
      %v3953 = vpop.permute.xlu0 %3952
      %3954 = vrot.lane.b32.xlu0 %v789, 4
      %v3955 = vpop.permute.xlu0 %3954
      %3956 = vrot.lane.b32.xlu0 %v947, 4
      %v3957 = vpop.permute.xlu0 %3956
      %3958 = vrot.lane.b32.xlu0 %v792, 4
      %v3959 = vpop.permute.xlu0 %3958
      %3960 = vrot.lane.b32.xlu0 %v948, 4
      %v3961 = vpop.permute.xlu0 %3960
      %3962 = vrot.lane.b32.xlu0 %v795, 4
      %v3963 = vpop.permute.xlu0 %3962
      %3964 = vrot.lane.b32.xlu0 %v949, 4
      %v3965 = vpop.permute.xlu0 %3964
      %3966 = vrot.lane.b32.xlu0 %v798, 4
      %v3967 = vpop.permute.xlu0 %3966
      %3968 = vrot.lane.b32.xlu0 %v950, 4
      %v3969 = vpop.permute.xlu0 %3968
      %3970 = vrot.lane.b32.xlu0 %v801, 4
      %v3971 = vpop.permute.xlu0 %3970
      %3972 = vrot.lane.b32.xlu0 %v951, 4
      %v3973 = vpop.permute.xlu0 %3972
      %3974 = vrot.lane.b32.xlu0 %v804, 4
      %v3975 = vpop.permute.xlu0 %3974
      %3976 = vrot.lane.b32.xlu0 %v952, 4
      %v3977 = vpop.permute.xlu0 %3976
      %3978 = vrot.lane.b32.xlu0 %v807, 4
      %v3979 = vpop.permute.xlu0 %3978
      %3980 = vrot.lane.b32.xlu0 %v953, 4
      %v3981 = vpop.permute.xlu0 %3980
      %3982 = vrot.lane.b32.xlu0 %v810, 4
      %v3983 = vpop.permute.xlu0 %3982
      %3984 = vrot.lane.b32.xlu0 %v954, 4
      %v3985 = vpop.permute.xlu0 %3984
      %3986 = vrot.lane.b32.xlu0 %v813, 4
      %v3987 = vpop.permute.xlu0 %3986
      %3988 = vrot.lane.b32.xlu0 %v955, 4
      %v3989 = vpop.permute.xlu0 %3988
      %3990 = vrot.lane.b32.xlu0 %v816, 4
      %v3991 = vpop.permute.xlu0 %3990
      %3992 = vrot.lane.b32.xlu0 %v956, 4
      %v3993 = vpop.permute.xlu0 %3992
      %3994 = vrot.lane.b32.xlu0 %v819, 4
      %v3995 = vpop.permute.xlu0 %3994
      %3996 = vrot.lane.b32.xlu0 %v957, 4
      %v3997 = vpop.permute.xlu0 %3996
      %3998 = vrot.lane.b32.xlu0 %v822, 4
      %v3999 = vpop.permute.xlu0 %3998
      %4000 = vrot.lane.b32.xlu0 %v958, 4
      %v4001 = vpop.permute.xlu0 %4000
      %4002 = vrot.lane.b32.xlu0 %v825, 4
      %v4003 = vpop.permute.xlu0 %4002
      %4004 = vrot.lane.b32.xlu0 %v959, 4
      %v4005 = vpop.permute.xlu0 %4004
      %4006 = vrot.lane.b32.xlu0 %v828, 4
      %v4007 = vpop.permute.xlu0 %4006
      %4008 = vrot.lane.b32.xlu0 %v960, 4
      %v4009 = vpop.permute.xlu0 %4008
      %4010 = vrot.lane.b32.xlu0 %v831, 4
      %v4011 = vpop.permute.xlu0 %4010
      %4012 = vrot.lane.b32.xlu0 %v961, 4
      %v4013 = vpop.permute.xlu0 %4012
      %4014 = vrot.lane.b32.xlu0 %v834, 4
      %v4015 = vpop.permute.xlu0 %4014
      %4016 = vrot.lane.b32.xlu0 %v962, 4
      %v4017 = vpop.permute.xlu0 %4016
      %v4114 = vsel %vm1603, %v3682, %v225
      %v4115 = vsel %vm1603, %v3397, %v226
      %v4116 = vsel %vm1603, %v3683, %v227
      %v4117 = vsel %vm1603, %v3401, %v228
      %v4118 = vsel %vm1603, %v3684, %v229
      %v4119 = vsel %vm1603, %v3405, %v230
      %v4120 = vsel %vm1603, %v3685, %v231
      %v4121 = vsel %vm1603, %v3409, %v232
      %v4122 = vsel %vm1603, %v3686, %v233
      %v4123 = vsel %vm1603, %v3413, %v234
      %v4124 = vsel %vm1603, %v3687, %v235
      %v4125 = vsel %vm1603, %v3417, %v236
      %v4126 = vsel %vm1603, %v3688, %v237
      %v4127 = vsel %vm1603, %v3421, %v238
      %v4128 = vsel %vm1603, %v3689, %v239
      %v4129 = vsel %vm1603, %v3425, %v240
      %v4130 = vsel %vm1603, %v3690, %v241
      %v4131 = vsel %vm1603, %v3429, %v242
      %v4132 = vsel %vm1603, %v3691, %v243
      %v4133 = vsel %vm1603, %v3433, %v244
      %v4134 = vsel %vm1603, %v3692, %v245
      %v4135 = vsel %vm1603, %v3437, %v246
      %v4136 = vsel %vm1603, %v3693, %v247
      %v4137 = vsel %vm1603, %v3441, %v248
      %v4138 = vsel %vm1603, %v3694, %v249
      %v4139 = vsel %vm1603, %v3445, %v250
      %v4140 = vsel %vm1603, %v3695, %v251
      %v4141 = vsel %vm1603, %v3449, %v252
      %v4142 = vsel %vm1603, %v3696, %v253
      %v4143 = vsel %vm1603, %v3453, %v254
      %v4144 = vsel %vm1603, %v3697, %v255
      %v4145 = vsel %vm1603, %v3457, %v256
      %v4146 = vsel %vm1603, %v3698, %v257
      %v4147 = vsel %vm1603, %v3461, %v258
      %v4148 = vsel %vm1603, %v3699, %v259
      %v4149 = vsel %vm1603, %v3465, %v260
      %v4150 = vsel %vm1603, %v3700, %v261
      %v4151 = vsel %vm1603, %v3469, %v262
      %v4152 = vsel %vm1603, %v3701, %v263
      %v4153 = vsel %vm1603, %v3473, %v264
      %v4154 = vsel %vm1603, %v3702, %v265
      %v4155 = vsel %vm1603, %v3477, %v266
      %v4156 = vsel %vm1603, %v3703, %v267
      %v4157 = vsel %vm1603, %v3481, %v268
      %v4158 = vsel %vm1603, %v3704, %v269
      %v4159 = vsel %vm1603, %v3485, %v270
      %v4160 = vsel %vm1603, %v3705, %v271
      %v4161 = vsel %vm1603, %v3489, %v272
      %v4162 = vsel %vm1603, %v3706, %v273
      %v4163 = vsel %vm1603, %v3493, %v274
      %v4164 = vsel %vm1603, %v3707, %v275
      %v4165 = vsel %vm1603, %v3497, %v276
      %v4166 = vsel %vm1603, %v3708, %v277
      %v4167 = vsel %vm1603, %v3501, %v278
      %v4168 = vsel %vm1603, %v3709, %v279
      %v4169 = vsel %vm1603, %v3505, %v280
      %v4170 = vsel %vm1603, %v3710, %v281
      %v4171 = vsel %vm1603, %v3509, %v282
      %v4172 = vsel %vm1603, %v3711, %v283
      %v4173 = vsel %vm1603, %v3513, %v284
      %v4174 = vsel %vm1603, %v3712, %v285
      %v4175 = vsel %vm1603, %v3517, %v286
      %v4176 = vsel %vm1603, %v3713, %v287
      %v4177 = vsel %vm1603, %v3521, %v288
      %v4178 = vsel %vm1603, %v3714, %v289
      %v4179 = vsel %vm1603, %v3525, %v290
      %v4180 = vsel %vm1603, %v3715, %v291
      %v4181 = vsel %vm1603, %v3529, %v292
      %v4182 = vsel %vm1603, %v3716, %v293
      %v4183 = vsel %vm1603, %v3533, %v294
      %v4184 = vsel %vm1603, %v3717, %v295
      %v4185 = vsel %vm1603, %v3537, %v296
      %v4186 = vsel %vm1603, %v3718, %v297
      %v4187 = vsel %vm1603, %v3541, %v298
      %v4188 = vsel %vm1603, %v3719, %v299
      %v4189 = vsel %vm1603, %v3545, %v300
      %v4190 = vsel %vm1603, %v3720, %v301
      %v4191 = vsel %vm1603, %v3549, %v302
      %v4192 = vsel %vm1603, %v3721, %v303
      %v4193 = vsel %vm1603, %v3553, %v304
      %v4194 = vsel %vm1603, %v3722, %v305
      %v4195 = vsel %vm1603, %v3557, %v306
      %v4196 = vsel %vm1603, %v3723, %v307
      %v4197 = vsel %vm1603, %v3561, %v308
      %v4198 = vsel %vm1603, %v3724, %v309
      %v4199 = vsel %vm1603, %v3565, %v310
      %v4200 = vsel %vm1603, %v3725, %v311
      %v4201 = vsel %vm1603, %v3569, %v312
      %v4202 = vsel %vm1603, %v3726, %v313
      %v4203 = vsel %vm1603, %v3573, %v314
      %v4204 = vsel %vm1603, %v3727, %v315
      %v4205 = vsel %vm1603, %v3577, %v316
      %v4206 = vsel %vm1603, %v3728, %v317
      %v4207 = vsel %vm1603, %v3581, %v318
      %v4208 = vsel %vm1603, %v3729, %v319
      %v4209 = vsel %vm1603, %v3585, %v320
      %v4210 = vsel %vm1700, %v4114, %v3827
      %v4211 = vsel %vm1700, %v4115, %v3829
      %v4212 = vsel %vm1700, %v4116, %v3831
      %v4213 = vsel %vm1700, %v4117, %v3833
      %v4214 = vsel %vm1700, %v4118, %v3835
      %v4215 = vsel %vm1700, %v4119, %v3837
      %v4216 = vsel %vm1700, %v4120, %v3839
      %v4217 = vsel %vm1700, %v4121, %v3841
      %v4218 = vsel %vm1700, %v4122, %v3843
      %v4219 = vsel %vm1700, %v4123, %v3845
      %v4220 = vsel %vm1700, %v4124, %v3847
      %v4221 = vsel %vm1700, %v4125, %v3849
      %v4222 = vsel %vm1700, %v4126, %v3851
      %v4223 = vsel %vm1700, %v4127, %v3853
      %v4224 = vsel %vm1700, %v4128, %v3855
      %v4225 = vsel %vm1700, %v4129, %v3857
      %v4226 = vsel %vm1700, %v4130, %v3859
      %v4227 = vsel %vm1700, %v4131, %v3861
      %v4228 = vsel %vm1700, %v4132, %v3863
      %v4229 = vsel %vm1700, %v4133, %v3865
      %v4230 = vsel %vm1700, %v4134, %v3867
      %v4231 = vsel %vm1700, %v4135, %v3869
      %v4232 = vsel %vm1700, %v4136, %v3871
      %v4233 = vsel %vm1700, %v4137, %v3873
      %v4234 = vsel %vm1700, %v4138, %v3875
      %v4235 = vsel %vm1700, %v4139, %v3877
      %v4236 = vsel %vm1700, %v4140, %v3879
      %v4237 = vsel %vm1700, %v4141, %v3881
      %v4238 = vsel %vm1700, %v4142, %v3883
      %v4239 = vsel %vm1700, %v4143, %v3885
      %v4240 = vsel %vm1700, %v4144, %v3887
      %v4241 = vsel %vm1700, %v4145, %v3889
      %v4242 = vsel %vm1700, %v4146, %v3891
      %v4243 = vsel %vm1700, %v4147, %v3893
      %v4244 = vsel %vm1700, %v4148, %v3895
      %v4245 = vsel %vm1700, %v4149, %v3897
      %v4246 = vsel %vm1700, %v4150, %v3899
      %v4247 = vsel %vm1700, %v4151, %v3901
      %v4248 = vsel %vm1700, %v4152, %v3903
      %v4249 = vsel %vm1700, %v4153, %v3905
      %v4250 = vsel %vm1700, %v4154, %v3907
      %v4251 = vsel %vm1700, %v4155, %v3909
      %v4252 = vsel %vm1700, %v4156, %v3911
      %v4253 = vsel %vm1700, %v4157, %v3913
      %v4254 = vsel %vm1700, %v4158, %v3915
      %v4255 = vsel %vm1700, %v4159, %v3917
      %v4256 = vsel %vm1700, %v4160, %v3919
      %v4257 = vsel %vm1700, %v4161, %v3921
      %v4258 = vsel %vm1700, %v4162, %v3923
      %v4259 = vsel %vm1700, %v4163, %v3925
      %v4260 = vsel %vm1700, %v4164, %v3927
      %v4261 = vsel %vm1700, %v4165, %v3929
      %v4262 = vsel %vm1700, %v4166, %v3931
      %v4263 = vsel %vm1700, %v4167, %v3933
      %v4264 = vsel %vm1700, %v4168, %v3935
      %v4265 = vsel %vm1700, %v4169, %v3937
      %v4266 = vsel %vm1700, %v4170, %v3939
      %v4267 = vsel %vm1700, %v4171, %v3941
      %v4268 = vsel %vm1700, %v4172, %v3943
      %v4269 = vsel %vm1700, %v4173, %v3945
      %v4270 = vsel %vm1700, %v4174, %v3947
      %v4271 = vsel %vm1700, %v4175, %v3949
      %v4272 = vsel %vm1700, %v4176, %v3951
      %v4273 = vsel %vm1700, %v4177, %v3953
      %v4274 = vsel %vm1700, %v4178, %v3955
      %v4275 = vsel %vm1700, %v4179, %v3957
      %v4276 = vsel %vm1700, %v4180, %v3959
      %v4277 = vsel %vm1700, %v4181, %v3961
      %v4278 = vsel %vm1700, %v4182, %v3963
      %v4279 = vsel %vm1700, %v4183, %v3965
      %v4280 = vsel %vm1700, %v4184, %v3967
      %v4281 = vsel %vm1700, %v4185, %v3969
      %v4282 = vsel %vm1700, %v4186, %v3971
      %v4283 = vsel %vm1700, %v4187, %v3973
      %v4284 = vsel %vm1700, %v4188, %v3975
      %v4285 = vsel %vm1700, %v4189, %v3977
      %v4286 = vsel %vm1700, %v4190, %v3979
      %v4287 = vsel %vm1700, %v4191, %v3981
      %v4288 = vsel %vm1700, %v4192, %v3983
      %v4289 = vsel %vm1700, %v4193, %v3985
      %v4290 = vsel %vm1700, %v4194, %v3987
      %v4291 = vsel %vm1700, %v4195, %v3989
      %v4292 = vsel %vm1700, %v4196, %v3991
      %v4293 = vsel %vm1700, %v4197, %v3993
      %v4294 = vsel %vm1700, %v4198, %v3995
      %v4295 = vsel %vm1700, %v4199, %v3997
      %v4296 = vsel %vm1700, %v4200, %v3999
      %v4297 = vsel %vm1700, %v4201, %v4001
      %v4298 = vsel %vm1700, %v4202, %v4003
      %v4299 = vsel %vm1700, %v4203, %v4005
      %v4300 = vsel %vm1700, %v4204, %v4007
      %v4301 = vsel %vm1700, %v4205, %v4009
      %v4302 = vsel %vm1700, %v4206, %v4011
      %v4303 = vsel %vm1700, %v4207, %v4013
      %v4304 = vsel %vm1700, %v4208, %v4015
      %v4305 = vsel %vm1700, %v4209, %v4017
      %v4306 = vld [vmem:[%s3] sm:$0xff]
      %v4307 = vld [vmem:[%s3 + $0x8] sm:$0xf]
      %s4308 = scalar_lea.vmem %s3, 16
      %v4309 = vld [vmem:[%s4308] sm:$0xff]
      %v4310 = vld [vmem:[%s4308 + $0x8] sm:$0xf]
      %v4312 = vsel %vm1802, %v4210, 0
      %v4315 = vsel %vm1802, %v4211, 0
      %v4318 = vsel %vm1802, %v4212, 0
      %v4321 = vsel %vm1802, %v4213, 0
      %v4324 = vsel %vm1802, %v4214, 0
      %v4327 = vsel %vm1802, %v4215, 0
      %v4330 = vsel %vm1802, %v4216, 0
      %v4333 = vsel %vm1802, %v4217, 0
      %v4336 = vsel %vm1802, %v4218, 0
      %v4339 = vsel %vm1802, %v4219, 0
      %v4342 = vsel %vm1802, %v4220, 0
      %v4345 = vsel %vm1802, %v4221, 0
      %v4348 = vsel %vm1802, %v4222, 0
      %v4351 = vsel %vm1802, %v4223, 0
      %v4354 = vsel %vm1802, %v4224, 0
      %v4357 = vsel %vm1802, %v4225, 0
      %v4360 = vsel %vm1802, %v4226, 0
      %v4363 = vsel %vm1802, %v4227, 0
      %v4366 = vsel %vm1802, %v4228, 0
      %v4369 = vsel %vm1802, %v4229, 0
      %v4372 = vsel %vm1802, %v4230, 0
      %v4375 = vsel %vm1802, %v4231, 0
      %v4378 = vsel %vm1802, %v4232, 0
      %v4381 = vsel %vm1802, %v4233, 0
      %v4384 = vsel %vm1802, %v4234, 0
      %v4387 = vsel %vm1802, %v4235, 0
      %v4390 = vsel %vm1802, %v4236, 0
      %v4393 = vsel %vm1802, %v4237, 0
      %v4396 = vsel %vm1802, %v4238, 0
      %v4399 = vsel %vm1802, %v4239, 0
      %v4402 = vsel %vm1802, %v4240, 0
      %v4405 = vsel %vm1802, %v4241, 0
      %v4408 = vsel %vm1802, %v4242, 0
      %v4411 = vsel %vm1802, %v4243, 0
      %v4414 = vsel %vm1802, %v4244, 0
      %v4417 = vsel %vm1802, %v4245, 0
      %v4420 = vsel %vm1802, %v4246, 0
      %v4423 = vsel %vm1802, %v4247, 0
      %v4426 = vsel %vm1802, %v4248, 0
      %v4429 = vsel %vm1802, %v4249, 0
      %v4432 = vsel %vm1802, %v4250, 0
      %v4435 = vsel %vm1802, %v4251, 0
      %v4438 = vsel %vm1802, %v4252, 0
      %v4441 = vsel %vm1802, %v4253, 0
      %v4444 = vsel %vm1802, %v4254, 0
      %v4447 = vsel %vm1802, %v4255, 0
      %v4450 = vsel %vm1802, %v4256, 0
      %v4453 = vsel %vm1802, %v4257, 0
      %v4456 = vsel %vm1802, %v4258, 0
      %v4459 = vsel %vm1802, %v4259, 0
      %v4462 = vsel %vm1802, %v4260, 0
      %v4465 = vsel %vm1802, %v4261, 0
      %v4468 = vsel %vm1802, %v4262, 0
      %v4471 = vsel %vm1802, %v4263, 0
      %v4474 = vsel %vm1802, %v4264, 0
      %v4477 = vsel %vm1802, %v4265, 0
      %v4480 = vsel %vm1802, %v4266, 0
      %v4483 = vsel %vm1802, %v4267, 0
      %v4486 = vsel %vm1802, %v4268, 0
      %v4489 = vsel %vm1802, %v4269, 0
      %v4492 = vsel %vm1802, %v4270, 0
      %v4495 = vsel %vm1802, %v4271, 0
      %v4498 = vsel %vm1802, %v4272, 0
      %v4501 = vsel %vm1802, %v4273, 0
      %v4504 = vsel %vm1802, %v4274, 0
      %v4507 = vsel %vm1802, %v4275, 0
      %v4510 = vsel %vm1802, %v4276, 0
      %v4513 = vsel %vm1802, %v4277, 0
      %v4516 = vsel %vm1802, %v4278, 0
      %v4519 = vsel %vm1802, %v4279, 0
      %v4522 = vsel %vm1802, %v4280, 0
      %v4525 = vsel %vm1802, %v4281, 0
      %v4528 = vsel %vm1802, %v4282, 0
      %v4531 = vsel %vm1802, %v4283, 0
      %v4534 = vsel %vm1802, %v4284, 0
      %v4537 = vsel %vm1802, %v4285, 0
      %v4540 = vsel %vm1802, %v4286, 0
      %v4543 = vsel %vm1802, %v4287, 0
      %v4546 = vsel %vm1802, %v4288, 0
      %v4549 = vsel %vm1802, %v4289, 0
      %v4552 = vsel %vm1802, %v4290, 0
      %v4555 = vsel %vm1802, %v4291, 0
      %v4558 = vsel %vm1802, %v4292, 0
      %v4561 = vsel %vm1802, %v4293, 0
      %v4564 = vsel %vm1802, %v4294, 0
      %v4567 = vsel %vm1802, %v4295, 0
      %v4570 = vsel %vm1802, %v4296, 0
      %v4573 = vsel %vm1802, %v4297, 0
      %v4576 = vsel %vm1802, %v4298, 0
      %v4579 = vsel %vm1802, %v4299, 0
      %v4582 = vsel %vm1802, %v4300, 0
      %v4585 = vsel %vm1802, %v4301, 0
      %v4588 = vsel %vm1802, %v4302, 0
      %v4591 = vsel %vm1802, %v4303, 0
      %v4594 = vsel %vm1802, %v4304, 0
      %v4597 = vsel %vm1802, %v4305, 0
      %v4600 = vsel %vm2091, %v4310, 0
      %4602 = vmatpush.msra.mxu0 0.0
      %4603 = vmatpush.msra.mxu0 0.0
      %4604 = vmatpush.msra.mxu0 0.0
      %4605 = vmatpush.msra.mxu0 0.0
      %4606 = vmatpush.msra.mxu0 0.0
      %4607 = vmatpush.msra.mxu0 0.0
      %4608 = vmatpush.msra.mxu0 0.0
      %4609 = vmatpush.msra.mxu0 0.0
      %4610 = vmatpush.msra.mxu0 0.0
      %4611 = vmatpush.msra.mxu0 0.0
      %4612 = vmatpush.msra.mxu0 0.0
      %4613 = vmatpush.msra.mxu0 0.0
      %4614 = vmatpush.msra.mxu0 0.0
      %4615 = vmatpush.msra.mxu0 0.0
      %4616 = vmatpush.msra.mxu0 %v4600
      %4617 = vmatpush.msra.mxu0 %v4309
      %4618 = vmatmul.f32.gmra.mxu0 %v4312
      %v4619 = vpop.f32.mrf.mxu0
      %v4620 = vadd.f32 0.0, %v4619
      %4621 = vmatmul.f32.gmra.mxu0 %v4315
      %v4622 = vpop.f32.mrf.mxu0
      %v4623 = vadd.f32 0.0, %v4622
      %4624 = vmatmul.f32.gmra.mxu0 %v4318
      %v4625 = vpop.f32.mrf.mxu0
      %v4626 = vadd.f32 0.0, %v4625
      %4627 = vmatmul.f32.gmra.mxu0 %v4321
      %v4628 = vpop.f32.mrf.mxu0
      %v4629 = vadd.f32 0.0, %v4628
      %4630 = vmatmul.f32.gmra.mxu0 %v4324
      %v4631 = vpop.f32.mrf.mxu0
      %v4632 = vadd.f32 0.0, %v4631
      %4633 = vmatmul.f32.gmra.mxu0 %v4327
      %v4634 = vpop.f32.mrf.mxu0
      %v4635 = vadd.f32 0.0, %v4634
      %4636 = vmatmul.f32.gmra.mxu0 %v4330
      %v4637 = vpop.f32.mrf.mxu0
      %v4638 = vadd.f32 0.0, %v4637
      %4639 = vmatmul.f32.gmra.mxu0 %v4333
      %v4640 = vpop.f32.mrf.mxu0
      %v4641 = vadd.f32 0.0, %v4640
      %4642 = vmatmul.f32.gmra.mxu0 %v4336
      %v4643 = vpop.f32.mrf.mxu0
      %v4644 = vadd.f32 0.0, %v4643
      %4645 = vmatmul.f32.gmra.mxu0 %v4339
      %v4646 = vpop.f32.mrf.mxu0
      %v4647 = vadd.f32 0.0, %v4646
      %4648 = vmatmul.f32.gmra.mxu0 %v4342
      %v4649 = vpop.f32.mrf.mxu0
      %v4650 = vadd.f32 0.0, %v4649
      %4651 = vmatmul.f32.gmra.mxu0 %v4345
      %v4652 = vpop.f32.mrf.mxu0
      %v4653 = vadd.f32 0.0, %v4652
      %4654 = vmatmul.f32.gmra.mxu0 %v4348
      %v4655 = vpop.f32.mrf.mxu0
      %v4656 = vadd.f32 0.0, %v4655
      %4657 = vmatmul.f32.gmra.mxu0 %v4351
      %v4658 = vpop.f32.mrf.mxu0
      %v4659 = vadd.f32 0.0, %v4658
      %4660 = vmatmul.f32.gmra.mxu0 %v4354
      %v4661 = vpop.f32.mrf.mxu0
      %v4662 = vadd.f32 0.0, %v4661
      %4663 = vmatmul.f32.gmra.mxu0 %v4357
      %v4664 = vpop.f32.mrf.mxu0
      %v4665 = vadd.f32 0.0, %v4664
      %4666 = vmatmul.f32.gmra.mxu0 %v4360
      %v4667 = vpop.f32.mrf.mxu0
      %v4668 = vadd.f32 0.0, %v4667
      %4669 = vmatmul.f32.gmra.mxu0 %v4363
      %v4670 = vpop.f32.mrf.mxu0
      %v4671 = vadd.f32 0.0, %v4670
      %4672 = vmatmul.f32.gmra.mxu0 %v4366
      %v4673 = vpop.f32.mrf.mxu0
      %v4674 = vadd.f32 0.0, %v4673
      %4675 = vmatmul.f32.gmra.mxu0 %v4369
      %v4676 = vpop.f32.mrf.mxu0
      %v4677 = vadd.f32 0.0, %v4676
      %4678 = vmatmul.f32.gmra.mxu0 %v4372
      %v4679 = vpop.f32.mrf.mxu0
      %v4680 = vadd.f32 0.0, %v4679
      %4681 = vmatmul.f32.gmra.mxu0 %v4375
      %v4682 = vpop.f32.mrf.mxu0
      %v4683 = vadd.f32 0.0, %v4682
      %4684 = vmatmul.f32.gmra.mxu0 %v4378
      %v4685 = vpop.f32.mrf.mxu0
      %v4686 = vadd.f32 0.0, %v4685
      %4687 = vmatmul.f32.gmra.mxu0 %v4381
      %v4688 = vpop.f32.mrf.mxu0
      %v4689 = vadd.f32 0.0, %v4688
      %4690 = vmatmul.f32.gmra.mxu0 %v4384
      %v4691 = vpop.f32.mrf.mxu0
      %v4692 = vadd.f32 0.0, %v4691
      %4693 = vmatmul.f32.gmra.mxu0 %v4387
      %v4694 = vpop.f32.mrf.mxu0
      %v4695 = vadd.f32 0.0, %v4694
      %4696 = vmatmul.f32.gmra.mxu0 %v4390
      %v4697 = vpop.f32.mrf.mxu0
      %v4698 = vadd.f32 0.0, %v4697
      %4699 = vmatmul.f32.gmra.mxu0 %v4393
      %v4700 = vpop.f32.mrf.mxu0
      %v4701 = vadd.f32 0.0, %v4700
      %4702 = vmatmul.f32.gmra.mxu0 %v4396
      %v4703 = vpop.f32.mrf.mxu0
      %v4704 = vadd.f32 0.0, %v4703
      %4705 = vmatmul.f32.gmra.mxu0 %v4399
      %v4706 = vpop.f32.mrf.mxu0
      %v4707 = vadd.f32 0.0, %v4706
      %4708 = vmatmul.f32.gmra.mxu0 %v4402
      %v4709 = vpop.f32.mrf.mxu0
      %v4710 = vadd.f32 0.0, %v4709
      %4711 = vmatmul.f32.gmra.mxu0 %v4405
      %v4712 = vpop.f32.mrf.mxu0
      %v4713 = vadd.f32 0.0, %v4712
      %4714 = vmatmul.f32.gmra.mxu0 %v4408
      %v4715 = vpop.f32.mrf.mxu0
      %v4716 = vadd.f32 0.0, %v4715
      %4717 = vmatmul.f32.gmra.mxu0 %v4411
      %v4718 = vpop.f32.mrf.mxu0
      %v4719 = vadd.f32 0.0, %v4718
      %4720 = vmatmul.f32.gmra.mxu0 %v4414
      %v4721 = vpop.f32.mrf.mxu0
      %v4722 = vadd.f32 0.0, %v4721
      %4723 = vmatmul.f32.gmra.mxu0 %v4417
      %v4724 = vpop.f32.mrf.mxu0
      %v4725 = vadd.f32 0.0, %v4724
      %4726 = vmatmul.f32.gmra.mxu0 %v4420
      %v4727 = vpop.f32.mrf.mxu0
      %v4728 = vadd.f32 0.0, %v4727
      %4729 = vmatmul.f32.gmra.mxu0 %v4423
      %v4730 = vpop.f32.mrf.mxu0
      %v4731 = vadd.f32 0.0, %v4730
      %4732 = vmatmul.f32.gmra.mxu0 %v4426
      %v4733 = vpop.f32.mrf.mxu0
      %v4734 = vadd.f32 0.0, %v4733
      %4735 = vmatmul.f32.gmra.mxu0 %v4429
      %v4736 = vpop.f32.mrf.mxu0
      %v4737 = vadd.f32 0.0, %v4736
      %4738 = vmatmul.f32.gmra.mxu0 %v4432
      %v4739 = vpop.f32.mrf.mxu0
      %v4740 = vadd.f32 0.0, %v4739
      %4741 = vmatmul.f32.gmra.mxu0 %v4435
      %v4742 = vpop.f32.mrf.mxu0
      %v4743 = vadd.f32 0.0, %v4742
      %4744 = vmatmul.f32.gmra.mxu0 %v4438
      %v4745 = vpop.f32.mrf.mxu0
      %v4746 = vadd.f32 0.0, %v4745
      %4747 = vmatmul.f32.gmra.mxu0 %v4441
      %v4748 = vpop.f32.mrf.mxu0
      %v4749 = vadd.f32 0.0, %v4748
      %4750 = vmatmul.f32.gmra.mxu0 %v4444
      %v4751 = vpop.f32.mrf.mxu0
      %v4752 = vadd.f32 0.0, %v4751
      %4753 = vmatmul.f32.gmra.mxu0 %v4447
      %v4754 = vpop.f32.mrf.mxu0
      %v4755 = vadd.f32 0.0, %v4754
      %4756 = vmatmul.f32.gmra.mxu0 %v4450
      %v4757 = vpop.f32.mrf.mxu0
      %v4758 = vadd.f32 0.0, %v4757
      %4759 = vmatmul.f32.gmra.mxu0 %v4453
      %v4760 = vpop.f32.mrf.mxu0
      %v4761 = vadd.f32 0.0, %v4760
      %4762 = vmatmul.f32.gmra.mxu0 %v4456
      %v4763 = vpop.f32.mrf.mxu0
      %v4764 = vadd.f32 0.0, %v4763
      %4765 = vmatmul.f32.gmra.mxu0 %v4459
      %v4766 = vpop.f32.mrf.mxu0
      %v4767 = vadd.f32 0.0, %v4766
      %4768 = vmatmul.f32.gmra.mxu0 %v4462
      %v4769 = vpop.f32.mrf.mxu0
      %v4770 = vadd.f32 0.0, %v4769
      %4771 = vmatmul.f32.gmra.mxu0 %v4465
      %v4772 = vpop.f32.mrf.mxu0
      %v4773 = vadd.f32 0.0, %v4772
      %4774 = vmatmul.f32.gmra.mxu0 %v4468
      %v4775 = vpop.f32.mrf.mxu0
      %v4776 = vadd.f32 0.0, %v4775
      %4777 = vmatmul.f32.gmra.mxu0 %v4471
      %v4778 = vpop.f32.mrf.mxu0
      %v4779 = vadd.f32 0.0, %v4778
      %4780 = vmatmul.f32.gmra.mxu0 %v4474
      %v4781 = vpop.f32.mrf.mxu0
      %v4782 = vadd.f32 0.0, %v4781
      %4783 = vmatmul.f32.gmra.mxu0 %v4477
      %v4784 = vpop.f32.mrf.mxu0
      %v4785 = vadd.f32 0.0, %v4784
      %4786 = vmatmul.f32.gmra.mxu0 %v4480
      %v4787 = vpop.f32.mrf.mxu0
      %v4788 = vadd.f32 0.0, %v4787
      %4789 = vmatmul.f32.gmra.mxu0 %v4483
      %v4790 = vpop.f32.mrf.mxu0
      %v4791 = vadd.f32 0.0, %v4790
      %4792 = vmatmul.f32.gmra.mxu0 %v4486
      %v4793 = vpop.f32.mrf.mxu0
      %v4794 = vadd.f32 0.0, %v4793
      %4795 = vmatmul.f32.gmra.mxu0 %v4489
      %v4796 = vpop.f32.mrf.mxu0
      %v4797 = vadd.f32 0.0, %v4796
      %4798 = vmatmul.f32.gmra.mxu0 %v4492
      %v4799 = vpop.f32.mrf.mxu0
      %v4800 = vadd.f32 0.0, %v4799
      %4801 = vmatmul.f32.gmra.mxu0 %v4495
      %v4802 = vpop.f32.mrf.mxu0
      %v4803 = vadd.f32 0.0, %v4802
      %4804 = vmatmul.f32.gmra.mxu0 %v4498
      %v4805 = vpop.f32.mrf.mxu0
      %v4806 = vadd.f32 0.0, %v4805
      %4807 = vmatmul.f32.gmra.mxu0 %v4501
      %v4808 = vpop.f32.mrf.mxu0
      %v4809 = vadd.f32 0.0, %v4808
      %4810 = vmatmul.f32.gmra.mxu0 %v4504
      %v4811 = vpop.f32.mrf.mxu0
      %v4812 = vadd.f32 0.0, %v4811
      %4813 = vmatmul.f32.gmra.mxu0 %v4507
      %v4814 = vpop.f32.mrf.mxu0
      %v4815 = vadd.f32 0.0, %v4814
      %4816 = vmatmul.f32.gmra.mxu0 %v4510
      %v4817 = vpop.f32.mrf.mxu0
      %v4818 = vadd.f32 0.0, %v4817
      %4819 = vmatmul.f32.gmra.mxu0 %v4513
      %v4820 = vpop.f32.mrf.mxu0
      %v4821 = vadd.f32 0.0, %v4820
      %4822 = vmatmul.f32.gmra.mxu0 %v4516
      %v4823 = vpop.f32.mrf.mxu0
      %v4824 = vadd.f32 0.0, %v4823
      %4825 = vmatmul.f32.gmra.mxu0 %v4519
      %v4826 = vpop.f32.mrf.mxu0
      %v4827 = vadd.f32 0.0, %v4826
      %4828 = vmatmul.f32.gmra.mxu0 %v4522
      %v4829 = vpop.f32.mrf.mxu0
      %v4830 = vadd.f32 0.0, %v4829
      %4831 = vmatmul.f32.gmra.mxu0 %v4525
      %v4832 = vpop.f32.mrf.mxu0
      %v4833 = vadd.f32 0.0, %v4832
      %4834 = vmatmul.f32.gmra.mxu0 %v4528
      %v4835 = vpop.f32.mrf.mxu0
      %v4836 = vadd.f32 0.0, %v4835
      %4837 = vmatmul.f32.gmra.mxu0 %v4531
      %v4838 = vpop.f32.mrf.mxu0
      %v4839 = vadd.f32 0.0, %v4838
      %4840 = vmatmul.f32.gmra.mxu0 %v4534
      %v4841 = vpop.f32.mrf.mxu0
      %v4842 = vadd.f32 0.0, %v4841
      %4843 = vmatmul.f32.gmra.mxu0 %v4537
      %v4844 = vpop.f32.mrf.mxu0
      %v4845 = vadd.f32 0.0, %v4844
      %4846 = vmatmul.f32.gmra.mxu0 %v4540
      %v4847 = vpop.f32.mrf.mxu0
      %v4848 = vadd.f32 0.0, %v4847
      %4849 = vmatmul.f32.gmra.mxu0 %v4543
      %v4850 = vpop.f32.mrf.mxu0
      %v4851 = vadd.f32 0.0, %v4850
      %4852 = vmatmul.f32.gmra.mxu0 %v4546
      %v4853 = vpop.f32.mrf.mxu0
      %v4854 = vadd.f32 0.0, %v4853
      %4855 = vmatmul.f32.gmra.mxu0 %v4549
      %v4856 = vpop.f32.mrf.mxu0
      %v4857 = vadd.f32 0.0, %v4856
      %4858 = vmatmul.f32.gmra.mxu0 %v4552
      %v4859 = vpop.f32.mrf.mxu0
      %v4860 = vadd.f32 0.0, %v4859
      %4861 = vmatmul.f32.gmra.mxu0 %v4555
      %v4862 = vpop.f32.mrf.mxu0
      %v4863 = vadd.f32 0.0, %v4862
      %4864 = vmatmul.f32.gmra.mxu0 %v4558
      %v4865 = vpop.f32.mrf.mxu0
      %v4866 = vadd.f32 0.0, %v4865
      %4867 = vmatmul.f32.gmra.mxu0 %v4561
      %v4868 = vpop.f32.mrf.mxu0
      %v4869 = vadd.f32 0.0, %v4868
      %4870 = vmatmul.f32.gmra.mxu0 %v4564
      %v4871 = vpop.f32.mrf.mxu0
      %v4872 = vadd.f32 0.0, %v4871
      %4873 = vmatmul.f32.gmra.mxu0 %v4567
      %v4874 = vpop.f32.mrf.mxu0
      %v4875 = vadd.f32 0.0, %v4874
      %4876 = vmatmul.f32.gmra.mxu0 %v4570
      %v4877 = vpop.f32.mrf.mxu0
      %v4878 = vadd.f32 0.0, %v4877
      %4879 = vmatmul.f32.gmra.mxu0 %v4573
      %v4880 = vpop.f32.mrf.mxu0
      %v4881 = vadd.f32 0.0, %v4880
      %4882 = vmatmul.f32.gmra.mxu0 %v4576
      %v4883 = vpop.f32.mrf.mxu0
      %v4884 = vadd.f32 0.0, %v4883
      %4885 = vmatmul.f32.gmra.mxu0 %v4579
      %v4886 = vpop.f32.mrf.mxu0
      %v4887 = vadd.f32 0.0, %v4886
      %4888 = vmatmul.f32.gmra.mxu0 %v4582
      %v4889 = vpop.f32.mrf.mxu0
      %v4890 = vadd.f32 0.0, %v4889
      %4891 = vmatmul.f32.gmra.mxu0 %v4585
      %v4892 = vpop.f32.mrf.mxu0
      %v4893 = vadd.f32 0.0, %v4892
      %4894 = vmatmul.f32.gmra.mxu0 %v4588
      %v4895 = vpop.f32.mrf.mxu0
      %v4896 = vadd.f32 0.0, %v4895
      %4897 = vmatmul.f32.gmra.mxu0 %v4591
      %v4898 = vpop.f32.mrf.mxu0
      %v4899 = vadd.f32 0.0, %v4898
      %4900 = vmatmul.f32.gmra.mxu0 %v4594
      %v4901 = vpop.f32.mrf.mxu0
      %v4902 = vadd.f32 0.0, %v4901
      %4903 = vmatmul.f32.gmra.mxu0 %v4597
      %v4904 = vpop.f32.mrf.mxu0
      %v4905 = vadd.f32 0.0, %v4904
      %4906 = vdwg.mxu0
      %v4908 = vsel %vm2091, %v4307, 0
      %4910 = vmatpush.msra.mxu0 0.0
      %4911 = vmatpush.msra.mxu0 0.0
      %4912 = vmatpush.msra.mxu0 0.0
      %4913 = vmatpush.msra.mxu0 0.0
      %4914 = vmatpush.msra.mxu0 0.0
      %4915 = vmatpush.msra.mxu0 0.0
      %4916 = vmatpush.msra.mxu0 0.0
      %4917 = vmatpush.msra.mxu0 0.0
      %4918 = vmatpush.msra.mxu0 0.0
      %4919 = vmatpush.msra.mxu0 0.0
      %4920 = vmatpush.msra.mxu0 0.0
      %4921 = vmatpush.msra.mxu0 0.0
      %4922 = vmatpush.msra.mxu0 0.0
      %4923 = vmatpush.msra.mxu0 0.0
      %4924 = vmatpush.msra.mxu0 %v4908
      %4925 = vmatpush.msra.mxu0 %v4306
      %4926 = vmatmul.f32.gmra.mxu0 %v2401
      %v4927 = vpop.f32.mrf.mxu0
      %v4928 = vadd.f32 %v4620, %v4927
      %4929 = vmatmul.f32.gmra.mxu0 %v2401
      %v4930 = vpop.f32.mrf.mxu0
      %v4931 = vadd.f32 %v4623, %v4930
      %4932 = vmatmul.f32.gmra.mxu0 %v4312
      %v4933 = vpop.f32.mrf.mxu0
      %v4934 = vadd.f32 %v4626, %v4933
      %4935 = vmatmul.f32.gmra.mxu0 %v4315
      %v4936 = vpop.f32.mrf.mxu0
      %v4937 = vadd.f32 %v4629, %v4936
      %4938 = vmatmul.f32.gmra.mxu0 %v4318
      %v4939 = vpop.f32.mrf.mxu0
      %v4940 = vadd.f32 %v4632, %v4939
      %4941 = vmatmul.f32.gmra.mxu0 %v4321
      %v4942 = vpop.f32.mrf.mxu0
      %v4943 = vadd.f32 %v4635, %v4942
      %4944 = vmatmul.f32.gmra.mxu0 %v4324
      %v4945 = vpop.f32.mrf.mxu0
      %v4946 = vadd.f32 %v4638, %v4945
      %4947 = vmatmul.f32.gmra.mxu0 %v4327
      %v4948 = vpop.f32.mrf.mxu0
      %v4949 = vadd.f32 %v4641, %v4948
      %4950 = vmatmul.f32.gmra.mxu0 %v4330
      %v4951 = vpop.f32.mrf.mxu0
      %v4952 = vadd.f32 %v4644, %v4951
      %4953 = vmatmul.f32.gmra.mxu0 %v4333
      %v4954 = vpop.f32.mrf.mxu0
      %v4955 = vadd.f32 %v4647, %v4954
      %4956 = vmatmul.f32.gmra.mxu0 %v4336
      %v4957 = vpop.f32.mrf.mxu0
      %v4958 = vadd.f32 %v4650, %v4957
      %4959 = vmatmul.f32.gmra.mxu0 %v4339
      %v4960 = vpop.f32.mrf.mxu0
      %v4961 = vadd.f32 %v4653, %v4960
      %4962 = vmatmul.f32.gmra.mxu0 %v4342
      %v4963 = vpop.f32.mrf.mxu0
      %v4964 = vadd.f32 %v4656, %v4963
      %4965 = vmatmul.f32.gmra.mxu0 %v4345
      %v4966 = vpop.f32.mrf.mxu0
      %v4967 = vadd.f32 %v4659, %v4966
      %4968 = vmatmul.f32.gmra.mxu0 %v4348
      %v4969 = vpop.f32.mrf.mxu0
      %v4970 = vadd.f32 %v4662, %v4969
      %4971 = vmatmul.f32.gmra.mxu0 %v4351
      %v4972 = vpop.f32.mrf.mxu0
      %v4973 = vadd.f32 %v4665, %v4972
      %4974 = vmatmul.f32.gmra.mxu0 %v4354
      %v4975 = vpop.f32.mrf.mxu0
      %v4976 = vadd.f32 %v4668, %v4975
      %4977 = vmatmul.f32.gmra.mxu0 %v4357
      %v4978 = vpop.f32.mrf.mxu0
      %v4979 = vadd.f32 %v4671, %v4978
      %4980 = vmatmul.f32.gmra.mxu0 %v4360
      %v4981 = vpop.f32.mrf.mxu0
      %v4982 = vadd.f32 %v4674, %v4981
      %4983 = vmatmul.f32.gmra.mxu0 %v4363
      %v4984 = vpop.f32.mrf.mxu0
      %v4985 = vadd.f32 %v4677, %v4984
      %4986 = vmatmul.f32.gmra.mxu0 %v4366
      %v4987 = vpop.f32.mrf.mxu0
      %v4988 = vadd.f32 %v4680, %v4987
      %4989 = vmatmul.f32.gmra.mxu0 %v4369
      %v4990 = vpop.f32.mrf.mxu0
      %v4991 = vadd.f32 %v4683, %v4990
      %4992 = vmatmul.f32.gmra.mxu0 %v4372
      %v4993 = vpop.f32.mrf.mxu0
      %v4994 = vadd.f32 %v4686, %v4993
      %4995 = vmatmul.f32.gmra.mxu0 %v4375
      %v4996 = vpop.f32.mrf.mxu0
      %v4997 = vadd.f32 %v4689, %v4996
      %4998 = vmatmul.f32.gmra.mxu0 %v4378
      %v4999 = vpop.f32.mrf.mxu0
      %v5000 = vadd.f32 %v4692, %v4999
      %5001 = vmatmul.f32.gmra.mxu0 %v4381
      %v5002 = vpop.f32.mrf.mxu0
      %v5003 = vadd.f32 %v4695, %v5002
      %5004 = vmatmul.f32.gmra.mxu0 %v4384
      %v5005 = vpop.f32.mrf.mxu0
      %v5006 = vadd.f32 %v4698, %v5005
      %5007 = vmatmul.f32.gmra.mxu0 %v4387
      %v5008 = vpop.f32.mrf.mxu0
      %v5009 = vadd.f32 %v4701, %v5008
      %5010 = vmatmul.f32.gmra.mxu0 %v4390
      %v5011 = vpop.f32.mrf.mxu0
      %v5012 = vadd.f32 %v4704, %v5011
      %5013 = vmatmul.f32.gmra.mxu0 %v4393
      %v5014 = vpop.f32.mrf.mxu0
      %v5015 = vadd.f32 %v4707, %v5014
      %5016 = vmatmul.f32.gmra.mxu0 %v4396
      %v5017 = vpop.f32.mrf.mxu0
      %v5018 = vadd.f32 %v4710, %v5017
      %5019 = vmatmul.f32.gmra.mxu0 %v4399
      %v5020 = vpop.f32.mrf.mxu0
      %v5021 = vadd.f32 %v4713, %v5020
      %5022 = vmatmul.f32.gmra.mxu0 %v2401
      %v5023 = vpop.f32.mrf.mxu0
      %v5024 = vadd.f32 %v4716, %v5023
      %5025 = vmatmul.f32.gmra.mxu0 %v2401
      %v5026 = vpop.f32.mrf.mxu0
      %v5027 = vadd.f32 %v4719, %v5026
      %5028 = vmatmul.f32.gmra.mxu0 %v4408
      %v5029 = vpop.f32.mrf.mxu0
      %v5030 = vadd.f32 %v4722, %v5029
      %5031 = vmatmul.f32.gmra.mxu0 %v4411
      %v5032 = vpop.f32.mrf.mxu0
      %v5033 = vadd.f32 %v4725, %v5032
      %5034 = vmatmul.f32.gmra.mxu0 %v4414
      %v5035 = vpop.f32.mrf.mxu0
      %v5036 = vadd.f32 %v4728, %v5035
      %5037 = vmatmul.f32.gmra.mxu0 %v4417
      %v5038 = vpop.f32.mrf.mxu0
      %v5039 = vadd.f32 %v4731, %v5038
      %5040 = vmatmul.f32.gmra.mxu0 %v4420
      %v5041 = vpop.f32.mrf.mxu0
      %v5042 = vadd.f32 %v4734, %v5041
      %5043 = vmatmul.f32.gmra.mxu0 %v4423
      %v5044 = vpop.f32.mrf.mxu0
      %v5045 = vadd.f32 %v4737, %v5044
      %5046 = vmatmul.f32.gmra.mxu0 %v4426
      %v5047 = vpop.f32.mrf.mxu0
      %v5048 = vadd.f32 %v4740, %v5047
      %5049 = vmatmul.f32.gmra.mxu0 %v4429
      %v5050 = vpop.f32.mrf.mxu0
      %v5051 = vadd.f32 %v4743, %v5050
      %5052 = vmatmul.f32.gmra.mxu0 %v4432
      %v5053 = vpop.f32.mrf.mxu0
      %v5054 = vadd.f32 %v4746, %v5053
      %5055 = vmatmul.f32.gmra.mxu0 %v4435
      %v5056 = vpop.f32.mrf.mxu0
      %v5057 = vadd.f32 %v4749, %v5056
      %5058 = vmatmul.f32.gmra.mxu0 %v4438
      %v5059 = vpop.f32.mrf.mxu0
      %v5060 = vadd.f32 %v4752, %v5059
      %5061 = vmatmul.f32.gmra.mxu0 %v4441
      %v5062 = vpop.f32.mrf.mxu0
      %v5063 = vadd.f32 %v4755, %v5062
      %5064 = vmatmul.f32.gmra.mxu0 %v4444
      %v5065 = vpop.f32.mrf.mxu0
      %v5066 = vadd.f32 %v4758, %v5065
      %5067 = vmatmul.f32.gmra.mxu0 %v4447
      %v5068 = vpop.f32.mrf.mxu0
      %v5069 = vadd.f32 %v4761, %v5068
      %5070 = vmatmul.f32.gmra.mxu0 %v4450
      %v5071 = vpop.f32.mrf.mxu0
      %v5072 = vadd.f32 %v4764, %v5071
      %5073 = vmatmul.f32.gmra.mxu0 %v4453
      %v5074 = vpop.f32.mrf.mxu0
      %v5075 = vadd.f32 %v4767, %v5074
      %5076 = vmatmul.f32.gmra.mxu0 %v4456
      %v5077 = vpop.f32.mrf.mxu0
      %v5078 = vadd.f32 %v4770, %v5077
      %5079 = vmatmul.f32.gmra.mxu0 %v4459
      %v5080 = vpop.f32.mrf.mxu0
      %v5081 = vadd.f32 %v4773, %v5080
      %5082 = vmatmul.f32.gmra.mxu0 %v4462
      %v5083 = vpop.f32.mrf.mxu0
      %v5084 = vadd.f32 %v4776, %v5083
      %5085 = vmatmul.f32.gmra.mxu0 %v4465
      %v5086 = vpop.f32.mrf.mxu0
      %v5087 = vadd.f32 %v4779, %v5086
      %5088 = vmatmul.f32.gmra.mxu0 %v4468
      %v5089 = vpop.f32.mrf.mxu0
      %v5090 = vadd.f32 %v4782, %v5089
      %5091 = vmatmul.f32.gmra.mxu0 %v4471
      %v5092 = vpop.f32.mrf.mxu0
      %v5093 = vadd.f32 %v4785, %v5092
      %5094 = vmatmul.f32.gmra.mxu0 %v4474
      %v5095 = vpop.f32.mrf.mxu0
      %v5096 = vadd.f32 %v4788, %v5095
      %5097 = vmatmul.f32.gmra.mxu0 %v4477
      %v5098 = vpop.f32.mrf.mxu0
      %v5099 = vadd.f32 %v4791, %v5098
      %5100 = vmatmul.f32.gmra.mxu0 %v4480
      %v5101 = vpop.f32.mrf.mxu0
      %v5102 = vadd.f32 %v4794, %v5101
      %5103 = vmatmul.f32.gmra.mxu0 %v4483
      %v5104 = vpop.f32.mrf.mxu0
      %v5105 = vadd.f32 %v4797, %v5104
      %5106 = vmatmul.f32.gmra.mxu0 %v4486
      %v5107 = vpop.f32.mrf.mxu0
      %v5108 = vadd.f32 %v4800, %v5107
      %5109 = vmatmul.f32.gmra.mxu0 %v4489
      %v5110 = vpop.f32.mrf.mxu0
      %v5111 = vadd.f32 %v4803, %v5110
      %5112 = vmatmul.f32.gmra.mxu0 %v4492
      %v5113 = vpop.f32.mrf.mxu0
      %v5114 = vadd.f32 %v4806, %v5113
      %5115 = vmatmul.f32.gmra.mxu0 %v4495
      %v5116 = vpop.f32.mrf.mxu0
      %v5117 = vadd.f32 %v4809, %v5116
      %5118 = vmatmul.f32.gmra.mxu0 %v2401
      %v5119 = vpop.f32.mrf.mxu0
      %v5120 = vadd.f32 %v4812, %v5119
      %5121 = vmatmul.f32.gmra.mxu0 %v2401
      %v5122 = vpop.f32.mrf.mxu0
      %v5123 = vadd.f32 %v4815, %v5122
      %5124 = vmatmul.f32.gmra.mxu0 %v4504
      %v5125 = vpop.f32.mrf.mxu0
      %v5126 = vadd.f32 %v4818, %v5125
      %5127 = vmatmul.f32.gmra.mxu0 %v4507
      %v5128 = vpop.f32.mrf.mxu0
      %v5129 = vadd.f32 %v4821, %v5128
      %5130 = vmatmul.f32.gmra.mxu0 %v4510
      %v5131 = vpop.f32.mrf.mxu0
      %v5132 = vadd.f32 %v4824, %v5131
      %5133 = vmatmul.f32.gmra.mxu0 %v4513
      %v5134 = vpop.f32.mrf.mxu0
      %v5135 = vadd.f32 %v4827, %v5134
      %5136 = vmatmul.f32.gmra.mxu0 %v4516
      %v5137 = vpop.f32.mrf.mxu0
      %v5138 = vadd.f32 %v4830, %v5137
      %5139 = vmatmul.f32.gmra.mxu0 %v4519
      %v5140 = vpop.f32.mrf.mxu0
      %v5141 = vadd.f32 %v4833, %v5140
      %5142 = vmatmul.f32.gmra.mxu0 %v4522
      %v5143 = vpop.f32.mrf.mxu0
      %v5144 = vadd.f32 %v4836, %v5143
      %5145 = vmatmul.f32.gmra.mxu0 %v4525
      %v5146 = vpop.f32.mrf.mxu0
      %v5147 = vadd.f32 %v4839, %v5146
      %5148 = vmatmul.f32.gmra.mxu0 %v4528
      %v5149 = vpop.f32.mrf.mxu0
      %v5150 = vadd.f32 %v4842, %v5149
      %5151 = vmatmul.f32.gmra.mxu0 %v4531
      %v5152 = vpop.f32.mrf.mxu0
      %v5153 = vadd.f32 %v4845, %v5152
      %5154 = vmatmul.f32.gmra.mxu0 %v4534
      %v5155 = vpop.f32.mrf.mxu0
      %v5156 = vadd.f32 %v4848, %v5155
      %5157 = vmatmul.f32.gmra.mxu0 %v4537
      %v5158 = vpop.f32.mrf.mxu0
      %v5159 = vadd.f32 %v4851, %v5158
      %5160 = vmatmul.f32.gmra.mxu0 %v4540
      %v5161 = vpop.f32.mrf.mxu0
      %v5162 = vadd.f32 %v4854, %v5161
      %5163 = vmatmul.f32.gmra.mxu0 %v4543
      %v5164 = vpop.f32.mrf.mxu0
      %v5165 = vadd.f32 %v4857, %v5164
      %5166 = vmatmul.f32.gmra.mxu0 %v4546
      %v5167 = vpop.f32.mrf.mxu0
      %v5168 = vadd.f32 %v4860, %v5167
      %5169 = vmatmul.f32.gmra.mxu0 %v4549
      %v5170 = vpop.f32.mrf.mxu0
      %v5171 = vadd.f32 %v4863, %v5170
      %5172 = vmatmul.f32.gmra.mxu0 %v4552
      %v5173 = vpop.f32.mrf.mxu0
      %v5174 = vadd.f32 %v4866, %v5173
      %5175 = vmatmul.f32.gmra.mxu0 %v4555
      %v5176 = vpop.f32.mrf.mxu0
      %v5177 = vadd.f32 %v4869, %v5176
      %5178 = vmatmul.f32.gmra.mxu0 %v4558
      %v5179 = vpop.f32.mrf.mxu0
      %v5180 = vadd.f32 %v4872, %v5179
      %5181 = vmatmul.f32.gmra.mxu0 %v4561
      %v5182 = vpop.f32.mrf.mxu0
      %v5183 = vadd.f32 %v4875, %v5182
      %5184 = vmatmul.f32.gmra.mxu0 %v4564
      %v5185 = vpop.f32.mrf.mxu0
      %v5186 = vadd.f32 %v4878, %v5185
      %5187 = vmatmul.f32.gmra.mxu0 %v4567
      %v5188 = vpop.f32.mrf.mxu0
      %v5189 = vadd.f32 %v4881, %v5188
      %5190 = vmatmul.f32.gmra.mxu0 %v4570
      %v5191 = vpop.f32.mrf.mxu0
      %v5192 = vadd.f32 %v4884, %v5191
      %5193 = vmatmul.f32.gmra.mxu0 %v4573
      %v5194 = vpop.f32.mrf.mxu0
      %v5195 = vadd.f32 %v4887, %v5194
      %5196 = vmatmul.f32.gmra.mxu0 %v4576
      %v5197 = vpop.f32.mrf.mxu0
      %v5198 = vadd.f32 %v4890, %v5197
      %5199 = vmatmul.f32.gmra.mxu0 %v4579
      %v5200 = vpop.f32.mrf.mxu0
      %v5201 = vadd.f32 %v4893, %v5200
      %5202 = vmatmul.f32.gmra.mxu0 %v4582
      %v5203 = vpop.f32.mrf.mxu0
      %v5204 = vadd.f32 %v4896, %v5203
      %5205 = vmatmul.f32.gmra.mxu0 %v4585
      %v5206 = vpop.f32.mrf.mxu0
      %v5207 = vadd.f32 %v4899, %v5206
      %5208 = vmatmul.f32.gmra.mxu0 %v4588
      %v5209 = vpop.f32.mrf.mxu0
      %v5210 = vadd.f32 %v4902, %v5209
      %5211 = vmatmul.f32.gmra.mxu0 %v4591
      %v5212 = vpop.f32.mrf.mxu0
      %v5213 = vadd.f32 %v4905, %v5212
      %5214 = vdwg.mxu0
      %s5215 = scalar_lea.vmem %s3, 32
      %v5216 = vld [vmem:[%s5215] sm:$0xff]
      %v5217 = vld [vmem:[%s5215 + $0x8] sm:$0xf]
      %v5219 = vsel %vm2091, %v5217, 0
      %5221 = vmatpush.msra.mxu0 0.0
      %5222 = vmatpush.msra.mxu0 0.0
      %5223 = vmatpush.msra.mxu0 0.0
      %5224 = vmatpush.msra.mxu0 0.0
      %5225 = vmatpush.msra.mxu0 0.0
      %5226 = vmatpush.msra.mxu0 0.0
      %5227 = vmatpush.msra.mxu0 0.0
      %5228 = vmatpush.msra.mxu0 0.0
      %5229 = vmatpush.msra.mxu0 0.0
      %5230 = vmatpush.msra.mxu0 0.0
      %5231 = vmatpush.msra.mxu0 0.0
      %5232 = vmatpush.msra.mxu0 0.0
      %5233 = vmatpush.msra.mxu0 0.0
      %5234 = vmatpush.msra.mxu0 0.0
      %5235 = vmatpush.msra.mxu0 %v5219
      %5236 = vmatpush.msra.mxu0 %v5216
      %5237 = vmatmul.f32.gmra.mxu0 %v4318
      %v5238 = vpop.f32.mrf.mxu0
      %v5239 = vadd.f32 0.0, %v5238
      %5240 = vmatmul.f32.gmra.mxu0 %v4321
      %v5241 = vpop.f32.mrf.mxu0
      %v5242 = vadd.f32 0.0, %v5241
      %5243 = vmatmul.f32.gmra.mxu0 %v4324
      %v5244 = vpop.f32.mrf.mxu0
      %v5245 = vadd.f32 0.0, %v5244
      %5246 = vmatmul.f32.gmra.mxu0 %v4327
      %v5247 = vpop.f32.mrf.mxu0
      %v5248 = vadd.f32 0.0, %v5247
      %5249 = vmatmul.f32.gmra.mxu0 %v4330
      %v5250 = vpop.f32.mrf.mxu0
      %v5251 = vadd.f32 0.0, %v5250
      %5252 = vmatmul.f32.gmra.mxu0 %v4333
      %v5253 = vpop.f32.mrf.mxu0
      %v5254 = vadd.f32 0.0, %v5253
      %5255 = vmatmul.f32.gmra.mxu0 %v4336
      %v5256 = vpop.f32.mrf.mxu0
      %v5257 = vadd.f32 0.0, %v5256
      %5258 = vmatmul.f32.gmra.mxu0 %v4339
      %v5259 = vpop.f32.mrf.mxu0
      %v5260 = vadd.f32 0.0, %v5259
      %5261 = vmatmul.f32.gmra.mxu0 %v4342
      %v5262 = vpop.f32.mrf.mxu0
      %v5263 = vadd.f32 0.0, %v5262
      %5264 = vmatmul.f32.gmra.mxu0 %v4345
      %v5265 = vpop.f32.mrf.mxu0
      %v5266 = vadd.f32 0.0, %v5265
      %5267 = vmatmul.f32.gmra.mxu0 %v4348
      %v5268 = vpop.f32.mrf.mxu0
      %v5269 = vadd.f32 0.0, %v5268
      %5270 = vmatmul.f32.gmra.mxu0 %v4351
      %v5271 = vpop.f32.mrf.mxu0
      %v5272 = vadd.f32 0.0, %v5271
      %5273 = vmatmul.f32.gmra.mxu0 %v4354
      %v5274 = vpop.f32.mrf.mxu0
      %v5275 = vadd.f32 0.0, %v5274
      %5276 = vmatmul.f32.gmra.mxu0 %v4357
      %v5277 = vpop.f32.mrf.mxu0
      %v5278 = vadd.f32 0.0, %v5277
      %5279 = vmatmul.f32.gmra.mxu0 %v4360
      %v5280 = vpop.f32.mrf.mxu0
      %v5281 = vadd.f32 0.0, %v5280
      %5282 = vmatmul.f32.gmra.mxu0 %v4363
      %v5283 = vpop.f32.mrf.mxu0
      %v5284 = vadd.f32 0.0, %v5283
      %5285 = vmatmul.f32.gmra.mxu0 %v4366
      %v5286 = vpop.f32.mrf.mxu0
      %v5287 = vadd.f32 0.0, %v5286
      %5288 = vmatmul.f32.gmra.mxu0 %v4369
      %v5289 = vpop.f32.mrf.mxu0
      %v5290 = vadd.f32 0.0, %v5289
      %5291 = vmatmul.f32.gmra.mxu0 %v4372
      %v5292 = vpop.f32.mrf.mxu0
      %v5293 = vadd.f32 0.0, %v5292
      %5294 = vmatmul.f32.gmra.mxu0 %v4375
      %v5295 = vpop.f32.mrf.mxu0
      %v5296 = vadd.f32 0.0, %v5295
      %5297 = vmatmul.f32.gmra.mxu0 %v4378
      %v5298 = vpop.f32.mrf.mxu0
      %v5299 = vadd.f32 0.0, %v5298
      %5300 = vmatmul.f32.gmra.mxu0 %v4381
      %v5301 = vpop.f32.mrf.mxu0
      %v5302 = vadd.f32 0.0, %v5301
      %5303 = vmatmul.f32.gmra.mxu0 %v4384
      %v5304 = vpop.f32.mrf.mxu0
      %v5305 = vadd.f32 0.0, %v5304
      %5306 = vmatmul.f32.gmra.mxu0 %v4387
      %v5307 = vpop.f32.mrf.mxu0
      %v5308 = vadd.f32 0.0, %v5307
      %5309 = vmatmul.f32.gmra.mxu0 %v4390
      %v5310 = vpop.f32.mrf.mxu0
      %v5311 = vadd.f32 0.0, %v5310
      %5312 = vmatmul.f32.gmra.mxu0 %v4393
      %v5313 = vpop.f32.mrf.mxu0
      %v5314 = vadd.f32 0.0, %v5313
      %5315 = vmatmul.f32.gmra.mxu0 %v4396
      %v5316 = vpop.f32.mrf.mxu0
      %v5317 = vadd.f32 0.0, %v5316
      %5318 = vmatmul.f32.gmra.mxu0 %v4399
      %v5319 = vpop.f32.mrf.mxu0
      %v5320 = vadd.f32 0.0, %v5319
      %5321 = vmatmul.f32.gmra.mxu0 %v4402
      %v5322 = vpop.f32.mrf.mxu0
      %v5323 = vadd.f32 0.0, %v5322
      %5324 = vmatmul.f32.gmra.mxu0 %v4405
      %v5325 = vpop.f32.mrf.mxu0
      %v5326 = vadd.f32 0.0, %v5325
      %5327 = vmatmul.f32.gmra.mxu0 %v2401
      %v5328 = vpop.f32.mrf.mxu0
      %v5329 = vadd.f32 0.0, %v5328
      %5330 = vmatmul.f32.gmra.mxu0 %v2401
      %v5331 = vpop.f32.mrf.mxu0
      %v5332 = vadd.f32 0.0, %v5331
      %5333 = vmatmul.f32.gmra.mxu0 %v4414
      %v5334 = vpop.f32.mrf.mxu0
      %v5335 = vadd.f32 0.0, %v5334
      %5336 = vmatmul.f32.gmra.mxu0 %v4417
      %v5337 = vpop.f32.mrf.mxu0
      %v5338 = vadd.f32 0.0, %v5337
      %5339 = vmatmul.f32.gmra.mxu0 %v4420
      %v5340 = vpop.f32.mrf.mxu0
      %v5341 = vadd.f32 0.0, %v5340
      %5342 = vmatmul.f32.gmra.mxu0 %v4423
      %v5343 = vpop.f32.mrf.mxu0
      %v5344 = vadd.f32 0.0, %v5343
      %5345 = vmatmul.f32.gmra.mxu0 %v4426
      %v5346 = vpop.f32.mrf.mxu0
      %v5347 = vadd.f32 0.0, %v5346
      %5348 = vmatmul.f32.gmra.mxu0 %v4429
      %v5349 = vpop.f32.mrf.mxu0
      %v5350 = vadd.f32 0.0, %v5349
      %5351 = vmatmul.f32.gmra.mxu0 %v4432
      %v5352 = vpop.f32.mrf.mxu0
      %v5353 = vadd.f32 0.0, %v5352
      %5354 = vmatmul.f32.gmra.mxu0 %v4435
      %v5355 = vpop.f32.mrf.mxu0
      %v5356 = vadd.f32 0.0, %v5355
      %5357 = vmatmul.f32.gmra.mxu0 %v4438
      %v5358 = vpop.f32.mrf.mxu0
      %v5359 = vadd.f32 0.0, %v5358
      %5360 = vmatmul.f32.gmra.mxu0 %v4441
      %v5361 = vpop.f32.mrf.mxu0
      %v5362 = vadd.f32 0.0, %v5361
      %5363 = vmatmul.f32.gmra.mxu0 %v4444
      %v5364 = vpop.f32.mrf.mxu0
      %v5365 = vadd.f32 0.0, %v5364
      %5366 = vmatmul.f32.gmra.mxu0 %v4447
      %v5367 = vpop.f32.mrf.mxu0
      %v5368 = vadd.f32 0.0, %v5367
      %5369 = vmatmul.f32.gmra.mxu0 %v4450
      %v5370 = vpop.f32.mrf.mxu0
      %v5371 = vadd.f32 0.0, %v5370
      %5372 = vmatmul.f32.gmra.mxu0 %v4453
      %v5373 = vpop.f32.mrf.mxu0
      %v5374 = vadd.f32 0.0, %v5373
      %5375 = vmatmul.f32.gmra.mxu0 %v4456
      %v5376 = vpop.f32.mrf.mxu0
      %v5377 = vadd.f32 0.0, %v5376
      %5378 = vmatmul.f32.gmra.mxu0 %v4459
      %v5379 = vpop.f32.mrf.mxu0
      %v5380 = vadd.f32 0.0, %v5379
      %5381 = vmatmul.f32.gmra.mxu0 %v4462
      %v5382 = vpop.f32.mrf.mxu0
      %v5383 = vadd.f32 0.0, %v5382
      %5384 = vmatmul.f32.gmra.mxu0 %v4465
      %v5385 = vpop.f32.mrf.mxu0
      %v5386 = vadd.f32 0.0, %v5385
      %5387 = vmatmul.f32.gmra.mxu0 %v4468
      %v5388 = vpop.f32.mrf.mxu0
      %v5389 = vadd.f32 0.0, %v5388
      %5390 = vmatmul.f32.gmra.mxu0 %v4471
      %v5391 = vpop.f32.mrf.mxu0
      %v5392 = vadd.f32 0.0, %v5391
      %5393 = vmatmul.f32.gmra.mxu0 %v4474
      %v5394 = vpop.f32.mrf.mxu0
      %v5395 = vadd.f32 0.0, %v5394
      %5396 = vmatmul.f32.gmra.mxu0 %v4477
      %v5397 = vpop.f32.mrf.mxu0
      %v5398 = vadd.f32 0.0, %v5397
      %5399 = vmatmul.f32.gmra.mxu0 %v4480
      %v5400 = vpop.f32.mrf.mxu0
      %v5401 = vadd.f32 0.0, %v5400
      %5402 = vmatmul.f32.gmra.mxu0 %v4483
      %v5403 = vpop.f32.mrf.mxu0
      %v5404 = vadd.f32 0.0, %v5403
      %5405 = vmatmul.f32.gmra.mxu0 %v4486
      %v5406 = vpop.f32.mrf.mxu0
      %v5407 = vadd.f32 0.0, %v5406
      %5408 = vmatmul.f32.gmra.mxu0 %v4489
      %v5409 = vpop.f32.mrf.mxu0
      %v5410 = vadd.f32 0.0, %v5409
      %5411 = vmatmul.f32.gmra.mxu0 %v4492
      %v5412 = vpop.f32.mrf.mxu0
      %v5413 = vadd.f32 0.0, %v5412
      %5414 = vmatmul.f32.gmra.mxu0 %v4495
      %v5415 = vpop.f32.mrf.mxu0
      %v5416 = vadd.f32 0.0, %v5415
      %5417 = vmatmul.f32.gmra.mxu0 %v4498
      %v5418 = vpop.f32.mrf.mxu0
      %v5419 = vadd.f32 0.0, %v5418
      %5420 = vmatmul.f32.gmra.mxu0 %v4501
      %v5421 = vpop.f32.mrf.mxu0
      %v5422 = vadd.f32 0.0, %v5421
      %5423 = vmatmul.f32.gmra.mxu0 %v2401
      %v5424 = vpop.f32.mrf.mxu0
      %v5425 = vadd.f32 0.0, %v5424
      %5426 = vmatmul.f32.gmra.mxu0 %v2401
      %v5427 = vpop.f32.mrf.mxu0
      %v5428 = vadd.f32 0.0, %v5427
      %5429 = vmatmul.f32.gmra.mxu0 %v4510
      %v5430 = vpop.f32.mrf.mxu0
      %v5431 = vadd.f32 0.0, %v5430
      %5432 = vmatmul.f32.gmra.mxu0 %v4513
      %v5433 = vpop.f32.mrf.mxu0
      %v5434 = vadd.f32 0.0, %v5433
      %5435 = vmatmul.f32.gmra.mxu0 %v4516
      %v5436 = vpop.f32.mrf.mxu0
      %v5437 = vadd.f32 0.0, %v5436
      %5438 = vmatmul.f32.gmra.mxu0 %v4519
      %v5439 = vpop.f32.mrf.mxu0
      %v5440 = vadd.f32 0.0, %v5439
      %5441 = vmatmul.f32.gmra.mxu0 %v4522
      %v5442 = vpop.f32.mrf.mxu0
      %v5443 = vadd.f32 0.0, %v5442
      %5444 = vmatmul.f32.gmra.mxu0 %v4525
      %v5445 = vpop.f32.mrf.mxu0
      %v5446 = vadd.f32 0.0, %v5445
      %5447 = vmatmul.f32.gmra.mxu0 %v4528
      %v5448 = vpop.f32.mrf.mxu0
      %v5449 = vadd.f32 0.0, %v5448
      %5450 = vmatmul.f32.gmra.mxu0 %v4531
      %v5451 = vpop.f32.mrf.mxu0
      %v5452 = vadd.f32 0.0, %v5451
      %5453 = vmatmul.f32.gmra.mxu0 %v4534
      %v5454 = vpop.f32.mrf.mxu0
      %v5455 = vadd.f32 0.0, %v5454
      %5456 = vmatmul.f32.gmra.mxu0 %v4537
      %v5457 = vpop.f32.mrf.mxu0
      %v5458 = vadd.f32 0.0, %v5457
      %5459 = vmatmul.f32.gmra.mxu0 %v4540
      %v5460 = vpop.f32.mrf.mxu0
      %v5461 = vadd.f32 0.0, %v5460
      %5462 = vmatmul.f32.gmra.mxu0 %v4543
      %v5463 = vpop.f32.mrf.mxu0
      %v5464 = vadd.f32 0.0, %v5463
      %5465 = vmatmul.f32.gmra.mxu0 %v4546
      %v5466 = vpop.f32.mrf.mxu0
      %v5467 = vadd.f32 0.0, %v5466
      %5468 = vmatmul.f32.gmra.mxu0 %v4549
      %v5469 = vpop.f32.mrf.mxu0
      %v5470 = vadd.f32 0.0, %v5469
      %5471 = vmatmul.f32.gmra.mxu0 %v4552
      %v5472 = vpop.f32.mrf.mxu0
      %v5473 = vadd.f32 0.0, %v5472
      %5474 = vmatmul.f32.gmra.mxu0 %v4555
      %v5475 = vpop.f32.mrf.mxu0
      %v5476 = vadd.f32 0.0, %v5475
      %5477 = vmatmul.f32.gmra.mxu0 %v4558
      %v5478 = vpop.f32.mrf.mxu0
      %v5479 = vadd.f32 0.0, %v5478
      %5480 = vmatmul.f32.gmra.mxu0 %v4561
      %v5481 = vpop.f32.mrf.mxu0
      %v5482 = vadd.f32 0.0, %v5481
      %5483 = vmatmul.f32.gmra.mxu0 %v4564
      %v5484 = vpop.f32.mrf.mxu0
      %v5485 = vadd.f32 0.0, %v5484
      %5486 = vmatmul.f32.gmra.mxu0 %v4567
      %v5487 = vpop.f32.mrf.mxu0
      %v5488 = vadd.f32 0.0, %v5487
      %5489 = vmatmul.f32.gmra.mxu0 %v4570
      %v5490 = vpop.f32.mrf.mxu0
      %v5491 = vadd.f32 0.0, %v5490
      %5492 = vmatmul.f32.gmra.mxu0 %v4573
      %v5493 = vpop.f32.mrf.mxu0
      %v5494 = vadd.f32 0.0, %v5493
      %5495 = vmatmul.f32.gmra.mxu0 %v4576
      %v5496 = vpop.f32.mrf.mxu0
      %v5497 = vadd.f32 0.0, %v5496
      %5498 = vmatmul.f32.gmra.mxu0 %v4579
      %v5499 = vpop.f32.mrf.mxu0
      %v5500 = vadd.f32 0.0, %v5499
      %5501 = vmatmul.f32.gmra.mxu0 %v4582
      %v5502 = vpop.f32.mrf.mxu0
      %v5503 = vadd.f32 0.0, %v5502
      %5504 = vmatmul.f32.gmra.mxu0 %v4585
      %v5505 = vpop.f32.mrf.mxu0
      %v5506 = vadd.f32 0.0, %v5505
      %5507 = vmatmul.f32.gmra.mxu0 %v4588
      %v5508 = vpop.f32.mrf.mxu0
      %v5509 = vadd.f32 0.0, %v5508
      %5510 = vmatmul.f32.gmra.mxu0 %v4591
      %v5511 = vpop.f32.mrf.mxu0
      %v5512 = vadd.f32 0.0, %v5511
      %5513 = vmatmul.f32.gmra.mxu0 %v4594
      %v5514 = vpop.f32.mrf.mxu0
      %v5515 = vadd.f32 0.0, %v5514
      %5516 = vmatmul.f32.gmra.mxu0 %v4597
      %v5517 = vpop.f32.mrf.mxu0
      %v5518 = vadd.f32 0.0, %v5517
      %5519 = vmatmul.f32.gmra.mxu0 %v2401
      %v5520 = vpop.f32.mrf.mxu0
      %v5521 = vadd.f32 0.0, %v5520
      %5522 = vmatmul.f32.gmra.mxu0 %v2401
      %v5523 = vpop.f32.mrf.mxu0
      %v5524 = vadd.f32 0.0, %v5523
      %5525 = vdwg.mxu0
      %v5526 = vadd.f32 %v4928, %v5239
      %v5527 = vadd.f32 %v4931, %v5242
      %v5528 = vadd.f32 %v4934, %v5245
      %v5529 = vadd.f32 %v4937, %v5248
      %v5530 = vadd.f32 %v4940, %v5251
      %v5531 = vadd.f32 %v4943, %v5254
      %v5532 = vadd.f32 %v4946, %v5257
      %v5533 = vadd.f32 %v4949, %v5260
      %v5534 = vadd.f32 %v4952, %v5263
      %v5535 = vadd.f32 %v4955, %v5266
      %v5536 = vadd.f32 %v4958, %v5269
      %v5537 = vadd.f32 %v4961, %v5272
      %v5538 = vadd.f32 %v4964, %v5275
      %v5539 = vadd.f32 %v4967, %v5278
      %v5540 = vadd.f32 %v4970, %v5281
      %v5541 = vadd.f32 %v4973, %v5284
      %v5542 = vadd.f32 %v4976, %v5287
      %v5543 = vadd.f32 %v4979, %v5290
      %v5544 = vadd.f32 %v4982, %v5293
      %v5545 = vadd.f32 %v4985, %v5296
      %v5546 = vadd.f32 %v4988, %v5299
      %v5547 = vadd.f32 %v4991, %v5302
      %v5548 = vadd.f32 %v4994, %v5305
      %v5549 = vadd.f32 %v4997, %v5308
      %v5550 = vadd.f32 %v5000, %v5311
      %v5551 = vadd.f32 %v5003, %v5314
      %v5552 = vadd.f32 %v5006, %v5317
      %v5553 = vadd.f32 %v5009, %v5320
      %v5554 = vadd.f32 %v5012, %v5323
      %v5555 = vadd.f32 %v5015, %v5326
      %v5556 = vadd.f32 %v5018, %v5329
      %v5557 = vadd.f32 %v5021, %v5332
      %v5558 = vadd.f32 %v5024, %v5335
      %v5559 = vadd.f32 %v5027, %v5338
      %v5560 = vadd.f32 %v5030, %v5341
      %v5561 = vadd.f32 %v5033, %v5344
      %v5562 = vadd.f32 %v5036, %v5347
      %v5563 = vadd.f32 %v5039, %v5350
      %v5564 = vadd.f32 %v5042, %v5353
      %v5565 = vadd.f32 %v5045, %v5356
      %v5566 = vadd.f32 %v5048, %v5359
      %v5567 = vadd.f32 %v5051, %v5362
      %v5568 = vadd.f32 %v5054, %v5365
      %v5569 = vadd.f32 %v5057, %v5368
      %v5570 = vadd.f32 %v5060, %v5371
      %v5571 = vadd.f32 %v5063, %v5374
      %v5572 = vadd.f32 %v5066, %v5377
      %v5573 = vadd.f32 %v5069, %v5380
      %v5574 = vadd.f32 %v5072, %v5383
      %v5575 = vadd.f32 %v5075, %v5386
      %v5576 = vadd.f32 %v5078, %v5389
      %v5577 = vadd.f32 %v5081, %v5392
      %v5578 = vadd.f32 %v5084, %v5395
      %v5579 = vadd.f32 %v5087, %v5398
      %v5580 = vadd.f32 %v5090, %v5401
      %v5581 = vadd.f32 %v5093, %v5404
      %v5582 = vadd.f32 %v5096, %v5407
      %v5583 = vadd.f32 %v5099, %v5410
      %v5584 = vadd.f32 %v5102, %v5413
      %v5585 = vadd.f32 %v5105, %v5416
      %v5586 = vadd.f32 %v5108, %v5419
      %v5587 = vadd.f32 %v5111, %v5422
      %v5588 = vadd.f32 %v5114, %v5425
      %v5589 = vadd.f32 %v5117, %v5428
      %v5590 = vadd.f32 %v5120, %v5431
      %v5591 = vadd.f32 %v5123, %v5434
      %v5592 = vadd.f32 %v5126, %v5437
      %v5593 = vadd.f32 %v5129, %v5440
      %v5594 = vadd.f32 %v5132, %v5443
      %v5595 = vadd.f32 %v5135, %v5446
      %v5596 = vadd.f32 %v5138, %v5449
      %v5597 = vadd.f32 %v5141, %v5452
      %v5598 = vadd.f32 %v5144, %v5455
      %v5599 = vadd.f32 %v5147, %v5458
      %v5600 = vadd.f32 %v5150, %v5461
      %v5601 = vadd.f32 %v5153, %v5464
      %v5602 = vadd.f32 %v5156, %v5467
      %v5603 = vadd.f32 %v5159, %v5470
      %v5604 = vadd.f32 %v5162, %v5473
      %v5605 = vadd.f32 %v5165, %v5476
      %v5606 = vadd.f32 %v5168, %v5479
      %v5607 = vadd.f32 %v5171, %v5482
      %v5608 = vadd.f32 %v5174, %v5485
      %v5609 = vadd.f32 %v5177, %v5488
      %v5610 = vadd.f32 %v5180, %v5491
      %v5611 = vadd.f32 %v5183, %v5494
      %v5612 = vadd.f32 %v5186, %v5497
      %v5613 = vadd.f32 %v5189, %v5500
      %v5614 = vadd.f32 %v5192, %v5503
      %v5615 = vadd.f32 %v5195, %v5506
      %v5616 = vadd.f32 %v5198, %v5509
      %v5617 = vadd.f32 %v5201, %v5512
      %v5618 = vadd.f32 %v5204, %v5515
      %v5619 = vadd.f32 %v5207, %v5518
      %v5620 = vadd.f32 %v5210, %v5521
      %v5621 = vadd.f32 %v5213, %v5524
      %v5622 = vld [vmem:[%s4] sm:$0x1]
      %v5624 = vperm.slane %v5622, 0
      %v5626 = vadd.f32 %v5526, %v5624
      %v5627 = vadd.f32 %v5527, %v5624
      %v5628 = vadd.f32 %v5528, %v5624
      %v5629 = vadd.f32 %v5529, %v5624
      %v5630 = vadd.f32 %v5530, %v5624
      %v5631 = vadd.f32 %v5531, %v5624
      %v5632 = vadd.f32 %v5532, %v5624
      %v5633 = vadd.f32 %v5533, %v5624
      %v5634 = vadd.f32 %v5534, %v5624
      %v5635 = vadd.f32 %v5535, %v5624
      %v5636 = vadd.f32 %v5536, %v5624
      %v5637 = vadd.f32 %v5537, %v5624
      %v5638 = vadd.f32 %v5538, %v5624
      %v5639 = vadd.f32 %v5539, %v5624
      %v5640 = vadd.f32 %v5540, %v5624
      %v5641 = vadd.f32 %v5541, %v5624
      %v5642 = vadd.f32 %v5542, %v5624
      %v5643 = vadd.f32 %v5543, %v5624
      %v5644 = vadd.f32 %v5544, %v5624
      %v5645 = vadd.f32 %v5545, %v5624
      %v5646 = vadd.f32 %v5546, %v5624
      %v5647 = vadd.f32 %v5547, %v5624
      %v5648 = vadd.f32 %v5548, %v5624
      %v5649 = vadd.f32 %v5549, %v5624
      %v5650 = vadd.f32 %v5550, %v5624
      %v5651 = vadd.f32 %v5551, %v5624
      %v5652 = vadd.f32 %v5552, %v5624
      %v5653 = vadd.f32 %v5553, %v5624
      %v5654 = vadd.f32 %v5554, %v5624
      %v5655 = vadd.f32 %v5555, %v5624
      %v5656 = vadd.f32 %v5556, %v5624
      %v5657 = vadd.f32 %v5557, %v5624
      %v5658 = vadd.f32 %v5558, %v5624
      %v5659 = vadd.f32 %v5559, %v5624
      %v5660 = vadd.f32 %v5560, %v5624
      %v5661 = vadd.f32 %v5561, %v5624
      %v5662 = vadd.f32 %v5562, %v5624
      %v5663 = vadd.f32 %v5563, %v5624
      %v5664 = vadd.f32 %v5564, %v5624
      %v5665 = vadd.f32 %v5565, %v5624
      %v5666 = vadd.f32 %v5566, %v5624
      %v5667 = vadd.f32 %v5567, %v5624
      %v5668 = vadd.f32 %v5568, %v5624
      %v5669 = vadd.f32 %v5569, %v5624
      %v5670 = vadd.f32 %v5570, %v5624
      %v5671 = vadd.f32 %v5571, %v5624
      %v5672 = vadd.f32 %v5572, %v5624
      %v5673 = vadd.f32 %v5573, %v5624
      %v5674 = vadd.f32 %v5574, %v5624
      %v5675 = vadd.f32 %v5575, %v5624
      %v5676 = vadd.f32 %v5576, %v5624
      %v5677 = vadd.f32 %v5577, %v5624
      %v5678 = vadd.f32 %v5578, %v5624
      %v5679 = vadd.f32 %v5579, %v5624
      %v5680 = vadd.f32 %v5580, %v5624
      %v5681 = vadd.f32 %v5581, %v5624
      %v5682 = vadd.f32 %v5582, %v5624
      %v5683 = vadd.f32 %v5583, %v5624
      %v5684 = vadd.f32 %v5584, %v5624
      %v5685 = vadd.f32 %v5585, %v5624
      %v5686 = vadd.f32 %v5586, %v5624
      %v5687 = vadd.f32 %v5587, %v5624
      %v5688 = vadd.f32 %v5588, %v5624
      %v5689 = vadd.f32 %v5589, %v5624
      %v5690 = vadd.f32 %v5590, %v5624
      %v5691 = vadd.f32 %v5591, %v5624
      %v5692 = vadd.f32 %v5592, %v5624
      %v5693 = vadd.f32 %v5593, %v5624
      %v5694 = vadd.f32 %v5594, %v5624
      %v5695 = vadd.f32 %v5595, %v5624
      %v5696 = vadd.f32 %v5596, %v5624
      %v5697 = vadd.f32 %v5597, %v5624
      %v5698 = vadd.f32 %v5598, %v5624
      %v5699 = vadd.f32 %v5599, %v5624
      %v5700 = vadd.f32 %v5600, %v5624
      %v5701 = vadd.f32 %v5601, %v5624
      %v5702 = vadd.f32 %v5602, %v5624
      %v5703 = vadd.f32 %v5603, %v5624
      %v5704 = vadd.f32 %v5604, %v5624
      %v5705 = vadd.f32 %v5605, %v5624
      %v5706 = vadd.f32 %v5606, %v5624
      %v5707 = vadd.f32 %v5607, %v5624
      %v5708 = vadd.f32 %v5608, %v5624
      %v5709 = vadd.f32 %v5609, %v5624
      %v5710 = vadd.f32 %v5610, %v5624
      %v5711 = vadd.f32 %v5611, %v5624
      %v5712 = vadd.f32 %v5612, %v5624
      %v5713 = vadd.f32 %v5613, %v5624
      %v5714 = vadd.f32 %v5614, %v5624
      %v5715 = vadd.f32 %v5615, %v5624
      %v5716 = vadd.f32 %v5616, %v5624
      %v5717 = vadd.f32 %v5617, %v5624
      %v5718 = vadd.f32 %v5618, %v5624
      %v5719 = vadd.f32 %v5619, %v5624
      %v5720 = vadd.f32 %v5620, %v5624
      %v5721 = vadd.f32 %v5621, %v5624
      %5818 = vrot.lane.b32.xlu0 %v5626, 4
      %v5819 = vpop.permute.xlu0 %5818
      %5820 = vrot.lane.b32.xlu0 %v5627, 4
      %v5821 = vpop.permute.xlu0 %5820
      %5822 = vrot.lane.b32.xlu0 %v5628, 4
      %v5823 = vpop.permute.xlu0 %5822
      %5824 = vrot.lane.b32.xlu0 %v5629, 4
      %v5825 = vpop.permute.xlu0 %5824
      %5826 = vrot.lane.b32.xlu0 %v5630, 4
      %v5827 = vpop.permute.xlu0 %5826
      %5828 = vrot.lane.b32.xlu0 %v5631, 4
      %v5829 = vpop.permute.xlu0 %5828
      %5830 = vrot.lane.b32.xlu0 %v5632, 4
      %v5831 = vpop.permute.xlu0 %5830
      %5832 = vrot.lane.b32.xlu0 %v5633, 4
      %v5833 = vpop.permute.xlu0 %5832
      %5834 = vrot.lane.b32.xlu0 %v5634, 4
      %v5835 = vpop.permute.xlu0 %5834
      %5836 = vrot.lane.b32.xlu0 %v5635, 4
      %v5837 = vpop.permute.xlu0 %5836
      %5838 = vrot.lane.b32.xlu0 %v5636, 4
      %v5839 = vpop.permute.xlu0 %5838
      %5840 = vrot.lane.b32.xlu0 %v5637, 4
      %v5841 = vpop.permute.xlu0 %5840
      %5842 = vrot.lane.b32.xlu0 %v5638, 4
      %v5843 = vpop.permute.xlu0 %5842
      %5844 = vrot.lane.b32.xlu0 %v5639, 4
      %v5845 = vpop.permute.xlu0 %5844
      %5846 = vrot.lane.b32.xlu0 %v5640, 4
      %v5847 = vpop.permute.xlu0 %5846
      %5848 = vrot.lane.b32.xlu0 %v5641, 4
      %v5849 = vpop.permute.xlu0 %5848
      %5850 = vrot.lane.b32.xlu0 %v5642, 4
      %v5851 = vpop.permute.xlu0 %5850
      %5852 = vrot.lane.b32.xlu0 %v5643, 4
      %v5853 = vpop.permute.xlu0 %5852
      %5854 = vrot.lane.b32.xlu0 %v5644, 4
      %v5855 = vpop.permute.xlu0 %5854
      %5856 = vrot.lane.b32.xlu0 %v5645, 4
      %v5857 = vpop.permute.xlu0 %5856
      %5858 = vrot.lane.b32.xlu0 %v5646, 4
      %v5859 = vpop.permute.xlu0 %5858
      %5860 = vrot.lane.b32.xlu0 %v5647, 4
      %v5861 = vpop.permute.xlu0 %5860
      %5862 = vrot.lane.b32.xlu0 %v5648, 4
      %v5863 = vpop.permute.xlu0 %5862
      %5864 = vrot.lane.b32.xlu0 %v5649, 4
      %v5865 = vpop.permute.xlu0 %5864
      %5866 = vrot.lane.b32.xlu0 %v5650, 4
      %v5867 = vpop.permute.xlu0 %5866
      %5868 = vrot.lane.b32.xlu0 %v5651, 4
      %v5869 = vpop.permute.xlu0 %5868
      %5870 = vrot.lane.b32.xlu0 %v5652, 4
      %v5871 = vpop.permute.xlu0 %5870
      %5872 = vrot.lane.b32.xlu0 %v5653, 4
      %v5873 = vpop.permute.xlu0 %5872
      %5874 = vrot.lane.b32.xlu0 %v5654, 4
      %v5875 = vpop.permute.xlu0 %5874
      %5876 = vrot.lane.b32.xlu0 %v5655, 4
      %v5877 = vpop.permute.xlu0 %5876
      %5878 = vrot.lane.b32.xlu0 %v5656, 4
      %v5879 = vpop.permute.xlu0 %5878
      %5880 = vrot.lane.b32.xlu0 %v5657, 4
      %v5881 = vpop.permute.xlu0 %5880
      %5882 = vrot.lane.b32.xlu0 %v5658, 4
      %v5883 = vpop.permute.xlu0 %5882
      %5884 = vrot.lane.b32.xlu0 %v5659, 4
      %v5885 = vpop.permute.xlu0 %5884
      %5886 = vrot.lane.b32.xlu0 %v5660, 4
      %v5887 = vpop.permute.xlu0 %5886
      %5888 = vrot.lane.b32.xlu0 %v5661, 4
      %v5889 = vpop.permute.xlu0 %5888
      %5890 = vrot.lane.b32.xlu0 %v5662, 4
      %v5891 = vpop.permute.xlu0 %5890
      %5892 = vrot.lane.b32.xlu0 %v5663, 4
      %v5893 = vpop.permute.xlu0 %5892
      %5894 = vrot.lane.b32.xlu0 %v5664, 4
      %v5895 = vpop.permute.xlu0 %5894
      %5896 = vrot.lane.b32.xlu0 %v5665, 4
      %v5897 = vpop.permute.xlu0 %5896
      %5898 = vrot.lane.b32.xlu0 %v5666, 4
      %v5899 = vpop.permute.xlu0 %5898
      %5900 = vrot.lane.b32.xlu0 %v5667, 4
      %v5901 = vpop.permute.xlu0 %5900
      %5902 = vrot.lane.b32.xlu0 %v5668, 4
      %v5903 = vpop.permute.xlu0 %5902
      %5904 = vrot.lane.b32.xlu0 %v5669, 4
      %v5905 = vpop.permute.xlu0 %5904
      %5906 = vrot.lane.b32.xlu0 %v5670, 4
      %v5907 = vpop.permute.xlu0 %5906
      %5908 = vrot.lane.b32.xlu0 %v5671, 4
      %v5909 = vpop.permute.xlu0 %5908
      %5910 = vrot.lane.b32.xlu0 %v5672, 4
      %v5911 = vpop.permute.xlu0 %5910
      %5912 = vrot.lane.b32.xlu0 %v5673, 4
      %v5913 = vpop.permute.xlu0 %5912
      %5914 = vrot.lane.b32.xlu0 %v5674, 4
      %v5915 = vpop.permute.xlu0 %5914
      %5916 = vrot.lane.b32.xlu0 %v5675, 4
      %v5917 = vpop.permute.xlu0 %5916
      %5918 = vrot.lane.b32.xlu0 %v5676, 4
      %v5919 = vpop.permute.xlu0 %5918
      %5920 = vrot.lane.b32.xlu0 %v5677, 4
      %v5921 = vpop.permute.xlu0 %5920
      %5922 = vrot.lane.b32.xlu0 %v5678, 4
      %v5923 = vpop.permute.xlu0 %5922
      %5924 = vrot.lane.b32.xlu0 %v5679, 4
      %v5925 = vpop.permute.xlu0 %5924
      %5926 = vrot.lane.b32.xlu0 %v5680, 4
      %v5927 = vpop.permute.xlu0 %5926
      %5928 = vrot.lane.b32.xlu0 %v5681, 4
      %v5929 = vpop.permute.xlu0 %5928
      %5930 = vrot.lane.b32.xlu0 %v5682, 4
      %v5931 = vpop.permute.xlu0 %5930
      %5932 = vrot.lane.b32.xlu0 %v5683, 4
      %v5933 = vpop.permute.xlu0 %5932
      %5934 = vrot.lane.b32.xlu0 %v5684, 4
      %v5935 = vpop.permute.xlu0 %5934
      %5936 = vrot.lane.b32.xlu0 %v5685, 4
      %v5937 = vpop.permute.xlu0 %5936
      %5938 = vrot.lane.b32.xlu0 %v5686, 4
      %v5939 = vpop.permute.xlu0 %5938
      %5940 = vrot.lane.b32.xlu0 %v5687, 4
      %v5941 = vpop.permute.xlu0 %5940
      %5942 = vrot.lane.b32.xlu0 %v5688, 4
      %v5943 = vpop.permute.xlu0 %5942
      %5944 = vrot.lane.b32.xlu0 %v5689, 4
      %v5945 = vpop.permute.xlu0 %5944
      %5946 = vrot.lane.b32.xlu0 %v5690, 4
      %v5947 = vpop.permute.xlu0 %5946
      %5948 = vrot.lane.b32.xlu0 %v5691, 4
      %v5949 = vpop.permute.xlu0 %5948
      %5950 = vrot.lane.b32.xlu0 %v5692, 4
      %v5951 = vpop.permute.xlu0 %5950
      %5952 = vrot.lane.b32.xlu0 %v5693, 4
      %v5953 = vpop.permute.xlu0 %5952
      %5954 = vrot.lane.b32.xlu0 %v5694, 4
      %v5955 = vpop.permute.xlu0 %5954
      %5956 = vrot.lane.b32.xlu0 %v5695, 4
      %v5957 = vpop.permute.xlu0 %5956
      %5958 = vrot.lane.b32.xlu0 %v5696, 4
      %v5959 = vpop.permute.xlu0 %5958
      %5960 = vrot.lane.b32.xlu0 %v5697, 4
      %v5961 = vpop.permute.xlu0 %5960
      %5962 = vrot.lane.b32.xlu0 %v5698, 4
      %v5963 = vpop.permute.xlu0 %5962
      %5964 = vrot.lane.b32.xlu0 %v5699, 4
      %v5965 = vpop.permute.xlu0 %5964
      %5966 = vrot.lane.b32.xlu0 %v5700, 4
      %v5967 = vpop.permute.xlu0 %5966
      %5968 = vrot.lane.b32.xlu0 %v5701, 4
      %v5969 = vpop.permute.xlu0 %5968
      %5970 = vrot.lane.b32.xlu0 %v5702, 4
      %v5971 = vpop.permute.xlu0 %5970
      %5972 = vrot.lane.b32.xlu0 %v5703, 4
      %v5973 = vpop.permute.xlu0 %5972
      %5974 = vrot.lane.b32.xlu0 %v5704, 4
      %v5975 = vpop.permute.xlu0 %5974
      %5976 = vrot.lane.b32.xlu0 %v5705, 4
      %v5977 = vpop.permute.xlu0 %5976
      %5978 = vrot.lane.b32.xlu0 %v5706, 4
      %v5979 = vpop.permute.xlu0 %5978
      %5980 = vrot.lane.b32.xlu0 %v5707, 4
      %v5981 = vpop.permute.xlu0 %5980
      %5982 = vrot.lane.b32.xlu0 %v5708, 4
      %v5983 = vpop.permute.xlu0 %5982
      %5984 = vrot.lane.b32.xlu0 %v5709, 4
      %v5985 = vpop.permute.xlu0 %5984
      %5986 = vrot.lane.b32.xlu0 %v5710, 4
      %v5987 = vpop.permute.xlu0 %5986
      %5988 = vrot.lane.b32.xlu0 %v5711, 4
      %v5989 = vpop.permute.xlu0 %5988
      %5990 = vrot.lane.b32.xlu0 %v5712, 4
      %v5991 = vpop.permute.xlu0 %5990
      %5992 = vrot.lane.b32.xlu0 %v5713, 4
      %v5993 = vpop.permute.xlu0 %5992
      %5994 = vrot.lane.b32.xlu0 %v5714, 4
      %v5995 = vpop.permute.xlu0 %5994
      %5996 = vrot.lane.b32.xlu0 %v5715, 4
      %v5997 = vpop.permute.xlu0 %5996
      %5998 = vrot.lane.b32.xlu0 %v5716, 4
      %v5999 = vpop.permute.xlu0 %5998
      %6000 = vrot.lane.b32.xlu0 %v5717, 4
      %v6001 = vpop.permute.xlu0 %6000
      %6002 = vrot.lane.b32.xlu0 %v5718, 4
      %v6003 = vpop.permute.xlu0 %6002
      %6004 = vrot.lane.b32.xlu0 %v5719, 4
      %v6005 = vpop.permute.xlu0 %6004
      %6006 = vrot.lane.b32.xlu0 %v5720, 4
      %v6007 = vpop.permute.xlu0 %6006
      %6008 = vrot.lane.b32.xlu0 %v5721, 4
      %v6009 = vpop.permute.xlu0 %6008
      %v6106 = vsub.f32 %v257, %v5819
      %v6107 = vsub.f32 %v258, %v5821
      %v6108 = vsub.f32 %v259, %v5823
      %v6109 = vsub.f32 %v260, %v5825
      %v6110 = vsub.f32 %v261, %v5827
      %v6111 = vsub.f32 %v262, %v5829
      %v6112 = vsub.f32 %v263, %v5831
      %v6113 = vsub.f32 %v264, %v5833
      %v6114 = vsub.f32 %v265, %v5835
      %v6115 = vsub.f32 %v266, %v5837
      %v6116 = vsub.f32 %v267, %v5839
      %v6117 = vsub.f32 %v268, %v5841
      %v6118 = vsub.f32 %v269, %v5843
      %v6119 = vsub.f32 %v270, %v5845
      %v6120 = vsub.f32 %v271, %v5847
      %v6121 = vsub.f32 %v272, %v5849
      %v6122 = vsub.f32 %v273, %v5851
      %v6123 = vsub.f32 %v274, %v5853
      %v6124 = vsub.f32 %v275, %v5855
      %v6125 = vsub.f32 %v276, %v5857
      %v6126 = vsub.f32 %v277, %v5859
      %v6127 = vsub.f32 %v278, %v5861
      %v6128 = vsub.f32 %v279, %v5863
      %v6129 = vsub.f32 %v280, %v5865
      %v6130 = vsub.f32 %v281, %v5867
      %v6131 = vsub.f32 %v282, %v5869
      %v6132 = vsub.f32 %v283, %v5871
      %v6133 = vsub.f32 %v284, %v5873
      %v6134 = vsub.f32 %v285, %v5875
      %v6135 = vsub.f32 %v286, %v5877
      %v6136 = vsub.f32 %v287, %v5879
      %v6137 = vsub.f32 %v288, %v5881
      %v6138 = vsub.f32 %v289, %v5883
      %v6139 = vsub.f32 %v290, %v5885
      %v6140 = vsub.f32 %v291, %v5887
      %v6141 = vsub.f32 %v292, %v5889
      %v6142 = vsub.f32 %v293, %v5891
      %v6143 = vsub.f32 %v294, %v5893
      %v6144 = vsub.f32 %v295, %v5895
      %v6145 = vsub.f32 %v296, %v5897
      %v6146 = vsub.f32 %v297, %v5899
      %v6147 = vsub.f32 %v298, %v5901
      %v6148 = vsub.f32 %v299, %v5903
      %v6149 = vsub.f32 %v300, %v5905
      %v6150 = vsub.f32 %v301, %v5907
      %v6151 = vsub.f32 %v302, %v5909
      %v6152 = vsub.f32 %v303, %v5911
      %v6153 = vsub.f32 %v304, %v5913
      %v6154 = vsub.f32 %v305, %v5915
      %v6155 = vsub.f32 %v306, %v5917
      %v6156 = vsub.f32 %v307, %v5919
      %v6157 = vsub.f32 %v308, %v5921
      %v6158 = vsub.f32 %v309, %v5923
      %v6159 = vsub.f32 %v310, %v5925
      %v6160 = vsub.f32 %v311, %v5927
      %v6161 = vsub.f32 %v312, %v5929
      %v6162 = vsub.f32 %v313, %v5931
      %v6163 = vsub.f32 %v314, %v5933
      %v6164 = vsub.f32 %v315, %v5935
      %v6165 = vsub.f32 %v316, %v5937
      %v6166 = vsub.f32 %v317, %v5939
      %v6167 = vsub.f32 %v318, %v5941
      %v6168 = vsub.f32 %v319, %v5943
      %v6169 = vsub.f32 %v320, %v5945
      %v6170 = vsub.f32 %v321, %v5947
      %v6171 = vsub.f32 %v322, %v5949
      %v6172 = vsub.f32 %v323, %v5951
      %v6173 = vsub.f32 %v324, %v5953
      %v6174 = vsub.f32 %v325, %v5955
      %v6175 = vsub.f32 %v326, %v5957
      %v6176 = vsub.f32 %v327, %v5959
      %v6177 = vsub.f32 %v328, %v5961
      %v6178 = vsub.f32 %v329, %v5963
      %v6179 = vsub.f32 %v330, %v5965
      %v6180 = vsub.f32 %v331, %v5967
      %v6181 = vsub.f32 %v332, %v5969
      %v6182 = vsub.f32 %v333, %v5971
      %v6183 = vsub.f32 %v334, %v5973
      %v6184 = vsub.f32 %v335, %v5975
      %v6185 = vsub.f32 %v336, %v5977
      %v6186 = vsub.f32 %v337, %v5979
      %v6187 = vsub.f32 %v338, %v5981
      %v6188 = vsub.f32 %v339, %v5983
      %v6189 = vsub.f32 %v340, %v5985
      %v6190 = vsub.f32 %v341, %v5987
      %v6191 = vsub.f32 %v342, %v5989
      %v6192 = vsub.f32 %v343, %v5991
      %v6193 = vsub.f32 %v344, %v5993
      %v6194 = vsub.f32 %v345, %v5995
      %v6195 = vsub.f32 %v346, %v5997
      %v6196 = vsub.f32 %v347, %v5999
      %v6197 = vsub.f32 %v348, %v6001
      %v6198 = vsub.f32 %v349, %v6003
      %v6199 = vsub.f32 %v350, %v6005
      %v6200 = vsub.f32 %v351, %v6007
      %v6201 = vsub.f32 %v352, %v6009
      %6202 = vst.msk [vmem:[%s224] sm:$0xff] %vm1603, %v3218
      %6203 = vst.msk [vmem:[%s224 + $0x8] sm:$0xff] %vm1603, %v3219
      %6204 = vst.msk [vmem:[%s224 + $0x10] sm:$0xff] %vm1603, %v3220
      %6205 = vst.msk [vmem:[%s224 + $0x18] sm:$0xff] %vm1603, %v3221
      %6206 = vst.msk [vmem:[%s224 + $0x20] sm:$0xff] %vm1603, %v3222
      %6207 = vst.msk [vmem:[%s224 + $0x28] sm:$0xff] %vm1603, %v3223
      %6208 = vst.msk [vmem:[%s224 + $0x30] sm:$0xff] %vm1603, %v3224
      %6209 = vst.msk [vmem:[%s224 + $0x38] sm:$0xff] %vm1603, %v3225
      %6210 = vst.msk [vmem:[%s224 + $0x40] sm:$0xff] %vm1603, %v3226
      %6211 = vst.msk [vmem:[%s224 + $0x48] sm:$0xff] %vm1603, %v3227
      %6212 = vst.msk [vmem:[%s224 + $0x50] sm:$0xff] %vm1603, %v3228
      %6213 = vst.msk [vmem:[%s224 + $0x58] sm:$0xff] %vm1603, %v3229
      %6214 = vst.msk [vmem:[%s224 + $0x60] sm:$0xff] %vm1603, %v3230
      %6215 = vst.msk [vmem:[%s224 + $0x68] sm:$0xff] %vm1603, %v3231
      %6216 = vst.msk [vmem:[%s224 + $0x70] sm:$0xff] %vm1603, %v3232
      %6217 = vst.msk [vmem:[%s224 + $0x78] sm:$0xff] %vm1603, %v3233
      %6218 = vst.msk [vmem:[%s224 + $0x80] sm:$0xff] %vm1603, %v3234
      %6219 = vst.msk [vmem:[%s224 + $0x88] sm:$0xff] %vm1603, %v3235
      %6220 = vst.msk [vmem:[%s224 + $0x90] sm:$0xff] %vm1603, %v3236
      %6221 = vst.msk [vmem:[%s224 + $0x98] sm:$0xff] %vm1603, %v3237
      %6222 = vst.msk [vmem:[%s224 + $0xa0] sm:$0xff] %vm1603, %v3238
      %6223 = vst.msk [vmem:[%s224 + $0xa8] sm:$0xff] %vm1603, %v3239
      %6224 = vst.msk [vmem:[%s224 + $0xb0] sm:$0xff] %vm1603, %v3240
      %6225 = vst.msk [vmem:[%s224 + $0xb8] sm:$0xff] %vm1603, %v3241
      %6226 = vst.msk [vmem:[%s224 + $0xc0] sm:$0xff] %vm1603, %v3242
      %6227 = vst.msk [vmem:[%s224 + $0xc8] sm:$0xff] %vm1603, %v3243
      %6228 = vst.msk [vmem:[%s224 + $0xd0] sm:$0xff] %vm1603, %v3244
      %6229 = vst.msk [vmem:[%s224 + $0xd8] sm:$0xff] %vm1603, %v3245
      %6230 = vst.msk [vmem:[%s224 + $0xe0] sm:$0xff] %vm1603, %v3246
      %6231 = vst.msk [vmem:[%s224 + $0xe8] sm:$0xff] %vm1603, %v3247
      %6232 = vst.msk [vmem:[%s224 + $0xf0] sm:$0xff] %vm1603, %v3248
      %6233 = vst.msk [vmem:[%s224 + $0xf8] sm:$0xff] %vm1603, %v3249
      %6234 = vst.msk [vmem:[%s224 + $0x100] sm:$0xff] %vm1603, %v3250
      %6235 = vst.msk [vmem:[%s224 + $0x108] sm:$0xff] %vm1603, %v3251
      %6236 = vst.msk [vmem:[%s224 + $0x110] sm:$0xff] %vm1603, %v3252
      %6237 = vst.msk [vmem:[%s224 + $0x118] sm:$0xff] %vm1603, %v3253
      %6238 = vst.msk [vmem:[%s224 + $0x120] sm:$0xff] %vm1603, %v3254
      %6239 = vst.msk [vmem:[%s224 + $0x128] sm:$0xff] %vm1603, %v3255
      %6240 = vst.msk [vmem:[%s224 + $0x130] sm:$0xff] %vm1603, %v3256
      %6241 = vst.msk [vmem:[%s224 + $0x138] sm:$0xff] %vm1603, %v3257
      %6242 = vst.msk [vmem:[%s224 + $0x140] sm:$0xff] %vm1603, %v3258
      %6243 = vst.msk [vmem:[%s224 + $0x148] sm:$0xff] %vm1603, %v3259
      %6244 = vst.msk [vmem:[%s224 + $0x150] sm:$0xff] %vm1603, %v3260
      %6245 = vst.msk [vmem:[%s224 + $0x158] sm:$0xff] %vm1603, %v3261
      %6246 = vst.msk [vmem:[%s224 + $0x160] sm:$0xff] %vm1603, %v3262
      %6247 = vst.msk [vmem:[%s224 + $0x168] sm:$0xff] %vm1603, %v3263
      %6248 = vst.msk [vmem:[%s224 + $0x170] sm:$0xff] %vm1603, %v3264
      %6249 = vst.msk [vmem:[%s224 + $0x178] sm:$0xff] %vm1603, %v3265
      %6250 = vst.msk [vmem:[%s224 + $0x180] sm:$0xff] %vm1603, %v3266
      %6251 = vst.msk [vmem:[%s224 + $0x188] sm:$0xff] %vm1603, %v3267
      %6252 = vst.msk [vmem:[%s224 + $0x190] sm:$0xff] %vm1603, %v3268
      %6253 = vst.msk [vmem:[%s224 + $0x198] sm:$0xff] %vm1603, %v3269
      %6254 = vst.msk [vmem:[%s224 + $0x1a0] sm:$0xff] %vm1603, %v3270
      %6255 = vst.msk [vmem:[%s224 + $0x1a8] sm:$0xff] %vm1603, %v3271
      %6256 = vst.msk [vmem:[%s224 + $0x1b0] sm:$0xff] %vm1603, %v3272
      %6257 = vst.msk [vmem:[%s224 + $0x1b8] sm:$0xff] %vm1603, %v3273
      %6258 = vst.msk [vmem:[%s224 + $0x1c0] sm:$0xff] %vm1603, %v3274
      %6259 = vst.msk [vmem:[%s224 + $0x1c8] sm:$0xff] %vm1603, %v3275
      %6260 = vst.msk [vmem:[%s224 + $0x1d0] sm:$0xff] %vm1603, %v3276
      %6261 = vst.msk [vmem:[%s224 + $0x1d8] sm:$0xff] %vm1603, %v3277
      %6262 = vst.msk [vmem:[%s224 + $0x1e0] sm:$0xff] %vm1603, %v3278
      %6263 = vst.msk [vmem:[%s224 + $0x1e8] sm:$0xff] %vm1603, %v3279
      %6264 = vst.msk [vmem:[%s224 + $0x1f0] sm:$0xff] %vm1603, %v3280
      %6265 = vst.msk [vmem:[%s224 + $0x1f8] sm:$0xff] %vm1603, %v3281
      %6266 = vst.msk [vmem:[%s224 + $0x200] sm:$0xff] %vm1603, %v3282
      %6267 = vst.msk [vmem:[%s224 + $0x208] sm:$0xff] %vm1603, %v3283
      %6268 = vst.msk [vmem:[%s224 + $0x210] sm:$0xff] %vm1603, %v3284
      %6269 = vst.msk [vmem:[%s224 + $0x218] sm:$0xff] %vm1603, %v3285
      %6270 = vst.msk [vmem:[%s224 + $0x220] sm:$0xff] %vm1603, %v3286
      %6271 = vst.msk [vmem:[%s224 + $0x228] sm:$0xff] %vm1603, %v3287
      %6272 = vst.msk [vmem:[%s224 + $0x230] sm:$0xff] %vm1603, %v3288
      %6273 = vst.msk [vmem:[%s224 + $0x238] sm:$0xff] %vm1603, %v3289
      %6274 = vst.msk [vmem:[%s224 + $0x240] sm:$0xff] %vm1603, %v3290
      %6275 = vst.msk [vmem:[%s224 + $0x248] sm:$0xff] %vm1603, %v3291
      %6276 = vst.msk [vmem:[%s224 + $0x250] sm:$0xff] %vm1603, %v3292
      %6277 = vst.msk [vmem:[%s224 + $0x258] sm:$0xff] %vm1603, %v3293
      %6278 = vst.msk [vmem:[%s224 + $0x260] sm:$0xff] %vm1603, %v3294
      %6279 = vst.msk [vmem:[%s224 + $0x268] sm:$0xff] %vm1603, %v3295
      %6280 = vst.msk [vmem:[%s224 + $0x270] sm:$0xff] %vm1603, %v3296
      %6281 = vst.msk [vmem:[%s224 + $0x278] sm:$0xff] %vm1603, %v3297
      %6282 = vst.msk [vmem:[%s224 + $0x280] sm:$0xff] %vm1603, %v3298
      %6283 = vst.msk [vmem:[%s224 + $0x288] sm:$0xff] %vm1603, %v3299
      %6284 = vst.msk [vmem:[%s224 + $0x290] sm:$0xff] %vm1603, %v3300
      %6285 = vst.msk [vmem:[%s224 + $0x298] sm:$0xff] %vm1603, %v3301
      %6286 = vst.msk [vmem:[%s224 + $0x2a0] sm:$0xff] %vm1603, %v3302
      %6287 = vst.msk [vmem:[%s224 + $0x2a8] sm:$0xff] %vm1603, %v3303
      %6288 = vst.msk [vmem:[%s224 + $0x2b0] sm:$0xff] %vm1603, %v3304
      %6289 = vst.msk [vmem:[%s224 + $0x2b8] sm:$0xff] %vm1603, %v3305
      %6290 = vst.msk [vmem:[%s224 + $0x2c0] sm:$0xff] %vm1603, %v3306
      %6291 = vst.msk [vmem:[%s224 + $0x2c8] sm:$0xff] %vm1603, %v3307
      %6292 = vst.msk [vmem:[%s224 + $0x2d0] sm:$0xff] %vm1603, %v3308
      %6293 = vst.msk [vmem:[%s224 + $0x2d8] sm:$0xff] %vm1603, %v3309
      %6294 = vst.msk [vmem:[%s224 + $0x2e0] sm:$0xff] %vm1603, %v3310
      %6295 = vst.msk [vmem:[%s224 + $0x2e8] sm:$0xff] %vm1603, %v3311
      %6296 = vst.msk [vmem:[%s224 + $0x2f0] sm:$0xff] %vm1603, %v3312
      %6297 = vst.msk [vmem:[%s224 + $0x2f8] sm:$0xff] %vm1603, %v3313
      %s6298 = scalar_lea.vmem %s224, 768
      %6299 = vst.msk [vmem:[%s6298] sm:$0xff] %vm1603, 0.0
      %6300 = vst.msk [vmem:[%s6298 + $0x8] sm:$0xff] %vm1603, 0.0
      %6301 = vst.msk [vmem:[%s6298 + $0x10] sm:$0xff] %vm1603, 0.0
      %6302 = vst.msk [vmem:[%s6298 + $0x18] sm:$0xff] %vm1603, 0.0
      %6303 = vst.msk [vmem:[%s6298 + $0x20] sm:$0xff] %vm1603, 0.0
      %6304 = vst.msk [vmem:[%s6298 + $0x28] sm:$0xff] %vm1603, 0.0
      %6305 = vst.msk [vmem:[%s6298 + $0x30] sm:$0xff] %vm1603, 0.0
      %6306 = vst.msk [vmem:[%s6298 + $0x38] sm:$0xff] %vm1603, 0.0
      %6307 = vst.msk [vmem:[%s6298 + $0x40] sm:$0xff] %vm1603, 0.0
      %6308 = vst.msk [vmem:[%s6298 + $0x48] sm:$0xff] %vm1603, 0.0
      %6309 = vst.msk [vmem:[%s6298 + $0x50] sm:$0xff] %vm1603, 0.0
      %6310 = vst.msk [vmem:[%s6298 + $0x58] sm:$0xff] %vm1603, 0.0
      %6311 = vst.msk [vmem:[%s6298 + $0x60] sm:$0xff] %vm1603, 0.0
      %6312 = vst.msk [vmem:[%s6298 + $0x68] sm:$0xff] %vm1603, 0.0
      %6313 = vst.msk [vmem:[%s6298 + $0x70] sm:$0xff] %vm1603, 0.0
      %6314 = vst.msk [vmem:[%s6298 + $0x78] sm:$0xff] %vm1603, 0.0
      %6315 = vst.msk [vmem:[%s6298 + $0x80] sm:$0xff] %vm1603, 0.0
      %6316 = vst.msk [vmem:[%s6298 + $0x88] sm:$0xff] %vm1603, 0.0
      %6317 = vst.msk [vmem:[%s6298 + $0x90] sm:$0xff] %vm1603, 0.0
      %6318 = vst.msk [vmem:[%s6298 + $0x98] sm:$0xff] %vm1603, 0.0
      %6319 = vst.msk [vmem:[%s6298 + $0xa0] sm:$0xff] %vm1603, 0.0
      %6320 = vst.msk [vmem:[%s6298 + $0xa8] sm:$0xff] %vm1603, 0.0
      %6321 = vst.msk [vmem:[%s6298 + $0xb0] sm:$0xff] %vm1603, 0.0
      %6322 = vst.msk [vmem:[%s6298 + $0xb8] sm:$0xff] %vm1603, 0.0
      %6323 = vst.msk [vmem:[%s6298 + $0xc0] sm:$0xff] %vm1603, 0.0
      %6324 = vst.msk [vmem:[%s6298 + $0xc8] sm:$0xff] %vm1603, 0.0
      %6325 = vst.msk [vmem:[%s6298 + $0xd0] sm:$0xff] %vm1603, 0.0
      %6326 = vst.msk [vmem:[%s6298 + $0xd8] sm:$0xff] %vm1603, 0.0
      %6327 = vst.msk [vmem:[%s6298 + $0xe0] sm:$0xff] %vm1603, 0.0
      %6328 = vst.msk [vmem:[%s6298 + $0xe8] sm:$0xff] %vm1603, 0.0
      %6329 = vst.msk [vmem:[%s6298 + $0xf0] sm:$0xff] %vm1603, 0.0
      %6330 = vst.msk [vmem:[%s6298 + $0xf8] sm:$0xff] %vm1603, 0.0
      %vm6331 = vcmask 64544
      %6332 = vst.msk [vmem:[%s224] sm:$0xff] %vm6331, 0.0
      %6333 = vst.msk [vmem:[%s224 + $0x8] sm:$0xff] %vm6331, 0.0
      %6334 = vst.msk [vmem:[%s224 + $0x10] sm:$0xff] %vm6331, 0.0
      %6335 = vst.msk [vmem:[%s224 + $0x18] sm:$0xff] %vm6331, 0.0
      %6336 = vst.msk [vmem:[%s224 + $0x20] sm:$0xff] %vm6331, 0.0
      %6337 = vst.msk [vmem:[%s224 + $0x28] sm:$0xff] %vm6331, 0.0
      %6338 = vst.msk [vmem:[%s224 + $0x30] sm:$0xff] %vm6331, 0.0
      %6339 = vst.msk [vmem:[%s224 + $0x38] sm:$0xff] %vm6331, 0.0
      %6340 = vst.msk [vmem:[%s224 + $0x40] sm:$0xff] %vm6331, 0.0
      %6341 = vst.msk [vmem:[%s224 + $0x48] sm:$0xff] %vm6331, 0.0
      %6342 = vst.msk [vmem:[%s224 + $0x50] sm:$0xff] %vm6331, 0.0
      %6343 = vst.msk [vmem:[%s224 + $0x58] sm:$0xff] %vm6331, 0.0
      %6344 = vst.msk [vmem:[%s224 + $0x60] sm:$0xff] %vm6331, 0.0
      %6345 = vst.msk [vmem:[%s224 + $0x68] sm:$0xff] %vm6331, 0.0
      %6346 = vst.msk [vmem:[%s224 + $0x70] sm:$0xff] %vm6331, 0.0
      %6347 = vst.msk [vmem:[%s224 + $0x78] sm:$0xff] %vm6331, 0.0
      %6348 = vst.msk [vmem:[%s224 + $0x80] sm:$0xff] %vm6331, 0.0
      %6349 = vst.msk [vmem:[%s224 + $0x88] sm:$0xff] %vm6331, 0.0
      %6350 = vst.msk [vmem:[%s224 + $0x90] sm:$0xff] %vm6331, 0.0
      %6351 = vst.msk [vmem:[%s224 + $0x98] sm:$0xff] %vm6331, 0.0
      %6352 = vst.msk [vmem:[%s224 + $0xa0] sm:$0xff] %vm6331, 0.0
      %6353 = vst.msk [vmem:[%s224 + $0xa8] sm:$0xff] %vm6331, 0.0
      %6354 = vst.msk [vmem:[%s224 + $0xb0] sm:$0xff] %vm6331, 0.0
      %6355 = vst.msk [vmem:[%s224 + $0xb8] sm:$0xff] %vm6331, 0.0
      %6356 = vst.msk [vmem:[%s224 + $0xc0] sm:$0xff] %vm6331, 0.0
      %6357 = vst.msk [vmem:[%s224 + $0xc8] sm:$0xff] %vm6331, 0.0
      %6358 = vst.msk [vmem:[%s224 + $0xd0] sm:$0xff] %vm6331, 0.0
      %6359 = vst.msk [vmem:[%s224 + $0xd8] sm:$0xff] %vm6331, 0.0
      %6360 = vst.msk [vmem:[%s224 + $0xe0] sm:$0xff] %vm6331, 0.0
      %6361 = vst.msk [vmem:[%s224 + $0xe8] sm:$0xff] %vm6331, 0.0
      %6362 = vst.msk [vmem:[%s224 + $0xf0] sm:$0xff] %vm6331, 0.0
      %6363 = vst.msk [vmem:[%s224 + $0xf8] sm:$0xff] %vm6331, 0.0
      %s6364 = scalar_lea.vmem %s224, 256
      %6365 = vst.msk [vmem:[%s6364] sm:$0xff] %vm6331, %v6106
      %6366 = vst.msk [vmem:[%s6364 + $0x8] sm:$0xff] %vm6331, %v6107
      %6367 = vst.msk [vmem:[%s6364 + $0x10] sm:$0xff] %vm6331, %v6108
      %6368 = vst.msk [vmem:[%s6364 + $0x18] sm:$0xff] %vm6331, %v6109
      %6369 = vst.msk [vmem:[%s6364 + $0x20] sm:$0xff] %vm6331, %v6110
      %6370 = vst.msk [vmem:[%s6364 + $0x28] sm:$0xff] %vm6331, %v6111
      %6371 = vst.msk [vmem:[%s6364 + $0x30] sm:$0xff] %vm6331, %v6112
      %6372 = vst.msk [vmem:[%s6364 + $0x38] sm:$0xff] %vm6331, %v6113
      %6373 = vst.msk [vmem:[%s6364 + $0x40] sm:$0xff] %vm6331, %v6114
      %6374 = vst.msk [vmem:[%s6364 + $0x48] sm:$0xff] %vm6331, %v6115
      %6375 = vst.msk [vmem:[%s6364 + $0x50] sm:$0xff] %vm6331, %v6116
      %6376 = vst.msk [vmem:[%s6364 + $0x58] sm:$0xff] %vm6331, %v6117
      %6377 = vst.msk [vmem:[%s6364 + $0x60] sm:$0xff] %vm6331, %v6118
      %6378 = vst.msk [vmem:[%s6364 + $0x68] sm:$0xff] %vm6331, %v6119
      %6379 = vst.msk [vmem:[%s6364 + $0x70] sm:$0xff] %vm6331, %v6120
      %6380 = vst.msk [vmem:[%s6364 + $0x78] sm:$0xff] %vm6331, %v6121
      %6381 = vst.msk [vmem:[%s6364 + $0x80] sm:$0xff] %vm6331, %v6122
      %6382 = vst.msk [vmem:[%s6364 + $0x88] sm:$0xff] %vm6331, %v6123
      %6383 = vst.msk [vmem:[%s6364 + $0x90] sm:$0xff] %vm6331, %v6124
      %6384 = vst.msk [vmem:[%s6364 + $0x98] sm:$0xff] %vm6331, %v6125
      %6385 = vst.msk [vmem:[%s6364 + $0xa0] sm:$0xff] %vm6331, %v6126
      %6386 = vst.msk [vmem:[%s6364 + $0xa8] sm:$0xff] %vm6331, %v6127
      %6387 = vst.msk [vmem:[%s6364 + $0xb0] sm:$0xff] %vm6331, %v6128
      %6388 = vst.msk [vmem:[%s6364 + $0xb8] sm:$0xff] %vm6331, %v6129
      %6389 = vst.msk [vmem:[%s6364 + $0xc0] sm:$0xff] %vm6331, %v6130
      %6390 = vst.msk [vmem:[%s6364 + $0xc8] sm:$0xff] %vm6331, %v6131
      %6391 = vst.msk [vmem:[%s6364 + $0xd0] sm:$0xff] %vm6331, %v6132
      %6392 = vst.msk [vmem:[%s6364 + $0xd8] sm:$0xff] %vm6331, %v6133
      %6393 = vst.msk [vmem:[%s6364 + $0xe0] sm:$0xff] %vm6331, %v6134
      %6394 = vst.msk [vmem:[%s6364 + $0xe8] sm:$0xff] %vm6331, %v6135
      %6395 = vst.msk [vmem:[%s6364 + $0xf0] sm:$0xff] %vm6331, %v6136
      %6396 = vst.msk [vmem:[%s6364 + $0xf8] sm:$0xff] %vm6331, %v6137
      %6397 = vst.msk [vmem:[%s6364 + $0x100] sm:$0xff] %vm6331, %v6138
      %6398 = vst.msk [vmem:[%s6364 + $0x108] sm:$0xff] %vm6331, %v6139
      %6399 = vst.msk [vmem:[%s6364 + $0x110] sm:$0xff] %vm6331, %v6140
      %6400 = vst.msk [vmem:[%s6364 + $0x118] sm:$0xff] %vm6331, %v6141
      %6401 = vst.msk [vmem:[%s6364 + $0x120] sm:$0xff] %vm6331, %v6142
      %6402 = vst.msk [vmem:[%s6364 + $0x128] sm:$0xff] %vm6331, %v6143
      %6403 = vst.msk [vmem:[%s6364 + $0x130] sm:$0xff] %vm6331, %v6144
      %6404 = vst.msk [vmem:[%s6364 + $0x138] sm:$0xff] %vm6331, %v6145
      %6405 = vst.msk [vmem:[%s6364 + $0x140] sm:$0xff] %vm6331, %v6146
      %6406 = vst.msk [vmem:[%s6364 + $0x148] sm:$0xff] %vm6331, %v6147
      %6407 = vst.msk [vmem:[%s6364 + $0x150] sm:$0xff] %vm6331, %v6148
      %6408 = vst.msk [vmem:[%s6364 + $0x158] sm:$0xff] %vm6331, %v6149
      %6409 = vst.msk [vmem:[%s6364 + $0x160] sm:$0xff] %vm6331, %v6150
      %6410 = vst.msk [vmem:[%s6364 + $0x168] sm:$0xff] %vm6331, %v6151
      %6411 = vst.msk [vmem:[%s6364 + $0x170] sm:$0xff] %vm6331, %v6152
      %6412 = vst.msk [vmem:[%s6364 + $0x178] sm:$0xff] %vm6331, %v6153
      %6413 = vst.msk [vmem:[%s6364 + $0x180] sm:$0xff] %vm6331, %v6154
      %6414 = vst.msk [vmem:[%s6364 + $0x188] sm:$0xff] %vm6331, %v6155
      %6415 = vst.msk [vmem:[%s6364 + $0x190] sm:$0xff] %vm6331, %v6156
      %6416 = vst.msk [vmem:[%s6364 + $0x198] sm:$0xff] %vm6331, %v6157
      %6417 = vst.msk [vmem:[%s6364 + $0x1a0] sm:$0xff] %vm6331, %v6158
      %6418 = vst.msk [vmem:[%s6364 + $0x1a8] sm:$0xff] %vm6331, %v6159
      %6419 = vst.msk [vmem:[%s6364 + $0x1b0] sm:$0xff] %vm6331, %v6160
      %6420 = vst.msk [vmem:[%s6364 + $0x1b8] sm:$0xff] %vm6331, %v6161
      %6421 = vst.msk [vmem:[%s6364 + $0x1c0] sm:$0xff] %vm6331, %v6162
      %6422 = vst.msk [vmem:[%s6364 + $0x1c8] sm:$0xff] %vm6331, %v6163
      %6423 = vst.msk [vmem:[%s6364 + $0x1d0] sm:$0xff] %vm6331, %v6164
      %6424 = vst.msk [vmem:[%s6364 + $0x1d8] sm:$0xff] %vm6331, %v6165
      %6425 = vst.msk [vmem:[%s6364 + $0x1e0] sm:$0xff] %vm6331, %v6166
      %6426 = vst.msk [vmem:[%s6364 + $0x1e8] sm:$0xff] %vm6331, %v6167
      %6427 = vst.msk [vmem:[%s6364 + $0x1f0] sm:$0xff] %vm6331, %v6168
      %6428 = vst.msk [vmem:[%s6364 + $0x1f8] sm:$0xff] %vm6331, %v6169
      %6429 = vst.msk [vmem:[%s6364 + $0x200] sm:$0xff] %vm6331, %v6170
      %6430 = vst.msk [vmem:[%s6364 + $0x208] sm:$0xff] %vm6331, %v6171
      %6431 = vst.msk [vmem:[%s6364 + $0x210] sm:$0xff] %vm6331, %v6172
      %6432 = vst.msk [vmem:[%s6364 + $0x218] sm:$0xff] %vm6331, %v6173
      %6433 = vst.msk [vmem:[%s6364 + $0x220] sm:$0xff] %vm6331, %v6174
      %6434 = vst.msk [vmem:[%s6364 + $0x228] sm:$0xff] %vm6331, %v6175
      %6435 = vst.msk [vmem:[%s6364 + $0x230] sm:$0xff] %vm6331, %v6176
      %6436 = vst.msk [vmem:[%s6364 + $0x238] sm:$0xff] %vm6331, %v6177
      %6437 = vst.msk [vmem:[%s6364 + $0x240] sm:$0xff] %vm6331, %v6178
      %6438 = vst.msk [vmem:[%s6364 + $0x248] sm:$0xff] %vm6331, %v6179
      %6439 = vst.msk [vmem:[%s6364 + $0x250] sm:$0xff] %vm6331, %v6180
      %6440 = vst.msk [vmem:[%s6364 + $0x258] sm:$0xff] %vm6331, %v6181
      %6441 = vst.msk [vmem:[%s6364 + $0x260] sm:$0xff] %vm6331, %v6182
      %6442 = vst.msk [vmem:[%s6364 + $0x268] sm:$0xff] %vm6331, %v6183
      %6443 = vst.msk [vmem:[%s6364 + $0x270] sm:$0xff] %vm6331, %v6184
      %6444 = vst.msk [vmem:[%s6364 + $0x278] sm:$0xff] %vm6331, %v6185
      %6445 = vst.msk [vmem:[%s6364 + $0x280] sm:$0xff] %vm6331, %v6186
      %6446 = vst.msk [vmem:[%s6364 + $0x288] sm:$0xff] %vm6331, %v6187
      %6447 = vst.msk [vmem:[%s6364 + $0x290] sm:$0xff] %vm6331, %v6188
      %6448 = vst.msk [vmem:[%s6364 + $0x298] sm:$0xff] %vm6331, %v6189
      %6449 = vst.msk [vmem:[%s6364 + $0x2a0] sm:$0xff] %vm6331, %v6190
      %6450 = vst.msk [vmem:[%s6364 + $0x2a8] sm:$0xff] %vm6331, %v6191
      %6451 = vst.msk [vmem:[%s6364 + $0x2b0] sm:$0xff] %vm6331, %v6192
      %6452 = vst.msk [vmem:[%s6364 + $0x2b8] sm:$0xff] %vm6331, %v6193
      %6453 = vst.msk [vmem:[%s6364 + $0x2c0] sm:$0xff] %vm6331, %v6194
      %6454 = vst.msk [vmem:[%s6364 + $0x2c8] sm:$0xff] %vm6331, %v6195
      %6455 = vst.msk [vmem:[%s6364 + $0x2d0] sm:$0xff] %vm6331, %v6196
      %6456 = vst.msk [vmem:[%s6364 + $0x2d8] sm:$0xff] %vm6331, %v6197
      %6457 = vst.msk [vmem:[%s6364 + $0x2e0] sm:$0xff] %vm6331, %v6198
      %6458 = vst.msk [vmem:[%s6364 + $0x2e8] sm:$0xff] %vm6331, %v6199
      %6459 = vst.msk [vmem:[%s6364 + $0x2f0] sm:$0xff] %vm6331, %v6200
      %6460 = vst.msk [vmem:[%s6364 + $0x2f8] sm:$0xff] %vm6331, %v6201
      %p6461 = scmp.lt.s32.totalorder %s16, 1
      %s6462 = scalar_select %p6461, %s16, 1
      %s6463 = smul.addr %s6462, 128
      %s6464 = smul.addr %s6463, 8
      %s6465 = scalar_lea.vmem %s5, %s6464
      // Predicated region
      $region41: #{light_motion_replace_block.3} parent=39 // pred_check
        %p6466 = pneg %p144
      $region42: #{light_motion_replace_block.3} parent=39 // pred_check_branch
        %6468 = sbr.rel (%p6466) target = $region44
      $region43: #{light_motion_replace_block.3} parent=39 // pred_region
        _
      $region44: #{light_motion_replace_block.3} parent=39 // pred_fallthru
        _
    $region40: #{light_motion_replace_block.3} parent=5 // pred_fallthru
      _
    %p6469 = scmp.le.s32.totalorder 2, %s11
    // Predicated region
    $region45: #{light_motion_replace_block.3} parent=5 // pred_check
      %p6470 = pneg %p6469
    $region46: #{light_motion_replace_block.3} parent=5 // pred_check_branch
      %6472 = sbr.rel (%p6470) target = $region48
    $region47: #{light_motion_replace_block.3} parent=5 // pred_region
      %s6473 = ssub.s32 %s11, 2
      // Predicated region
      $region49: #{light_motion_replace_block.3} parent=47 // pred_check
        %p6474 = pneg %p150
      $region50: #{light_motion_replace_block.3} parent=47 // pred_check_branch
        %6476 = sbr.rel (%p6474) target = $region52
      $region51: #{light_motion_replace_block.3} parent=47 // pred_region
        %p6477 = scmp.lt.s32.totalorder %s17, 1
        %s6478 = scalar_select %p6477, %s17, 1
        %s6479 = smul.addr %s6478, 128
        %s6480 = smul.addr %s6479, 8
        %s6481 = scalar_lea.vmem %s5, %s6480
      $region52: #{light_motion_replace_block.3} parent=47 // pred_fallthru
        _
    $region48: #{light_motion_replace_block.3} parent=5 // pred_fallthru
      _
  $region6: #{light_motion_replace_block.3} parent=0 // loop_footer
    %s15 = sadd.s32 1, %s11
  $region7: #{light_motion_replace_block.3} parent=0 // loop_footer_branch
    %10 = sbr.rel target = $region3
  $region8: #{light_motion_replace_block.3} parent=0 // loop_exit
    _

</llo_original>
